<compile_context>
chip_gen: v7x
topology: tpu7x:2x2x1
jax: 0.10.0
libtpu: 0.0.40
codegen_flags: <defaults>
</compile_context>

<pallas_src>
import functools

import jax
import jax.numpy as jnp
from jax.experimental import pallas as pl
from jax.experimental.pallas import tpu as pltpu


SLAB_W = 128  # lane width of the packed parameter slab


def _round8(n):
    return (n + 7) // 8 * 8


# ----------------------------------------------------------------------------
# Parameter packing: one (rows, 128) f32 slab, every param 8-row / lane-0 aligned
# ----------------------------------------------------------------------------
def _pack_params(params, in_pad):
    C = params["l1_1_w"][0].shape[0]

    entries = []  # (name, 2-D f32 array)

    def add(name, a):
        entries.append((name, jnp.asarray(a, jnp.float32)))

    # l1_1 convs (weights pre-transposed to (Cin, Cout); biases as (1, Cout) rows)
    w0T = jnp.transpose(params["l1_1_w"][0])                       # (in_dim, C)
    if w0T.shape[0] != in_pad:                                     # pad K to match padded x
        w0T = jnp.pad(w0T, ((0, in_pad - w0T.shape[0]), (0, 0)))
    add("l1_1_w0", w0T)
    add("l1_1_b0", jnp.reshape(params["l1_1_b"][0], (1, -1)))
    for i in range(1, len(params["l1_1_w"])):
        add(f"l1_1_w{i}", jnp.transpose(params["l1_1_w"][i]))
        add(f"l1_1_b{i}", jnp.reshape(params["l1_1_b"][i], (1, -1)))

    add("down_w", params["down_w"])                                # (M, C), raw
    add("down_b", jnp.reshape(params["down_b"], (-1, 1)))          # (M, 1) column
    add("up_w", params["up_w"])                                    # (M, C), raw
    add("up_b", jnp.reshape(params["up_b"], (1, -1)))              # (1, M) row

    for i, f in enumerate(params["oaf"]):
        add(f"oaf{i}_w1", jnp.transpose(f["w1"]))                  # (C, C)
        add(f"oaf{i}_b1", jnp.reshape(f["b1"], (1, -1)))
        add(f"oaf{i}_w2", f["w2"])                                 # (M, M)
        add(f"oaf{i}_b2", jnp.reshape(f["b2"], (-1, 1)))           # (M, 1)
        add(f"oaf{i}_w3", jnp.transpose(f["w3"]))                  # (C, C)
        add(f"oaf{i}_b3", jnp.reshape(f["b3"], (1, -1)))

    for i in range(len(params["l1_2_w"])):
        add(f"l1_2_w{i}", jnp.transpose(params["l1_2_w"][i]))      # first: (2C, C)
        add(f"l1_2_b{i}", jnp.reshape(params["l1_2_b"][i], (1, -1)))

    offsets = {}
    row = 0
    for name, a in entries:
        r, c = a.shape
        assert c <= SLAB_W
        offsets[name] = (row, r, c)
        row += _round8(r)

    slab = jnp.zeros((row, SLAB_W), jnp.float32)
    for name, a in entries:
        off, _, _ = offsets[name]
        slab = jax.lax.dynamic_update_slice(slab, a, (off, 0))
    return slab, offsets, C


# ----------------------------------------------------------------------------
# The fused OANet forward kernel
# ----------------------------------------------------------------------------
def _oanet_fused_kernel(x_ref, p_ref, o_ref, *, B, N, M, C, num_blocks, offs):
    f32 = jnp.float32

    def P(name):  # static, tile-aligned slice of the parameter slab
        off, r, c = offs[name]
        return p_ref[off:off + r, 0:c]

    def matmul(a, b):
        return jnp.dot(a, b, preferred_element_type=f32)

    def dot_t(a, b):  # contract LAST dims of both: (p,k) x (q,k) -> (p,q), no transpose
        return jax.lax.dot_general(a, b, (((1,), (1,)), ((), ())),
                                   preferred_element_type=f32)

    def col_norm_bn_relu(x, rows, mode):
        """Per-(batch, column) norm over `rows` (ContextNorm 'cn' unbiased /
        InstanceNorm 'in' biased, eps 1e-3), then train-mode BatchNorm over all
        rows (eps 1e-5), then ReLU.  x: (B*rows, C) slab."""
        cdim = x.shape[1]
        x3 = x.reshape(B, rows, cdim)
        mean = jnp.mean(x3, axis=1, keepdims=True)
        d = x3 - mean
        denom = float(rows - 1 if mode == "cn" else rows)
        var = jnp.sum(d * d, axis=1, keepdims=True) / denom
        n = (d * jax.lax.rsqrt(var + 1e-3)).reshape(B * rows, cdim)
        bmean = jnp.mean(n, axis=0, keepdims=True)
        cen = n - bmean
        bvar = jnp.mean(cen * cen, axis=0, keepdims=True)
        return jnp.maximum(cen * jax.lax.rsqrt(bvar + 1e-5), 0.0)

    def row_bn_relu(x, rows):
        """BatchNorm1d where the 'channel' axis is the ROW index within each
        batch block (OAFilter conv2's BatchNorm1d(points)), then ReLU."""
        cdim = x.shape[1]
        x3 = x.reshape(B, rows, cdim)
        cnt = float(B * cdim)
        mean = jnp.sum(jnp.sum(x3, axis=2, keepdims=True), axis=0, keepdims=True) / cnt
        d = x3 - mean
        var = jnp.sum(jnp.sum(d * d, axis=2, keepdims=True), axis=0, keepdims=True) / cnt
        return jnp.maximum(d * jax.lax.rsqrt(var + 1e-5), 0.0).reshape(B * rows, cdim)

    def softmax_lanes(e):  # softmax along the last (lane) axis of a 2-D tile
        p = jnp.exp(e - jnp.max(e, axis=1, keepdims=True))
        return p * pl.reciprocal(jnp.sum(p, axis=1, keepdims=True), approx=True)

    # ---- l1_1: Conv, then num_blocks x (Conv, ContextNorm, BN, ReLU) --------
    x = x_ref[...].astype(f32)                                     # (B*N, in_pad)
    x = matmul(x, P("l1_1_w0")) + P("l1_1_b0")
    for i in range(1, num_blocks + 1):
        x = matmul(x, P(f"l1_1_w{i}")) + P(f"l1_1_b{i}")
        x = col_norm_bn_relu(x, N, "cn")
    x1_1 = x                                                       # (B*N, C)

    # ---- shared InstanceNorm+BN+ReLU used by BOTH diff_pool and diff_unpool -
    h = col_norm_bn_relu(x1_1, N, "in")                            # (B*N, C)

    # ---- down1: diff_pool (softmax over N, per batch) ------------------------
    down_w, down_b = P("down_w"), P("down_b")                      # (M, C), (M, 1)
    x2_parts = []
    for bi in range(B):
        hb = h[bi * N:(bi + 1) * N]                                # (N, C), 8-aligned view
        e = dot_t(down_w, hb) + down_b                             # (M, N), no transpose
        s = softmax_lanes(e)                                       # softmax over N
        x2_parts.append(matmul(s, x1_1[bi * N:(bi + 1) * N]))      # (M, C)
    x2 = jnp.concatenate(x2_parts, axis=0)                         # (B*M, C)

    # ---- l2: num_blocks x OAFilter (transpose-free formulation) --------------
    for i in range(num_blocks):
        t = col_norm_bn_relu(x2, M, "in")
        t = matmul(t, P(f"oaf{i}_w1")) + P(f"oaf{i}_b1")           # (B*M, C)
        h2 = row_bn_relu(t, M)                                     # BN over points
        w2, b2 = P(f"oaf{i}_w2"), P(f"oaf{i}_b2")                  # (M, M), (M, 1)
        t2 = jnp.concatenate(
            [matmul(w2, h2[bi * M:(bi + 1) * M]) + b2 for bi in range(B)], axis=0)
        t = t + t2
        out = col_norm_bn_relu(t, M, "in")
        out = matmul(out, P(f"oaf{i}_w3")) + P(f"oaf{i}_b3")
        x2 = out + x2

    # ---- up1: diff_unpool (softmax over M; embedding fully batch-stacked) ----
    e = dot_t(h, P("up_w")) + P("up_b")                            # (B*N, M)
    s = softmax_lanes(e)                                           # softmax over M
    x_up = jnp.concatenate(
        [matmul(s[bi * N:(bi + 1) * N], x2[bi * M:(bi + 1) * M]) for bi in range(B)],
        axis=0)                                                    # (B*N, C)

    # ---- l1_2: Conv(2C->C) via split weight, then (num_blocks-1) norm blocks -
    off, _, c0 = offs["l1_2_w0"]                                   # (2C, C)
    w0_a = p_ref[off:off + C, 0:c0]
    w0_b = p_ref[off + C:off + 2 * C, 0:c0]
    y = matmul(x1_1, w0_a) + matmul(x_up, w0_b) + P("l1_2_b0")
    for i in range(1, num_blocks):
        y = matmul(y, P(f"l1_2_w{i}")) + P(f"l1_2_b{i}")
        y = col_norm_bn_relu(y, N, "cn")

    # Lane-dense slab store; (B, C, N) layout fix-up happens in the wrapper.
    o_ref[...] = y.astype(o_ref.dtype)


# ----------------------------------------------------------------------------
# Wrapper: packs parameters into one slab and issues ONE grid-less pallas_call
# ----------------------------------------------------------------------------
def oanet_forward(params, corr_pos):
    """corr_pos: [B, N, in_dim] -> [B, C, N] (same contract as OANet.forward)."""
    B, N, in_dim = corr_pos.shape
    assert N > 1, "ContextNormalization uses unbiased variance; needs N > 1"
    M = params["down_w"].shape[0]
    num_blocks = len(params["oaf"])
    in_pad = _round8(in_dim)

    slab, offs, C = _pack_params(params, in_pad)

    x = corr_pos.reshape(B * N, in_dim).astype(jnp.float32)
    if in_pad != in_dim:
        x = jnp.pad(x, ((0, 0), (0, in_pad - in_dim)))             # zero-pad K

    kernel = functools.partial(_oanet_fused_kernel, B=B, N=N, M=M, C=C,
                               num_blocks=num_blocks, offs=offs)
    out = pl.pallas_call(
        kernel,
        out_shape=jax.ShapeDtypeStruct((B * N, C), jnp.float32),
        # Grid-less call: 3 DMAs total (x, param slab, output); everything
        # stays resident in VMEM (« 1 MiB, fine on v5e/v6e/v7x).
        compiler_params=pltpu.CompilerParams(vmem_limit_bytes=32 * 1024 * 1024),
    )(x, slab)

    # Final layout fix-up (cheap XLA transpose, keeps the kernel store lane-dense).
    return jnp.transpose(out.reshape(B, N, C), (0, 2, 1)).astype(corr_pos.dtype)


# ----------------------------------------------------------------------------
# Pure-JAX reference (same math, channel-last layout) for correctness checking
# ----------------------------------------------------------------------------
def _reference_forward(params, corr_pos):
    hp = jax.lax.Precision.HIGHEST
    C = params["l1_1_w"][0].shape[0]

    def conv(x, w, b):  # x (B, L, Cin), w (Cout, Cin)
        return jnp.einsum("blk,ck->blc", x, w, precision=hp) + b[None, None, :]

    def cn_bn_relu(x, mode):
        L = x.shape[1]
        mean = jnp.mean(x, axis=1, keepdims=True)
        d = x - mean
        denom = float(L - 1 if mode == "cn" else L)
        var = jnp.sum(d * d, axis=1, keepdims=True) / denom
        x = d * jax.lax.rsqrt(var + 1e-3)
        bmean = jnp.mean(x, axis=(0, 1), keepdims=True)
        d = x - bmean
        bvar = jnp.mean(d * d, axis=(0, 1), keepdims=True)
        return jnp.maximum(d * jax.lax.rsqrt(bvar + 1e-5), 0.0)

    x = corr_pos.astype(jnp.float32)
    x = conv(x, params["l1_1_w"][0], params["l1_1_b"][0])
    for w, b in zip(params["l1_1_w"][1:], params["l1_1_b"][1:]):
        x = cn_bn_relu(conv(x, w, b), "cn")
    x1_1 = x                                                        # (B, N, C)

    h = cn_bn_relu(x1_1, "in")
    e = jnp.einsum("bnc,mc->bnm", h, params["down_w"], precision=hp) \
        + params["down_b"][None, None, :]
    s = jax.nn.softmax(e, axis=1)                                   # over N
    x2 = jnp.einsum("bnm,bnc->bmc", s, x1_1, precision=hp)          # (B, M, C)

    for f in params["oaf"]:
        t = conv(cn_bn_relu(x2, "in"), f["w1"], f["b1"])            # (B, M, C)
        mean = jnp.mean(t, axis=(0, 2), keepdims=True)
        d = t - mean
        var = jnp.mean(d * d, axis=(0, 2), keepdims=True)
        h2 = jnp.maximum(d * jax.lax.rsqrt(var + 1e-5), 0.0)
        t2 = jnp.einsum("pm,bmc->bpc", f["w2"], h2, precision=hp) + f["b2"][None, :, None]
        t = t + t2
        out = conv(cn_bn_relu(t, "in"), f["w3"], f["b3"])
        x2 = out + x2

    e = jnp.einsum("bnc,mc->bnm", h, params["up_w"], precision=hp) \
        + params["up_b"][None, None, :]
    s = jax.nn.softmax(e, axis=2)                                   # over M
    x_up = jnp.einsum("bnm,bmc->bnc", s, x2, precision=hp)          # (B, N, C)

    w0, b0 = params["l1_2_w"][0], params["l1_2_b"][0]               # (C, 2C)
    y = (jnp.einsum("bnc,kc->bnk", x1_1, w0[:, :C], precision=hp)
         + jnp.einsum("bnc,kc->bnk", x_up, w0[:, C:], precision=hp)
         + b0[None, None, :])
    for w, b in zip(params["l1_2_w"][1:], params["l1_2_b"][1:]):
        y = cn_bn_relu(conv(y, w, b), "cn")
    return jnp.transpose(y, (0, 2, 1))                              # (B, C, N)


# ----------------------------------------------------------------------------
# Deterministic parameter init (shapes from OANet.__init__)
# ----------------------------------------------------------------------------
def _uinit(key, shape, fan_in):
    bound = 1.0 / (fan_in ** 0.5)
    return jax.random.uniform(key, shape, jnp.float32, -bound, bound)


def init_params(key, in_dim, C, M, num_layers):
    half = num_layers // 2
    keys = iter(jax.random.split(key, 64))

    def conv(cout, cin):
        return _uinit(next(keys), (cout, cin), cin), _uinit(next(keys), (cout,), cin)

    l1_1_w, l1_1_b = [], []
    w, b = conv(C, in_dim); l1_1_w.append(w); l1_1_b.append(b)
    for _ in range(half):
        w, b = conv(C, C); l1_1_w.append(w); l1_1_b.append(b)

    down_w, down_b = conv(M, C)
    up_w, up_b = conv(M, C)

    oaf = []
    for _ in range(half):
        w1, b1 = conv(C, C)
        w2, b2 = conv(M, M)
        w3, b3 = conv(C, C)
        oaf.append(dict(w1=w1, b1=b1, w2=w2, b2=b2, w3=w3, b3=b3))

    l1_2_w, l1_2_b = [], []
    w, b = conv(C, 2 * C); l1_2_w.append(w); l1_2_b.append(b)
    for _ in range(half - 1):
        w, b = conv(C, C); l1_2_w.append(w); l1_2_b.append(b)

    return dict(l1_1_w=l1_1_w, l1_1_b=l1_1_b,
                down_w=down_w, down_b=down_b,
                up_w=up_w, up_b=up_b,
                oaf=oaf,
                l1_2_w=l1_2_w, l1_2_b=l1_2_b)


if __name__ == "__main__":
    B, N, IN_DIM = 2, 64, 6
    C, M, NUM_LAYERS = 32, 8, 6

    key = jax.random.PRNGKey(0)
    k_param, k_data = jax.random.split(key)
    params = init_params(k_param, IN_DIM, C, M, NUM_LAYERS)
    corr_pos = jax.random.normal(k_data, (B, N, IN_DIM), dtype=jnp.float32)

    fwd = jax.jit(oanet_forward)
    out = jax.block_until_ready(fwd(params, corr_pos))

    assert out.shape == (B, C, N), out.shape
    assert bool(jnp.all(jnp.isfinite(out)))

    # Pure-JAX reference check (loose tolerance: approx-reciprocal softmax +
    # MXU f32 accumulation-order differences).
    ref = jax.block_until_ready(jax.jit(_reference_forward)(params, corr_pos))
    err = float(jnp.max(jnp.abs(out - ref)))
    assert err < 5e-2, f"kernel vs pure-JAX reference mismatch: max abs err = {err}"

    print("KERNEL_OK")
</pallas_src>

<mosaic_0001>
module attributes {stable_mosaic.version = 11 : i64} {
  func.func @_oanet_fused_kernel(%arg0: memref<128x8xf32, #tpu.memory_space<vmem>>, %arg1: memref<608x128xf32, #tpu.memory_space<vmem>>, %arg2: memref<128x32xf32, #tpu.memory_space<vmem>>) attributes {dimension_semantics = [], scalar_prefetch = 0 : i64, scratch_operands = 0 : i64, tpu.core_type = #tpu.core_type<tc>} {
    %c0 = arith.constant 0 : index
    %c0_0 = arith.constant 0 : index
    %0 = vector.load %arg0[%c0, %c0_0] : memref<128x8xf32, #tpu.memory_space<vmem>>, vector<128x8xf32>
    %c0_1 = arith.constant 0 : index
    %c0_2 = arith.constant 0 : index
    %1 = vector.load %arg1[%c0_1, %c0_2] : memref<608x128xf32, #tpu.memory_space<vmem>>, vector<8x32xf32>
    %cst = arith.constant dense<0.000000e+00> : vector<128x32xf32>
    %2 = tpu.matmul %0, %1, %cst {dimension_numbers = #tpu.dot_dimension_numbers<[1], [0], [0], [1], [0, 0, 1, 1], [], []>} : vector<128x8xf32>, vector<8x32xf32>, vector<128x32xf32> -> vector<128x32xf32>
    %c8 = arith.constant 8 : index
    %c0_3 = arith.constant 0 : index
    %3 = vector.load %arg1[%c8, %c0_3] : memref<608x128xf32, #tpu.memory_space<vmem>>, vector<1x32xf32>
    %4 = vector.broadcast %3 : vector<1x32xf32> to vector<128x32xf32>
    %5 = arith.addf %2, %4 : vector<128x32xf32>
    %c16 = arith.constant 16 : index
    %c0_4 = arith.constant 0 : index
    %6 = vector.load %arg1[%c16, %c0_4] : memref<608x128xf32, #tpu.memory_space<vmem>>, vector<32x32xf32>
    %cst_5 = arith.constant dense<0.000000e+00> : vector<128x32xf32>
    %7 = tpu.matmul %5, %6, %cst_5 {dimension_numbers = #tpu.dot_dimension_numbers<[1], [0], [0], [1], [0, 0, 1, 1], [], []>} : vector<128x32xf32>, vector<32x32xf32>, vector<128x32xf32> -> vector<128x32xf32>
    %c48 = arith.constant 48 : index
    %c0_6 = arith.constant 0 : index
    %8 = vector.load %arg1[%c48, %c0_6] : memref<608x128xf32, #tpu.memory_space<vmem>>, vector<1x32xf32>
    %9 = vector.broadcast %8 : vector<1x32xf32> to vector<128x32xf32>
    %10 = arith.addf %7, %9 : vector<128x32xf32>
    %11 = vector.shape_cast %10 : vector<128x32xf32> to vector<2x64x32xf32>
    %cst_7 = arith.constant dense<0.000000e+00> : vector<2x32xf32>
    %12 = vector.multi_reduction <add>, %11, %cst_7 [1] : vector<2x64x32xf32> to vector<2x32xf32>
    %13 = vector.shape_cast %12 : vector<2x32xf32> to vector<2x1x32xf32>
    %cst_8 = arith.constant 6.400000e+01 : f32
    %14 = vector.broadcast %cst_8 : f32 to vector<2x1x32xf32>
    %15 = arith.divf %13, %14 : vector<2x1x32xf32>
    %16 = vector.broadcast %15 : vector<2x1x32xf32> to vector<2x64x32xf32>
    %17 = arith.subf %11, %16 : vector<2x64x32xf32>
    %18 = arith.mulf %17, %17 : vector<2x64x32xf32>
    %cst_9 = arith.constant dense<0.000000e+00> : vector<2x32xf32>
    %19 = vector.multi_reduction <add>, %18, %cst_9 [1] : vector<2x64x32xf32> to vector<2x32xf32>
    %20 = vector.shape_cast %19 : vector<2x32xf32> to vector<2x1x32xf32>
    %cst_10 = arith.constant 6.300000e+01 : f32
    %21 = vector.broadcast %cst_10 : f32 to vector<2x1x32xf32>
    %22 = arith.divf %20, %21 : vector<2x1x32xf32>
    %cst_11 = arith.constant 1.000000e-03 : f32
    %23 = vector.broadcast %cst_11 : f32 to vector<2x1x32xf32>
    %24 = arith.addf %22, %23 : vector<2x1x32xf32>
    %25 = math.rsqrt %24 : vector<2x1x32xf32>
    %26 = vector.broadcast %25 : vector<2x1x32xf32> to vector<2x64x32xf32>
    %27 = arith.mulf %17, %26 : vector<2x64x32xf32>
    %28 = vector.shape_cast %27 : vector<2x64x32xf32> to vector<128x32xf32>
    %cst_12 = arith.constant dense<0.000000e+00> : vector<32xf32>
    %29 = vector.multi_reduction <add>, %28, %cst_12 [0] : vector<128x32xf32> to vector<32xf32>
    %30 = vector.shape_cast %29 : vector<32xf32> to vector<1x32xf32>
    %cst_13 = arith.constant 1.280000e+02 : f32
    %31 = vector.broadcast %cst_13 : f32 to vector<1x32xf32>
    %32 = arith.divf %30, %31 : vector<1x32xf32>
    %33 = vector.broadcast %32 : vector<1x32xf32> to vector<128x32xf32>
    %34 = arith.subf %28, %33 : vector<128x32xf32>
    %35 = arith.mulf %34, %34 : vector<128x32xf32>
    %cst_14 = arith.constant dense<0.000000e+00> : vector<32xf32>
    %36 = vector.multi_reduction <add>, %35, %cst_14 [0] : vector<128x32xf32> to vector<32xf32>
    %37 = vector.shape_cast %36 : vector<32xf32> to vector<1x32xf32>
    %cst_15 = arith.constant 1.280000e+02 : f32
    %38 = vector.broadcast %cst_15 : f32 to vector<1x32xf32>
    %39 = arith.divf %37, %38 : vector<1x32xf32>
    %cst_16 = arith.constant 9.99999974E-6 : f32
    %40 = vector.broadcast %cst_16 : f32 to vector<1x32xf32>
    %41 = arith.addf %39, %40 : vector<1x32xf32>
    %42 = math.rsqrt %41 : vector<1x32xf32>
    %43 = vector.broadcast %42 : vector<1x32xf32> to vector<128x32xf32>
    %44 = arith.mulf %34, %43 : vector<128x32xf32>
    %cst_17 = arith.constant 0.000000e+00 : f32
    %45 = vector.broadcast %cst_17 : f32 to vector<128x32xf32>
    %46 = arith.maximumf %44, %45 : vector<128x32xf32>
    %c56 = arith.constant 56 : index
    %c0_18 = arith.constant 0 : index
    %47 = vector.load %arg1[%c56, %c0_18] : memref<608x128xf32, #tpu.memory_space<vmem>>, vector<32x32xf32>
    %cst_19 = arith.constant dense<0.000000e+00> : vector<128x32xf32>
    %48 = tpu.matmul %46, %47, %cst_19 {dimension_numbers = #tpu.dot_dimension_numbers<[1], [0], [0], [1], [0, 0, 1, 1], [], []>} : vector<128x32xf32>, vector<32x32xf32>, vector<128x32xf32> -> vector<128x32xf32>
    %c88 = arith.constant 88 : index
    %c0_20 = arith.constant 0 : index
    %49 = vector.load %arg1[%c88, %c0_20] : memref<608x128xf32, #tpu.memory_space<vmem>>, vector<1x32xf32>
    %50 = vector.broadcast %49 : vector<1x32xf32> to vector<128x32xf32>
    %51 = arith.addf %48, %50 : vector<128x32xf32>
    %52 = vector.shape_cast %51 : vector<128x32xf32> to vector<2x64x32xf32>
    %cst_21 = arith.constant dense<0.000000e+00> : vector<2x32xf32>
    %53 = vector.multi_reduction <add>, %52, %cst_21 [1] : vector<2x64x32xf32> to vector<2x32xf32>
    %54 = vector.shape_cast %53 : vector<2x32xf32> to vector<2x1x32xf32>
    %cst_22 = arith.constant 6.400000e+01 : f32
    %55 = vector.broadcast %cst_22 : f32 to vector<2x1x32xf32>
    %56 = arith.divf %54, %55 : vector<2x1x32xf32>
    %57 = vector.broadcast %56 : vector<2x1x32xf32> to vector<2x64x32xf32>
    %58 = arith.subf %52, %57 : vector<2x64x32xf32>
    %59 = arith.mulf %58, %58 : vector<2x64x32xf32>
    %cst_23 = arith.constant dense<0.000000e+00> : vector<2x32xf32>
    %60 = vector.multi_reduction <add>, %59, %cst_23 [1] : vector<2x64x32xf32> to vector<2x32xf32>
    %61 = vector.shape_cast %60 : vector<2x32xf32> to vector<2x1x32xf32>
    %cst_24 = arith.constant 6.300000e+01 : f32
    %62 = vector.broadcast %cst_24 : f32 to vector<2x1x32xf32>
    %63 = arith.divf %61, %62 : vector<2x1x32xf32>
    %cst_25 = arith.constant 1.000000e-03 : f32
    %64 = vector.broadcast %cst_25 : f32 to vector<2x1x32xf32>
    %65 = arith.addf %63, %64 : vector<2x1x32xf32>
    %66 = math.rsqrt %65 : vector<2x1x32xf32>
    %67 = vector.broadcast %66 : vector<2x1x32xf32> to vector<2x64x32xf32>
    %68 = arith.mulf %58, %67 : vector<2x64x32xf32>
    %69 = vector.shape_cast %68 : vector<2x64x32xf32> to vector<128x32xf32>
    %cst_26 = arith.constant dense<0.000000e+00> : vector<32xf32>
    %70 = vector.multi_reduction <add>, %69, %cst_26 [0] : vector<128x32xf32> to vector<32xf32>
    %71 = vector.shape_cast %70 : vector<32xf32> to vector<1x32xf32>
    %cst_27 = arith.constant 1.280000e+02 : f32
    %72 = vector.broadcast %cst_27 : f32 to vector<1x32xf32>
    %73 = arith.divf %71, %72 : vector<1x32xf32>
    %74 = vector.broadcast %73 : vector<1x32xf32> to vector<128x32xf32>
    %75 = arith.subf %69, %74 : vector<128x32xf32>
    %76 = arith.mulf %75, %75 : vector<128x32xf32>
    %cst_28 = arith.constant dense<0.000000e+00> : vector<32xf32>
    %77 = vector.multi_reduction <add>, %76, %cst_28 [0] : vector<128x32xf32> to vector<32xf32>
    %78 = vector.shape_cast %77 : vector<32xf32> to vector<1x32xf32>
    %cst_29 = arith.constant 1.280000e+02 : f32
    %79 = vector.broadcast %cst_29 : f32 to vector<1x32xf32>
    %80 = arith.divf %78, %79 : vector<1x32xf32>
    %cst_30 = arith.constant 9.99999974E-6 : f32
    %81 = vector.broadcast %cst_30 : f32 to vector<1x32xf32>
    %82 = arith.addf %80, %81 : vector<1x32xf32>
    %83 = math.rsqrt %82 : vector<1x32xf32>
    %84 = vector.broadcast %83 : vector<1x32xf32> to vector<128x32xf32>
    %85 = arith.mulf %75, %84 : vector<128x32xf32>
    %cst_31 = arith.constant 0.000000e+00 : f32
    %86 = vector.broadcast %cst_31 : f32 to vector<128x32xf32>
    %87 = arith.maximumf %85, %86 : vector<128x32xf32>
    %c96 = arith.constant 96 : index
    %c0_32 = arith.constant 0 : index
    %88 = vector.load %arg1[%c96, %c0_32] : memref<608x128xf32, #tpu.memory_space<vmem>>, vector<32x32xf32>
    %cst_33 = arith.constant dense<0.000000e+00> : vector<128x32xf32>
    %89 = tpu.matmul %87, %88, %cst_33 {dimension_numbers = #tpu.dot_dimension_numbers<[1], [0], [0], [1], [0, 0, 1, 1], [], []>} : vector<128x32xf32>, vector<32x32xf32>, vector<128x32xf32> -> vector<128x32xf32>
    %c128 = arith.constant 128 : index
    %c0_34 = arith.constant 0 : index
    %90 = vector.load %arg1[%c128, %c0_34] : memref<608x128xf32, #tpu.memory_space<vmem>>, vector<1x32xf32>
    %91 = vector.broadcast %90 : vector<1x32xf32> to vector<128x32xf32>
    %92 = arith.addf %89, %91 : vector<128x32xf32>
    %93 = vector.shape_cast %92 : vector<128x32xf32> to vector<2x64x32xf32>
    %cst_35 = arith.constant dense<0.000000e+00> : vector<2x32xf32>
    %94 = vector.multi_reduction <add>, %93, %cst_35 [1] : vector<2x64x32xf32> to vector<2x32xf32>
    %95 = vector.shape_cast %94 : vector<2x32xf32> to vector<2x1x32xf32>
    %cst_36 = arith.constant 6.400000e+01 : f32
    %96 = vector.broadcast %cst_36 : f32 to vector<2x1x32xf32>
    %97 = arith.divf %95, %96 : vector<2x1x32xf32>
    %98 = vector.broadcast %97 : vector<2x1x32xf32> to vector<2x64x32xf32>
    %99 = arith.subf %93, %98 : vector<2x64x32xf32>
    %100 = arith.mulf %99, %99 : vector<2x64x32xf32>
    %cst_37 = arith.constant dense<0.000000e+00> : vector<2x32xf32>
    %101 = vector.multi_reduction <add>, %100, %cst_37 [1] : vector<2x64x32xf32> to vector<2x32xf32>
    %102 = vector.shape_cast %101 : vector<2x32xf32> to vector<2x1x32xf32>
    %cst_38 = arith.constant 6.300000e+01 : f32
    %103 = vector.broadcast %cst_38 : f32 to vector<2x1x32xf32>
    %104 = arith.divf %102, %103 : vector<2x1x32xf32>
    %cst_39 = arith.constant 1.000000e-03 : f32
    %105 = vector.broadcast %cst_39 : f32 to vector<2x1x32xf32>
    %106 = arith.addf %104, %105 : vector<2x1x32xf32>
    %107 = math.rsqrt %106 : vector<2x1x32xf32>
    %108 = vector.broadcast %107 : vector<2x1x32xf32> to vector<2x64x32xf32>
    %109 = arith.mulf %99, %108 : vector<2x64x32xf32>
    %110 = vector.shape_cast %109 : vector<2x64x32xf32> to vector<128x32xf32>
    %cst_40 = arith.constant dense<0.000000e+00> : vector<32xf32>
    %111 = vector.multi_reduction <add>, %110, %cst_40 [0] : vector<128x32xf32> to vector<32xf32>
    %112 = vector.shape_cast %111 : vector<32xf32> to vector<1x32xf32>
    %cst_41 = arith.constant 1.280000e+02 : f32
    %113 = vector.broadcast %cst_41 : f32 to vector<1x32xf32>
    %114 = arith.divf %112, %113 : vector<1x32xf32>
    %115 = vector.broadcast %114 : vector<1x32xf32> to vector<128x32xf32>
    %116 = arith.subf %110, %115 : vector<128x32xf32>
    %117 = arith.mulf %116, %116 : vector<128x32xf32>
    %cst_42 = arith.constant dense<0.000000e+00> : vector<32xf32>
    %118 = vector.multi_reduction <add>, %117, %cst_42 [0] : vector<128x32xf32> to vector<32xf32>
    %119 = vector.shape_cast %118 : vector<32xf32> to vector<1x32xf32>
    %cst_43 = arith.constant 1.280000e+02 : f32
    %120 = vector.broadcast %cst_43 : f32 to vector<1x32xf32>
    %121 = arith.divf %119, %120 : vector<1x32xf32>
    %cst_44 = arith.constant 9.99999974E-6 : f32
    %122 = vector.broadcast %cst_44 : f32 to vector<1x32xf32>
    %123 = arith.addf %121, %122 : vector<1x32xf32>
    %124 = math.rsqrt %123 : vector<1x32xf32>
    %125 = vector.broadcast %124 : vector<1x32xf32> to vector<128x32xf32>
    %126 = arith.mulf %116, %125 : vector<128x32xf32>
    %cst_45 = arith.constant 0.000000e+00 : f32
    %127 = vector.broadcast %cst_45 : f32 to vector<128x32xf32>
    %128 = arith.maximumf %126, %127 : vector<128x32xf32>
    %129 = vector.shape_cast %128 : vector<128x32xf32> to vector<2x64x32xf32>
    %cst_46 = arith.constant dense<0.000000e+00> : vector<2x32xf32>
    %130 = vector.multi_reduction <add>, %129, %cst_46 [1] : vector<2x64x32xf32> to vector<2x32xf32>
    %131 = vector.shape_cast %130 : vector<2x32xf32> to vector<2x1x32xf32>
    %cst_47 = arith.constant 6.400000e+01 : f32
    %132 = vector.broadcast %cst_47 : f32 to vector<2x1x32xf32>
    %133 = arith.divf %131, %132 : vector<2x1x32xf32>
    %134 = vector.broadcast %133 : vector<2x1x32xf32> to vector<2x64x32xf32>
    %135 = arith.subf %129, %134 : vector<2x64x32xf32>
    %136 = arith.mulf %135, %135 : vector<2x64x32xf32>
    %cst_48 = arith.constant dense<0.000000e+00> : vector<2x32xf32>
    %137 = vector.multi_reduction <add>, %136, %cst_48 [1] : vector<2x64x32xf32> to vector<2x32xf32>
    %138 = vector.shape_cast %137 : vector<2x32xf32> to vector<2x1x32xf32>
    %cst_49 = arith.constant 6.400000e+01 : f32
    %139 = vector.broadcast %cst_49 : f32 to vector<2x1x32xf32>
    %140 = arith.divf %138, %139 : vector<2x1x32xf32>
    %cst_50 = arith.constant 1.000000e-03 : f32
    %141 = vector.broadcast %cst_50 : f32 to vector<2x1x32xf32>
    %142 = arith.addf %140, %141 : vector<2x1x32xf32>
    %143 = math.rsqrt %142 : vector<2x1x32xf32>
    %144 = vector.broadcast %143 : vector<2x1x32xf32> to vector<2x64x32xf32>
    %145 = arith.mulf %135, %144 : vector<2x64x32xf32>
    %146 = vector.shape_cast %145 : vector<2x64x32xf32> to vector<128x32xf32>
    %cst_51 = arith.constant dense<0.000000e+00> : vector<32xf32>
    %147 = vector.multi_reduction <add>, %146, %cst_51 [0] : vector<128x32xf32> to vector<32xf32>
    %148 = vector.shape_cast %147 : vector<32xf32> to vector<1x32xf32>
    %cst_52 = arith.constant 1.280000e+02 : f32
    %149 = vector.broadcast %cst_52 : f32 to vector<1x32xf32>
    %150 = arith.divf %148, %149 : vector<1x32xf32>
    %151 = vector.broadcast %150 : vector<1x32xf32> to vector<128x32xf32>
    %152 = arith.subf %146, %151 : vector<128x32xf32>
    %153 = arith.mulf %152, %152 : vector<128x32xf32>
    %cst_53 = arith.constant dense<0.000000e+00> : vector<32xf32>
    %154 = vector.multi_reduction <add>, %153, %cst_53 [0] : vector<128x32xf32> to vector<32xf32>
    %155 = vector.shape_cast %154 : vector<32xf32> to vector<1x32xf32>
    %cst_54 = arith.constant 1.280000e+02 : f32
    %156 = vector.broadcast %cst_54 : f32 to vector<1x32xf32>
    %157 = arith.divf %155, %156 : vector<1x32xf32>
    %cst_55 = arith.constant 9.99999974E-6 : f32
    %158 = vector.broadcast %cst_55 : f32 to vector<1x32xf32>
    %159 = arith.addf %157, %158 : vector<1x32xf32>
    %160 = math.rsqrt %159 : vector<1x32xf32>
    %161 = vector.broadcast %160 : vector<1x32xf32> to vector<128x32xf32>
    %162 = arith.mulf %152, %161 : vector<128x32xf32>
    %cst_56 = arith.constant 0.000000e+00 : f32
    %163 = vector.broadcast %cst_56 : f32 to vector<128x32xf32>
    %164 = arith.maximumf %162, %163 : vector<128x32xf32>
    %c136 = arith.constant 136 : index
    %c0_57 = arith.constant 0 : index
    %165 = vector.load %arg1[%c136, %c0_57] : memref<608x128xf32, #tpu.memory_space<vmem>>, vector<8x32xf32>
    %c144 = arith.constant 144 : index
    %c0_58 = arith.constant 0 : index
    %166 = vector.load %arg1[%c144, %c0_58] : memref<608x128xf32, #tpu.memory_space<vmem>>, vector<8x1xf32>
    %167 = vector.extract_strided_slice %164 {offsets = [0, 0], sizes = [64, 32], strides = [1, 1]} : vector<128x32xf32> to vector<64x32xf32>
    %cst_59 = arith.constant dense<0.000000e+00> : vector<8x64xf32>
    %168 = tpu.matmul %165, %167, %cst_59 {dimension_numbers = #tpu.dot_dimension_numbers<[1], [1], [0], [0], [0, 0, 1, 0], [], []>} : vector<8x32xf32>, vector<64x32xf32>, vector<8x64xf32> -> vector<8x64xf32>
    %169 = vector.broadcast %166 : vector<8x1xf32> to vector<8x64xf32>
    %170 = arith.addf %168, %169 : vector<8x64xf32>
    %cst_60 = arith.constant dense<0xFF800000> : vector<8xf32>
    %171 = vector.multi_reduction <maximumf>, %170, %cst_60 [1] : vector<8x64xf32> to vector<8xf32>
    %172 = vector.shape_cast %171 : vector<8xf32> to vector<8x1xf32>
    %173 = vector.broadcast %172 : vector<8x1xf32> to vector<8x64xf32>
    %174 = arith.subf %170, %173 : vector<8x64xf32>
    %175 = math.exp %174 : vector<8x64xf32>
    %cst_61 = arith.constant dense<0.000000e+00> : vector<8xf32>
    %176 = vector.multi_reduction <add>, %175, %cst_61 [1] : vector<8x64xf32> to vector<8xf32>
    %177 = vector.shape_cast %176 : vector<8xf32> to vector<8x1xf32>
    %178 = tpu.reciprocal %177 {approx = true} : vector<8x1xf32> -> vector<8x1xf32>
    %179 = vector.broadcast %178 : vector<8x1xf32> to vector<8x64xf32>
    %180 = arith.mulf %175, %179 : vector<8x64xf32>
    %181 = vector.extract_strided_slice %128 {offsets = [0, 0], sizes = [64, 32], strides = [1, 1]} : vector<128x32xf32> to vector<64x32xf32>
    %cst_62 = arith.constant dense<0.000000e+00> : vector<8x32xf32>
    %182 = tpu.matmul %180, %181, %cst_62 {dimension_numbers = #tpu.dot_dimension_numbers<[1], [0], [0], [1], [0, 0, 1, 1], [], []>} : vector<8x64xf32>, vector<64x32xf32>, vector<8x32xf32> -> vector<8x32xf32>
    %183 = vector.extract_strided_slice %164 {offsets = [64, 0], sizes = [64, 32], strides = [1, 1]} : vector<128x32xf32> to vector<64x32xf32>
    %cst_63 = arith.constant dense<0.000000e+00> : vector<8x64xf32>
    %184 = tpu.matmul %165, %183, %cst_63 {dimension_numbers = #tpu.dot_dimension_numbers<[1], [1], [0], [0], [0, 0, 1, 0], [], []>} : vector<8x32xf32>, vector<64x32xf32>, vector<8x64xf32> -> vector<8x64xf32>
    %185 = vector.broadcast %166 : vector<8x1xf32> to vector<8x64xf32>
    %186 = arith.addf %184, %185 : vector<8x64xf32>
    %cst_64 = arith.constant dense<0xFF800000> : vector<8xf32>
    %187 = vector.multi_reduction <maximumf>, %186, %cst_64 [1] : vector<8x64xf32> to vector<8xf32>
    %188 = vector.shape_cast %187 : vector<8xf32> to vector<8x1xf32>
    %189 = vector.broadcast %188 : vector<8x1xf32> to vector<8x64xf32>
    %190 = arith.subf %186, %189 : vector<8x64xf32>
    %191 = math.exp %190 : vector<8x64xf32>
    %cst_65 = arith.constant dense<0.000000e+00> : vector<8xf32>
    %192 = vector.multi_reduction <add>, %191, %cst_65 [1] : vector<8x64xf32> to vector<8xf32>
    %193 = vector.shape_cast %192 : vector<8xf32> to vector<8x1xf32>
    %194 = tpu.reciprocal %193 {approx = true} : vector<8x1xf32> -> vector<8x1xf32>
    %195 = vector.broadcast %194 : vector<8x1xf32> to vector<8x64xf32>
    %196 = arith.mulf %191, %195 : vector<8x64xf32>
    %197 = vector.extract_strided_slice %128 {offsets = [64, 0], sizes = [64, 32], strides = [1, 1]} : vector<128x32xf32> to vector<64x32xf32>
    %cst_66 = arith.constant dense<0.000000e+00> : vector<8x32xf32>
    %198 = tpu.matmul %196, %197, %cst_66 {dimension_numbers = #tpu.dot_dimension_numbers<[1], [0], [0], [1], [0, 0, 1, 1], [], []>} : vector<8x64xf32>, vector<64x32xf32>, vector<8x32xf32> -> vector<8x32xf32>
    %199 = tpu.concatenate %182, %198 in 0 : vector<8x32xf32>, vector<8x32xf32> -> vector<16x32xf32>
    %200 = vector.shape_cast %199 : vector<16x32xf32> to vector<2x8x32xf32>
    %cst_67 = arith.constant dense<0.000000e+00> : vector<2x32xf32>
    %201 = vector.multi_reduction <add>, %200, %cst_67 [1] : vector<2x8x32xf32> to vector<2x32xf32>
    %202 = vector.shape_cast %201 : vector<2x32xf32> to vector<2x1x32xf32>
    %cst_68 = arith.constant 8.000000e+00 : f32
    %203 = vector.broadcast %cst_68 : f32 to vector<2x1x32xf32>
    %204 = arith.divf %202, %203 : vector<2x1x32xf32>
    %205 = vector.broadcast %204 : vector<2x1x32xf32> to vector<2x8x32xf32>
    %206 = arith.subf %200, %205 : vector<2x8x32xf32>
    %207 = arith.mulf %206, %206 : vector<2x8x32xf32>
    %cst_69 = arith.constant dense<0.000000e+00> : vector<2x32xf32>
    %208 = vector.multi_reduction <add>, %207, %cst_69 [1] : vector<2x8x32xf32> to vector<2x32xf32>
    %209 = vector.shape_cast %208 : vector<2x32xf32> to vector<2x1x32xf32>
    %cst_70 = arith.constant 8.000000e+00 : f32
    %210 = vector.broadcast %cst_70 : f32 to vector<2x1x32xf32>
    %211 = arith.divf %209, %210 : vector<2x1x32xf32>
    %cst_71 = arith.constant 1.000000e-03 : f32
    %212 = vector.broadcast %cst_71 : f32 to vector<2x1x32xf32>
    %213 = arith.addf %211, %212 : vector<2x1x32xf32>
    %214 = math.rsqrt %213 : vector<2x1x32xf32>
    %215 = vector.broadcast %214 : vector<2x1x32xf32> to vector<2x8x32xf32>
    %216 = arith.mulf %206, %215 : vector<2x8x32xf32>
    %217 = vector.shape_cast %216 : vector<2x8x32xf32> to vector<16x32xf32>
    %cst_72 = arith.constant dense<0.000000e+00> : vector<32xf32>
    %218 = vector.multi_reduction <add>, %217, %cst_72 [0] : vector<16x32xf32> to vector<32xf32>
    %219 = vector.shape_cast %218 : vector<32xf32> to vector<1x32xf32>
    %cst_73 = arith.constant 1.600000e+01 : f32
    %220 = vector.broadcast %cst_73 : f32 to vector<1x32xf32>
    %221 = arith.divf %219, %220 : vector<1x32xf32>
    %222 = vector.broadcast %221 : vector<1x32xf32> to vector<16x32xf32>
    %223 = arith.subf %217, %222 : vector<16x32xf32>
    %224 = arith.mulf %223, %223 : vector<16x32xf32>
    %cst_74 = arith.constant dense<0.000000e+00> : vector<32xf32>
    %225 = vector.multi_reduction <add>, %224, %cst_74 [0] : vector<16x32xf32> to vector<32xf32>
    %226 = vector.shape_cast %225 : vector<32xf32> to vector<1x32xf32>
    %cst_75 = arith.constant 1.600000e+01 : f32
    %227 = vector.broadcast %cst_75 : f32 to vector<1x32xf32>
    %228 = arith.divf %226, %227 : vector<1x32xf32>
    %cst_76 = arith.constant 9.99999974E-6 : f32
    %229 = vector.broadcast %cst_76 : f32 to vector<1x32xf32>
    %230 = arith.addf %228, %229 : vector<1x32xf32>
    %231 = math.rsqrt %230 : vector<1x32xf32>
    %232 = vector.broadcast %231 : vector<1x32xf32> to vector<16x32xf32>
    %233 = arith.mulf %223, %232 : vector<16x32xf32>
    %cst_77 = arith.constant 0.000000e+00 : f32
    %234 = vector.broadcast %cst_77 : f32 to vector<16x32xf32>
    %235 = arith.maximumf %233, %234 : vector<16x32xf32>
    %c168 = arith.constant 168 : index
    %c0_78 = arith.constant 0 : index
    %236 = vector.load %arg1[%c168, %c0_78] : memref<608x128xf32, #tpu.memory_space<vmem>>, vector<32x32xf32>
    %cst_79 = arith.constant dense<0.000000e+00> : vector<16x32xf32>
    %237 = tpu.matmul %235, %236, %cst_79 {dimension_numbers = #tpu.dot_dimension_numbers<[1], [0], [0], [1], [0, 0, 1, 1], [], []>} : vector<16x32xf32>, vector<32x32xf32>, vector<16x32xf32> -> vector<16x32xf32>
    %c200 = arith.constant 200 : index
    %c0_80 = arith.constant 0 : index
    %238 = vector.load %arg1[%c200, %c0_80] : memref<608x128xf32, #tpu.memory_space<vmem>>, vector<1x32xf32>
    %239 = vector.broadcast %238 : vector<1x32xf32> to vector<16x32xf32>
    %240 = arith.addf %237, %239 : vector<16x32xf32>
    %241 = vector.shape_cast %240 : vector<16x32xf32> to vector<2x8x32xf32>
    %cst_81 = arith.constant dense<0.000000e+00> : vector<2x8xf32>
    %242 = vector.multi_reduction <add>, %241, %cst_81 [2] : vector<2x8x32xf32> to vector<2x8xf32>
    %243 = vector.shape_cast %242 : vector<2x8xf32> to vector<2x8x1xf32>
    %cst_82 = arith.constant dense<0.000000e+00> : vector<8x1xf32>
    %244 = vector.multi_reduction <add>, %243, %cst_82 [0] : vector<2x8x1xf32> to vector<8x1xf32>
    %245 = vector.shape_cast %244 : vector<8x1xf32> to vector<1x8x1xf32>
    %cst_83 = arith.constant 6.400000e+01 : f32
    %246 = vector.broadcast %cst_83 : f32 to vector<1x8x1xf32>
    %247 = arith.divf %245, %246 : vector<1x8x1xf32>
    %248 = vector.broadcast %247 : vector<1x8x1xf32> to vector<2x8x32xf32>
    %249 = arith.subf %241, %248 : vector<2x8x32xf32>
    %250 = arith.mulf %249, %249 : vector<2x8x32xf32>
    %cst_84 = arith.constant dense<0.000000e+00> : vector<2x8xf32>
    %251 = vector.multi_reduction <add>, %250, %cst_84 [2] : vector<2x8x32xf32> to vector<2x8xf32>
    %252 = vector.shape_cast %251 : vector<2x8xf32> to vector<2x8x1xf32>
    %cst_85 = arith.constant dense<0.000000e+00> : vector<8x1xf32>
    %253 = vector.multi_reduction <add>, %252, %cst_85 [0] : vector<2x8x1xf32> to vector<8x1xf32>
    %254 = vector.shape_cast %253 : vector<8x1xf32> to vector<1x8x1xf32>
    %cst_86 = arith.constant 6.400000e+01 : f32
    %255 = vector.broadcast %cst_86 : f32 to vector<1x8x1xf32>
    %256 = arith.divf %254, %255 : vector<1x8x1xf32>
    %cst_87 = arith.constant 9.99999974E-6 : f32
    %257 = vector.broadcast %cst_87 : f32 to vector<1x8x1xf32>
    %258 = arith.addf %256, %257 : vector<1x8x1xf32>
    %259 = math.rsqrt %258 : vector<1x8x1xf32>
    %260 = vector.broadcast %259 : vector<1x8x1xf32> to vector<2x8x32xf32>
    %261 = arith.mulf %249, %260 : vector<2x8x32xf32>
    %cst_88 = arith.constant 0.000000e+00 : f32
    %262 = vector.broadcast %cst_88 : f32 to vector<2x8x32xf32>
    %263 = arith.maximumf %261, %262 : vector<2x8x32xf32>
    %264 = vector.shape_cast %263 : vector<2x8x32xf32> to vector<16x32xf32>
    %c208 = arith.constant 208 : index
    %c0_89 = arith.constant 0 : index
    %265 = vector.load %arg1[%c208, %c0_89] : memref<608x128xf32, #tpu.memory_space<vmem>>, vector<8x8xf32>
    %c216 = arith.constant 216 : index
    %c0_90 = arith.constant 0 : index
    %266 = vector.load %arg1[%c216, %c0_90] : memref<608x128xf32, #tpu.memory_space<vmem>>, vector<8x1xf32>
    %267 = vector.extract_strided_slice %264 {offsets = [0, 0], sizes = [8, 32], strides = [1, 1]} : vector<16x32xf32> to vector<8x32xf32>
    %cst_91 = arith.constant dense<0.000000e+00> : vector<8x32xf32>
    %268 = tpu.matmul %265, %267, %cst_91 {dimension_numbers = #tpu.dot_dimension_numbers<[1], [0], [0], [1], [0, 0, 1, 1], [], []>} : vector<8x8xf32>, vector<8x32xf32>, vector<8x32xf32> -> vector<8x32xf32>
    %269 = vector.broadcast %266 : vector<8x1xf32> to vector<8x32xf32>
    %270 = arith.addf %268, %269 : vector<8x32xf32>
    %271 = vector.extract_strided_slice %264 {offsets = [8, 0], sizes = [8, 32], strides = [1, 1]} : vector<16x32xf32> to vector<8x32xf32>
    %cst_92 = arith.constant dense<0.000000e+00> : vector<8x32xf32>
    %272 = tpu.matmul %265, %271, %cst_92 {dimension_numbers = #tpu.dot_dimension_numbers<[1], [0], [0], [1], [0, 0, 1, 1], [], []>} : vector<8x8xf32>, vector<8x32xf32>, vector<8x32xf32> -> vector<8x32xf32>
    %273 = vector.broadcast %266 : vector<8x1xf32> to vector<8x32xf32>
    %274 = arith.addf %272, %273 : vector<8x32xf32>
    %275 = tpu.concatenate %270, %274 in 0 : vector<8x32xf32>, vector<8x32xf32> -> vector<16x32xf32>
    %276 = arith.addf %240, %275 : vector<16x32xf32>
    %277 = vector.shape_cast %276 : vector<16x32xf32> to vector<2x8x32xf32>
    %cst_93 = arith.constant dense<0.000000e+00> : vector<2x32xf32>
    %278 = vector.multi_reduction <add>, %277, %cst_93 [1] : vector<2x8x32xf32> to vector<2x32xf32>
    %279 = vector.shape_cast %278 : vector<2x32xf32> to vector<2x1x32xf32>
    %cst_94 = arith.constant 8.000000e+00 : f32
    %280 = vector.broadcast %cst_94 : f32 to vector<2x1x32xf32>
    %281 = arith.divf %279, %280 : vector<2x1x32xf32>
    %282 = vector.broadcast %281 : vector<2x1x32xf32> to vector<2x8x32xf32>
    %283 = arith.subf %277, %282 : vector<2x8x32xf32>
    %284 = arith.mulf %283, %283 : vector<2x8x32xf32>
    %cst_95 = arith.constant dense<0.000000e+00> : vector<2x32xf32>
    %285 = vector.multi_reduction <add>, %284, %cst_95 [1] : vector<2x8x32xf32> to vector<2x32xf32>
    %286 = vector.shape_cast %285 : vector<2x32xf32> to vector<2x1x32xf32>
    %cst_96 = arith.constant 8.000000e+00 : f32
    %287 = vector.broadcast %cst_96 : f32 to vector<2x1x32xf32>
    %288 = arith.divf %286, %287 : vector<2x1x32xf32>
    %cst_97 = arith.constant 1.000000e-03 : f32
    %289 = vector.broadcast %cst_97 : f32 to vector<2x1x32xf32>
    %290 = arith.addf %288, %289 : vector<2x1x32xf32>
    %291 = math.rsqrt %290 : vector<2x1x32xf32>
    %292 = vector.broadcast %291 : vector<2x1x32xf32> to vector<2x8x32xf32>
    %293 = arith.mulf %283, %292 : vector<2x8x32xf32>
    %294 = vector.shape_cast %293 : vector<2x8x32xf32> to vector<16x32xf32>
    %cst_98 = arith.constant dense<0.000000e+00> : vector<32xf32>
    %295 = vector.multi_reduction <add>, %294, %cst_98 [0] : vector<16x32xf32> to vector<32xf32>
    %296 = vector.shape_cast %295 : vector<32xf32> to vector<1x32xf32>
    %cst_99 = arith.constant 1.600000e+01 : f32
    %297 = vector.broadcast %cst_99 : f32 to vector<1x32xf32>
    %298 = arith.divf %296, %297 : vector<1x32xf32>
    %299 = vector.broadcast %298 : vector<1x32xf32> to vector<16x32xf32>
    %300 = arith.subf %294, %299 : vector<16x32xf32>
    %301 = arith.mulf %300, %300 : vector<16x32xf32>
    %cst_100 = arith.constant dense<0.000000e+00> : vector<32xf32>
    %302 = vector.multi_reduction <add>, %301, %cst_100 [0] : vector<16x32xf32> to vector<32xf32>
    %303 = vector.shape_cast %302 : vector<32xf32> to vector<1x32xf32>
    %cst_101 = arith.constant 1.600000e+01 : f32
    %304 = vector.broadcast %cst_101 : f32 to vector<1x32xf32>
    %305 = arith.divf %303, %304 : vector<1x32xf32>
    %cst_102 = arith.constant 9.99999974E-6 : f32
    %306 = vector.broadcast %cst_102 : f32 to vector<1x32xf32>
    %307 = arith.addf %305, %306 : vector<1x32xf32>
    %308 = math.rsqrt %307 : vector<1x32xf32>
    %309 = vector.broadcast %308 : vector<1x32xf32> to vector<16x32xf32>
    %310 = arith.mulf %300, %309 : vector<16x32xf32>
    %cst_103 = arith.constant 0.000000e+00 : f32
    %311 = vector.broadcast %cst_103 : f32 to vector<16x32xf32>
    %312 = arith.maximumf %310, %311 : vector<16x32xf32>
    %c224 = arith.constant 224 : index
    %c0_104 = arith.constant 0 : index
    %313 = vector.load %arg1[%c224, %c0_104] : memref<608x128xf32, #tpu.memory_space<vmem>>, vector<32x32xf32>
    %cst_105 = arith.constant dense<0.000000e+00> : vector<16x32xf32>
    %314 = tpu.matmul %312, %313, %cst_105 {dimension_numbers = #tpu.dot_dimension_numbers<[1], [0], [0], [1], [0, 0, 1, 1], [], []>} : vector<16x32xf32>, vector<32x32xf32>, vector<16x32xf32> -> vector<16x32xf32>
    %c256 = arith.constant 256 : index
    %c0_106 = arith.constant 0 : index
    %315 = vector.load %arg1[%c256, %c0_106] : memref<608x128xf32, #tpu.memory_space<vmem>>, vector<1x32xf32>
    %316 = vector.broadcast %315 : vector<1x32xf32> to vector<16x32xf32>
    %317 = arith.addf %314, %316 : vector<16x32xf32>
    %318 = arith.addf %317, %199 : vector<16x32xf32>
    %319 = vector.shape_cast %318 : vector<16x32xf32> to vector<2x8x32xf32>
    %cst_107 = arith.constant dense<0.000000e+00> : vector<2x32xf32>
    %320 = vector.multi_reduction <add>, %319, %cst_107 [1] : vector<2x8x32xf32> to vector<2x32xf32>
    %321 = vector.shape_cast %320 : vector<2x32xf32> to vector<2x1x32xf32>
    %cst_108 = arith.constant 8.000000e+00 : f32
    %322 = vector.broadcast %cst_108 : f32 to vector<2x1x32xf32>
    %323 = arith.divf %321, %322 : vector<2x1x32xf32>
    %324 = vector.broadcast %323 : vector<2x1x32xf32> to vector<2x8x32xf32>
    %325 = arith.subf %319, %324 : vector<2x8x32xf32>
    %326 = arith.mulf %325, %325 : vector<2x8x32xf32>
    %cst_109 = arith.constant dense<0.000000e+00> : vector<2x32xf32>
    %327 = vector.multi_reduction <add>, %326, %cst_109 [1] : vector<2x8x32xf32> to vector<2x32xf32>
    %328 = vector.shape_cast %327 : vector<2x32xf32> to vector<2x1x32xf32>
    %cst_110 = arith.constant 8.000000e+00 : f32
    %329 = vector.broadcast %cst_110 : f32 to vector<2x1x32xf32>
    %330 = arith.divf %328, %329 : vector<2x1x32xf32>
    %cst_111 = arith.constant 1.000000e-03 : f32
    %331 = vector.broadcast %cst_111 : f32 to vector<2x1x32xf32>
    %332 = arith.addf %330, %331 : vector<2x1x32xf32>
    %333 = math.rsqrt %332 : vector<2x1x32xf32>
    %334 = vector.broadcast %333 : vector<2x1x32xf32> to vector<2x8x32xf32>
    %335 = arith.mulf %325, %334 : vector<2x8x32xf32>
    %336 = vector.shape_cast %335 : vector<2x8x32xf32> to vector<16x32xf32>
    %cst_112 = arith.constant dense<0.000000e+00> : vector<32xf32>
    %337 = vector.multi_reduction <add>, %336, %cst_112 [0] : vector<16x32xf32> to vector<32xf32>
    %338 = vector.shape_cast %337 : vector<32xf32> to vector<1x32xf32>
    %cst_113 = arith.constant 1.600000e+01 : f32
    %339 = vector.broadcast %cst_113 : f32 to vector<1x32xf32>
    %340 = arith.divf %338, %339 : vector<1x32xf32>
    %341 = vector.broadcast %340 : vector<1x32xf32> to vector<16x32xf32>
    %342 = arith.subf %336, %341 : vector<16x32xf32>
    %343 = arith.mulf %342, %342 : vector<16x32xf32>
    %cst_114 = arith.constant dense<0.000000e+00> : vector<32xf32>
    %344 = vector.multi_reduction <add>, %343, %cst_114 [0] : vector<16x32xf32> to vector<32xf32>
    %345 = vector.shape_cast %344 : vector<32xf32> to vector<1x32xf32>
    %cst_115 = arith.constant 1.600000e+01 : f32
    %346 = vector.broadcast %cst_115 : f32 to vector<1x32xf32>
    %347 = arith.divf %345, %346 : vector<1x32xf32>
    %cst_116 = arith.constant 9.99999974E-6 : f32
    %348 = vector.broadcast %cst_116 : f32 to vector<1x32xf32>
    %349 = arith.addf %347, %348 : vector<1x32xf32>
    %350 = math.rsqrt %349 : vector<1x32xf32>
    %351 = vector.broadcast %350 : vector<1x32xf32> to vector<16x32xf32>
    %352 = arith.mulf %342, %351 : vector<16x32xf32>
    %cst_117 = arith.constant 0.000000e+00 : f32
    %353 = vector.broadcast %cst_117 : f32 to vector<16x32xf32>
    %354 = arith.maximumf %352, %353 : vector<16x32xf32>
    %c264 = arith.constant 264 : index
    %c0_118 = arith.constant 0 : index
    %355 = vector.load %arg1[%c264, %c0_118] : memref<608x128xf32, #tpu.memory_space<vmem>>, vector<32x32xf32>
    %cst_119 = arith.constant dense<0.000000e+00> : vector<16x32xf32>
    %356 = tpu.matmul %354, %355, %cst_119 {dimension_numbers = #tpu.dot_dimension_numbers<[1], [0], [0], [1], [0, 0, 1, 1], [], []>} : vector<16x32xf32>, vector<32x32xf32>, vector<16x32xf32> -> vector<16x32xf32>
    %c296 = arith.constant 296 : index
    %c0_120 = arith.constant 0 : index
    %357 = vector.load %arg1[%c296, %c0_120] : memref<608x128xf32, #tpu.memory_space<vmem>>, vector<1x32xf32>
    %358 = vector.broadcast %357 : vector<1x32xf32> to vector<16x32xf32>
    %359 = arith.addf %356, %358 : vector<16x32xf32>
    %360 = vector.shape_cast %359 : vector<16x32xf32> to vector<2x8x32xf32>
    %cst_121 = arith.constant dense<0.000000e+00> : vector<2x8xf32>
    %361 = vector.multi_reduction <add>, %360, %cst_121 [2] : vector<2x8x32xf32> to vector<2x8xf32>
    %362 = vector.shape_cast %361 : vector<2x8xf32> to vector<2x8x1xf32>
    %cst_122 = arith.constant dense<0.000000e+00> : vector<8x1xf32>
    %363 = vector.multi_reduction <add>, %362, %cst_122 [0] : vector<2x8x1xf32> to vector<8x1xf32>
    %364 = vector.shape_cast %363 : vector<8x1xf32> to vector<1x8x1xf32>
    %cst_123 = arith.constant 6.400000e+01 : f32
    %365 = vector.broadcast %cst_123 : f32 to vector<1x8x1xf32>
    %366 = arith.divf %364, %365 : vector<1x8x1xf32>
    %367 = vector.broadcast %366 : vector<1x8x1xf32> to vector<2x8x32xf32>
    %368 = arith.subf %360, %367 : vector<2x8x32xf32>
    %369 = arith.mulf %368, %368 : vector<2x8x32xf32>
    %cst_124 = arith.constant dense<0.000000e+00> : vector<2x8xf32>
    %370 = vector.multi_reduction <add>, %369, %cst_124 [2] : vector<2x8x32xf32> to vector<2x8xf32>
    %371 = vector.shape_cast %370 : vector<2x8xf32> to vector<2x8x1xf32>
    %cst_125 = arith.constant dense<0.000000e+00> : vector<8x1xf32>
    %372 = vector.multi_reduction <add>, %371, %cst_125 [0] : vector<2x8x1xf32> to vector<8x1xf32>
    %373 = vector.shape_cast %372 : vector<8x1xf32> to vector<1x8x1xf32>
    %cst_126 = arith.constant 6.400000e+01 : f32
    %374 = vector.broadcast %cst_126 : f32 to vector<1x8x1xf32>
    %375 = arith.divf %373, %374 : vector<1x8x1xf32>
    %cst_127 = arith.constant 9.99999974E-6 : f32
    %376 = vector.broadcast %cst_127 : f32 to vector<1x8x1xf32>
    %377 = arith.addf %375, %376 : vector<1x8x1xf32>
    %378 = math.rsqrt %377 : vector<1x8x1xf32>
    %379 = vector.broadcast %378 : vector<1x8x1xf32> to vector<2x8x32xf32>
    %380 = arith.mulf %368, %379 : vector<2x8x32xf32>
    %cst_128 = arith.constant 0.000000e+00 : f32
    %381 = vector.broadcast %cst_128 : f32 to vector<2x8x32xf32>
    %382 = arith.maximumf %380, %381 : vector<2x8x32xf32>
    %383 = vector.shape_cast %382 : vector<2x8x32xf32> to vector<16x32xf32>
    %c304 = arith.constant 304 : index
    %c0_129 = arith.constant 0 : index
    %384 = vector.load %arg1[%c304, %c0_129] : memref<608x128xf32, #tpu.memory_space<vmem>>, vector<8x8xf32>
    %c312 = arith.constant 312 : index
    %c0_130 = arith.constant 0 : index
    %385 = vector.load %arg1[%c312, %c0_130] : memref<608x128xf32, #tpu.memory_space<vmem>>, vector<8x1xf32>
    %386 = vector.extract_strided_slice %383 {offsets = [0, 0], sizes = [8, 32], strides = [1, 1]} : vector<16x32xf32> to vector<8x32xf32>
    %cst_131 = arith.constant dense<0.000000e+00> : vector<8x32xf32>
    %387 = tpu.matmul %384, %386, %cst_131 {dimension_numbers = #tpu.dot_dimension_numbers<[1], [0], [0], [1], [0, 0, 1, 1], [], []>} : vector<8x8xf32>, vector<8x32xf32>, vector<8x32xf32> -> vector<8x32xf32>
    %388 = vector.broadcast %385 : vector<8x1xf32> to vector<8x32xf32>
    %389 = arith.addf %387, %388 : vector<8x32xf32>
    %390 = vector.extract_strided_slice %383 {offsets = [8, 0], sizes = [8, 32], strides = [1, 1]} : vector<16x32xf32> to vector<8x32xf32>
    %cst_132 = arith.constant dense<0.000000e+00> : vector<8x32xf32>
    %391 = tpu.matmul %384, %390, %cst_132 {dimension_numbers = #tpu.dot_dimension_numbers<[1], [0], [0], [1], [0, 0, 1, 1], [], []>} : vector<8x8xf32>, vector<8x32xf32>, vector<8x32xf32> -> vector<8x32xf32>
    %392 = vector.broadcast %385 : vector<8x1xf32> to vector<8x32xf32>
    %393 = arith.addf %391, %392 : vector<8x32xf32>
    %394 = tpu.concatenate %389, %393 in 0 : vector<8x32xf32>, vector<8x32xf32> -> vector<16x32xf32>
    %395 = arith.addf %359, %394 : vector<16x32xf32>
    %396 = vector.shape_cast %395 : vector<16x32xf32> to vector<2x8x32xf32>
    %cst_133 = arith.constant dense<0.000000e+00> : vector<2x32xf32>
    %397 = vector.multi_reduction <add>, %396, %cst_133 [1] : vector<2x8x32xf32> to vector<2x32xf32>
    %398 = vector.shape_cast %397 : vector<2x32xf32> to vector<2x1x32xf32>
    %cst_134 = arith.constant 8.000000e+00 : f32
    %399 = vector.broadcast %cst_134 : f32 to vector<2x1x32xf32>
    %400 = arith.divf %398, %399 : vector<2x1x32xf32>
    %401 = vector.broadcast %400 : vector<2x1x32xf32> to vector<2x8x32xf32>
    %402 = arith.subf %396, %401 : vector<2x8x32xf32>
    %403 = arith.mulf %402, %402 : vector<2x8x32xf32>
    %cst_135 = arith.constant dense<0.000000e+00> : vector<2x32xf32>
    %404 = vector.multi_reduction <add>, %403, %cst_135 [1] : vector<2x8x32xf32> to vector<2x32xf32>
    %405 = vector.shape_cast %404 : vector<2x32xf32> to vector<2x1x32xf32>
    %cst_136 = arith.constant 8.000000e+00 : f32
    %406 = vector.broadcast %cst_136 : f32 to vector<2x1x32xf32>
    %407 = arith.divf %405, %406 : vector<2x1x32xf32>
    %cst_137 = arith.constant 1.000000e-03 : f32
    %408 = vector.broadcast %cst_137 : f32 to vector<2x1x32xf32>
    %409 = arith.addf %407, %408 : vector<2x1x32xf32>
    %410 = math.rsqrt %409 : vector<2x1x32xf32>
    %411 = vector.broadcast %410 : vector<2x1x32xf32> to vector<2x8x32xf32>
    %412 = arith.mulf %402, %411 : vector<2x8x32xf32>
    %413 = vector.shape_cast %412 : vector<2x8x32xf32> to vector<16x32xf32>
    %cst_138 = arith.constant dense<0.000000e+00> : vector<32xf32>
    %414 = vector.multi_reduction <add>, %413, %cst_138 [0] : vector<16x32xf32> to vector<32xf32>
    %415 = vector.shape_cast %414 : vector<32xf32> to vector<1x32xf32>
    %cst_139 = arith.constant 1.600000e+01 : f32
    %416 = vector.broadcast %cst_139 : f32 to vector<1x32xf32>
    %417 = arith.divf %415, %416 : vector<1x32xf32>
    %418 = vector.broadcast %417 : vector<1x32xf32> to vector<16x32xf32>
    %419 = arith.subf %413, %418 : vector<16x32xf32>
    %420 = arith.mulf %419, %419 : vector<16x32xf32>
    %cst_140 = arith.constant dense<0.000000e+00> : vector<32xf32>
    %421 = vector.multi_reduction <add>, %420, %cst_140 [0] : vector<16x32xf32> to vector<32xf32>
    %422 = vector.shape_cast %421 : vector<32xf32> to vector<1x32xf32>
    %cst_141 = arith.constant 1.600000e+01 : f32
    %423 = vector.broadcast %cst_141 : f32 to vector<1x32xf32>
    %424 = arith.divf %422, %423 : vector<1x32xf32>
    %cst_142 = arith.constant 9.99999974E-6 : f32
    %425 = vector.broadcast %cst_142 : f32 to vector<1x32xf32>
    %426 = arith.addf %424, %425 : vector<1x32xf32>
    %427 = math.rsqrt %426 : vector<1x32xf32>
    %428 = vector.broadcast %427 : vector<1x32xf32> to vector<16x32xf32>
    %429 = arith.mulf %419, %428 : vector<16x32xf32>
    %cst_143 = arith.constant 0.000000e+00 : f32
    %430 = vector.broadcast %cst_143 : f32 to vector<16x32xf32>
    %431 = arith.maximumf %429, %430 : vector<16x32xf32>
    %c320 = arith.constant 320 : index
    %c0_144 = arith.constant 0 : index
    %432 = vector.load %arg1[%c320, %c0_144] : memref<608x128xf32, #tpu.memory_space<vmem>>, vector<32x32xf32>
    %cst_145 = arith.constant dense<0.000000e+00> : vector<16x32xf32>
    %433 = tpu.matmul %431, %432, %cst_145 {dimension_numbers = #tpu.dot_dimension_numbers<[1], [0], [0], [1], [0, 0, 1, 1], [], []>} : vector<16x32xf32>, vector<32x32xf32>, vector<16x32xf32> -> vector<16x32xf32>
    %c352 = arith.constant 352 : index
    %c0_146 = arith.constant 0 : index
    %434 = vector.load %arg1[%c352, %c0_146] : memref<608x128xf32, #tpu.memory_space<vmem>>, vector<1x32xf32>
    %435 = vector.broadcast %434 : vector<1x32xf32> to vector<16x32xf32>
    %436 = arith.addf %433, %435 : vector<16x32xf32>
    %437 = arith.addf %436, %318 : vector<16x32xf32>
    %438 = vector.shape_cast %437 : vector<16x32xf32> to vector<2x8x32xf32>
    %cst_147 = arith.constant dense<0.000000e+00> : vector<2x32xf32>
    %439 = vector.multi_reduction <add>, %438, %cst_147 [1] : vector<2x8x32xf32> to vector<2x32xf32>
    %440 = vector.shape_cast %439 : vector<2x32xf32> to vector<2x1x32xf32>
    %cst_148 = arith.constant 8.000000e+00 : f32
    %441 = vector.broadcast %cst_148 : f32 to vector<2x1x32xf32>
    %442 = arith.divf %440, %441 : vector<2x1x32xf32>
    %443 = vector.broadcast %442 : vector<2x1x32xf32> to vector<2x8x32xf32>
    %444 = arith.subf %438, %443 : vector<2x8x32xf32>
    %445 = arith.mulf %444, %444 : vector<2x8x32xf32>
    %cst_149 = arith.constant dense<0.000000e+00> : vector<2x32xf32>
    %446 = vector.multi_reduction <add>, %445, %cst_149 [1] : vector<2x8x32xf32> to vector<2x32xf32>
    %447 = vector.shape_cast %446 : vector<2x32xf32> to vector<2x1x32xf32>
    %cst_150 = arith.constant 8.000000e+00 : f32
    %448 = vector.broadcast %cst_150 : f32 to vector<2x1x32xf32>
    %449 = arith.divf %447, %448 : vector<2x1x32xf32>
    %cst_151 = arith.constant 1.000000e-03 : f32
    %450 = vector.broadcast %cst_151 : f32 to vector<2x1x32xf32>
    %451 = arith.addf %449, %450 : vector<2x1x32xf32>
    %452 = math.rsqrt %451 : vector<2x1x32xf32>
    %453 = vector.broadcast %452 : vector<2x1x32xf32> to vector<2x8x32xf32>
    %454 = arith.mulf %444, %453 : vector<2x8x32xf32>
    %455 = vector.shape_cast %454 : vector<2x8x32xf32> to vector<16x32xf32>
    %cst_152 = arith.constant dense<0.000000e+00> : vector<32xf32>
    %456 = vector.multi_reduction <add>, %455, %cst_152 [0] : vector<16x32xf32> to vector<32xf32>
    %457 = vector.shape_cast %456 : vector<32xf32> to vector<1x32xf32>
    %cst_153 = arith.constant 1.600000e+01 : f32
    %458 = vector.broadcast %cst_153 : f32 to vector<1x32xf32>
    %459 = arith.divf %457, %458 : vector<1x32xf32>
    %460 = vector.broadcast %459 : vector<1x32xf32> to vector<16x32xf32>
    %461 = arith.subf %455, %460 : vector<16x32xf32>
    %462 = arith.mulf %461, %461 : vector<16x32xf32>
    %cst_154 = arith.constant dense<0.000000e+00> : vector<32xf32>
    %463 = vector.multi_reduction <add>, %462, %cst_154 [0] : vector<16x32xf32> to vector<32xf32>
    %464 = vector.shape_cast %463 : vector<32xf32> to vector<1x32xf32>
    %cst_155 = arith.constant 1.600000e+01 : f32
    %465 = vector.broadcast %cst_155 : f32 to vector<1x32xf32>
    %466 = arith.divf %464, %465 : vector<1x32xf32>
    %cst_156 = arith.constant 9.99999974E-6 : f32
    %467 = vector.broadcast %cst_156 : f32 to vector<1x32xf32>
    %468 = arith.addf %466, %467 : vector<1x32xf32>
    %469 = math.rsqrt %468 : vector<1x32xf32>
    %470 = vector.broadcast %469 : vector<1x32xf32> to vector<16x32xf32>
    %471 = arith.mulf %461, %470 : vector<16x32xf32>
    %cst_157 = arith.constant 0.000000e+00 : f32
    %472 = vector.broadcast %cst_157 : f32 to vector<16x32xf32>
    %473 = arith.maximumf %471, %472 : vector<16x32xf32>
    %c360 = arith.constant 360 : index
    %c0_158 = arith.constant 0 : index
    %474 = vector.load %arg1[%c360, %c0_158] : memref<608x128xf32, #tpu.memory_space<vmem>>, vector<32x32xf32>
    %cst_159 = arith.constant dense<0.000000e+00> : vector<16x32xf32>
    %475 = tpu.matmul %473, %474, %cst_159 {dimension_numbers = #tpu.dot_dimension_numbers<[1], [0], [0], [1], [0, 0, 1, 1], [], []>} : vector<16x32xf32>, vector<32x32xf32>, vector<16x32xf32> -> vector<16x32xf32>
    %c392 = arith.constant 392 : index
    %c0_160 = arith.constant 0 : index
    %476 = vector.load %arg1[%c392, %c0_160] : memref<608x128xf32, #tpu.memory_space<vmem>>, vector<1x32xf32>
    %477 = vector.broadcast %476 : vector<1x32xf32> to vector<16x32xf32>
    %478 = arith.addf %475, %477 : vector<16x32xf32>
    %479 = vector.shape_cast %478 : vector<16x32xf32> to vector<2x8x32xf32>
    %cst_161 = arith.constant dense<0.000000e+00> : vector<2x8xf32>
    %480 = vector.multi_reduction <add>, %479, %cst_161 [2] : vector<2x8x32xf32> to vector<2x8xf32>
    %481 = vector.shape_cast %480 : vector<2x8xf32> to vector<2x8x1xf32>
    %cst_162 = arith.constant dense<0.000000e+00> : vector<8x1xf32>
    %482 = vector.multi_reduction <add>, %481, %cst_162 [0] : vector<2x8x1xf32> to vector<8x1xf32>
    %483 = vector.shape_cast %482 : vector<8x1xf32> to vector<1x8x1xf32>
    %cst_163 = arith.constant 6.400000e+01 : f32
    %484 = vector.broadcast %cst_163 : f32 to vector<1x8x1xf32>
    %485 = arith.divf %483, %484 : vector<1x8x1xf32>
    %486 = vector.broadcast %485 : vector<1x8x1xf32> to vector<2x8x32xf32>
    %487 = arith.subf %479, %486 : vector<2x8x32xf32>
    %488 = arith.mulf %487, %487 : vector<2x8x32xf32>
    %cst_164 = arith.constant dense<0.000000e+00> : vector<2x8xf32>
    %489 = vector.multi_reduction <add>, %488, %cst_164 [2] : vector<2x8x32xf32> to vector<2x8xf32>
    %490 = vector.shape_cast %489 : vector<2x8xf32> to vector<2x8x1xf32>
    %cst_165 = arith.constant dense<0.000000e+00> : vector<8x1xf32>
    %491 = vector.multi_reduction <add>, %490, %cst_165 [0] : vector<2x8x1xf32> to vector<8x1xf32>
    %492 = vector.shape_cast %491 : vector<8x1xf32> to vector<1x8x1xf32>
    %cst_166 = arith.constant 6.400000e+01 : f32
    %493 = vector.broadcast %cst_166 : f32 to vector<1x8x1xf32>
    %494 = arith.divf %492, %493 : vector<1x8x1xf32>
    %cst_167 = arith.constant 9.99999974E-6 : f32
    %495 = vector.broadcast %cst_167 : f32 to vector<1x8x1xf32>
    %496 = arith.addf %494, %495 : vector<1x8x1xf32>
    %497 = math.rsqrt %496 : vector<1x8x1xf32>
    %498 = vector.broadcast %497 : vector<1x8x1xf32> to vector<2x8x32xf32>
    %499 = arith.mulf %487, %498 : vector<2x8x32xf32>
    %cst_168 = arith.constant 0.000000e+00 : f32
    %500 = vector.broadcast %cst_168 : f32 to vector<2x8x32xf32>
    %501 = arith.maximumf %499, %500 : vector<2x8x32xf32>
    %502 = vector.shape_cast %501 : vector<2x8x32xf32> to vector<16x32xf32>
    %c400 = arith.constant 400 : index
    %c0_169 = arith.constant 0 : index
    %503 = vector.load %arg1[%c400, %c0_169] : memref<608x128xf32, #tpu.memory_space<vmem>>, vector<8x8xf32>
    %c408 = arith.constant 408 : index
    %c0_170 = arith.constant 0 : index
    %504 = vector.load %arg1[%c408, %c0_170] : memref<608x128xf32, #tpu.memory_space<vmem>>, vector<8x1xf32>
    %505 = vector.extract_strided_slice %502 {offsets = [0, 0], sizes = [8, 32], strides = [1, 1]} : vector<16x32xf32> to vector<8x32xf32>
    %cst_171 = arith.constant dense<0.000000e+00> : vector<8x32xf32>
    %506 = tpu.matmul %503, %505, %cst_171 {dimension_numbers = #tpu.dot_dimension_numbers<[1], [0], [0], [1], [0, 0, 1, 1], [], []>} : vector<8x8xf32>, vector<8x32xf32>, vector<8x32xf32> -> vector<8x32xf32>
    %507 = vector.broadcast %504 : vector<8x1xf32> to vector<8x32xf32>
    %508 = arith.addf %506, %507 : vector<8x32xf32>
    %509 = vector.extract_strided_slice %502 {offsets = [8, 0], sizes = [8, 32], strides = [1, 1]} : vector<16x32xf32> to vector<8x32xf32>
    %cst_172 = arith.constant dense<0.000000e+00> : vector<8x32xf32>
    %510 = tpu.matmul %503, %509, %cst_172 {dimension_numbers = #tpu.dot_dimension_numbers<[1], [0], [0], [1], [0, 0, 1, 1], [], []>} : vector<8x8xf32>, vector<8x32xf32>, vector<8x32xf32> -> vector<8x32xf32>
    %511 = vector.broadcast %504 : vector<8x1xf32> to vector<8x32xf32>
    %512 = arith.addf %510, %511 : vector<8x32xf32>
    %513 = tpu.concatenate %508, %512 in 0 : vector<8x32xf32>, vector<8x32xf32> -> vector<16x32xf32>
    %514 = arith.addf %478, %513 : vector<16x32xf32>
    %515 = vector.shape_cast %514 : vector<16x32xf32> to vector<2x8x32xf32>
    %cst_173 = arith.constant dense<0.000000e+00> : vector<2x32xf32>
    %516 = vector.multi_reduction <add>, %515, %cst_173 [1] : vector<2x8x32xf32> to vector<2x32xf32>
    %517 = vector.shape_cast %516 : vector<2x32xf32> to vector<2x1x32xf32>
    %cst_174 = arith.constant 8.000000e+00 : f32
    %518 = vector.broadcast %cst_174 : f32 to vector<2x1x32xf32>
    %519 = arith.divf %517, %518 : vector<2x1x32xf32>
    %520 = vector.broadcast %519 : vector<2x1x32xf32> to vector<2x8x32xf32>
    %521 = arith.subf %515, %520 : vector<2x8x32xf32>
    %522 = arith.mulf %521, %521 : vector<2x8x32xf32>
    %cst_175 = arith.constant dense<0.000000e+00> : vector<2x32xf32>
    %523 = vector.multi_reduction <add>, %522, %cst_175 [1] : vector<2x8x32xf32> to vector<2x32xf32>
    %524 = vector.shape_cast %523 : vector<2x32xf32> to vector<2x1x32xf32>
    %cst_176 = arith.constant 8.000000e+00 : f32
    %525 = vector.broadcast %cst_176 : f32 to vector<2x1x32xf32>
    %526 = arith.divf %524, %525 : vector<2x1x32xf32>
    %cst_177 = arith.constant 1.000000e-03 : f32
    %527 = vector.broadcast %cst_177 : f32 to vector<2x1x32xf32>
    %528 = arith.addf %526, %527 : vector<2x1x32xf32>
    %529 = math.rsqrt %528 : vector<2x1x32xf32>
    %530 = vector.broadcast %529 : vector<2x1x32xf32> to vector<2x8x32xf32>
    %531 = arith.mulf %521, %530 : vector<2x8x32xf32>
    %532 = vector.shape_cast %531 : vector<2x8x32xf32> to vector<16x32xf32>
    %cst_178 = arith.constant dense<0.000000e+00> : vector<32xf32>
    %533 = vector.multi_reduction <add>, %532, %cst_178 [0] : vector<16x32xf32> to vector<32xf32>
    %534 = vector.shape_cast %533 : vector<32xf32> to vector<1x32xf32>
    %cst_179 = arith.constant 1.600000e+01 : f32
    %535 = vector.broadcast %cst_179 : f32 to vector<1x32xf32>
    %536 = arith.divf %534, %535 : vector<1x32xf32>
    %537 = vector.broadcast %536 : vector<1x32xf32> to vector<16x32xf32>
    %538 = arith.subf %532, %537 : vector<16x32xf32>
    %539 = arith.mulf %538, %538 : vector<16x32xf32>
    %cst_180 = arith.constant dense<0.000000e+00> : vector<32xf32>
    %540 = vector.multi_reduction <add>, %539, %cst_180 [0] : vector<16x32xf32> to vector<32xf32>
    %541 = vector.shape_cast %540 : vector<32xf32> to vector<1x32xf32>
    %cst_181 = arith.constant 1.600000e+01 : f32
    %542 = vector.broadcast %cst_181 : f32 to vector<1x32xf32>
    %543 = arith.divf %541, %542 : vector<1x32xf32>
    %cst_182 = arith.constant 9.99999974E-6 : f32
    %544 = vector.broadcast %cst_182 : f32 to vector<1x32xf32>
    %545 = arith.addf %543, %544 : vector<1x32xf32>
    %546 = math.rsqrt %545 : vector<1x32xf32>
    %547 = vector.broadcast %546 : vector<1x32xf32> to vector<16x32xf32>
    %548 = arith.mulf %538, %547 : vector<16x32xf32>
    %cst_183 = arith.constant 0.000000e+00 : f32
    %549 = vector.broadcast %cst_183 : f32 to vector<16x32xf32>
    %550 = arith.maximumf %548, %549 : vector<16x32xf32>
    %c416 = arith.constant 416 : index
    %c0_184 = arith.constant 0 : index
    %551 = vector.load %arg1[%c416, %c0_184] : memref<608x128xf32, #tpu.memory_space<vmem>>, vector<32x32xf32>
    %cst_185 = arith.constant dense<0.000000e+00> : vector<16x32xf32>
    %552 = tpu.matmul %550, %551, %cst_185 {dimension_numbers = #tpu.dot_dimension_numbers<[1], [0], [0], [1], [0, 0, 1, 1], [], []>} : vector<16x32xf32>, vector<32x32xf32>, vector<16x32xf32> -> vector<16x32xf32>
    %c448 = arith.constant 448 : index
    %c0_186 = arith.constant 0 : index
    %553 = vector.load %arg1[%c448, %c0_186] : memref<608x128xf32, #tpu.memory_space<vmem>>, vector<1x32xf32>
    %554 = vector.broadcast %553 : vector<1x32xf32> to vector<16x32xf32>
    %555 = arith.addf %552, %554 : vector<16x32xf32>
    %556 = arith.addf %555, %437 : vector<16x32xf32>
    %c152 = arith.constant 152 : index
    %c0_187 = arith.constant 0 : index
    %557 = vector.load %arg1[%c152, %c0_187] : memref<608x128xf32, #tpu.memory_space<vmem>>, vector<8x32xf32>
    %cst_188 = arith.constant dense<0.000000e+00> : vector<128x8xf32>
    %558 = tpu.matmul %164, %557, %cst_188 {dimension_numbers = #tpu.dot_dimension_numbers<[1], [1], [0], [0], [0, 0, 1, 0], [], []>} : vector<128x32xf32>, vector<8x32xf32>, vector<128x8xf32> -> vector<128x8xf32>
    %c160 = arith.constant 160 : index
    %c0_189 = arith.constant 0 : index
    %559 = vector.load %arg1[%c160, %c0_189] : memref<608x128xf32, #tpu.memory_space<vmem>>, vector<1x8xf32>
    %560 = vector.broadcast %559 : vector<1x8xf32> to vector<128x8xf32>
    %561 = arith.addf %558, %560 : vector<128x8xf32>
    %cst_190 = arith.constant dense<0xFF800000> : vector<128xf32>
    %562 = vector.multi_reduction <maximumf>, %561, %cst_190 [1] : vector<128x8xf32> to vector<128xf32>
    %563 = vector.shape_cast %562 : vector<128xf32> to vector<128x1xf32>
    %564 = vector.broadcast %563 : vector<128x1xf32> to vector<128x8xf32>
    %565 = arith.subf %561, %564 : vector<128x8xf32>
    %566 = math.exp %565 : vector<128x8xf32>
    %cst_191 = arith.constant dense<0.000000e+00> : vector<128xf32>
    %567 = vector.multi_reduction <add>, %566, %cst_191 [1] : vector<128x8xf32> to vector<128xf32>
    %568 = vector.shape_cast %567 : vector<128xf32> to vector<128x1xf32>
    %569 = tpu.reciprocal %568 {approx = true} : vector<128x1xf32> -> vector<128x1xf32>
    %570 = vector.broadcast %569 : vector<128x1xf32> to vector<128x8xf32>
    %571 = arith.mulf %566, %570 : vector<128x8xf32>
    %572 = vector.extract_strided_slice %571 {offsets = [0, 0], sizes = [64, 8], strides = [1, 1]} : vector<128x8xf32> to vector<64x8xf32>
    %573 = vector.extract_strided_slice %556 {offsets = [0, 0], sizes = [8, 32], strides = [1, 1]} : vector<16x32xf32> to vector<8x32xf32>
    %cst_192 = arith.constant dense<0.000000e+00> : vector<64x32xf32>
    %574 = tpu.matmul %572, %573, %cst_192 {dimension_numbers = #tpu.dot_dimension_numbers<[1], [0], [0], [1], [0, 0, 1, 1], [], []>} : vector<64x8xf32>, vector<8x32xf32>, vector<64x32xf32> -> vector<64x32xf32>
    %575 = vector.extract_strided_slice %571 {offsets = [64, 0], sizes = [64, 8], strides = [1, 1]} : vector<128x8xf32> to vector<64x8xf32>
    %576 = vector.extract_strided_slice %556 {offsets = [8, 0], sizes = [8, 32], strides = [1, 1]} : vector<16x32xf32> to vector<8x32xf32>
    %cst_193 = arith.constant dense<0.000000e+00> : vector<64x32xf32>
    %577 = tpu.matmul %575, %576, %cst_193 {dimension_numbers = #tpu.dot_dimension_numbers<[1], [0], [0], [1], [0, 0, 1, 1], [], []>} : vector<64x8xf32>, vector<8x32xf32>, vector<64x32xf32> -> vector<64x32xf32>
    %578 = tpu.concatenate %574, %577 in 0 : vector<64x32xf32>, vector<64x32xf32> -> vector<128x32xf32>
    %c456 = arith.constant 456 : index
    %c0_194 = arith.constant 0 : index
    %579 = vector.load %arg1[%c456, %c0_194] : memref<608x128xf32, #tpu.memory_space<vmem>>, vector<32x32xf32>
    %c488 = arith.constant 488 : index
    %c0_195 = arith.constant 0 : index
    %580 = vector.load %arg1[%c488, %c0_195] : memref<608x128xf32, #tpu.memory_space<vmem>>, vector<32x32xf32>
    %cst_196 = arith.constant dense<0.000000e+00> : vector<128x32xf32>
    %581 = tpu.matmul %128, %579, %cst_196 {dimension_numbers = #tpu.dot_dimension_numbers<[1], [0], [0], [1], [0, 0, 1, 1], [], []>} : vector<128x32xf32>, vector<32x32xf32>, vector<128x32xf32> -> vector<128x32xf32>
    %cst_197 = arith.constant dense<0.000000e+00> : vector<128x32xf32>
    %582 = tpu.matmul %578, %580, %cst_197 {dimension_numbers = #tpu.dot_dimension_numbers<[1], [0], [0], [1], [0, 0, 1, 1], [], []>} : vector<128x32xf32>, vector<32x32xf32>, vector<128x32xf32> -> vector<128x32xf32>
    %583 = arith.addf %581, %582 : vector<128x32xf32>
    %c520 = arith.constant 520 : index
    %c0_198 = arith.constant 0 : index
    %584 = vector.load %arg1[%c520, %c0_198] : memref<608x128xf32, #tpu.memory_space<vmem>>, vector<1x32xf32>
    %585 = vector.broadcast %584 : vector<1x32xf32> to vector<128x32xf32>
    %586 = arith.addf %583, %585 : vector<128x32xf32>
    %c528 = arith.constant 528 : index
    %c0_199 = arith.constant 0 : index
    %587 = vector.load %arg1[%c528, %c0_199] : memref<608x128xf32, #tpu.memory_space<vmem>>, vector<32x32xf32>
    %cst_200 = arith.constant dense<0.000000e+00> : vector<128x32xf32>
    %588 = tpu.matmul %586, %587, %cst_200 {dimension_numbers = #tpu.dot_dimension_numbers<[1], [0], [0], [1], [0, 0, 1, 1], [], []>} : vector<128x32xf32>, vector<32x32xf32>, vector<128x32xf32> -> vector<128x32xf32>
    %c560 = arith.constant 560 : index
    %c0_201 = arith.constant 0 : index
    %589 = vector.load %arg1[%c560, %c0_201] : memref<608x128xf32, #tpu.memory_space<vmem>>, vector<1x32xf32>
    %590 = vector.broadcast %589 : vector<1x32xf32> to vector<128x32xf32>
    %591 = arith.addf %588, %590 : vector<128x32xf32>
    %592 = vector.shape_cast %591 : vector<128x32xf32> to vector<2x64x32xf32>
    %cst_202 = arith.constant dense<0.000000e+00> : vector<2x32xf32>
    %593 = vector.multi_reduction <add>, %592, %cst_202 [1] : vector<2x64x32xf32> to vector<2x32xf32>
    %594 = vector.shape_cast %593 : vector<2x32xf32> to vector<2x1x32xf32>
    %cst_203 = arith.constant 6.400000e+01 : f32
    %595 = vector.broadcast %cst_203 : f32 to vector<2x1x32xf32>
    %596 = arith.divf %594, %595 : vector<2x1x32xf32>
    %597 = vector.broadcast %596 : vector<2x1x32xf32> to vector<2x64x32xf32>
    %598 = arith.subf %592, %597 : vector<2x64x32xf32>
    %599 = arith.mulf %598, %598 : vector<2x64x32xf32>
    %cst_204 = arith.constant dense<0.000000e+00> : vector<2x32xf32>
    %600 = vector.multi_reduction <add>, %599, %cst_204 [1] : vector<2x64x32xf32> to vector<2x32xf32>
    %601 = vector.shape_cast %600 : vector<2x32xf32> to vector<2x1x32xf32>
    %cst_205 = arith.constant 6.300000e+01 : f32
    %602 = vector.broadcast %cst_205 : f32 to vector<2x1x32xf32>
    %603 = arith.divf %601, %602 : vector<2x1x32xf32>
    %cst_206 = arith.constant 1.000000e-03 : f32
    %604 = vector.broadcast %cst_206 : f32 to vector<2x1x32xf32>
    %605 = arith.addf %603, %604 : vector<2x1x32xf32>
    %606 = math.rsqrt %605 : vector<2x1x32xf32>
    %607 = vector.broadcast %606 : vector<2x1x32xf32> to vector<2x64x32xf32>
    %608 = arith.mulf %598, %607 : vector<2x64x32xf32>
    %609 = vector.shape_cast %608 : vector<2x64x32xf32> to vector<128x32xf32>
    %cst_207 = arith.constant dense<0.000000e+00> : vector<32xf32>
    %610 = vector.multi_reduction <add>, %609, %cst_207 [0] : vector<128x32xf32> to vector<32xf32>
    %611 = vector.shape_cast %610 : vector<32xf32> to vector<1x32xf32>
    %cst_208 = arith.constant 1.280000e+02 : f32
    %612 = vector.broadcast %cst_208 : f32 to vector<1x32xf32>
    %613 = arith.divf %611, %612 : vector<1x32xf32>
    %614 = vector.broadcast %613 : vector<1x32xf32> to vector<128x32xf32>
    %615 = arith.subf %609, %614 : vector<128x32xf32>
    %616 = arith.mulf %615, %615 : vector<128x32xf32>
    %cst_209 = arith.constant dense<0.000000e+00> : vector<32xf32>
    %617 = vector.multi_reduction <add>, %616, %cst_209 [0] : vector<128x32xf32> to vector<32xf32>
    %618 = vector.shape_cast %617 : vector<32xf32> to vector<1x32xf32>
    %cst_210 = arith.constant 1.280000e+02 : f32
    %619 = vector.broadcast %cst_210 : f32 to vector<1x32xf32>
    %620 = arith.divf %618, %619 : vector<1x32xf32>
    %cst_211 = arith.constant 9.99999974E-6 : f32
    %621 = vector.broadcast %cst_211 : f32 to vector<1x32xf32>
    %622 = arith.addf %620, %621 : vector<1x32xf32>
    %623 = math.rsqrt %622 : vector<1x32xf32>
    %624 = vector.broadcast %623 : vector<1x32xf32> to vector<128x32xf32>
    %625 = arith.mulf %615, %624 : vector<128x32xf32>
    %cst_212 = arith.constant 0.000000e+00 : f32
    %626 = vector.broadcast %cst_212 : f32 to vector<128x32xf32>
    %627 = arith.maximumf %625, %626 : vector<128x32xf32>
    %c568 = arith.constant 568 : index
    %c0_213 = arith.constant 0 : index
    %628 = vector.load %arg1[%c568, %c0_213] : memref<608x128xf32, #tpu.memory_space<vmem>>, vector<32x32xf32>
    %cst_214 = arith.constant dense<0.000000e+00> : vector<128x32xf32>
    %629 = tpu.matmul %627, %628, %cst_214 {dimension_numbers = #tpu.dot_dimension_numbers<[1], [0], [0], [1], [0, 0, 1, 1], [], []>} : vector<128x32xf32>, vector<32x32xf32>, vector<128x32xf32> -> vector<128x32xf32>
    %c600 = arith.constant 600 : index
    %c0_215 = arith.constant 0 : index
    %630 = vector.load %arg1[%c600, %c0_215] : memref<608x128xf32, #tpu.memory_space<vmem>>, vector<1x32xf32>
    %631 = vector.broadcast %630 : vector<1x32xf32> to vector<128x32xf32>
    %632 = arith.addf %629, %631 : vector<128x32xf32>
    %633 = vector.shape_cast %632 : vector<128x32xf32> to vector<2x64x32xf32>
    %cst_216 = arith.constant dense<0.000000e+00> : vector<2x32xf32>
    %634 = vector.multi_reduction <add>, %633, %cst_216 [1] : vector<2x64x32xf32> to vector<2x32xf32>
    %635 = vector.shape_cast %634 : vector<2x32xf32> to vector<2x1x32xf32>
    %cst_217 = arith.constant 6.400000e+01 : f32
    %636 = vector.broadcast %cst_217 : f32 to vector<2x1x32xf32>
    %637 = arith.divf %635, %636 : vector<2x1x32xf32>
    %638 = vector.broadcast %637 : vector<2x1x32xf32> to vector<2x64x32xf32>
    %639 = arith.subf %633, %638 : vector<2x64x32xf32>
    %640 = arith.mulf %639, %639 : vector<2x64x32xf32>
    %cst_218 = arith.constant dense<0.000000e+00> : vector<2x32xf32>
    %641 = vector.multi_reduction <add>, %640, %cst_218 [1] : vector<2x64x32xf32> to vector<2x32xf32>
    %642 = vector.shape_cast %641 : vector<2x32xf32> to vector<2x1x32xf32>
    %cst_219 = arith.constant 6.300000e+01 : f32
    %643 = vector.broadcast %cst_219 : f32 to vector<2x1x32xf32>
    %644 = arith.divf %642, %643 : vector<2x1x32xf32>
    %cst_220 = arith.constant 1.000000e-03 : f32
    %645 = vector.broadcast %cst_220 : f32 to vector<2x1x32xf32>
    %646 = arith.addf %644, %645 : vector<2x1x32xf32>
    %647 = math.rsqrt %646 : vector<2x1x32xf32>
    %648 = vector.broadcast %647 : vector<2x1x32xf32> to vector<2x64x32xf32>
    %649 = arith.mulf %639, %648 : vector<2x64x32xf32>
    %650 = vector.shape_cast %649 : vector<2x64x32xf32> to vector<128x32xf32>
    %cst_221 = arith.constant dense<0.000000e+00> : vector<32xf32>
    %651 = vector.multi_reduction <add>, %650, %cst_221 [0] : vector<128x32xf32> to vector<32xf32>
    %652 = vector.shape_cast %651 : vector<32xf32> to vector<1x32xf32>
    %cst_222 = arith.constant 1.280000e+02 : f32
    %653 = vector.broadcast %cst_222 : f32 to vector<1x32xf32>
    %654 = arith.divf %652, %653 : vector<1x32xf32>
    %655 = vector.broadcast %654 : vector<1x32xf32> to vector<128x32xf32>
    %656 = arith.subf %650, %655 : vector<128x32xf32>
    %657 = arith.mulf %656, %656 : vector<128x32xf32>
    %cst_223 = arith.constant dense<0.000000e+00> : vector<32xf32>
    %658 = vector.multi_reduction <add>, %657, %cst_223 [0] : vector<128x32xf32> to vector<32xf32>
    %659 = vector.shape_cast %658 : vector<32xf32> to vector<1x32xf32>
    %cst_224 = arith.constant 1.280000e+02 : f32
    %660 = vector.broadcast %cst_224 : f32 to vector<1x32xf32>
    %661 = arith.divf %659, %660 : vector<1x32xf32>
    %cst_225 = arith.constant 9.99999974E-6 : f32
    %662 = vector.broadcast %cst_225 : f32 to vector<1x32xf32>
    %663 = arith.addf %661, %662 : vector<1x32xf32>
    %664 = math.rsqrt %663 : vector<1x32xf32>
    %665 = vector.broadcast %664 : vector<1x32xf32> to vector<128x32xf32>
    %666 = arith.mulf %656, %665 : vector<128x32xf32>
    %cst_226 = arith.constant 0.000000e+00 : f32
    %667 = vector.broadcast %cst_226 : f32 to vector<128x32xf32>
    %668 = arith.maximumf %666, %667 : vector<128x32xf32>
    %c0_227 = arith.constant 0 : index
    %c0_228 = arith.constant 0 : index
    %669 = vector.load %arg2[%c0_227, %c0_228] : memref<128x32xf32, #tpu.memory_space<vmem>>, vector<128x32xf32>
    tpu.vector_store %arg2[%c0_227, %c0_228], %668 {strides = array<i32>} : memref<128x32xf32, #tpu.memory_space<vmem>>, vector<128x32xf32>,
    return
  }
}

</mosaic_0001>

<llo_original>
// kernel: oanet_forward.1
$region0: #{oanet_forward.1}
  #allocation0 [shape = 'u32[]', space=smem, size = 0x4, offset = 0x4, fixed_abs, tag = 'smem constant byte address 0x4 - core index']
  #allocation1 [shape = 'u32[144,128]{1,0:T(1,128)}', space=vmem, size = 0x12000, scoped, tag = 'internal scratch']
  %s0 = inlined_call_operand.vmem [shape: f32[128,8], index: 0, kind: input, shape index: {}]
  %s1 = inlined_call_operand.vmem [shape: f32[608,128], index: 1, kind: input, shape index: {}]
  %s2 = inlined_call_operand.vmem [shape: f32[128,32], index: 2, kind: output, shape index: {}]
  %s3 = sld [smem:[#allocation0]]
  $region18: #{oanet_forward.1} parent=0
    _
  %s5 = ssub.s32 1, %s3
  %s6 = scalar_select 0, %s5, %s3
  // Predicated region
  $region2: #{oanet_forward.1} parent=0 // pred_check
    _
  $region3: #{oanet_forward.1} parent=0 // pred_check_branch
    %8 = sbr.rel (0) target = $region5
  $region4: #{oanet_forward.1} parent=0 // pred_region
    _
  $region5: #{oanet_forward.1} parent=0 // pred_fallthru
    _
  // Predicated region
  $region6: #{oanet_forward.1} parent=0 // pred_check
    _
  $region7: #{oanet_forward.1} parent=0 // pred_check_branch
    %10 = sbr.rel (0) target = $region9
  $region8: #{oanet_forward.1} parent=0 // pred_region
    _
  $region9: #{oanet_forward.1} parent=0 // pred_fallthru
    _
  %v11 = vld [vmem:[%s0] sm:$0xff]
  %v12 = vld [vmem:[%s0 + $0x8] sm:$0xff]
  %v13 = vld [vmem:[%s0 + $0x10] sm:$0xff]
  %v14 = vld [vmem:[%s0 + $0x18] sm:$0xff]
  %v15 = vld [vmem:[%s0 + $0x20] sm:$0xff]
  %v16 = vld [vmem:[%s0 + $0x28] sm:$0xff]
  %v17 = vld [vmem:[%s0 + $0x30] sm:$0xff]
  %v18 = vld [vmem:[%s0 + $0x38] sm:$0xff]
  %v19 = vld [vmem:[%s0 + $0x40] sm:$0xff]
  %v20 = vld [vmem:[%s0 + $0x48] sm:$0xff]
  %v21 = vld [vmem:[%s0 + $0x50] sm:$0xff]
  %v22 = vld [vmem:[%s0 + $0x58] sm:$0xff]
  %v23 = vld [vmem:[%s0 + $0x60] sm:$0xff]
  %v24 = vld [vmem:[%s0 + $0x68] sm:$0xff]
  %v25 = vld [vmem:[%s0 + $0x70] sm:$0xff]
  %v26 = vld [vmem:[%s0 + $0x78] sm:$0xff]
  %v27 = vld [vmem:[%s1] sm:$0xff]
  %v28 = vld [vmem:[%s1 + $0x8] sm:$0x1]
  %v29 = vlaneseq
  %v30 = vshrl.u32 %v29, 7
  %v31 = vsub.s32 0, %v30
  %v32 = vrot.slane %v28, %v31
  %vm33 = vcmask 64512
  %v35 = vsel %vm33, %v11, 0
  %v38 = vsel %vm33, %v12, 0
  %v41 = vsel %vm33, %v13, 0
  %v44 = vsel %vm33, %v14, 0
  %v47 = vsel %vm33, %v15, 0
  %v50 = vsel %vm33, %v16, 0
  %v53 = vsel %vm33, %v17, 0
  %v56 = vsel %vm33, %v18, 0
  %v59 = vsel %vm33, %v19, 0
  %v62 = vsel %vm33, %v20, 0
  %v65 = vsel %vm33, %v21, 0
  %v68 = vsel %vm33, %v22, 0
  %v71 = vsel %vm33, %v23, 0
  %v74 = vsel %vm33, %v24, 0
  %v77 = vsel %vm33, %v25, 0
  %v80 = vsel %vm33, %v26, 0
  %82 = vmatprep.subr.mxu0 0.0
  %83 = vmatpush1.msra.mxu0 %v27
  %84 = vmatprep.subr.mxu0 0.0
  %85 = vmatpush1.msra.mxu0 0.0
  %86 = vmatprep.subr.mxu0 0.0
  %87 = vmatpush1.msra.mxu0 0.0
  %88 = vmatprep.subr.mxu0 0.0
  %89 = vmatpush1.msra.mxu0 0.0
  %90 = vmatprep.subr.mxu0 0.0
  %91 = vmatpush1.msra.mxu0 0.0
  %92 = vmatprep.subr.mxu0 0.0
  %93 = vmatpush1.msra.mxu0 0.0
  %94 = vmatprep.subr.mxu0 0.0
  %95 = vmatpush1.msra.mxu0 0.0
  %96 = vmatprep.subr.mxu0 0.0
  %97 = vmatpush1.msra.mxu0 0.0
  %98 = vmatprep.subr.mxu0 0.0
  %99 = vmatpush1.msra.mxu0 0.0
  %100 = vmatprep.subr.mxu0 0.0
  %101 = vmatpush1.msra.mxu0 0.0
  %102 = vmatprep.subr.mxu0 0.0
  %103 = vmatpush1.msra.mxu0 0.0
  %104 = vmatprep.subr.mxu0 0.0
  %105 = vmatpush1.msra.mxu0 0.0
  %106 = vmatprep.subr.mxu0 0.0
  %107 = vmatpush1.msra.mxu0 0.0
  %108 = vmatprep.subr.mxu0 0.0
  %109 = vmatpush1.msra.mxu0 0.0
  %110 = vmatprep.subr.mxu0 0.0
  %111 = vmatpush1.msra.mxu0 0.0
  %112 = vmatprep.subr.mxu0 0.0
  %113 = vmatpush1.msra.mxu0 0.0
  %114 = vmatprep.subr.mxu0 0.0
  %115 = vmatpush1.msra.mxu0 0.0
  %116 = vmatprep.subr.mxu0 0.0
  %117 = vmatpush1.msra.mxu0 0.0
  %118 = vmatprep.subr.mxu0 0.0
  %119 = vmatpush1.msra.mxu0 0.0
  %120 = vmatprep.subr.mxu0 0.0
  %121 = vmatpush1.msra.mxu0 0.0
  %122 = vmatprep.subr.mxu0 0.0
  %123 = vmatpush1.msra.mxu0 0.0
  %124 = vmatprep.subr.mxu0 0.0
  %125 = vmatpush1.msra.mxu0 0.0
  %126 = vmatprep.subr.mxu0 0.0
  %127 = vmatpush1.msra.mxu0 0.0
  %128 = vmatprep.subr.mxu0 0.0
  %129 = vmatpush1.msra.mxu0 0.0
  %130 = vmatprep.subr.mxu0 0.0
  %131 = vmatpush1.msra.mxu0 0.0
  %132 = vmatprep.subr.mxu0 0.0
  %133 = vmatpush1.msra.mxu0 0.0
  %134 = vmatprep.subr.mxu0 0.0
  %135 = vmatpush1.msra.mxu0 0.0
  %136 = vmatprep.subr.mxu0 0.0
  %137 = vmatpush1.msra.mxu0 0.0
  %138 = vmatprep.subr.mxu0 0.0
  %139 = vmatpush1.msra.mxu0 0.0
  %140 = vmatprep.subr.mxu0 0.0
  %141 = vmatpush1.msra.mxu0 0.0
  %142 = vmatprep.subr.mxu0 0.0
  %143 = vmatpush1.msra.mxu0 0.0
  %144 = vmatprep.subr.mxu0 0.0
  %145 = vmatpush1.msra.mxu0 0.0
  %146 = vmatprep.mubr.f32.mxu0 0.0
  %147 = vmatmul.mubr.f32.gmra.mrb[0].mxu0 %v35
  %v148 = vpop.f32.mrb[0].mxu0
  %v149 = vadd.f32 %v32, %v148
  %v150 = vpop.f32.mrb[0].mxu0
  %151 = vmatprep.mubr.f32.mxu0 0.0
  %152 = vmatmul.mubr.f32.gmra.mrb[0].mxu0 %v38
  %v153 = vpop.f32.mrb[0].mxu0
  %v154 = vadd.f32 %v32, %v153
  %v155 = vpop.f32.mrb[0].mxu0
  %156 = vmatprep.mubr.f32.mxu0 0.0
  %157 = vmatmul.mubr.f32.gmra.mrb[0].mxu0 %v41
  %v158 = vpop.f32.mrb[0].mxu0
  %v159 = vadd.f32 %v32, %v158
  %v160 = vpop.f32.mrb[0].mxu0
  %161 = vmatprep.mubr.f32.mxu0 0.0
  %162 = vmatmul.mubr.f32.gmra.mrb[0].mxu0 %v44
  %v163 = vpop.f32.mrb[0].mxu0
  %v164 = vadd.f32 %v32, %v163
  %v165 = vpop.f32.mrb[0].mxu0
  %166 = vmatprep.mubr.f32.mxu0 0.0
  %167 = vmatmul.mubr.f32.gmra.mrb[0].mxu0 %v47
  %v168 = vpop.f32.mrb[0].mxu0
  %v169 = vadd.f32 %v32, %v168
  %v170 = vpop.f32.mrb[0].mxu0
  %171 = vmatprep.mubr.f32.mxu0 0.0
  %172 = vmatmul.mubr.f32.gmra.mrb[0].mxu0 %v50
  %v173 = vpop.f32.mrb[0].mxu0
  %v174 = vadd.f32 %v32, %v173
  %v175 = vpop.f32.mrb[0].mxu0
  %176 = vmatprep.mubr.f32.mxu0 0.0
  %177 = vmatmul.mubr.f32.gmra.mrb[0].mxu0 %v53
  %v178 = vpop.f32.mrb[0].mxu0
  %v179 = vadd.f32 %v32, %v178
  %v180 = vpop.f32.mrb[0].mxu0
  %181 = vmatprep.mubr.f32.mxu0 0.0
  %182 = vmatmul.mubr.f32.gmra.mrb[0].mxu0 %v56
  %v183 = vpop.f32.mrb[0].mxu0
  %v184 = vadd.f32 %v32, %v183
  %v185 = vpop.f32.mrb[0].mxu0
  %186 = vmatprep.mubr.f32.mxu0 0.0
  %187 = vmatmul.mubr.f32.gmra.mrb[0].mxu0 %v59
  %v188 = vpop.f32.mrb[0].mxu0
  %v189 = vadd.f32 %v32, %v188
  %v190 = vpop.f32.mrb[0].mxu0
  %191 = vmatprep.mubr.f32.mxu0 0.0
  %192 = vmatmul.mubr.f32.gmra.mrb[0].mxu0 %v62
  %v193 = vpop.f32.mrb[0].mxu0
  %v194 = vadd.f32 %v32, %v193
  %v195 = vpop.f32.mrb[0].mxu0
  %196 = vmatprep.mubr.f32.mxu0 0.0
  %197 = vmatmul.mubr.f32.gmra.mrb[0].mxu0 %v65
  %v198 = vpop.f32.mrb[0].mxu0
  %v199 = vadd.f32 %v32, %v198
  %v200 = vpop.f32.mrb[0].mxu0
  %201 = vmatprep.mubr.f32.mxu0 0.0
  %202 = vmatmul.mubr.f32.gmra.mrb[0].mxu0 %v68
  %v203 = vpop.f32.mrb[0].mxu0
  %v204 = vadd.f32 %v32, %v203
  %v205 = vpop.f32.mrb[0].mxu0
  %206 = vmatprep.mubr.f32.mxu0 0.0
  %207 = vmatmul.mubr.f32.gmra.mrb[0].mxu0 %v71
  %v208 = vpop.f32.mrb[0].mxu0
  %v209 = vadd.f32 %v32, %v208
  %v210 = vpop.f32.mrb[0].mxu0
  %211 = vmatprep.mubr.f32.mxu0 0.0
  %212 = vmatmul.mubr.f32.gmra.mrb[0].mxu0 %v74
  %v213 = vpop.f32.mrb[0].mxu0
  %v214 = vadd.f32 %v32, %v213
  %v215 = vpop.f32.mrb[0].mxu0
  %216 = vmatprep.mubr.f32.mxu0 0.0
  %217 = vmatmul.mubr.f32.gmra.mrb[0].mxu0 %v77
  %v218 = vpop.f32.mrb[0].mxu0
  %v219 = vadd.f32 %v32, %v218
  %v220 = vpop.f32.mrb[0].mxu0
  %221 = vmatprep.mubr.f32.mxu0 0.0
  %222 = vmatmul.mubr.f32.gmra.mrb[0].mxu0 %v80
  %v223 = vpop.f32.mrb[0].mxu0
  %v224 = vadd.f32 %v32, %v223
  %v225 = vpop.f32.mrb[0].mxu0
  %226 = vdwg.mxu0
  %v227 = vld [vmem:[%s1 + $0x10] sm:$0xff]
  %v228 = vld [vmem:[%s1 + $0x18] sm:$0xff]
  %v229 = vld [vmem:[%s1 + $0x20] sm:$0xff]
  %v230 = vld [vmem:[%s1 + $0x28] sm:$0xff]
  %v231 = vld [vmem:[%s1 + $0x30] sm:$0x1]
  %v232 = vlaneseq
  %v233 = vshrl.u32 %v232, 7
  %v234 = vsub.s32 0, %v233
  %v235 = vrot.slane %v231, %v234
  %vm236 = vcmask 261120
  %v238 = vsel %vm236, %v149, 0
  %v241 = vsel %vm236, %v154, 0
  %v244 = vsel %vm236, %v159, 0
  %v247 = vsel %vm236, %v164, 0
  %v250 = vsel %vm236, %v169, 0
  %v253 = vsel %vm236, %v174, 0
  %v256 = vsel %vm236, %v179, 0
  %v259 = vsel %vm236, %v184, 0
  %v262 = vsel %vm236, %v189, 0
  %v265 = vsel %vm236, %v194, 0
  %v268 = vsel %vm236, %v199, 0
  %v271 = vsel %vm236, %v204, 0
  %v274 = vsel %vm236, %v209, 0
  %v277 = vsel %vm236, %v214, 0
  %v280 = vsel %vm236, %v219, 0
  %v283 = vsel %vm236, %v224, 0
  %285 = vmatprep.subr.mxu0 0.0
  %286 = vmatpush1.msra.mxu0 %v227
  %287 = vmatprep.subr.mxu0 0.0
  %288 = vmatpush1.msra.mxu0 %v228
  %289 = vmatprep.subr.mxu0 0.0
  %290 = vmatpush1.msra.mxu0 %v229
  %291 = vmatprep.subr.mxu0 0.0
  %292 = vmatpush1.msra.mxu0 %v230
  %293 = vmatprep.subr.mxu0 0.0
  %294 = vmatpush1.msra.mxu0 0.0
  %295 = vmatprep.subr.mxu0 0.0
  %296 = vmatpush1.msra.mxu0 0.0
  %297 = vmatprep.subr.mxu0 0.0
  %298 = vmatpush1.msra.mxu0 0.0
  %299 = vmatprep.subr.mxu0 0.0
  %300 = vmatpush1.msra.mxu0 0.0
  %301 = vmatprep.subr.mxu0 0.0
  %302 = vmatpush1.msra.mxu0 0.0
  %303 = vmatprep.subr.mxu0 0.0
  %304 = vmatpush1.msra.mxu0 0.0
  %305 = vmatprep.subr.mxu0 0.0
  %306 = vmatpush1.msra.mxu0 0.0
  %307 = vmatprep.subr.mxu0 0.0
  %308 = vmatpush1.msra.mxu0 0.0
  %309 = vmatprep.subr.mxu0 0.0
  %310 = vmatpush1.msra.mxu0 0.0
  %311 = vmatprep.subr.mxu0 0.0
  %312 = vmatpush1.msra.mxu0 0.0
  %313 = vmatprep.subr.mxu0 0.0
  %314 = vmatpush1.msra.mxu0 0.0
  %315 = vmatprep.subr.mxu0 0.0
  %316 = vmatpush1.msra.mxu0 0.0
  %317 = vmatprep.subr.mxu0 0.0
  %318 = vmatpush1.msra.mxu0 0.0
  %319 = vmatprep.subr.mxu0 0.0
  %320 = vmatpush1.msra.mxu0 0.0
  %321 = vmatprep.subr.mxu0 0.0
  %322 = vmatpush1.msra.mxu0 0.0
  %323 = vmatprep.subr.mxu0 0.0
  %324 = vmatpush1.msra.mxu0 0.0
  %325 = vmatprep.subr.mxu0 0.0
  %326 = vmatpush1.msra.mxu0 0.0
  %327 = vmatprep.subr.mxu0 0.0
  %328 = vmatpush1.msra.mxu0 0.0
  %329 = vmatprep.subr.mxu0 0.0
  %330 = vmatpush1.msra.mxu0 0.0
  %331 = vmatprep.subr.mxu0 0.0
  %332 = vmatpush1.msra.mxu0 0.0
  %333 = vmatprep.subr.mxu0 0.0
  %334 = vmatpush1.msra.mxu0 0.0
  %335 = vmatprep.subr.mxu0 0.0
  %336 = vmatpush1.msra.mxu0 0.0
  %337 = vmatprep.subr.mxu0 0.0
  %338 = vmatpush1.msra.mxu0 0.0
  %339 = vmatprep.subr.mxu0 0.0
  %340 = vmatpush1.msra.mxu0 0.0
  %341 = vmatprep.subr.mxu0 0.0
  %342 = vmatpush1.msra.mxu0 0.0
  %343 = vmatprep.subr.mxu0 0.0
  %344 = vmatpush1.msra.mxu0 0.0
  %345 = vmatprep.subr.mxu0 0.0
  %346 = vmatpush1.msra.mxu0 0.0
  %347 = vmatprep.subr.mxu0 0.0
  %348 = vmatpush1.msra.mxu0 0.0
  %349 = vmatprep.mubr.f32.mxu0 0.0
  %350 = vmatmul.mubr.f32.gmra.mrb[0].mxu0 %v238
  %v351 = vpop.f32.mrb[0].mxu0
  %v352 = vadd.f32 %v235, %v351
  %v353 = vpop.f32.mrb[0].mxu0
  %354 = vmatprep.mubr.f32.mxu0 0.0
  %355 = vmatmul.mubr.f32.gmra.mrb[0].mxu0 %v241
  %v356 = vpop.f32.mrb[0].mxu0
  %v357 = vadd.f32 %v235, %v356
  %v358 = vpop.f32.mrb[0].mxu0
  %359 = vmatprep.mubr.f32.mxu0 0.0
  %360 = vmatmul.mubr.f32.gmra.mrb[0].mxu0 %v244
  %v361 = vpop.f32.mrb[0].mxu0
  %v362 = vadd.f32 %v235, %v361
  %v363 = vpop.f32.mrb[0].mxu0
  %364 = vmatprep.mubr.f32.mxu0 0.0
  %365 = vmatmul.mubr.f32.gmra.mrb[0].mxu0 %v247
  %v366 = vpop.f32.mrb[0].mxu0
  %v367 = vadd.f32 %v235, %v366
  %v368 = vpop.f32.mrb[0].mxu0
  %369 = vmatprep.mubr.f32.mxu0 0.0
  %370 = vmatmul.mubr.f32.gmra.mrb[0].mxu0 %v250
  %v371 = vpop.f32.mrb[0].mxu0
  %v372 = vadd.f32 %v235, %v371
  %v373 = vpop.f32.mrb[0].mxu0
  %374 = vmatprep.mubr.f32.mxu0 0.0
  %375 = vmatmul.mubr.f32.gmra.mrb[0].mxu0 %v253
  %v376 = vpop.f32.mrb[0].mxu0
  %v377 = vadd.f32 %v235, %v376
  %v378 = vpop.f32.mrb[0].mxu0
  %379 = vmatprep.mubr.f32.mxu0 0.0
  %380 = vmatmul.mubr.f32.gmra.mrb[0].mxu0 %v256
  %v381 = vpop.f32.mrb[0].mxu0
  %v382 = vadd.f32 %v235, %v381
  %v383 = vpop.f32.mrb[0].mxu0
  %384 = vmatprep.mubr.f32.mxu0 0.0
  %385 = vmatmul.mubr.f32.gmra.mrb[0].mxu0 %v259
  %v386 = vpop.f32.mrb[0].mxu0
  %v387 = vadd.f32 %v235, %v386
  %v388 = vpop.f32.mrb[0].mxu0
  %389 = vmatprep.mubr.f32.mxu0 0.0
  %390 = vmatmul.mubr.f32.gmra.mrb[0].mxu0 %v262
  %v391 = vpop.f32.mrb[0].mxu0
  %v392 = vadd.f32 %v235, %v391
  %v393 = vpop.f32.mrb[0].mxu0
  %394 = vmatprep.mubr.f32.mxu0 0.0
  %395 = vmatmul.mubr.f32.gmra.mrb[0].mxu0 %v265
  %v396 = vpop.f32.mrb[0].mxu0
  %v397 = vadd.f32 %v235, %v396
  %v398 = vpop.f32.mrb[0].mxu0
  %399 = vmatprep.mubr.f32.mxu0 0.0
  %400 = vmatmul.mubr.f32.gmra.mrb[0].mxu0 %v268
  %v401 = vpop.f32.mrb[0].mxu0
  %v402 = vadd.f32 %v235, %v401
  %v403 = vpop.f32.mrb[0].mxu0
  %404 = vmatprep.mubr.f32.mxu0 0.0
  %405 = vmatmul.mubr.f32.gmra.mrb[0].mxu0 %v271
  %v406 = vpop.f32.mrb[0].mxu0
  %v407 = vadd.f32 %v235, %v406
  %v408 = vpop.f32.mrb[0].mxu0
  %409 = vmatprep.mubr.f32.mxu0 0.0
  %410 = vmatmul.mubr.f32.gmra.mrb[0].mxu0 %v274
  %v411 = vpop.f32.mrb[0].mxu0
  %v412 = vadd.f32 %v235, %v411
  %v413 = vpop.f32.mrb[0].mxu0
  %414 = vmatprep.mubr.f32.mxu0 0.0
  %415 = vmatmul.mubr.f32.gmra.mrb[0].mxu0 %v277
  %v416 = vpop.f32.mrb[0].mxu0
  %v417 = vadd.f32 %v235, %v416
  %v418 = vpop.f32.mrb[0].mxu0
  %419 = vmatprep.mubr.f32.mxu0 0.0
  %420 = vmatmul.mubr.f32.gmra.mrb[0].mxu0 %v280
  %v421 = vpop.f32.mrb[0].mxu0
  %v422 = vadd.f32 %v235, %v421
  %v423 = vpop.f32.mrb[0].mxu0
  %424 = vmatprep.mubr.f32.mxu0 0.0
  %425 = vmatmul.mubr.f32.gmra.mrb[0].mxu0 %v283
  %v426 = vpop.f32.mrb[0].mxu0
  %v427 = vadd.f32 %v235, %v426
  %v428 = vpop.f32.mrb[0].mxu0
  %429 = vdwg.mxu0
  %v430 = vsel %vm236, %v352, 0.0
  %v431 = vsel %vm236, %v357, 0.0
  %v432 = vadd.f32 %v430, %v431
  %v433 = vsel %vm236, %v362, 0.0
  %v434 = vadd.f32 %v432, %v433
  %v435 = vsel %vm236, %v367, 0.0
  %v436 = vadd.f32 %v434, %v435
  %v437 = vsel %vm236, %v372, 0.0
  %v438 = vadd.f32 %v436, %v437
  %v439 = vsel %vm236, %v377, 0.0
  %v440 = vadd.f32 %v438, %v439
  %v441 = vsel %vm236, %v382, 0.0
  %v442 = vadd.f32 %v440, %v441
  %v443 = vsel %vm236, %v387, 0.0
  %v444 = vadd.f32 %v442, %v443
  %v445 = vrot.slane %v444, 4
  %v446 = vadd.f32 %v444, %v445
  %v447 = vrot.slane %v446, 2
  %v448 = vadd.f32 %v446, %v447
  %v449 = vrot.slane %v448, 1
  %v450 = vadd.f32 %v448, %v449
  %v451 = vsel %vm236, %v392, 0.0
  %v452 = vsel %vm236, %v397, 0.0
  %v453 = vadd.f32 %v451, %v452
  %v454 = vsel %vm236, %v402, 0.0
  %v455 = vadd.f32 %v453, %v454
  %v456 = vsel %vm236, %v407, 0.0
  %v457 = vadd.f32 %v455, %v456
  %v458 = vsel %vm236, %v412, 0.0
  %v459 = vadd.f32 %v457, %v458
  %v460 = vsel %vm236, %v417, 0.0
  %v461 = vadd.f32 %v459, %v460
  %v462 = vsel %vm236, %v422, 0.0
  %v463 = vadd.f32 %v461, %v462
  %v464 = vsel %vm236, %v427, 0.0
  %v465 = vadd.f32 %v463, %v464
  %v466 = vrot.slane %v465, 4
  %v467 = vadd.f32 %v465, %v466
  %v468 = vrot.slane %v467, 2
  %v469 = vadd.f32 %v467, %v468
  %v470 = vrot.slane %v469, 1
  %v471 = vadd.f32 %v469, %v470
  %v472 = vrcp.pop 64.0
  %v473 = vmul.f32 %v450, %v472
  %v474 = vmul.f32 %v471, %v472
  %v475 = vsub.f32 %v352, %v473
  %v476 = vsub.f32 %v357, %v473
  %v477 = vsub.f32 %v362, %v473
  %v478 = vsub.f32 %v367, %v473
  %v479 = vsub.f32 %v372, %v473
  %v480 = vsub.f32 %v377, %v473
  %v481 = vsub.f32 %v382, %v473
  %v482 = vsub.f32 %v387, %v473
  %v483 = vsub.f32 %v392, %v474
  %v484 = vsub.f32 %v397, %v474
  %v485 = vsub.f32 %v402, %v474
  %v486 = vsub.f32 %v407, %v474
  %v487 = vsub.f32 %v412, %v474
  %v488 = vsub.f32 %v417, %v474
  %v489 = vsub.f32 %v422, %v474
  %v490 = vsub.f32 %v427, %v474
  %v491 = vmul.f32 %v475, %v475
  %v492 = vmul.f32 %v476, %v476
  %v493 = vmul.f32 %v477, %v477
  %v494 = vmul.f32 %v478, %v478
  %v495 = vmul.f32 %v479, %v479
  %v496 = vmul.f32 %v480, %v480
  %v497 = vmul.f32 %v481, %v481
  %v498 = vmul.f32 %v482, %v482
  %v499 = vmul.f32 %v483, %v483
  %v500 = vmul.f32 %v484, %v484
  %v501 = vmul.f32 %v485, %v485
  %v502 = vmul.f32 %v486, %v486
  %v503 = vmul.f32 %v487, %v487
  %v504 = vmul.f32 %v488, %v488
  %v505 = vmul.f32 %v489, %v489
  %v506 = vmul.f32 %v490, %v490
  %v507 = vsel %vm236, %v491, 0.0
  %v508 = vsel %vm236, %v492, 0.0
  %v509 = vadd.f32 %v507, %v508
  %v510 = vsel %vm236, %v493, 0.0
  %v511 = vadd.f32 %v509, %v510
  %v512 = vsel %vm236, %v494, 0.0
  %v513 = vadd.f32 %v511, %v512
  %v514 = vsel %vm236, %v495, 0.0
  %v515 = vadd.f32 %v513, %v514
  %v516 = vsel %vm236, %v496, 0.0
  %v517 = vadd.f32 %v515, %v516
  %v518 = vsel %vm236, %v497, 0.0
  %v519 = vadd.f32 %v517, %v518
  %v520 = vsel %vm236, %v498, 0.0
  %v521 = vadd.f32 %v519, %v520
  %v522 = vrot.slane %v521, 4
  %v523 = vadd.f32 %v521, %v522
  %v524 = vrot.slane %v523, 2
  %v525 = vadd.f32 %v523, %v524
  %v526 = vrot.slane %v525, 1
  %v527 = vadd.f32 %v525, %v526
  %v528 = vsel %vm236, %v499, 0.0
  %v529 = vsel %vm236, %v500, 0.0
  %v530 = vadd.f32 %v528, %v529
  %v531 = vsel %vm236, %v501, 0.0
  %v532 = vadd.f32 %v530, %v531
  %v533 = vsel %vm236, %v502, 0.0
  %v534 = vadd.f32 %v532, %v533
  %v535 = vsel %vm236, %v503, 0.0
  %v536 = vadd.f32 %v534, %v535
  %v537 = vsel %vm236, %v504, 0.0
  %v538 = vadd.f32 %v536, %v537
  %v539 = vsel %vm236, %v505, 0.0
  %v540 = vadd.f32 %v538, %v539
  %v541 = vsel %vm236, %v506, 0.0
  %v542 = vadd.f32 %v540, %v541
  %v543 = vrot.slane %v542, 4
  %v544 = vadd.f32 %v542, %v543
  %v545 = vrot.slane %v544, 2
  %v546 = vadd.f32 %v544, %v545
  %v547 = vrot.slane %v546, 1
  %v548 = vadd.f32 %v546, %v547
  %v549 = vrcp.pop 63.0
  %v550 = vmul.f32 %v527, %v549
  %v551 = vmul.f32 %v548, %v549
  %v552 = vadd.f32 %v550, 0.001
  %v553 = vadd.f32 %v551, 0.001
  %v554 = vrsqrt.pop %v552
  %v555 = vrsqrt.pop %v553
  %v556 = vmul.f32 %v475, %v554
  %v557 = vmul.f32 %v476, %v554
  %v558 = vmul.f32 %v477, %v554
  %v559 = vmul.f32 %v478, %v554
  %v560 = vmul.f32 %v479, %v554
  %v561 = vmul.f32 %v480, %v554
  %v562 = vmul.f32 %v481, %v554
  %v563 = vmul.f32 %v482, %v554
  %v564 = vmul.f32 %v483, %v555
  %v565 = vmul.f32 %v484, %v555
  %v566 = vmul.f32 %v485, %v555
  %v567 = vmul.f32 %v486, %v555
  %v568 = vmul.f32 %v487, %v555
  %v569 = vmul.f32 %v488, %v555
  %v570 = vmul.f32 %v489, %v555
  %v571 = vmul.f32 %v490, %v555
  %v572 = vsel %vm236, %v556, 0.0
  %v573 = vsel %vm236, %v557, 0.0
  %v574 = vadd.f32 %v572, %v573
  %v575 = vsel %vm236, %v558, 0.0
  %v576 = vadd.f32 %v574, %v575
  %v577 = vsel %vm236, %v559, 0.0
  %v578 = vadd.f32 %v576, %v577
  %v579 = vsel %vm236, %v560, 0.0
  %v580 = vadd.f32 %v578, %v579
  %v581 = vsel %vm236, %v561, 0.0
  %v582 = vadd.f32 %v580, %v581
  %v583 = vsel %vm236, %v562, 0.0
  %v584 = vadd.f32 %v582, %v583
  %v585 = vsel %vm236, %v563, 0.0
  %v586 = vadd.f32 %v584, %v585
  %v587 = vsel %vm236, %v564, 0.0
  %v588 = vadd.f32 %v586, %v587
  %v589 = vsel %vm236, %v565, 0.0
  %v590 = vadd.f32 %v588, %v589
  %v591 = vsel %vm236, %v566, 0.0
  %v592 = vadd.f32 %v590, %v591
  %v593 = vsel %vm236, %v567, 0.0
  %v594 = vadd.f32 %v592, %v593
  %v595 = vsel %vm236, %v568, 0.0
  %v596 = vadd.f32 %v594, %v595
  %v597 = vsel %vm236, %v569, 0.0
  %v598 = vadd.f32 %v596, %v597
  %v599 = vsel %vm236, %v570, 0.0
  %v600 = vadd.f32 %v598, %v599
  %v601 = vsel %vm236, %v571, 0.0
  %v602 = vadd.f32 %v600, %v601
  %v603 = vrot.slane %v602, 4
  %v604 = vadd.f32 %v602, %v603
  %v605 = vrot.slane %v604, 2
  %v606 = vadd.f32 %v604, %v605
  %v607 = vrot.slane %v606, 1
  %v608 = vadd.f32 %v606, %v607
  %v609 = vrcp.pop 128.0
  %v610 = vmul.f32 %v608, %v609
  %v611 = vsub.f32 %v556, %v610
  %v612 = vsub.f32 %v557, %v610
  %v613 = vsub.f32 %v558, %v610
  %v614 = vsub.f32 %v559, %v610
  %v615 = vsub.f32 %v560, %v610
  %v616 = vsub.f32 %v561, %v610
  %v617 = vsub.f32 %v562, %v610
  %v618 = vsub.f32 %v563, %v610
  %v619 = vsub.f32 %v564, %v610
  %v620 = vsub.f32 %v565, %v610
  %v621 = vsub.f32 %v566, %v610
  %v622 = vsub.f32 %v567, %v610
  %v623 = vsub.f32 %v568, %v610
  %v624 = vsub.f32 %v569, %v610
  %v625 = vsub.f32 %v570, %v610
  %v626 = vsub.f32 %v571, %v610
  %v627 = vmul.f32 %v611, %v611
  %v628 = vmul.f32 %v612, %v612
  %v629 = vmul.f32 %v613, %v613
  %v630 = vmul.f32 %v614, %v614
  %v631 = vmul.f32 %v615, %v615
  %v632 = vmul.f32 %v616, %v616
  %v633 = vmul.f32 %v617, %v617
  %v634 = vmul.f32 %v618, %v618
  %v635 = vmul.f32 %v619, %v619
  %v636 = vmul.f32 %v620, %v620
  %v637 = vmul.f32 %v621, %v621
  %v638 = vmul.f32 %v622, %v622
  %v639 = vmul.f32 %v623, %v623
  %v640 = vmul.f32 %v624, %v624
  %v641 = vmul.f32 %v625, %v625
  %v642 = vmul.f32 %v626, %v626
  %v643 = vsel %vm236, %v627, 0.0
  %v644 = vsel %vm236, %v628, 0.0
  %v645 = vadd.f32 %v643, %v644
  %v646 = vsel %vm236, %v629, 0.0
  %v647 = vadd.f32 %v645, %v646
  %v648 = vsel %vm236, %v630, 0.0
  %v649 = vadd.f32 %v647, %v648
  %v650 = vsel %vm236, %v631, 0.0
  %v651 = vadd.f32 %v649, %v650
  %v652 = vsel %vm236, %v632, 0.0
  %v653 = vadd.f32 %v651, %v652
  %v654 = vsel %vm236, %v633, 0.0
  %v655 = vadd.f32 %v653, %v654
  %v656 = vsel %vm236, %v634, 0.0
  %v657 = vadd.f32 %v655, %v656
  %v658 = vsel %vm236, %v635, 0.0
  %v659 = vadd.f32 %v657, %v658
  %v660 = vsel %vm236, %v636, 0.0
  %v661 = vadd.f32 %v659, %v660
  %v662 = vsel %vm236, %v637, 0.0
  %v663 = vadd.f32 %v661, %v662
  %v664 = vsel %vm236, %v638, 0.0
  %v665 = vadd.f32 %v663, %v664
  %v666 = vsel %vm236, %v639, 0.0
  %v667 = vadd.f32 %v665, %v666
  %v668 = vsel %vm236, %v640, 0.0
  %v669 = vadd.f32 %v667, %v668
  %v670 = vsel %vm236, %v641, 0.0
  %v671 = vadd.f32 %v669, %v670
  %v672 = vsel %vm236, %v642, 0.0
  %v673 = vadd.f32 %v671, %v672
  %v674 = vrot.slane %v673, 4
  %v675 = vadd.f32 %v673, %v674
  %v676 = vrot.slane %v675, 2
  %v677 = vadd.f32 %v675, %v676
  %v678 = vrot.slane %v677, 1
  %v679 = vadd.f32 %v677, %v678
  %v680 = vmul.f32 %v679, %v609
  %v681 = vadd.f32 %v680, 1e-05
  %v682 = vrsqrt.pop %v681
  %v683 = vmul.f32 %v611, %v682
  %v684 = vmul.f32 %v612, %v682
  %v685 = vmul.f32 %v613, %v682
  %v686 = vmul.f32 %v614, %v682
  %v687 = vmul.f32 %v615, %v682
  %v688 = vmul.f32 %v616, %v682
  %v689 = vmul.f32 %v617, %v682
  %v690 = vmul.f32 %v618, %v682
  %v691 = vmul.f32 %v619, %v682
  %v692 = vmul.f32 %v620, %v682
  %v693 = vmul.f32 %v621, %v682
  %v694 = vmul.f32 %v622, %v682
  %v695 = vmul.f32 %v623, %v682
  %v696 = vmul.f32 %v624, %v682
  %v697 = vmul.f32 %v625, %v682
  %v698 = vmul.f32 %v626, %v682
  %v699 = vmax.f32 %v683, 0.0
  %v700 = vmax.f32 %v684, 0.0
  %v701 = vmax.f32 %v685, 0.0
  %v702 = vmax.f32 %v686, 0.0
  %v703 = vmax.f32 %v687, 0.0
  %v704 = vmax.f32 %v688, 0.0
  %v705 = vmax.f32 %v689, 0.0
  %v706 = vmax.f32 %v690, 0.0
  %v707 = vmax.f32 %v691, 0.0
  %v708 = vmax.f32 %v692, 0.0
  %v709 = vmax.f32 %v693, 0.0
  %v710 = vmax.f32 %v694, 0.0
  %v711 = vmax.f32 %v695, 0.0
  %v712 = vmax.f32 %v696, 0.0
  %v713 = vmax.f32 %v697, 0.0
  %v714 = vmax.f32 %v698, 0.0
  %v715 = vld [vmem:[%s1 + $0x38] sm:$0xff]
  %v716 = vld [vmem:[%s1 + $0x40] sm:$0xff]
  %v717 = vld [vmem:[%s1 + $0x48] sm:$0xff]
  %v718 = vld [vmem:[%s1 + $0x50] sm:$0xff]
  %v719 = vld [vmem:[%s1 + $0x58] sm:$0x1]
  %v720 = vlaneseq
  %v721 = vshrl.u32 %v720, 7
  %v722 = vsub.s32 0, %v721
  %v723 = vrot.slane %v719, %v722
  %v725 = vsel %vm236, %v699, 0
  %v728 = vsel %vm236, %v700, 0
  %v731 = vsel %vm236, %v701, 0
  %v734 = vsel %vm236, %v702, 0
  %v737 = vsel %vm236, %v703, 0
  %v740 = vsel %vm236, %v704, 0
  %v743 = vsel %vm236, %v705, 0
  %v746 = vsel %vm236, %v706, 0
  %v749 = vsel %vm236, %v707, 0
  %v752 = vsel %vm236, %v708, 0
  %v755 = vsel %vm236, %v709, 0
  %v758 = vsel %vm236, %v710, 0
  %v761 = vsel %vm236, %v711, 0
  %v764 = vsel %vm236, %v712, 0
  %v767 = vsel %vm236, %v713, 0
  %v770 = vsel %vm236, %v714, 0
  %772 = vmatprep.subr.mxu0 0.0
  %773 = vmatpush1.msra.mxu0 %v715
  %774 = vmatprep.subr.mxu0 0.0
  %775 = vmatpush1.msra.mxu0 %v716
  %776 = vmatprep.subr.mxu0 0.0
  %777 = vmatpush1.msra.mxu0 %v717
  %778 = vmatprep.subr.mxu0 0.0
  %779 = vmatpush1.msra.mxu0 %v718
  %780 = vmatprep.subr.mxu0 0.0
  %781 = vmatpush1.msra.mxu0 0.0
  %782 = vmatprep.subr.mxu0 0.0
  %783 = vmatpush1.msra.mxu0 0.0
  %784 = vmatprep.subr.mxu0 0.0
  %785 = vmatpush1.msra.mxu0 0.0
  %786 = vmatprep.subr.mxu0 0.0
  %787 = vmatpush1.msra.mxu0 0.0
  %788 = vmatprep.subr.mxu0 0.0
  %789 = vmatpush1.msra.mxu0 0.0
  %790 = vmatprep.subr.mxu0 0.0
  %791 = vmatpush1.msra.mxu0 0.0
  %792 = vmatprep.subr.mxu0 0.0
  %793 = vmatpush1.msra.mxu0 0.0
  %794 = vmatprep.subr.mxu0 0.0
  %795 = vmatpush1.msra.mxu0 0.0
  %796 = vmatprep.subr.mxu0 0.0
  %797 = vmatpush1.msra.mxu0 0.0
  %798 = vmatprep.subr.mxu0 0.0
  %799 = vmatpush1.msra.mxu0 0.0
  %800 = vmatprep.subr.mxu0 0.0
  %801 = vmatpush1.msra.mxu0 0.0
  %802 = vmatprep.subr.mxu0 0.0
  %803 = vmatpush1.msra.mxu0 0.0
  %804 = vmatprep.subr.mxu0 0.0
  %805 = vmatpush1.msra.mxu0 0.0
  %806 = vmatprep.subr.mxu0 0.0
  %807 = vmatpush1.msra.mxu0 0.0
  %808 = vmatprep.subr.mxu0 0.0
  %809 = vmatpush1.msra.mxu0 0.0
  %810 = vmatprep.subr.mxu0 0.0
  %811 = vmatpush1.msra.mxu0 0.0
  %812 = vmatprep.subr.mxu0 0.0
  %813 = vmatpush1.msra.mxu0 0.0
  %814 = vmatprep.subr.mxu0 0.0
  %815 = vmatpush1.msra.mxu0 0.0
  %816 = vmatprep.subr.mxu0 0.0
  %817 = vmatpush1.msra.mxu0 0.0
  %818 = vmatprep.subr.mxu0 0.0
  %819 = vmatpush1.msra.mxu0 0.0
  %820 = vmatprep.subr.mxu0 0.0
  %821 = vmatpush1.msra.mxu0 0.0
  %822 = vmatprep.subr.mxu0 0.0
  %823 = vmatpush1.msra.mxu0 0.0
  %824 = vmatprep.subr.mxu0 0.0
  %825 = vmatpush1.msra.mxu0 0.0
  %826 = vmatprep.subr.mxu0 0.0
  %827 = vmatpush1.msra.mxu0 0.0
  %828 = vmatprep.subr.mxu0 0.0
  %829 = vmatpush1.msra.mxu0 0.0
  %830 = vmatprep.subr.mxu0 0.0
  %831 = vmatpush1.msra.mxu0 0.0
  %832 = vmatprep.subr.mxu0 0.0
  %833 = vmatpush1.msra.mxu0 0.0
  %834 = vmatprep.subr.mxu0 0.0
  %835 = vmatpush1.msra.mxu0 0.0
  %836 = vmatprep.mubr.f32.mxu0 0.0
  %837 = vmatmul.mubr.f32.gmra.mrb[0].mxu0 %v725
  %v838 = vpop.f32.mrb[0].mxu0
  %v839 = vadd.f32 %v723, %v838
  %v840 = vpop.f32.mrb[0].mxu0
  %841 = vmatprep.mubr.f32.mxu0 0.0
  %842 = vmatmul.mubr.f32.gmra.mrb[0].mxu0 %v728
  %v843 = vpop.f32.mrb[0].mxu0
  %v844 = vadd.f32 %v723, %v843
  %v845 = vpop.f32.mrb[0].mxu0
  %846 = vmatprep.mubr.f32.mxu0 0.0
  %847 = vmatmul.mubr.f32.gmra.mrb[0].mxu0 %v731
  %v848 = vpop.f32.mrb[0].mxu0
  %v849 = vadd.f32 %v723, %v848
  %v850 = vpop.f32.mrb[0].mxu0
  %851 = vmatprep.mubr.f32.mxu0 0.0
  %852 = vmatmul.mubr.f32.gmra.mrb[0].mxu0 %v734
  %v853 = vpop.f32.mrb[0].mxu0
  %v854 = vadd.f32 %v723, %v853
  %v855 = vpop.f32.mrb[0].mxu0
  %856 = vmatprep.mubr.f32.mxu0 0.0
  %857 = vmatmul.mubr.f32.gmra.mrb[0].mxu0 %v737
  %v858 = vpop.f32.mrb[0].mxu0
  %v859 = vadd.f32 %v723, %v858
  %v860 = vpop.f32.mrb[0].mxu0
  %861 = vmatprep.mubr.f32.mxu0 0.0
  %862 = vmatmul.mubr.f32.gmra.mrb[0].mxu0 %v740
  %v863 = vpop.f32.mrb[0].mxu0
  %v864 = vadd.f32 %v723, %v863
  %v865 = vpop.f32.mrb[0].mxu0
  %866 = vmatprep.mubr.f32.mxu0 0.0
  %867 = vmatmul.mubr.f32.gmra.mrb[0].mxu0 %v743
  %v868 = vpop.f32.mrb[0].mxu0
  %v869 = vadd.f32 %v723, %v868
  %v870 = vpop.f32.mrb[0].mxu0
  %871 = vmatprep.mubr.f32.mxu0 0.0
  %872 = vmatmul.mubr.f32.gmra.mrb[0].mxu0 %v746
  %v873 = vpop.f32.mrb[0].mxu0
  %v874 = vadd.f32 %v723, %v873
  %v875 = vpop.f32.mrb[0].mxu0
  %876 = vmatprep.mubr.f32.mxu0 0.0
  %877 = vmatmul.mubr.f32.gmra.mrb[0].mxu0 %v749
  %v878 = vpop.f32.mrb[0].mxu0
  %v879 = vadd.f32 %v723, %v878
  %v880 = vpop.f32.mrb[0].mxu0
  %881 = vmatprep.mubr.f32.mxu0 0.0
  %882 = vmatmul.mubr.f32.gmra.mrb[0].mxu0 %v752
  %v883 = vpop.f32.mrb[0].mxu0
  %v884 = vadd.f32 %v723, %v883
  %v885 = vpop.f32.mrb[0].mxu0
  %886 = vmatprep.mubr.f32.mxu0 0.0
  %887 = vmatmul.mubr.f32.gmra.mrb[0].mxu0 %v755
  %v888 = vpop.f32.mrb[0].mxu0
  %v889 = vadd.f32 %v723, %v888
  %v890 = vpop.f32.mrb[0].mxu0
  %891 = vmatprep.mubr.f32.mxu0 0.0
  %892 = vmatmul.mubr.f32.gmra.mrb[0].mxu0 %v758
  %v893 = vpop.f32.mrb[0].mxu0
  %v894 = vadd.f32 %v723, %v893
  %v895 = vpop.f32.mrb[0].mxu0
  %896 = vmatprep.mubr.f32.mxu0 0.0
  %897 = vmatmul.mubr.f32.gmra.mrb[0].mxu0 %v761
  %v898 = vpop.f32.mrb[0].mxu0
  %v899 = vadd.f32 %v723, %v898
  %v900 = vpop.f32.mrb[0].mxu0
  %901 = vmatprep.mubr.f32.mxu0 0.0
  %902 = vmatmul.mubr.f32.gmra.mrb[0].mxu0 %v764
  %v903 = vpop.f32.mrb[0].mxu0
  %v904 = vadd.f32 %v723, %v903
  %v905 = vpop.f32.mrb[0].mxu0
  %906 = vmatprep.mubr.f32.mxu0 0.0
  %907 = vmatmul.mubr.f32.gmra.mrb[0].mxu0 %v767
  %v908 = vpop.f32.mrb[0].mxu0
  %v909 = vadd.f32 %v723, %v908
  %v910 = vpop.f32.mrb[0].mxu0
  %911 = vmatprep.mubr.f32.mxu0 0.0
  %912 = vmatmul.mubr.f32.gmra.mrb[0].mxu0 %v770
  %v913 = vpop.f32.mrb[0].mxu0
  %v914 = vadd.f32 %v723, %v913
  %v915 = vpop.f32.mrb[0].mxu0
  %916 = vdwg.mxu0
  %v917 = vsel %vm236, %v839, 0.0
  %v918 = vsel %vm236, %v844, 0.0
  %v919 = vadd.f32 %v917, %v918
  %v920 = vsel %vm236, %v849, 0.0
  %v921 = vadd.f32 %v919, %v920
  %v922 = vsel %vm236, %v854, 0.0
  %v923 = vadd.f32 %v921, %v922
  %v924 = vsel %vm236, %v859, 0.0
  %v925 = vadd.f32 %v923, %v924
  %v926 = vsel %vm236, %v864, 0.0
  %v927 = vadd.f32 %v925, %v926
  %v928 = vsel %vm236, %v869, 0.0
  %v929 = vadd.f32 %v927, %v928
  %v930 = vsel %vm236, %v874, 0.0
  %v931 = vadd.f32 %v929, %v930
  %v932 = vrot.slane %v931, 4
  %v933 = vadd.f32 %v931, %v932
  %v934 = vrot.slane %v933, 2
  %v935 = vadd.f32 %v933, %v934
  %v936 = vrot.slane %v935, 1
  %v937 = vadd.f32 %v935, %v936
  %v938 = vsel %vm236, %v879, 0.0
  %v939 = vsel %vm236, %v884, 0.0
  %v940 = vadd.f32 %v938, %v939
  %v941 = vsel %vm236, %v889, 0.0
  %v942 = vadd.f32 %v940, %v941
  %v943 = vsel %vm236, %v894, 0.0
  %v944 = vadd.f32 %v942, %v943
  %v945 = vsel %vm236, %v899, 0.0
  %v946 = vadd.f32 %v944, %v945
  %v947 = vsel %vm236, %v904, 0.0
  %v948 = vadd.f32 %v946, %v947
  %v949 = vsel %vm236, %v909, 0.0
  %v950 = vadd.f32 %v948, %v949
  %v951 = vsel %vm236, %v914, 0.0
  %v952 = vadd.f32 %v950, %v951
  %v953 = vrot.slane %v952, 4
  %v954 = vadd.f32 %v952, %v953
  %v955 = vrot.slane %v954, 2
  %v956 = vadd.f32 %v954, %v955
  %v957 = vrot.slane %v956, 1
  %v958 = vadd.f32 %v956, %v957
  %v959 = vmul.f32 %v937, %v472
  %v960 = vmul.f32 %v958, %v472
  %v961 = vsub.f32 %v839, %v959
  %v962 = vsub.f32 %v844, %v959
  %v963 = vsub.f32 %v849, %v959
  %v964 = vsub.f32 %v854, %v959
  %v965 = vsub.f32 %v859, %v959
  %v966 = vsub.f32 %v864, %v959
  %v967 = vsub.f32 %v869, %v959
  %v968 = vsub.f32 %v874, %v959
  %v969 = vsub.f32 %v879, %v960
  %v970 = vsub.f32 %v884, %v960
  %v971 = vsub.f32 %v889, %v960
  %v972 = vsub.f32 %v894, %v960
  %v973 = vsub.f32 %v899, %v960
  %v974 = vsub.f32 %v904, %v960
  %v975 = vsub.f32 %v909, %v960
  %v976 = vsub.f32 %v914, %v960
  %v977 = vmul.f32 %v961, %v961
  %v978 = vmul.f32 %v962, %v962
  %v979 = vmul.f32 %v963, %v963
  %v980 = vmul.f32 %v964, %v964
  %v981 = vmul.f32 %v965, %v965
  %v982 = vmul.f32 %v966, %v966
  %v983 = vmul.f32 %v967, %v967
  %v984 = vmul.f32 %v968, %v968
  %v985 = vmul.f32 %v969, %v969
  %v986 = vmul.f32 %v970, %v970
  %v987 = vmul.f32 %v971, %v971
  %v988 = vmul.f32 %v972, %v972
  %v989 = vmul.f32 %v973, %v973
  %v990 = vmul.f32 %v974, %v974
  %v991 = vmul.f32 %v975, %v975
  %v992 = vmul.f32 %v976, %v976
  %v993 = vsel %vm236, %v977, 0.0
  %v994 = vsel %vm236, %v978, 0.0
  %v995 = vadd.f32 %v993, %v994
  %v996 = vsel %vm236, %v979, 0.0
  %v997 = vadd.f32 %v995, %v996
  %v998 = vsel %vm236, %v980, 0.0
  %v999 = vadd.f32 %v997, %v998
  %v1000 = vsel %vm236, %v981, 0.0
  %v1001 = vadd.f32 %v999, %v1000
  %v1002 = vsel %vm236, %v982, 0.0
  %v1003 = vadd.f32 %v1001, %v1002
  %v1004 = vsel %vm236, %v983, 0.0
  %v1005 = vadd.f32 %v1003, %v1004
  %v1006 = vsel %vm236, %v984, 0.0
  %v1007 = vadd.f32 %v1005, %v1006
  %v1008 = vrot.slane %v1007, 4
  %v1009 = vadd.f32 %v1007, %v1008
  %v1010 = vrot.slane %v1009, 2
  %v1011 = vadd.f32 %v1009, %v1010
  %v1012 = vrot.slane %v1011, 1
  %v1013 = vadd.f32 %v1011, %v1012
  %v1014 = vsel %vm236, %v985, 0.0
  %v1015 = vsel %vm236, %v986, 0.0
  %v1016 = vadd.f32 %v1014, %v1015
  %v1017 = vsel %vm236, %v987, 0.0
  %v1018 = vadd.f32 %v1016, %v1017
  %v1019 = vsel %vm236, %v988, 0.0
  %v1020 = vadd.f32 %v1018, %v1019
  %v1021 = vsel %vm236, %v989, 0.0
  %v1022 = vadd.f32 %v1020, %v1021
  %v1023 = vsel %vm236, %v990, 0.0
  %v1024 = vadd.f32 %v1022, %v1023
  %v1025 = vsel %vm236, %v991, 0.0
  %v1026 = vadd.f32 %v1024, %v1025
  %v1027 = vsel %vm236, %v992, 0.0
  %v1028 = vadd.f32 %v1026, %v1027
  %v1029 = vrot.slane %v1028, 4
  %v1030 = vadd.f32 %v1028, %v1029
  %v1031 = vrot.slane %v1030, 2
  %v1032 = vadd.f32 %v1030, %v1031
  %v1033 = vrot.slane %v1032, 1
  %v1034 = vadd.f32 %v1032, %v1033
  %v1035 = vmul.f32 %v1013, %v549
  %v1036 = vmul.f32 %v1034, %v549
  %v1037 = vadd.f32 %v1035, 0.001
  %v1038 = vadd.f32 %v1036, 0.001
  %v1039 = vrsqrt.pop %v1037
  %v1040 = vrsqrt.pop %v1038
  %v1041 = vmul.f32 %v961, %v1039
  %v1042 = vmul.f32 %v962, %v1039
  %v1043 = vmul.f32 %v963, %v1039
  %v1044 = vmul.f32 %v964, %v1039
  %v1045 = vmul.f32 %v965, %v1039
  %v1046 = vmul.f32 %v966, %v1039
  %v1047 = vmul.f32 %v967, %v1039
  %v1048 = vmul.f32 %v968, %v1039
  %v1049 = vmul.f32 %v969, %v1040
  %v1050 = vmul.f32 %v970, %v1040
  %v1051 = vmul.f32 %v971, %v1040
  %v1052 = vmul.f32 %v972, %v1040
  %v1053 = vmul.f32 %v973, %v1040
  %v1054 = vmul.f32 %v974, %v1040
  %v1055 = vmul.f32 %v975, %v1040
  %v1056 = vmul.f32 %v976, %v1040
  %v1057 = vsel %vm236, %v1041, 0.0
  %v1058 = vsel %vm236, %v1042, 0.0
  %v1059 = vadd.f32 %v1057, %v1058
  %v1060 = vsel %vm236, %v1043, 0.0
  %v1061 = vadd.f32 %v1059, %v1060
  %v1062 = vsel %vm236, %v1044, 0.0
  %v1063 = vadd.f32 %v1061, %v1062
  %v1064 = vsel %vm236, %v1045, 0.0
  %v1065 = vadd.f32 %v1063, %v1064
  %v1066 = vsel %vm236, %v1046, 0.0
  %v1067 = vadd.f32 %v1065, %v1066
  %v1068 = vsel %vm236, %v1047, 0.0
  %v1069 = vadd.f32 %v1067, %v1068
  %v1070 = vsel %vm236, %v1048, 0.0
  %v1071 = vadd.f32 %v1069, %v1070
  %v1072 = vsel %vm236, %v1049, 0.0
  %v1073 = vadd.f32 %v1071, %v1072
  %v1074 = vsel %vm236, %v1050, 0.0
  %v1075 = vadd.f32 %v1073, %v1074
  %v1076 = vsel %vm236, %v1051, 0.0
  %v1077 = vadd.f32 %v1075, %v1076
  %v1078 = vsel %vm236, %v1052, 0.0
  %v1079 = vadd.f32 %v1077, %v1078
  %v1080 = vsel %vm236, %v1053, 0.0
  %v1081 = vadd.f32 %v1079, %v1080
  %v1082 = vsel %vm236, %v1054, 0.0
  %v1083 = vadd.f32 %v1081, %v1082
  %v1084 = vsel %vm236, %v1055, 0.0
  %v1085 = vadd.f32 %v1083, %v1084
  %v1086 = vsel %vm236, %v1056, 0.0
  %v1087 = vadd.f32 %v1085, %v1086
  %v1088 = vrot.slane %v1087, 4
  %v1089 = vadd.f32 %v1087, %v1088
  %v1090 = vrot.slane %v1089, 2
  %v1091 = vadd.f32 %v1089, %v1090
  %v1092 = vrot.slane %v1091, 1
  %v1093 = vadd.f32 %v1091, %v1092
  %v1094 = vmul.f32 %v1093, %v609
  %v1095 = vsub.f32 %v1041, %v1094
  %v1096 = vsub.f32 %v1042, %v1094
  %v1097 = vsub.f32 %v1043, %v1094
  %v1098 = vsub.f32 %v1044, %v1094
  %v1099 = vsub.f32 %v1045, %v1094
  %v1100 = vsub.f32 %v1046, %v1094
  %v1101 = vsub.f32 %v1047, %v1094
  %v1102 = vsub.f32 %v1048, %v1094
  %v1103 = vsub.f32 %v1049, %v1094
  %v1104 = vsub.f32 %v1050, %v1094
  %v1105 = vsub.f32 %v1051, %v1094
  %v1106 = vsub.f32 %v1052, %v1094
  %v1107 = vsub.f32 %v1053, %v1094
  %v1108 = vsub.f32 %v1054, %v1094
  %v1109 = vsub.f32 %v1055, %v1094
  %v1110 = vsub.f32 %v1056, %v1094
  %v1111 = vmul.f32 %v1095, %v1095
  %v1112 = vmul.f32 %v1096, %v1096
  %v1113 = vmul.f32 %v1097, %v1097
  %v1114 = vmul.f32 %v1098, %v1098
  %v1115 = vmul.f32 %v1099, %v1099
  %v1116 = vmul.f32 %v1100, %v1100
  %v1117 = vmul.f32 %v1101, %v1101
  %v1118 = vmul.f32 %v1102, %v1102
  %v1119 = vmul.f32 %v1103, %v1103
  %v1120 = vmul.f32 %v1104, %v1104
  %v1121 = vmul.f32 %v1105, %v1105
  %v1122 = vmul.f32 %v1106, %v1106
  %v1123 = vmul.f32 %v1107, %v1107
  %v1124 = vmul.f32 %v1108, %v1108
  %v1125 = vmul.f32 %v1109, %v1109
  %v1126 = vmul.f32 %v1110, %v1110
  %v1127 = vsel %vm236, %v1111, 0.0
  %v1128 = vsel %vm236, %v1112, 0.0
  %v1129 = vadd.f32 %v1127, %v1128
  %v1130 = vsel %vm236, %v1113, 0.0
  %v1131 = vadd.f32 %v1129, %v1130
  %v1132 = vsel %vm236, %v1114, 0.0
  %v1133 = vadd.f32 %v1131, %v1132
  %v1134 = vsel %vm236, %v1115, 0.0
  %v1135 = vadd.f32 %v1133, %v1134
  %v1136 = vsel %vm236, %v1116, 0.0
  %v1137 = vadd.f32 %v1135, %v1136
  %v1138 = vsel %vm236, %v1117, 0.0
  %v1139 = vadd.f32 %v1137, %v1138
  %v1140 = vsel %vm236, %v1118, 0.0
  %v1141 = vadd.f32 %v1139, %v1140
  %v1142 = vsel %vm236, %v1119, 0.0
  %v1143 = vadd.f32 %v1141, %v1142
  %v1144 = vsel %vm236, %v1120, 0.0
  %v1145 = vadd.f32 %v1143, %v1144
  %v1146 = vsel %vm236, %v1121, 0.0
  %v1147 = vadd.f32 %v1145, %v1146
  %v1148 = vsel %vm236, %v1122, 0.0
  %v1149 = vadd.f32 %v1147, %v1148
  %v1150 = vsel %vm236, %v1123, 0.0
  %v1151 = vadd.f32 %v1149, %v1150
  %v1152 = vsel %vm236, %v1124, 0.0
  %v1153 = vadd.f32 %v1151, %v1152
  %v1154 = vsel %vm236, %v1125, 0.0
  %v1155 = vadd.f32 %v1153, %v1154
  %v1156 = vsel %vm236, %v1126, 0.0
  %v1157 = vadd.f32 %v1155, %v1156
  %v1158 = vrot.slane %v1157, 4
  %v1159 = vadd.f32 %v1157, %v1158
  %v1160 = vrot.slane %v1159, 2
  %v1161 = vadd.f32 %v1159, %v1160
  %v1162 = vrot.slane %v1161, 1
  %v1163 = vadd.f32 %v1161, %v1162
  %v1164 = vmul.f32 %v1163, %v609
  %v1165 = vadd.f32 %v1164, 1e-05
  %v1166 = vrsqrt.pop %v1165
  %v1167 = vmul.f32 %v1095, %v1166
  %v1168 = vmul.f32 %v1096, %v1166
  %v1169 = vmul.f32 %v1097, %v1166
  %v1170 = vmul.f32 %v1098, %v1166
  %v1171 = vmul.f32 %v1099, %v1166
  %v1172 = vmul.f32 %v1100, %v1166
  %v1173 = vmul.f32 %v1101, %v1166
  %v1174 = vmul.f32 %v1102, %v1166
  %v1175 = vmul.f32 %v1103, %v1166
  %v1176 = vmul.f32 %v1104, %v1166
  %v1177 = vmul.f32 %v1105, %v1166
  %v1178 = vmul.f32 %v1106, %v1166
  %v1179 = vmul.f32 %v1107, %v1166
  %v1180 = vmul.f32 %v1108, %v1166
  %v1181 = vmul.f32 %v1109, %v1166
  %v1182 = vmul.f32 %v1110, %v1166
  %v1183 = vmax.f32 %v1167, 0.0
  %v1184 = vmax.f32 %v1168, 0.0
  %v1185 = vmax.f32 %v1169, 0.0
  %v1186 = vmax.f32 %v1170, 0.0
  %v1187 = vmax.f32 %v1171, 0.0
  %v1188 = vmax.f32 %v1172, 0.0
  %v1189 = vmax.f32 %v1173, 0.0
  %v1190 = vmax.f32 %v1174, 0.0
  %v1191 = vmax.f32 %v1175, 0.0
  %v1192 = vmax.f32 %v1176, 0.0
  %v1193 = vmax.f32 %v1177, 0.0
  %v1194 = vmax.f32 %v1178, 0.0
  %v1195 = vmax.f32 %v1179, 0.0
  %v1196 = vmax.f32 %v1180, 0.0
  %v1197 = vmax.f32 %v1181, 0.0
  %v1198 = vmax.f32 %v1182, 0.0
  %v1199 = vld [vmem:[%s1 + $0x60] sm:$0xff]
  %v1200 = vld [vmem:[%s1 + $0x68] sm:$0xff]
  %v1201 = vld [vmem:[%s1 + $0x70] sm:$0xff]
  %v1202 = vld [vmem:[%s1 + $0x78] sm:$0xff]
  %v1203 = vld [vmem:[%s1 + $0x80] sm:$0x1]
  %v1204 = vlaneseq
  %v1205 = vshrl.u32 %v1204, 7
  %v1206 = vsub.s32 0, %v1205
  %v1207 = vrot.slane %v1203, %v1206
  %v1209 = vsel %vm236, %v1183, 0
  %v1212 = vsel %vm236, %v1184, 0
  %v1215 = vsel %vm236, %v1185, 0
  %v1218 = vsel %vm236, %v1186, 0
  %v1221 = vsel %vm236, %v1187, 0
  %v1224 = vsel %vm236, %v1188, 0
  %v1227 = vsel %vm236, %v1189, 0
  %v1230 = vsel %vm236, %v1190, 0
  %v1233 = vsel %vm236, %v1191, 0
  %v1236 = vsel %vm236, %v1192, 0
  %v1239 = vsel %vm236, %v1193, 0
  %v1242 = vsel %vm236, %v1194, 0
  %v1245 = vsel %vm236, %v1195, 0
  %v1248 = vsel %vm236, %v1196, 0
  %v1251 = vsel %vm236, %v1197, 0
  %v1254 = vsel %vm236, %v1198, 0
  %1256 = vmatprep.subr.mxu0 0.0
  %1257 = vmatpush1.msra.mxu0 %v1199
  %1258 = vmatprep.subr.mxu0 0.0
  %1259 = vmatpush1.msra.mxu0 %v1200
  %1260 = vmatprep.subr.mxu0 0.0
  %1261 = vmatpush1.msra.mxu0 %v1201
  %1262 = vmatprep.subr.mxu0 0.0
  %1263 = vmatpush1.msra.mxu0 %v1202
  %1264 = vmatprep.subr.mxu0 0.0
  %1265 = vmatpush1.msra.mxu0 0.0
  %1266 = vmatprep.subr.mxu0 0.0
  %1267 = vmatpush1.msra.mxu0 0.0
  %1268 = vmatprep.subr.mxu0 0.0
  %1269 = vmatpush1.msra.mxu0 0.0
  %1270 = vmatprep.subr.mxu0 0.0
  %1271 = vmatpush1.msra.mxu0 0.0
  %1272 = vmatprep.subr.mxu0 0.0
  %1273 = vmatpush1.msra.mxu0 0.0
  %1274 = vmatprep.subr.mxu0 0.0
  %1275 = vmatpush1.msra.mxu0 0.0
  %1276 = vmatprep.subr.mxu0 0.0
  %1277 = vmatpush1.msra.mxu0 0.0
  %1278 = vmatprep.subr.mxu0 0.0
  %1279 = vmatpush1.msra.mxu0 0.0
  %1280 = vmatprep.subr.mxu0 0.0
  %1281 = vmatpush1.msra.mxu0 0.0
  %1282 = vmatprep.subr.mxu0 0.0
  %1283 = vmatpush1.msra.mxu0 0.0
  %1284 = vmatprep.subr.mxu0 0.0
  %1285 = vmatpush1.msra.mxu0 0.0
  %1286 = vmatprep.subr.mxu0 0.0
  %1287 = vmatpush1.msra.mxu0 0.0
  %1288 = vmatprep.subr.mxu0 0.0
  %1289 = vmatpush1.msra.mxu0 0.0
  %1290 = vmatprep.subr.mxu0 0.0
  %1291 = vmatpush1.msra.mxu0 0.0
  %1292 = vmatprep.subr.mxu0 0.0
  %1293 = vmatpush1.msra.mxu0 0.0
  %1294 = vmatprep.subr.mxu0 0.0
  %1295 = vmatpush1.msra.mxu0 0.0
  %1296 = vmatprep.subr.mxu0 0.0
  %1297 = vmatpush1.msra.mxu0 0.0
  %1298 = vmatprep.subr.mxu0 0.0
  %1299 = vmatpush1.msra.mxu0 0.0
  %1300 = vmatprep.subr.mxu0 0.0
  %1301 = vmatpush1.msra.mxu0 0.0
  %1302 = vmatprep.subr.mxu0 0.0
  %1303 = vmatpush1.msra.mxu0 0.0
  %1304 = vmatprep.subr.mxu0 0.0
  %1305 = vmatpush1.msra.mxu0 0.0
  %1306 = vmatprep.subr.mxu0 0.0
  %1307 = vmatpush1.msra.mxu0 0.0
  %1308 = vmatprep.subr.mxu0 0.0
  %1309 = vmatpush1.msra.mxu0 0.0
  %1310 = vmatprep.subr.mxu0 0.0
  %1311 = vmatpush1.msra.mxu0 0.0
  %1312 = vmatprep.subr.mxu0 0.0
  %1313 = vmatpush1.msra.mxu0 0.0
  %1314 = vmatprep.subr.mxu0 0.0
  %1315 = vmatpush1.msra.mxu0 0.0
  %1316 = vmatprep.subr.mxu0 0.0
  %1317 = vmatpush1.msra.mxu0 0.0
  %1318 = vmatprep.subr.mxu0 0.0
  %1319 = vmatpush1.msra.mxu0 0.0
  %1320 = vmatprep.mubr.f32.mxu0 0.0
  %1321 = vmatmul.mubr.f32.gmra.mrb[0].mxu0 %v1209
  %v1322 = vpop.f32.mrb[0].mxu0
  %v1323 = vadd.f32 %v1207, %v1322
  %v1324 = vpop.f32.mrb[0].mxu0
  %1325 = vmatprep.mubr.f32.mxu0 0.0
  %1326 = vmatmul.mubr.f32.gmra.mrb[0].mxu0 %v1212
  %v1327 = vpop.f32.mrb[0].mxu0
  %v1328 = vadd.f32 %v1207, %v1327
  %v1329 = vpop.f32.mrb[0].mxu0
  %1330 = vmatprep.mubr.f32.mxu0 0.0
  %1331 = vmatmul.mubr.f32.gmra.mrb[0].mxu0 %v1215
  %v1332 = vpop.f32.mrb[0].mxu0
  %v1333 = vadd.f32 %v1207, %v1332
  %v1334 = vpop.f32.mrb[0].mxu0
  %1335 = vmatprep.mubr.f32.mxu0 0.0
  %1336 = vmatmul.mubr.f32.gmra.mrb[0].mxu0 %v1218
  %v1337 = vpop.f32.mrb[0].mxu0
  %v1338 = vadd.f32 %v1207, %v1337
  %v1339 = vpop.f32.mrb[0].mxu0
  %1340 = vmatprep.mubr.f32.mxu0 0.0
  %1341 = vmatmul.mubr.f32.gmra.mrb[0].mxu0 %v1221
  %v1342 = vpop.f32.mrb[0].mxu0
  %v1343 = vadd.f32 %v1207, %v1342
  %v1344 = vpop.f32.mrb[0].mxu0
  %1345 = vmatprep.mubr.f32.mxu0 0.0
  %1346 = vmatmul.mubr.f32.gmra.mrb[0].mxu0 %v1224
  %v1347 = vpop.f32.mrb[0].mxu0
  %v1348 = vadd.f32 %v1207, %v1347
  %v1349 = vpop.f32.mrb[0].mxu0
  %1350 = vmatprep.mubr.f32.mxu0 0.0
  %1351 = vmatmul.mubr.f32.gmra.mrb[0].mxu0 %v1227
  %v1352 = vpop.f32.mrb[0].mxu0
  %v1353 = vadd.f32 %v1207, %v1352
  %v1354 = vpop.f32.mrb[0].mxu0
  %1355 = vmatprep.mubr.f32.mxu0 0.0
  %1356 = vmatmul.mubr.f32.gmra.mrb[0].mxu0 %v1230
  %v1357 = vpop.f32.mrb[0].mxu0
  %v1358 = vadd.f32 %v1207, %v1357
  %v1359 = vpop.f32.mrb[0].mxu0
  %1360 = vmatprep.mubr.f32.mxu0 0.0
  %1361 = vmatmul.mubr.f32.gmra.mrb[0].mxu0 %v1233
  %v1362 = vpop.f32.mrb[0].mxu0
  %v1363 = vadd.f32 %v1207, %v1362
  %v1364 = vpop.f32.mrb[0].mxu0
  %1365 = vmatprep.mubr.f32.mxu0 0.0
  %1366 = vmatmul.mubr.f32.gmra.mrb[0].mxu0 %v1236
  %v1367 = vpop.f32.mrb[0].mxu0
  %v1368 = vadd.f32 %v1207, %v1367
  %v1369 = vpop.f32.mrb[0].mxu0
  %1370 = vmatprep.mubr.f32.mxu0 0.0
  %1371 = vmatmul.mubr.f32.gmra.mrb[0].mxu0 %v1239
  %v1372 = vpop.f32.mrb[0].mxu0
  %v1373 = vadd.f32 %v1207, %v1372
  %v1374 = vpop.f32.mrb[0].mxu0
  %1375 = vmatprep.mubr.f32.mxu0 0.0
  %1376 = vmatmul.mubr.f32.gmra.mrb[0].mxu0 %v1242
  %v1377 = vpop.f32.mrb[0].mxu0
  %v1378 = vadd.f32 %v1207, %v1377
  %v1379 = vpop.f32.mrb[0].mxu0
  %1380 = vmatprep.mubr.f32.mxu0 0.0
  %1381 = vmatmul.mubr.f32.gmra.mrb[0].mxu0 %v1245
  %v1382 = vpop.f32.mrb[0].mxu0
  %v1383 = vadd.f32 %v1207, %v1382
  %v1384 = vpop.f32.mrb[0].mxu0
  %1385 = vmatprep.mubr.f32.mxu0 0.0
  %1386 = vmatmul.mubr.f32.gmra.mrb[0].mxu0 %v1248
  %v1387 = vpop.f32.mrb[0].mxu0
  %v1388 = vadd.f32 %v1207, %v1387
  %v1389 = vpop.f32.mrb[0].mxu0
  %1390 = vmatprep.mubr.f32.mxu0 0.0
  %1391 = vmatmul.mubr.f32.gmra.mrb[0].mxu0 %v1251
  %v1392 = vpop.f32.mrb[0].mxu0
  %v1393 = vadd.f32 %v1207, %v1392
  %v1394 = vpop.f32.mrb[0].mxu0
  %1395 = vmatprep.mubr.f32.mxu0 0.0
  %1396 = vmatmul.mubr.f32.gmra.mrb[0].mxu0 %v1254
  %v1397 = vpop.f32.mrb[0].mxu0
  %v1398 = vadd.f32 %v1207, %v1397
  %v1399 = vpop.f32.mrb[0].mxu0
  %1400 = vdwg.mxu0
  %v1401 = vsel %vm236, %v1323, 0.0
  %v1402 = vsel %vm236, %v1328, 0.0
  %v1403 = vadd.f32 %v1401, %v1402
  %v1404 = vsel %vm236, %v1333, 0.0
  %v1405 = vadd.f32 %v1403, %v1404
  %v1406 = vsel %vm236, %v1338, 0.0
  %v1407 = vadd.f32 %v1405, %v1406
  %v1408 = vsel %vm236, %v1343, 0.0
  %v1409 = vadd.f32 %v1407, %v1408
  %v1410 = vsel %vm236, %v1348, 0.0
  %v1411 = vadd.f32 %v1409, %v1410
  %v1412 = vsel %vm236, %v1353, 0.0
  %v1413 = vadd.f32 %v1411, %v1412
  %v1414 = vsel %vm236, %v1358, 0.0
  %v1415 = vadd.f32 %v1413, %v1414
  %v1416 = vrot.slane %v1415, 4
  %v1417 = vadd.f32 %v1415, %v1416
  %v1418 = vrot.slane %v1417, 2
  %v1419 = vadd.f32 %v1417, %v1418
  %v1420 = vrot.slane %v1419, 1
  %v1421 = vadd.f32 %v1419, %v1420
  %v1422 = vsel %vm236, %v1363, 0.0
  %v1423 = vsel %vm236, %v1368, 0.0
  %v1424 = vadd.f32 %v1422, %v1423
  %v1425 = vsel %vm236, %v1373, 0.0
  %v1426 = vadd.f32 %v1424, %v1425
  %v1427 = vsel %vm236, %v1378, 0.0
  %v1428 = vadd.f32 %v1426, %v1427
  %v1429 = vsel %vm236, %v1383, 0.0
  %v1430 = vadd.f32 %v1428, %v1429
  %v1431 = vsel %vm236, %v1388, 0.0
  %v1432 = vadd.f32 %v1430, %v1431
  %v1433 = vsel %vm236, %v1393, 0.0
  %v1434 = vadd.f32 %v1432, %v1433
  %v1435 = vsel %vm236, %v1398, 0.0
  %v1436 = vadd.f32 %v1434, %v1435
  %v1437 = vrot.slane %v1436, 4
  %v1438 = vadd.f32 %v1436, %v1437
  %v1439 = vrot.slane %v1438, 2
  %v1440 = vadd.f32 %v1438, %v1439
  %v1441 = vrot.slane %v1440, 1
  %v1442 = vadd.f32 %v1440, %v1441
  %v1443 = vmul.f32 %v1421, %v472
  %v1444 = vmul.f32 %v1442, %v472
  %v1445 = vsub.f32 %v1323, %v1443
  %v1446 = vsub.f32 %v1328, %v1443
  %v1447 = vsub.f32 %v1333, %v1443
  %v1448 = vsub.f32 %v1338, %v1443
  %v1449 = vsub.f32 %v1343, %v1443
  %v1450 = vsub.f32 %v1348, %v1443
  %v1451 = vsub.f32 %v1353, %v1443
  %v1452 = vsub.f32 %v1358, %v1443
  %v1453 = vsub.f32 %v1363, %v1444
  %v1454 = vsub.f32 %v1368, %v1444
  %v1455 = vsub.f32 %v1373, %v1444
  %v1456 = vsub.f32 %v1378, %v1444
  %v1457 = vsub.f32 %v1383, %v1444
  %v1458 = vsub.f32 %v1388, %v1444
  %v1459 = vsub.f32 %v1393, %v1444
  %v1460 = vsub.f32 %v1398, %v1444
  %v1461 = vmul.f32 %v1445, %v1445
  %v1462 = vmul.f32 %v1446, %v1446
  %v1463 = vmul.f32 %v1447, %v1447
  %v1464 = vmul.f32 %v1448, %v1448
  %v1465 = vmul.f32 %v1449, %v1449
  %v1466 = vmul.f32 %v1450, %v1450
  %v1467 = vmul.f32 %v1451, %v1451
  %v1468 = vmul.f32 %v1452, %v1452
  %v1469 = vmul.f32 %v1453, %v1453
  %v1470 = vmul.f32 %v1454, %v1454
  %v1471 = vmul.f32 %v1455, %v1455
  %v1472 = vmul.f32 %v1456, %v1456
  %v1473 = vmul.f32 %v1457, %v1457
  %v1474 = vmul.f32 %v1458, %v1458
  %v1475 = vmul.f32 %v1459, %v1459
  %v1476 = vmul.f32 %v1460, %v1460
  %v1477 = vsel %vm236, %v1461, 0.0
  %v1478 = vsel %vm236, %v1462, 0.0
  %v1479 = vadd.f32 %v1477, %v1478
  %v1480 = vsel %vm236, %v1463, 0.0
  %v1481 = vadd.f32 %v1479, %v1480
  %v1482 = vsel %vm236, %v1464, 0.0
  %v1483 = vadd.f32 %v1481, %v1482
  %v1484 = vsel %vm236, %v1465, 0.0
  %v1485 = vadd.f32 %v1483, %v1484
  %v1486 = vsel %vm236, %v1466, 0.0
  %v1487 = vadd.f32 %v1485, %v1486
  %v1488 = vsel %vm236, %v1467, 0.0
  %v1489 = vadd.f32 %v1487, %v1488
  %v1490 = vsel %vm236, %v1468, 0.0
  %v1491 = vadd.f32 %v1489, %v1490
  %v1492 = vrot.slane %v1491, 4
  %v1493 = vadd.f32 %v1491, %v1492
  %v1494 = vrot.slane %v1493, 2
  %v1495 = vadd.f32 %v1493, %v1494
  %v1496 = vrot.slane %v1495, 1
  %v1497 = vadd.f32 %v1495, %v1496
  %v1498 = vsel %vm236, %v1469, 0.0
  %v1499 = vsel %vm236, %v1470, 0.0
  %v1500 = vadd.f32 %v1498, %v1499
  %v1501 = vsel %vm236, %v1471, 0.0
  %v1502 = vadd.f32 %v1500, %v1501
  %v1503 = vsel %vm236, %v1472, 0.0
  %v1504 = vadd.f32 %v1502, %v1503
  %v1505 = vsel %vm236, %v1473, 0.0
  %v1506 = vadd.f32 %v1504, %v1505
  %v1507 = vsel %vm236, %v1474, 0.0
  %v1508 = vadd.f32 %v1506, %v1507
  %v1509 = vsel %vm236, %v1475, 0.0
  %v1510 = vadd.f32 %v1508, %v1509
  %v1511 = vsel %vm236, %v1476, 0.0
  %v1512 = vadd.f32 %v1510, %v1511
  %v1513 = vrot.slane %v1512, 4
  %v1514 = vadd.f32 %v1512, %v1513
  %v1515 = vrot.slane %v1514, 2
  %v1516 = vadd.f32 %v1514, %v1515
  %v1517 = vrot.slane %v1516, 1
  %v1518 = vadd.f32 %v1516, %v1517
  %v1519 = vmul.f32 %v1497, %v549
  %v1520 = vmul.f32 %v1518, %v549
  %v1521 = vadd.f32 %v1519, 0.001
  %v1522 = vadd.f32 %v1520, 0.001
  %v1523 = vrsqrt.pop %v1521
  %v1524 = vrsqrt.pop %v1522
  %v1525 = vmul.f32 %v1445, %v1523
  %v1526 = vmul.f32 %v1446, %v1523
  %v1527 = vmul.f32 %v1447, %v1523
  %v1528 = vmul.f32 %v1448, %v1523
  %v1529 = vmul.f32 %v1449, %v1523
  %v1530 = vmul.f32 %v1450, %v1523
  %v1531 = vmul.f32 %v1451, %v1523
  %v1532 = vmul.f32 %v1452, %v1523
  %v1533 = vmul.f32 %v1453, %v1524
  %v1534 = vmul.f32 %v1454, %v1524
  %v1535 = vmul.f32 %v1455, %v1524
  %v1536 = vmul.f32 %v1456, %v1524
  %v1537 = vmul.f32 %v1457, %v1524
  %v1538 = vmul.f32 %v1458, %v1524
  %v1539 = vmul.f32 %v1459, %v1524
  %v1540 = vmul.f32 %v1460, %v1524
  %v1541 = vsel %vm236, %v1525, 0.0
  %v1542 = vsel %vm236, %v1526, 0.0
  %v1543 = vadd.f32 %v1541, %v1542
  %v1544 = vsel %vm236, %v1527, 0.0
  %v1545 = vadd.f32 %v1543, %v1544
  %v1546 = vsel %vm236, %v1528, 0.0
  %v1547 = vadd.f32 %v1545, %v1546
  %v1548 = vsel %vm236, %v1529, 0.0
  %v1549 = vadd.f32 %v1547, %v1548
  %v1550 = vsel %vm236, %v1530, 0.0
  %v1551 = vadd.f32 %v1549, %v1550
  %v1552 = vsel %vm236, %v1531, 0.0
  %v1553 = vadd.f32 %v1551, %v1552
  %v1554 = vsel %vm236, %v1532, 0.0
  %v1555 = vadd.f32 %v1553, %v1554
  %v1556 = vsel %vm236, %v1533, 0.0
  %v1557 = vadd.f32 %v1555, %v1556
  %v1558 = vsel %vm236, %v1534, 0.0
  %v1559 = vadd.f32 %v1557, %v1558
  %v1560 = vsel %vm236, %v1535, 0.0
  %v1561 = vadd.f32 %v1559, %v1560
  %v1562 = vsel %vm236, %v1536, 0.0
  %v1563 = vadd.f32 %v1561, %v1562
  %v1564 = vsel %vm236, %v1537, 0.0
  %v1565 = vadd.f32 %v1563, %v1564
  %v1566 = vsel %vm236, %v1538, 0.0
  %v1567 = vadd.f32 %v1565, %v1566
  %v1568 = vsel %vm236, %v1539, 0.0
  %v1569 = vadd.f32 %v1567, %v1568
  %v1570 = vsel %vm236, %v1540, 0.0
  %v1571 = vadd.f32 %v1569, %v1570
  %v1572 = vrot.slane %v1571, 4
  %v1573 = vadd.f32 %v1571, %v1572
  %v1574 = vrot.slane %v1573, 2
  %v1575 = vadd.f32 %v1573, %v1574
  %v1576 = vrot.slane %v1575, 1
  %v1577 = vadd.f32 %v1575, %v1576
  %v1578 = vmul.f32 %v1577, %v609
  %v1579 = vsub.f32 %v1525, %v1578
  %v1580 = vsub.f32 %v1526, %v1578
  %v1581 = vsub.f32 %v1527, %v1578
  %v1582 = vsub.f32 %v1528, %v1578
  %v1583 = vsub.f32 %v1529, %v1578
  %v1584 = vsub.f32 %v1530, %v1578
  %v1585 = vsub.f32 %v1531, %v1578
  %v1586 = vsub.f32 %v1532, %v1578
  %v1587 = vsub.f32 %v1533, %v1578
  %v1588 = vsub.f32 %v1534, %v1578
  %v1589 = vsub.f32 %v1535, %v1578
  %v1590 = vsub.f32 %v1536, %v1578
  %v1591 = vsub.f32 %v1537, %v1578
  %v1592 = vsub.f32 %v1538, %v1578
  %v1593 = vsub.f32 %v1539, %v1578
  %v1594 = vsub.f32 %v1540, %v1578
  %v1595 = vmul.f32 %v1579, %v1579
  %v1596 = vmul.f32 %v1580, %v1580
  %v1597 = vmul.f32 %v1581, %v1581
  %v1598 = vmul.f32 %v1582, %v1582
  %v1599 = vmul.f32 %v1583, %v1583
  %v1600 = vmul.f32 %v1584, %v1584
  %v1601 = vmul.f32 %v1585, %v1585
  %v1602 = vmul.f32 %v1586, %v1586
  %v1603 = vmul.f32 %v1587, %v1587
  %v1604 = vmul.f32 %v1588, %v1588
  %v1605 = vmul.f32 %v1589, %v1589
  %v1606 = vmul.f32 %v1590, %v1590
  %v1607 = vmul.f32 %v1591, %v1591
  %v1608 = vmul.f32 %v1592, %v1592
  %v1609 = vmul.f32 %v1593, %v1593
  %v1610 = vmul.f32 %v1594, %v1594
  %v1611 = vsel %vm236, %v1595, 0.0
  %v1612 = vsel %vm236, %v1596, 0.0
  %v1613 = vadd.f32 %v1611, %v1612
  %v1614 = vsel %vm236, %v1597, 0.0
  %v1615 = vadd.f32 %v1613, %v1614
  %v1616 = vsel %vm236, %v1598, 0.0
  %v1617 = vadd.f32 %v1615, %v1616
  %v1618 = vsel %vm236, %v1599, 0.0
  %v1619 = vadd.f32 %v1617, %v1618
  %v1620 = vsel %vm236, %v1600, 0.0
  %v1621 = vadd.f32 %v1619, %v1620
  %v1622 = vsel %vm236, %v1601, 0.0
  %v1623 = vadd.f32 %v1621, %v1622
  %v1624 = vsel %vm236, %v1602, 0.0
  %v1625 = vadd.f32 %v1623, %v1624
  %v1626 = vsel %vm236, %v1603, 0.0
  %v1627 = vadd.f32 %v1625, %v1626
  %v1628 = vsel %vm236, %v1604, 0.0
  %v1629 = vadd.f32 %v1627, %v1628
  %v1630 = vsel %vm236, %v1605, 0.0
  %v1631 = vadd.f32 %v1629, %v1630
  %v1632 = vsel %vm236, %v1606, 0.0
  %v1633 = vadd.f32 %v1631, %v1632
  %v1634 = vsel %vm236, %v1607, 0.0
  %v1635 = vadd.f32 %v1633, %v1634
  %v1636 = vsel %vm236, %v1608, 0.0
  %v1637 = vadd.f32 %v1635, %v1636
  %v1638 = vsel %vm236, %v1609, 0.0
  %v1639 = vadd.f32 %v1637, %v1638
  %v1640 = vsel %vm236, %v1610, 0.0
  %v1641 = vadd.f32 %v1639, %v1640
  %v1642 = vrot.slane %v1641, 4
  %v1643 = vadd.f32 %v1641, %v1642
  %v1644 = vrot.slane %v1643, 2
  %v1645 = vadd.f32 %v1643, %v1644
  %v1646 = vrot.slane %v1645, 1
  %v1647 = vadd.f32 %v1645, %v1646
  %v1648 = vmul.f32 %v1647, %v609
  %v1649 = vadd.f32 %v1648, 1e-05
  %v1650 = vrsqrt.pop %v1649
  %v1651 = vmul.f32 %v1579, %v1650
  %v1652 = vmul.f32 %v1580, %v1650
  %v1653 = vmul.f32 %v1581, %v1650
  %v1654 = vmul.f32 %v1582, %v1650
  %v1655 = vmul.f32 %v1583, %v1650
  %v1656 = vmul.f32 %v1584, %v1650
  %v1657 = vmul.f32 %v1585, %v1650
  %v1658 = vmul.f32 %v1586, %v1650
  %v1659 = vmul.f32 %v1587, %v1650
  %v1660 = vmul.f32 %v1588, %v1650
  %v1661 = vmul.f32 %v1589, %v1650
  %v1662 = vmul.f32 %v1590, %v1650
  %v1663 = vmul.f32 %v1591, %v1650
  %v1664 = vmul.f32 %v1592, %v1650
  %v1665 = vmul.f32 %v1593, %v1650
  %v1666 = vmul.f32 %v1594, %v1650
  %v1667 = vmax.f32 %v1651, 0.0
  %v1668 = vmax.f32 %v1652, 0.0
  %v1669 = vmax.f32 %v1653, 0.0
  %v1670 = vmax.f32 %v1654, 0.0
  %v1671 = vmax.f32 %v1655, 0.0
  %v1672 = vmax.f32 %v1656, 0.0
  %v1673 = vmax.f32 %v1657, 0.0
  %v1674 = vmax.f32 %v1658, 0.0
  %v1675 = vmax.f32 %v1659, 0.0
  %v1676 = vmax.f32 %v1660, 0.0
  %v1677 = vmax.f32 %v1661, 0.0
  %v1678 = vmax.f32 %v1662, 0.0
  %v1679 = vmax.f32 %v1663, 0.0
  %v1680 = vmax.f32 %v1664, 0.0
  %v1681 = vmax.f32 %v1665, 0.0
  %v1682 = vmax.f32 %v1666, 0.0
  %v1683 = vsel %vm236, %v1667, 0.0
  %v1684 = vsel %vm236, %v1668, 0.0
  %v1685 = vadd.f32 %v1683, %v1684
  %v1686 = vsel %vm236, %v1669, 0.0
  %v1687 = vadd.f32 %v1685, %v1686
  %v1688 = vsel %vm236, %v1670, 0.0
  %v1689 = vadd.f32 %v1687, %v1688
  %v1690 = vsel %vm236, %v1671, 0.0
  %v1691 = vadd.f32 %v1689, %v1690
  %v1692 = vsel %vm236, %v1672, 0.0
  %v1693 = vadd.f32 %v1691, %v1692
  %v1694 = vsel %vm236, %v1673, 0.0
  %v1695 = vadd.f32 %v1693, %v1694
  %v1696 = vsel %vm236, %v1674, 0.0
  %v1697 = vadd.f32 %v1695, %v1696
  %v1698 = vrot.slane %v1697, 4
  %v1699 = vadd.f32 %v1697, %v1698
  %v1700 = vrot.slane %v1699, 2
  %v1701 = vadd.f32 %v1699, %v1700
  %v1702 = vrot.slane %v1701, 1
  %v1703 = vadd.f32 %v1701, %v1702
  %v1704 = vsel %vm236, %v1675, 0.0
  %v1705 = vsel %vm236, %v1676, 0.0
  %v1706 = vadd.f32 %v1704, %v1705
  %v1707 = vsel %vm236, %v1677, 0.0
  %v1708 = vadd.f32 %v1706, %v1707
  %v1709 = vsel %vm236, %v1678, 0.0
  %v1710 = vadd.f32 %v1708, %v1709
  %v1711 = vsel %vm236, %v1679, 0.0
  %v1712 = vadd.f32 %v1710, %v1711
  %v1713 = vsel %vm236, %v1680, 0.0
  %v1714 = vadd.f32 %v1712, %v1713
  %v1715 = vsel %vm236, %v1681, 0.0
  %v1716 = vadd.f32 %v1714, %v1715
  %v1717 = vsel %vm236, %v1682, 0.0
  %v1718 = vadd.f32 %v1716, %v1717
  %v1719 = vrot.slane %v1718, 4
  %v1720 = vadd.f32 %v1718, %v1719
  %v1721 = vrot.slane %v1720, 2
  %v1722 = vadd.f32 %v1720, %v1721
  %v1723 = vrot.slane %v1722, 1
  %v1724 = vadd.f32 %v1722, %v1723
  %v1725 = vmul.f32 %v1703, %v472
  %v1726 = vmul.f32 %v1724, %v472
  %v1727 = vsub.f32 %v1667, %v1725
  %v1728 = vsub.f32 %v1668, %v1725
  %v1729 = vsub.f32 %v1669, %v1725
  %v1730 = vsub.f32 %v1670, %v1725
  %v1731 = vsub.f32 %v1671, %v1725
  %v1732 = vsub.f32 %v1672, %v1725
  %v1733 = vsub.f32 %v1673, %v1725
  %v1734 = vsub.f32 %v1674, %v1725
  %v1735 = vsub.f32 %v1675, %v1726
  %v1736 = vsub.f32 %v1676, %v1726
  %v1737 = vsub.f32 %v1677, %v1726
  %v1738 = vsub.f32 %v1678, %v1726
  %v1739 = vsub.f32 %v1679, %v1726
  %v1740 = vsub.f32 %v1680, %v1726
  %v1741 = vsub.f32 %v1681, %v1726
  %v1742 = vsub.f32 %v1682, %v1726
  %v1743 = vmul.f32 %v1727, %v1727
  %v1744 = vmul.f32 %v1728, %v1728
  %v1745 = vmul.f32 %v1729, %v1729
  %v1746 = vmul.f32 %v1730, %v1730
  %v1747 = vmul.f32 %v1731, %v1731
  %v1748 = vmul.f32 %v1732, %v1732
  %v1749 = vmul.f32 %v1733, %v1733
  %v1750 = vmul.f32 %v1734, %v1734
  %v1751 = vmul.f32 %v1735, %v1735
  %v1752 = vmul.f32 %v1736, %v1736
  %v1753 = vmul.f32 %v1737, %v1737
  %v1754 = vmul.f32 %v1738, %v1738
  %v1755 = vmul.f32 %v1739, %v1739
  %v1756 = vmul.f32 %v1740, %v1740
  %v1757 = vmul.f32 %v1741, %v1741
  %v1758 = vmul.f32 %v1742, %v1742
  %v1759 = vsel %vm236, %v1743, 0.0
  %v1760 = vsel %vm236, %v1744, 0.0
  %v1761 = vadd.f32 %v1759, %v1760
  %v1762 = vsel %vm236, %v1745, 0.0
  %v1763 = vadd.f32 %v1761, %v1762
  %v1764 = vsel %vm236, %v1746, 0.0
  %v1765 = vadd.f32 %v1763, %v1764
  %v1766 = vsel %vm236, %v1747, 0.0
  %v1767 = vadd.f32 %v1765, %v1766
  %v1768 = vsel %vm236, %v1748, 0.0
  %v1769 = vadd.f32 %v1767, %v1768
  %v1770 = vsel %vm236, %v1749, 0.0
  %v1771 = vadd.f32 %v1769, %v1770
  %v1772 = vsel %vm236, %v1750, 0.0
  %v1773 = vadd.f32 %v1771, %v1772
  %v1774 = vrot.slane %v1773, 4
  %v1775 = vadd.f32 %v1773, %v1774
  %v1776 = vrot.slane %v1775, 2
  %v1777 = vadd.f32 %v1775, %v1776
  %v1778 = vrot.slane %v1777, 1
  %v1779 = vadd.f32 %v1777, %v1778
  %v1780 = vsel %vm236, %v1751, 0.0
  %v1781 = vsel %vm236, %v1752, 0.0
  %v1782 = vadd.f32 %v1780, %v1781
  %v1783 = vsel %vm236, %v1753, 0.0
  %v1784 = vadd.f32 %v1782, %v1783
  %v1785 = vsel %vm236, %v1754, 0.0
  %v1786 = vadd.f32 %v1784, %v1785
  %v1787 = vsel %vm236, %v1755, 0.0
  %v1788 = vadd.f32 %v1786, %v1787
  %v1789 = vsel %vm236, %v1756, 0.0
  %v1790 = vadd.f32 %v1788, %v1789
  %v1791 = vsel %vm236, %v1757, 0.0
  %v1792 = vadd.f32 %v1790, %v1791
  %v1793 = vsel %vm236, %v1758, 0.0
  %v1794 = vadd.f32 %v1792, %v1793
  %v1795 = vrot.slane %v1794, 4
  %v1796 = vadd.f32 %v1794, %v1795
  %v1797 = vrot.slane %v1796, 2
  %v1798 = vadd.f32 %v1796, %v1797
  %v1799 = vrot.slane %v1798, 1
  %v1800 = vadd.f32 %v1798, %v1799
  %v1801 = vmul.f32 %v1779, %v472
  %v1802 = vmul.f32 %v1800, %v472
  %v1803 = vadd.f32 %v1801, 0.001
  %v1804 = vadd.f32 %v1802, 0.001
  %v1805 = vrsqrt.pop %v1803
  %v1806 = vrsqrt.pop %v1804
  %v1807 = vmul.f32 %v1727, %v1805
  %v1808 = vmul.f32 %v1728, %v1805
  %v1809 = vmul.f32 %v1729, %v1805
  %v1810 = vmul.f32 %v1730, %v1805
  %v1811 = vmul.f32 %v1731, %v1805
  %v1812 = vmul.f32 %v1732, %v1805
  %v1813 = vmul.f32 %v1733, %v1805
  %v1814 = vmul.f32 %v1734, %v1805
  %v1815 = vmul.f32 %v1735, %v1806
  %v1816 = vmul.f32 %v1736, %v1806
  %v1817 = vmul.f32 %v1737, %v1806
  %v1818 = vmul.f32 %v1738, %v1806
  %v1819 = vmul.f32 %v1739, %v1806
  %v1820 = vmul.f32 %v1740, %v1806
  %v1821 = vmul.f32 %v1741, %v1806
  %v1822 = vmul.f32 %v1742, %v1806
  %v1823 = vsel %vm236, %v1807, 0.0
  %v1824 = vsel %vm236, %v1808, 0.0
  %v1825 = vadd.f32 %v1823, %v1824
  %v1826 = vsel %vm236, %v1809, 0.0
  %v1827 = vadd.f32 %v1825, %v1826
  %v1828 = vsel %vm236, %v1810, 0.0
  %v1829 = vadd.f32 %v1827, %v1828
  %v1830 = vsel %vm236, %v1811, 0.0
  %v1831 = vadd.f32 %v1829, %v1830
  %v1832 = vsel %vm236, %v1812, 0.0
  %v1833 = vadd.f32 %v1831, %v1832
  %v1834 = vsel %vm236, %v1813, 0.0
  %v1835 = vadd.f32 %v1833, %v1834
  %v1836 = vsel %vm236, %v1814, 0.0
  %v1837 = vadd.f32 %v1835, %v1836
  %v1838 = vsel %vm236, %v1815, 0.0
  %v1839 = vadd.f32 %v1837, %v1838
  %v1840 = vsel %vm236, %v1816, 0.0
  %v1841 = vadd.f32 %v1839, %v1840
  %v1842 = vsel %vm236, %v1817, 0.0
  %v1843 = vadd.f32 %v1841, %v1842
  %v1844 = vsel %vm236, %v1818, 0.0
  %v1845 = vadd.f32 %v1843, %v1844
  %v1846 = vsel %vm236, %v1819, 0.0
  %v1847 = vadd.f32 %v1845, %v1846
  %v1848 = vsel %vm236, %v1820, 0.0
  %v1849 = vadd.f32 %v1847, %v1848
  %v1850 = vsel %vm236, %v1821, 0.0
  %v1851 = vadd.f32 %v1849, %v1850
  %v1852 = vsel %vm236, %v1822, 0.0
  %v1853 = vadd.f32 %v1851, %v1852
  %v1854 = vrot.slane %v1853, 4
  %v1855 = vadd.f32 %v1853, %v1854
  %v1856 = vrot.slane %v1855, 2
  %v1857 = vadd.f32 %v1855, %v1856
  %v1858 = vrot.slane %v1857, 1
  %v1859 = vadd.f32 %v1857, %v1858
  %v1860 = vmul.f32 %v1859, %v609
  %v1861 = vsub.f32 %v1807, %v1860
  %v1862 = vsub.f32 %v1808, %v1860
  %v1863 = vsub.f32 %v1809, %v1860
  %v1864 = vsub.f32 %v1810, %v1860
  %v1865 = vsub.f32 %v1811, %v1860
  %v1866 = vsub.f32 %v1812, %v1860
  %v1867 = vsub.f32 %v1813, %v1860
  %v1868 = vsub.f32 %v1814, %v1860
  %v1869 = vsub.f32 %v1815, %v1860
  %v1870 = vsub.f32 %v1816, %v1860
  %v1871 = vsub.f32 %v1817, %v1860
  %v1872 = vsub.f32 %v1818, %v1860
  %v1873 = vsub.f32 %v1819, %v1860
  %v1874 = vsub.f32 %v1820, %v1860
  %v1875 = vsub.f32 %v1821, %v1860
  %v1876 = vsub.f32 %v1822, %v1860
  %v1877 = vmul.f32 %v1861, %v1861
  %v1878 = vmul.f32 %v1862, %v1862
  %v1879 = vmul.f32 %v1863, %v1863
  %v1880 = vmul.f32 %v1864, %v1864
  %v1881 = vmul.f32 %v1865, %v1865
  %v1882 = vmul.f32 %v1866, %v1866
  %v1883 = vmul.f32 %v1867, %v1867
  %v1884 = vmul.f32 %v1868, %v1868
  %v1885 = vmul.f32 %v1869, %v1869
  %v1886 = vmul.f32 %v1870, %v1870
  %v1887 = vmul.f32 %v1871, %v1871
  %v1888 = vmul.f32 %v1872, %v1872
  %v1889 = vmul.f32 %v1873, %v1873
  %v1890 = vmul.f32 %v1874, %v1874
  %v1891 = vmul.f32 %v1875, %v1875
  %v1892 = vmul.f32 %v1876, %v1876
  %v1893 = vsel %vm236, %v1877, 0.0
  %v1894 = vsel %vm236, %v1878, 0.0
  %v1895 = vadd.f32 %v1893, %v1894
  %v1896 = vsel %vm236, %v1879, 0.0
  %v1897 = vadd.f32 %v1895, %v1896
  %v1898 = vsel %vm236, %v1880, 0.0
  %v1899 = vadd.f32 %v1897, %v1898
  %v1900 = vsel %vm236, %v1881, 0.0
  %v1901 = vadd.f32 %v1899, %v1900
  %v1902 = vsel %vm236, %v1882, 0.0
  %v1903 = vadd.f32 %v1901, %v1902
  %v1904 = vsel %vm236, %v1883, 0.0
  %v1905 = vadd.f32 %v1903, %v1904
  %v1906 = vsel %vm236, %v1884, 0.0
  %v1907 = vadd.f32 %v1905, %v1906
  %v1908 = vsel %vm236, %v1885, 0.0
  %v1909 = vadd.f32 %v1907, %v1908
  %v1910 = vsel %vm236, %v1886, 0.0
  %v1911 = vadd.f32 %v1909, %v1910
  %v1912 = vsel %vm236, %v1887, 0.0
  %v1913 = vadd.f32 %v1911, %v1912
  %v1914 = vsel %vm236, %v1888, 0.0
  %v1915 = vadd.f32 %v1913, %v1914
  %v1916 = vsel %vm236, %v1889, 0.0
  %v1917 = vadd.f32 %v1915, %v1916
  %v1918 = vsel %vm236, %v1890, 0.0
  %v1919 = vadd.f32 %v1917, %v1918
  %v1920 = vsel %vm236, %v1891, 0.0
  %v1921 = vadd.f32 %v1919, %v1920
  %v1922 = vsel %vm236, %v1892, 0.0
  %v1923 = vadd.f32 %v1921, %v1922
  %v1924 = vrot.slane %v1923, 4
  %v1925 = vadd.f32 %v1923, %v1924
  %v1926 = vrot.slane %v1925, 2
  %v1927 = vadd.f32 %v1925, %v1926
  %v1928 = vrot.slane %v1927, 1
  %v1929 = vadd.f32 %v1927, %v1928
  %v1930 = vmul.f32 %v1929, %v609
  %v1931 = vadd.f32 %v1930, 1e-05
  %v1932 = vrsqrt.pop %v1931
  %v1933 = vmul.f32 %v1861, %v1932
  %v1934 = vmul.f32 %v1862, %v1932
  %v1935 = vmul.f32 %v1863, %v1932
  %v1936 = vmul.f32 %v1864, %v1932
  %v1937 = vmul.f32 %v1865, %v1932
  %v1938 = vmul.f32 %v1866, %v1932
  %v1939 = vmul.f32 %v1867, %v1932
  %v1940 = vmul.f32 %v1868, %v1932
  %v1941 = vmul.f32 %v1869, %v1932
  %v1942 = vmul.f32 %v1870, %v1932
  %v1943 = vmul.f32 %v1871, %v1932
  %v1944 = vmul.f32 %v1872, %v1932
  %v1945 = vmul.f32 %v1873, %v1932
  %v1946 = vmul.f32 %v1874, %v1932
  %v1947 = vmul.f32 %v1875, %v1932
  %v1948 = vmul.f32 %v1876, %v1932
  %v1949 = vmax.f32 %v1933, 0.0
  %v1950 = vmax.f32 %v1934, 0.0
  %v1951 = vmax.f32 %v1935, 0.0
  %v1952 = vmax.f32 %v1936, 0.0
  %v1953 = vmax.f32 %v1937, 0.0
  %v1954 = vmax.f32 %v1938, 0.0
  %v1955 = vmax.f32 %v1939, 0.0
  %v1956 = vmax.f32 %v1940, 0.0
  %v1957 = vmax.f32 %v1941, 0.0
  %v1958 = vmax.f32 %v1942, 0.0
  %v1959 = vmax.f32 %v1943, 0.0
  %v1960 = vmax.f32 %v1944, 0.0
  %v1961 = vmax.f32 %v1945, 0.0
  %v1962 = vmax.f32 %v1946, 0.0
  %v1963 = vmax.f32 %v1947, 0.0
  %v1964 = vmax.f32 %v1948, 0.0
  %v1965 = vld [vmem:[%s1 + $0x88] sm:$0xff]
  %v1966 = vld [vmem:[%s1 + $0x90] sm:$0xff]
  %1968 = vset.pattern.permute.xlu0 0
  %1969 = vperm.xlu0 %1968, %v1966
  %v1970 = vpop.permute.xlu0 %1969
  %v1973 = vsel %vm236, %v1965, 0
  %v1976 = vsel %vm236, %v1949, 0
  %v1979 = vsel %vm236, %v1950, 0
  %v1982 = vsel %vm236, %v1951, 0
  %v1985 = vsel %vm236, %v1952, 0
  %v1988 = vsel %vm236, %v1953, 0
  %v1991 = vsel %vm236, %v1954, 0
  %v1994 = vsel %vm236, %v1955, 0
  %v1997 = vsel %vm236, %v1956, 0
  %1999 = vmatprep.subr.mxu0 0.0
  %2000 = vmatpush1.xpose.msra.mxu0 %v1976
  %2001 = vmatprep.subr.mxu0 0.0
  %2002 = vmatpush1.xpose.msra.mxu0 %v1979
  %2003 = vmatprep.subr.mxu0 0.0
  %2004 = vmatpush1.xpose.msra.mxu0 %v1982
  %2005 = vmatprep.subr.mxu0 0.0
  %2006 = vmatpush1.xpose.msra.mxu0 %v1985
  %2007 = vmatprep.subr.mxu0 0.0
  %2008 = vmatpush1.xpose.msra.mxu0 %v1988
  %2009 = vmatprep.subr.mxu0 0.0
  %2010 = vmatpush1.xpose.msra.mxu0 %v1991
  %2011 = vmatprep.subr.mxu0 0.0
  %2012 = vmatpush1.xpose.msra.mxu0 %v1994
  %2013 = vmatprep.subr.mxu0 0.0
  %2014 = vmatpush1.xpose.msra.mxu0 %v1997
  %2015 = vmatprep.subr.mxu0 0.0
  %2016 = vmatpush1.xpose.msra.mxu0 0.0
  %2017 = vmatprep.subr.mxu0 0.0
  %2018 = vmatpush1.xpose.msra.mxu0 0.0
  %2019 = vmatprep.subr.mxu0 0.0
  %2020 = vmatpush1.xpose.msra.mxu0 0.0
  %2021 = vmatprep.subr.mxu0 0.0
  %2022 = vmatpush1.xpose.msra.mxu0 0.0
  %2023 = vmatprep.subr.mxu0 0.0
  %2024 = vmatpush1.xpose.msra.mxu0 0.0
  %2025 = vmatprep.subr.mxu0 0.0
  %2026 = vmatpush1.xpose.msra.mxu0 0.0
  %2027 = vmatprep.subr.mxu0 0.0
  %2028 = vmatpush1.xpose.msra.mxu0 0.0
  %2029 = vmatprep.subr.mxu0 0.0
  %2030 = vmatpush1.xpose.msra.mxu0 0.0
  %2031 = vmatprep.subr.mxu0 0.0
  %2032 = vmatpush1.xpose.msra.mxu0 0.0
  %2033 = vmatprep.subr.mxu0 0.0
  %2034 = vmatpush1.xpose.msra.mxu0 0.0
  %2035 = vmatprep.subr.mxu0 0.0
  %2036 = vmatpush1.xpose.msra.mxu0 0.0
  %2037 = vmatprep.subr.mxu0 0.0
  %2038 = vmatpush1.xpose.msra.mxu0 0.0
  %2039 = vmatprep.subr.mxu0 0.0
  %2040 = vmatpush1.xpose.msra.mxu0 0.0
  %2041 = vmatprep.subr.mxu0 0.0
  %2042 = vmatpush1.xpose.msra.mxu0 0.0
  %2043 = vmatprep.subr.mxu0 0.0
  %2044 = vmatpush1.xpose.msra.mxu0 0.0
  %2045 = vmatprep.subr.mxu0 0.0
  %2046 = vmatpush1.xpose.msra.mxu0 0.0
  %2047 = vmatprep.subr.mxu0 0.0
  %2048 = vmatpush1.xpose.msra.mxu0 0.0
  %2049 = vmatprep.subr.mxu0 0.0
  %2050 = vmatpush1.xpose.msra.mxu0 0.0
  %2051 = vmatprep.subr.mxu0 0.0
  %2052 = vmatpush1.xpose.msra.mxu0 0.0
  %2053 = vmatprep.subr.mxu0 0.0
  %2054 = vmatpush1.xpose.msra.mxu0 0.0
  %2055 = vmatprep.subr.mxu0 0.0
  %2056 = vmatpush1.xpose.msra.mxu0 0.0
  %2057 = vmatprep.subr.mxu0 0.0
  %2058 = vmatpush1.xpose.msra.mxu0 0.0
  %2059 = vmatprep.subr.mxu0 0.0
  %2060 = vmatpush1.xpose.msra.mxu0 0.0
  %2061 = vmatprep.subr.mxu0 0.0
  %2062 = vmatpush1.xpose.msra.mxu0 0.0
  %2063 = vmatprep.mubr.f32.mxu0 0.0
  %2064 = vmatmul.mubr.f32.gmra.mrb[0].mxu0 %v1973
  %v2065 = vpop.f32.mrb[0].mxu0
  %v2066 = vadd.f32 %v1970, %v2065
  %v2067 = vpop.f32.mrb[0].mxu0
  %2068 = vdwg.mxu0
  %vm2069 = vcmask 523264
  %v2070 = vsel %vm2069, %v2066, -inf
  %2071 = vmax.xlane.f32.xlu0 %v2070
  %v2072 = vpop.xlane.xlu0 %2071
  %v2073 = vsub.f32 %v2066, %v2072
  %v2074 = vmul.f32 %v2073, 1.442695
  %v2075 = vpow.pop %v2074
  %v2076 = vsel %vm2069, %v2075, 0.0
  %2077 = vadd.xlane.f32.xlu0 %v2076
  %v2078 = vpop.xlane.xlu0 %2077
  %v2079 = vrcp.pop %v2078
  %v2080 = vmul.f32 %v2075, %v2079
  %v2082 = vsel %vm2069, %v2080, 0
  %2084 = vmatprep.subr.mxu0 0.0
  %2085 = vmatpush1.msra.mxu0 %v1667
  %2086 = vmatprep.subr.mxu0 0.0
  %2087 = vmatpush1.msra.mxu0 %v1668
  %2088 = vmatprep.subr.mxu0 0.0
  %2089 = vmatpush1.msra.mxu0 %v1669
  %2090 = vmatprep.subr.mxu0 0.0
  %2091 = vmatpush1.msra.mxu0 %v1670
  %2092 = vmatprep.subr.mxu0 0.0
  %2093 = vmatpush1.msra.mxu0 %v1671
  %2094 = vmatprep.subr.mxu0 0.0
  %2095 = vmatpush1.msra.mxu0 %v1672
  %2096 = vmatprep.subr.mxu0 0.0
  %2097 = vmatpush1.msra.mxu0 %v1673
  %2098 = vmatprep.subr.mxu0 0.0
  %2099 = vmatpush1.msra.mxu0 %v1674
  %2100 = vmatprep.subr.mxu0 0.0
  %2101 = vmatpush1.msra.mxu0 0.0
  %2102 = vmatprep.subr.mxu0 0.0
  %2103 = vmatpush1.msra.mxu0 0.0
  %2104 = vmatprep.subr.mxu0 0.0
  %2105 = vmatpush1.msra.mxu0 0.0
  %2106 = vmatprep.subr.mxu0 0.0
  %2107 = vmatpush1.msra.mxu0 0.0
  %2108 = vmatprep.subr.mxu0 0.0
  %2109 = vmatpush1.msra.mxu0 0.0
  %2110 = vmatprep.subr.mxu0 0.0
  %2111 = vmatpush1.msra.mxu0 0.0
  %2112 = vmatprep.subr.mxu0 0.0
  %2113 = vmatpush1.msra.mxu0 0.0
  %2114 = vmatprep.subr.mxu0 0.0
  %2115 = vmatpush1.msra.mxu0 0.0
  %2116 = vmatprep.subr.mxu0 0.0
  %2117 = vmatpush1.msra.mxu0 0.0
  %2118 = vmatprep.subr.mxu0 0.0
  %2119 = vmatpush1.msra.mxu0 0.0
  %2120 = vmatprep.subr.mxu0 0.0
  %2121 = vmatpush1.msra.mxu0 0.0
  %2122 = vmatprep.subr.mxu0 0.0
  %2123 = vmatpush1.msra.mxu0 0.0
  %2124 = vmatprep.subr.mxu0 0.0
  %2125 = vmatpush1.msra.mxu0 0.0
  %2126 = vmatprep.subr.mxu0 0.0
  %2127 = vmatpush1.msra.mxu0 0.0
  %2128 = vmatprep.subr.mxu0 0.0
  %2129 = vmatpush1.msra.mxu0 0.0
  %2130 = vmatprep.subr.mxu0 0.0
  %2131 = vmatpush1.msra.mxu0 0.0
  %2132 = vmatprep.subr.mxu0 0.0
  %2133 = vmatpush1.msra.mxu0 0.0
  %2134 = vmatprep.subr.mxu0 0.0
  %2135 = vmatpush1.msra.mxu0 0.0
  %2136 = vmatprep.subr.mxu0 0.0
  %2137 = vmatpush1.msra.mxu0 0.0
  %2138 = vmatprep.subr.mxu0 0.0
  %2139 = vmatpush1.msra.mxu0 0.0
  %2140 = vmatprep.subr.mxu0 0.0
  %2141 = vmatpush1.msra.mxu0 0.0
  %2142 = vmatprep.subr.mxu0 0.0
  %2143 = vmatpush1.msra.mxu0 0.0
  %2144 = vmatprep.subr.mxu0 0.0
  %2145 = vmatpush1.msra.mxu0 0.0
  %2146 = vmatprep.subr.mxu0 0.0
  %2147 = vmatpush1.msra.mxu0 0.0
  %2148 = vmatprep.mubr.f32.mxu0 0.0
  %2149 = vmatmul.mubr.f32.gmra.mrb[0].mxu0 %v2082
  %v2150 = vpop.f32.mrb[0].mxu0
  %v2151 = vadd.f32 0.0, %v2150
  %v2152 = vpop.f32.mrb[0].mxu0
  %2153 = vdwg.mxu0
  %v2155 = vsel %vm236, %v1957, 0
  %v2158 = vsel %vm236, %v1958, 0
  %v2161 = vsel %vm236, %v1959, 0
  %v2164 = vsel %vm236, %v1960, 0
  %v2167 = vsel %vm236, %v1961, 0
  %v2170 = vsel %vm236, %v1962, 0
  %v2173 = vsel %vm236, %v1963, 0
  %v2176 = vsel %vm236, %v1964, 0
  %2178 = vmatprep.subr.mxu0 0.0
  %2179 = vmatpush1.xpose.msra.mxu0 %v2155
  %2180 = vmatprep.subr.mxu0 0.0
  %2181 = vmatpush1.xpose.msra.mxu0 %v2158
  %2182 = vmatprep.subr.mxu0 0.0
  %2183 = vmatpush1.xpose.msra.mxu0 %v2161
  %2184 = vmatprep.subr.mxu0 0.0
  %2185 = vmatpush1.xpose.msra.mxu0 %v2164
  %2186 = vmatprep.subr.mxu0 0.0
  %2187 = vmatpush1.xpose.msra.mxu0 %v2167
  %2188 = vmatprep.subr.mxu0 0.0
  %2189 = vmatpush1.xpose.msra.mxu0 %v2170
  %2190 = vmatprep.subr.mxu0 0.0
  %2191 = vmatpush1.xpose.msra.mxu0 %v2173
  %2192 = vmatprep.subr.mxu0 0.0
  %2193 = vmatpush1.xpose.msra.mxu0 %v2176
  %2194 = vmatprep.subr.mxu0 0.0
  %2195 = vmatpush1.xpose.msra.mxu0 0.0
  %2196 = vmatprep.subr.mxu0 0.0
  %2197 = vmatpush1.xpose.msra.mxu0 0.0
  %2198 = vmatprep.subr.mxu0 0.0
  %2199 = vmatpush1.xpose.msra.mxu0 0.0
  %2200 = vmatprep.subr.mxu0 0.0
  %2201 = vmatpush1.xpose.msra.mxu0 0.0
  %2202 = vmatprep.subr.mxu0 0.0
  %2203 = vmatpush1.xpose.msra.mxu0 0.0
  %2204 = vmatprep.subr.mxu0 0.0
  %2205 = vmatpush1.xpose.msra.mxu0 0.0
  %2206 = vmatprep.subr.mxu0 0.0
  %2207 = vmatpush1.xpose.msra.mxu0 0.0
  %2208 = vmatprep.subr.mxu0 0.0
  %2209 = vmatpush1.xpose.msra.mxu0 0.0
  %2210 = vmatprep.subr.mxu0 0.0
  %2211 = vmatpush1.xpose.msra.mxu0 0.0
  %2212 = vmatprep.subr.mxu0 0.0
  %2213 = vmatpush1.xpose.msra.mxu0 0.0
  %2214 = vmatprep.subr.mxu0 0.0
  %2215 = vmatpush1.xpose.msra.mxu0 0.0
  %2216 = vmatprep.subr.mxu0 0.0
  %2217 = vmatpush1.xpose.msra.mxu0 0.0
  %2218 = vmatprep.subr.mxu0 0.0
  %2219 = vmatpush1.xpose.msra.mxu0 0.0
  %2220 = vmatprep.subr.mxu0 0.0
  %2221 = vmatpush1.xpose.msra.mxu0 0.0
  %2222 = vmatprep.subr.mxu0 0.0
  %2223 = vmatpush1.xpose.msra.mxu0 0.0
  %2224 = vmatprep.subr.mxu0 0.0
  %2225 = vmatpush1.xpose.msra.mxu0 0.0
  %2226 = vmatprep.subr.mxu0 0.0
  %2227 = vmatpush1.xpose.msra.mxu0 0.0
  %2228 = vmatprep.subr.mxu0 0.0
  %2229 = vmatpush1.xpose.msra.mxu0 0.0
  %2230 = vmatprep.subr.mxu0 0.0
  %2231 = vmatpush1.xpose.msra.mxu0 0.0
  %2232 = vmatprep.subr.mxu0 0.0
  %2233 = vmatpush1.xpose.msra.mxu0 0.0
  %2234 = vmatprep.subr.mxu0 0.0
  %2235 = vmatpush1.xpose.msra.mxu0 0.0
  %2236 = vmatprep.subr.mxu0 0.0
  %2237 = vmatpush1.xpose.msra.mxu0 0.0
  %2238 = vmatprep.subr.mxu0 0.0
  %2239 = vmatpush1.xpose.msra.mxu0 0.0
  %2240 = vmatprep.subr.mxu0 0.0
  %2241 = vmatpush1.xpose.msra.mxu0 0.0
  %2242 = vmatprep.mubr.f32.mxu0 0.0
  %2243 = vmatmul.mubr.f32.gmra.mrb[0].mxu0 %v1973
  %v2244 = vpop.f32.mrb[0].mxu0
  %v2245 = vadd.f32 %v1970, %v2244
  %v2246 = vpop.f32.mrb[0].mxu0
  %2247 = vdwg.mxu0
  %v2248 = vsel %vm2069, %v2245, -inf
  %2249 = vmax.xlane.f32.xlu0 %v2248
  %v2250 = vpop.xlane.xlu0 %2249
  %v2251 = vsub.f32 %v2245, %v2250
  %v2252 = vmul.f32 %v2251, 1.442695
  %v2253 = vpow.pop %v2252
  %v2254 = vsel %vm2069, %v2253, 0.0
  %2255 = vadd.xlane.f32.xlu0 %v2254
  %v2256 = vpop.xlane.xlu0 %2255
  %v2257 = vrcp.pop %v2256
  %v2258 = vmul.f32 %v2253, %v2257
  %v2260 = vsel %vm2069, %v2258, 0
  %2262 = vmatprep.subr.mxu0 0.0
  %2263 = vmatpush1.msra.mxu0 %v1675
  %2264 = vmatprep.subr.mxu0 0.0
  %2265 = vmatpush1.msra.mxu0 %v1676
  %2266 = vmatprep.subr.mxu0 0.0
  %2267 = vmatpush1.msra.mxu0 %v1677
  %2268 = vmatprep.subr.mxu0 0.0
  %2269 = vmatpush1.msra.mxu0 %v1678
  %2270 = vmatprep.subr.mxu0 0.0
  %2271 = vmatpush1.msra.mxu0 %v1679
  %2272 = vmatprep.subr.mxu0 0.0
  %2273 = vmatpush1.msra.mxu0 %v1680
  %2274 = vmatprep.subr.mxu0 0.0
  %2275 = vmatpush1.msra.mxu0 %v1681
  %2276 = vmatprep.subr.mxu0 0.0
  %2277 = vmatpush1.msra.mxu0 %v1682
  %2278 = vmatprep.subr.mxu0 0.0
  %2279 = vmatpush1.msra.mxu0 0.0
  %2280 = vmatprep.subr.mxu0 0.0
  %2281 = vmatpush1.msra.mxu0 0.0
  %2282 = vmatprep.subr.mxu0 0.0
  %2283 = vmatpush1.msra.mxu0 0.0
  %2284 = vmatprep.subr.mxu0 0.0
  %2285 = vmatpush1.msra.mxu0 0.0
  %2286 = vmatprep.subr.mxu0 0.0
  %2287 = vmatpush1.msra.mxu0 0.0
  %2288 = vmatprep.subr.mxu0 0.0
  %2289 = vmatpush1.msra.mxu0 0.0
  %2290 = vmatprep.subr.mxu0 0.0
  %2291 = vmatpush1.msra.mxu0 0.0
  %2292 = vmatprep.subr.mxu0 0.0
  %2293 = vmatpush1.msra.mxu0 0.0
  %2294 = vmatprep.subr.mxu0 0.0
  %2295 = vmatpush1.msra.mxu0 0.0
  %2296 = vmatprep.subr.mxu0 0.0
  %2297 = vmatpush1.msra.mxu0 0.0
  %2298 = vmatprep.subr.mxu0 0.0
  %2299 = vmatpush1.msra.mxu0 0.0
  %2300 = vmatprep.subr.mxu0 0.0
  %2301 = vmatpush1.msra.mxu0 0.0
  %2302 = vmatprep.subr.mxu0 0.0
  %2303 = vmatpush1.msra.mxu0 0.0
  %2304 = vmatprep.subr.mxu0 0.0
  %2305 = vmatpush1.msra.mxu0 0.0
  %2306 = vmatprep.subr.mxu0 0.0
  %2307 = vmatpush1.msra.mxu0 0.0
  %2308 = vmatprep.subr.mxu0 0.0
  %2309 = vmatpush1.msra.mxu0 0.0
  %2310 = vmatprep.subr.mxu0 0.0
  %2311 = vmatpush1.msra.mxu0 0.0
  %2312 = vmatprep.subr.mxu0 0.0
  %2313 = vmatpush1.msra.mxu0 0.0
  %2314 = vmatprep.subr.mxu0 0.0
  %2315 = vmatpush1.msra.mxu0 0.0
  %2316 = vmatprep.subr.mxu0 0.0
  %2317 = vmatpush1.msra.mxu0 0.0
  %2318 = vmatprep.subr.mxu0 0.0
  %2319 = vmatpush1.msra.mxu0 0.0
  %2320 = vmatprep.subr.mxu0 0.0
  %2321 = vmatpush1.msra.mxu0 0.0
  %2322 = vmatprep.subr.mxu0 0.0
  %2323 = vmatpush1.msra.mxu0 0.0
  %2324 = vmatprep.subr.mxu0 0.0
  %2325 = vmatpush1.msra.mxu0 0.0
  %2326 = vmatprep.mubr.f32.mxu0 0.0
  %2327 = vmatmul.mubr.f32.gmra.mrb[0].mxu0 %v2260
  %v2328 = vpop.f32.mrb[0].mxu0
  %v2329 = vadd.f32 0.0, %v2328
  %v2330 = vpop.f32.mrb[0].mxu0
  %2331 = vdwg.mxu0
  %v2332 = vsel %vm236, %v2151, 0.0
  %v2333 = vrot.slane %v2332, 4
  %v2334 = vadd.f32 %v2332, %v2333
  %v2335 = vrot.slane %v2334, 2
  %v2336 = vadd.f32 %v2334, %v2335
  %v2337 = vrot.slane %v2336, 1
  %v2338 = vadd.f32 %v2336, %v2337
  %v2339 = vsel %vm236, %v2329, 0.0
  %v2340 = vrot.slane %v2339, 4
  %v2341 = vadd.f32 %v2339, %v2340
  %v2342 = vrot.slane %v2341, 2
  %v2343 = vadd.f32 %v2341, %v2342
  %v2344 = vrot.slane %v2343, 1
  %v2345 = vadd.f32 %v2343, %v2344
  %v2346 = vrcp.pop 8.0
  %v2347 = vmul.f32 %v2338, %v2346
  %v2348 = vmul.f32 %v2345, %v2346
  %v2349 = vsub.f32 %v2151, %v2347
  %v2350 = vsub.f32 %v2329, %v2348
  %v2351 = vmul.f32 %v2349, %v2349
  %v2352 = vmul.f32 %v2350, %v2350
  %v2353 = vsel %vm236, %v2351, 0.0
  %v2354 = vrot.slane %v2353, 4
  %v2355 = vadd.f32 %v2353, %v2354
  %v2356 = vrot.slane %v2355, 2
  %v2357 = vadd.f32 %v2355, %v2356
  %v2358 = vrot.slane %v2357, 1
  %v2359 = vadd.f32 %v2357, %v2358
  %v2360 = vsel %vm236, %v2352, 0.0
  %v2361 = vrot.slane %v2360, 4
  %v2362 = vadd.f32 %v2360, %v2361
  %v2363 = vrot.slane %v2362, 2
  %v2364 = vadd.f32 %v2362, %v2363
  %v2365 = vrot.slane %v2364, 1
  %v2366 = vadd.f32 %v2364, %v2365
  %v2367 = vmul.f32 %v2359, %v2346
  %v2368 = vmul.f32 %v2366, %v2346
  %v2369 = vadd.f32 %v2367, 0.001
  %v2370 = vadd.f32 %v2368, 0.001
  %v2371 = vrsqrt.pop %v2369
  %v2372 = vrsqrt.pop %v2370
  %v2373 = vmul.f32 %v2349, %v2371
  %v2374 = vmul.f32 %v2350, %v2372
  %v2375 = vsel %vm236, %v2373, 0.0
  %v2376 = vsel %vm236, %v2374, 0.0
  %v2377 = vadd.f32 %v2375, %v2376
  %v2378 = vrot.slane %v2377, 4
  %v2379 = vadd.f32 %v2377, %v2378
  %v2380 = vrot.slane %v2379, 2
  %v2381 = vadd.f32 %v2379, %v2380
  %v2382 = vrot.slane %v2381, 1
  %v2383 = vadd.f32 %v2381, %v2382
  %v2384 = vrcp.pop 16.0
  %v2385 = vmul.f32 %v2383, %v2384
  %v2386 = vsub.f32 %v2373, %v2385
  %v2387 = vsub.f32 %v2374, %v2385
  %v2388 = vmul.f32 %v2386, %v2386
  %v2389 = vmul.f32 %v2387, %v2387
  %v2390 = vsel %vm236, %v2388, 0.0
  %v2391 = vsel %vm236, %v2389, 0.0
  %v2392 = vadd.f32 %v2390, %v2391
  %v2393 = vrot.slane %v2392, 4
  %v2394 = vadd.f32 %v2392, %v2393
  %v2395 = vrot.slane %v2394, 2
  %v2396 = vadd.f32 %v2394, %v2395
  %v2397 = vrot.slane %v2396, 1
  %v2398 = vadd.f32 %v2396, %v2397
  %v2399 = vmul.f32 %v2398, %v2384
  %v2400 = vadd.f32 %v2399, 1e-05
  %v2401 = vrsqrt.pop %v2400
  %v2402 = vmul.f32 %v2386, %v2401
  %v2403 = vmul.f32 %v2387, %v2401
  %v2404 = vmax.f32 %v2402, 0.0
  %v2405 = vmax.f32 %v2403, 0.0
  %v2406 = vld [vmem:[%s1 + $0xa8] sm:$0xff]
  %v2407 = vld [vmem:[%s1 + $0xb0] sm:$0xff]
  %v2408 = vld [vmem:[%s1 + $0xb8] sm:$0xff]
  %v2409 = vld [vmem:[%s1 + $0xc0] sm:$0xff]
  %v2410 = vld [vmem:[%s1 + $0xc8] sm:$0x1]
  %v2411 = vlaneseq
  %v2412 = vshrl.u32 %v2411, 7
  %v2413 = vsub.s32 0, %v2412
  %v2414 = vrot.slane %v2410, %v2413
  %v2416 = vsel %vm236, %v2404, 0
  %v2419 = vsel %vm236, %v2405, 0
  %2421 = vmatprep.subr.mxu0 0.0
  %2422 = vmatpush1.msra.mxu0 %v2406
  %2423 = vmatprep.subr.mxu0 0.0
  %2424 = vmatpush1.msra.mxu0 %v2407
  %2425 = vmatprep.subr.mxu0 0.0
  %2426 = vmatpush1.msra.mxu0 %v2408
  %2427 = vmatprep.subr.mxu0 0.0
  %2428 = vmatpush1.msra.mxu0 %v2409
  %2429 = vmatprep.subr.mxu0 0.0
  %2430 = vmatpush1.msra.mxu0 0.0
  %2431 = vmatprep.subr.mxu0 0.0
  %2432 = vmatpush1.msra.mxu0 0.0
  %2433 = vmatprep.subr.mxu0 0.0
  %2434 = vmatpush1.msra.mxu0 0.0
  %2435 = vmatprep.subr.mxu0 0.0
  %2436 = vmatpush1.msra.mxu0 0.0
  %2437 = vmatprep.subr.mxu0 0.0
  %2438 = vmatpush1.msra.mxu0 0.0
  %2439 = vmatprep.subr.mxu0 0.0
  %2440 = vmatpush1.msra.mxu0 0.0
  %2441 = vmatprep.subr.mxu0 0.0
  %2442 = vmatpush1.msra.mxu0 0.0
  %2443 = vmatprep.subr.mxu0 0.0
  %2444 = vmatpush1.msra.mxu0 0.0
  %2445 = vmatprep.subr.mxu0 0.0
  %2446 = vmatpush1.msra.mxu0 0.0
  %2447 = vmatprep.subr.mxu0 0.0
  %2448 = vmatpush1.msra.mxu0 0.0
  %2449 = vmatprep.subr.mxu0 0.0
  %2450 = vmatpush1.msra.mxu0 0.0
  %2451 = vmatprep.subr.mxu0 0.0
  %2452 = vmatpush1.msra.mxu0 0.0
  %2453 = vmatprep.subr.mxu0 0.0
  %2454 = vmatpush1.msra.mxu0 0.0
  %2455 = vmatprep.subr.mxu0 0.0
  %2456 = vmatpush1.msra.mxu0 0.0
  %2457 = vmatprep.subr.mxu0 0.0
  %2458 = vmatpush1.msra.mxu0 0.0
  %2459 = vmatprep.subr.mxu0 0.0
  %2460 = vmatpush1.msra.mxu0 0.0
  %2461 = vmatprep.subr.mxu0 0.0
  %2462 = vmatpush1.msra.mxu0 0.0
  %2463 = vmatprep.subr.mxu0 0.0
  %2464 = vmatpush1.msra.mxu0 0.0
  %2465 = vmatprep.subr.mxu0 0.0
  %2466 = vmatpush1.msra.mxu0 0.0
  %2467 = vmatprep.subr.mxu0 0.0
  %2468 = vmatpush1.msra.mxu0 0.0
  %2469 = vmatprep.subr.mxu0 0.0
  %2470 = vmatpush1.msra.mxu0 0.0
  %2471 = vmatprep.subr.mxu0 0.0
  %2472 = vmatpush1.msra.mxu0 0.0
  %2473 = vmatprep.subr.mxu0 0.0
  %2474 = vmatpush1.msra.mxu0 0.0
  %2475 = vmatprep.subr.mxu0 0.0
  %2476 = vmatpush1.msra.mxu0 0.0
  %2477 = vmatprep.subr.mxu0 0.0
  %2478 = vmatpush1.msra.mxu0 0.0
  %2479 = vmatprep.subr.mxu0 0.0
  %2480 = vmatpush1.msra.mxu0 0.0
  %2481 = vmatprep.subr.mxu0 0.0
  %2482 = vmatpush1.msra.mxu0 0.0
  %2483 = vmatprep.subr.mxu0 0.0
  %2484 = vmatpush1.msra.mxu0 0.0
  %2485 = vmatprep.mubr.f32.mxu0 0.0
  %2486 = vmatmul.mubr.f32.gmra.mrb[0].mxu0 %v2416
  %v2487 = vpop.f32.mrb[0].mxu0
  %v2488 = vadd.f32 %v2414, %v2487
  %v2489 = vpop.f32.mrb[0].mxu0
  %2490 = vmatprep.mubr.f32.mxu0 0.0
  %2491 = vmatmul.mubr.f32.gmra.mrb[0].mxu0 %v2419
  %v2492 = vpop.f32.mrb[0].mxu0
  %v2493 = vadd.f32 %v2414, %v2492
  %v2494 = vpop.f32.mrb[0].mxu0
  %2495 = vdwg.mxu0
  %v2496 = vsel %vm236, %v2488, 0.0
  %2497 = vadd.xlane.f32.xlu0 %v2496
  %v2498 = vpop.xlane.xlu0 %2497
  %v2499 = vsel %vm236, %v2493, 0.0
  %2500 = vadd.xlane.f32.xlu0 %v2499
  %v2501 = vpop.xlane.xlu0 %2500
  %v2502 = vadd.f32 %v2498, %v2501
  %v2503 = vmul.f32 %v2502, %v472
  %v2504 = vsub.f32 %v2488, %v2503
  %v2505 = vsub.f32 %v2493, %v2503
  %v2506 = vmul.f32 %v2504, %v2504
  %v2507 = vmul.f32 %v2505, %v2505
  %v2508 = vsel %vm236, %v2506, 0.0
  %2509 = vadd.xlane.f32.xlu0 %v2508
  %v2510 = vpop.xlane.xlu0 %2509
  %v2511 = vsel %vm236, %v2507, 0.0
  %2512 = vadd.xlane.f32.xlu0 %v2511
  %v2513 = vpop.xlane.xlu0 %2512
  %v2514 = vadd.f32 %v2510, %v2513
  %v2515 = vmul.f32 %v2514, %v472
  %v2516 = vadd.f32 %v2515, 1e-05
  %v2517 = vrsqrt.pop %v2516
  %v2518 = vmul.f32 %v2504, %v2517
  %v2519 = vmul.f32 %v2505, %v2517
  %v2520 = vmax.f32 %v2518, 0.0
  %v2521 = vmax.f32 %v2519, 0.0
  %v2522 = vld [vmem:[%s1 + $0xd0] sm:$0xff]
  %v2523 = vld [vmem:[%s1 + $0xd8] sm:$0xff]
  %2525 = vset.pattern.permute.xlu0 0
  %2526 = vperm.xlu0 %2525, %v2523
  %v2527 = vpop.permute.xlu0 %2526
  %v2530 = vsel %vm33, %v2522, 0
  %2532 = vmatprep.subr.mxu0 0.0
  %2533 = vmatpush1.msra.mxu0 %v2520
  %2534 = vmatprep.subr.mxu0 0.0
  %2535 = vmatpush1.msra.mxu0 0.0
  %2536 = vmatprep.subr.mxu0 0.0
  %2537 = vmatpush1.msra.mxu0 0.0
  %2538 = vmatprep.subr.mxu0 0.0
  %2539 = vmatpush1.msra.mxu0 0.0
  %2540 = vmatprep.subr.mxu0 0.0
  %2541 = vmatpush1.msra.mxu0 0.0
  %2542 = vmatprep.subr.mxu0 0.0
  %2543 = vmatpush1.msra.mxu0 0.0
  %2544 = vmatprep.subr.mxu0 0.0
  %2545 = vmatpush1.msra.mxu0 0.0
  %2546 = vmatprep.subr.mxu0 0.0
  %2547 = vmatpush1.msra.mxu0 0.0
  %2548 = vmatprep.subr.mxu0 0.0
  %2549 = vmatpush1.msra.mxu0 0.0
  %2550 = vmatprep.subr.mxu0 0.0
  %2551 = vmatpush1.msra.mxu0 0.0
  %2552 = vmatprep.subr.mxu0 0.0
  %2553 = vmatpush1.msra.mxu0 0.0
  %2554 = vmatprep.subr.mxu0 0.0
  %2555 = vmatpush1.msra.mxu0 0.0
  %2556 = vmatprep.subr.mxu0 0.0
  %2557 = vmatpush1.msra.mxu0 0.0
  %2558 = vmatprep.subr.mxu0 0.0
  %2559 = vmatpush1.msra.mxu0 0.0
  %2560 = vmatprep.subr.mxu0 0.0
  %2561 = vmatpush1.msra.mxu0 0.0
  %2562 = vmatprep.subr.mxu0 0.0
  %2563 = vmatpush1.msra.mxu0 0.0
  %2564 = vmatprep.subr.mxu0 0.0
  %2565 = vmatpush1.msra.mxu0 0.0
  %2566 = vmatprep.subr.mxu0 0.0
  %2567 = vmatpush1.msra.mxu0 0.0
  %2568 = vmatprep.subr.mxu0 0.0
  %2569 = vmatpush1.msra.mxu0 0.0
  %2570 = vmatprep.subr.mxu0 0.0
  %2571 = vmatpush1.msra.mxu0 0.0
  %2572 = vmatprep.subr.mxu0 0.0
  %2573 = vmatpush1.msra.mxu0 0.0
  %2574 = vmatprep.subr.mxu0 0.0
  %2575 = vmatpush1.msra.mxu0 0.0
  %2576 = vmatprep.subr.mxu0 0.0
  %2577 = vmatpush1.msra.mxu0 0.0
  %2578 = vmatprep.subr.mxu0 0.0
  %2579 = vmatpush1.msra.mxu0 0.0
  %2580 = vmatprep.subr.mxu0 0.0
  %2581 = vmatpush1.msra.mxu0 0.0
  %2582 = vmatprep.subr.mxu0 0.0
  %2583 = vmatpush1.msra.mxu0 0.0
  %2584 = vmatprep.subr.mxu0 0.0
  %2585 = vmatpush1.msra.mxu0 0.0
  %2586 = vmatprep.subr.mxu0 0.0
  %2587 = vmatpush1.msra.mxu0 0.0
  %2588 = vmatprep.subr.mxu0 0.0
  %2589 = vmatpush1.msra.mxu0 0.0
  %2590 = vmatprep.subr.mxu0 0.0
  %2591 = vmatpush1.msra.mxu0 0.0
  %2592 = vmatprep.subr.mxu0 0.0
  %2593 = vmatpush1.msra.mxu0 0.0
  %2594 = vmatprep.subr.mxu0 0.0
  %2595 = vmatpush1.msra.mxu0 0.0
  %2596 = vmatprep.mubr.f32.mxu0 0.0
  %2597 = vmatmul.mubr.f32.gmra.mrb[0].mxu0 %v2530
  %v2598 = vpop.f32.mrb[0].mxu0
  %v2599 = vadd.f32 %v2527, %v2598
  %v2600 = vpop.f32.mrb[0].mxu0
  %2601 = vdwg.mxu0
  %2602 = vmatprep.subr.mxu0 0.0
  %2603 = vmatpush1.msra.mxu0 %v2521
  %2604 = vmatprep.subr.mxu0 0.0
  %2605 = vmatpush1.msra.mxu0 0.0
  %2606 = vmatprep.subr.mxu0 0.0
  %2607 = vmatpush1.msra.mxu0 0.0
  %2608 = vmatprep.subr.mxu0 0.0
  %2609 = vmatpush1.msra.mxu0 0.0
  %2610 = vmatprep.subr.mxu0 0.0
  %2611 = vmatpush1.msra.mxu0 0.0
  %2612 = vmatprep.subr.mxu0 0.0
  %2613 = vmatpush1.msra.mxu0 0.0
  %2614 = vmatprep.subr.mxu0 0.0
  %2615 = vmatpush1.msra.mxu0 0.0
  %2616 = vmatprep.subr.mxu0 0.0
  %2617 = vmatpush1.msra.mxu0 0.0
  %2618 = vmatprep.subr.mxu0 0.0
  %2619 = vmatpush1.msra.mxu0 0.0
  %2620 = vmatprep.subr.mxu0 0.0
  %2621 = vmatpush1.msra.mxu0 0.0
  %2622 = vmatprep.subr.mxu0 0.0
  %2623 = vmatpush1.msra.mxu0 0.0
  %2624 = vmatprep.subr.mxu0 0.0
  %2625 = vmatpush1.msra.mxu0 0.0
  %2626 = vmatprep.subr.mxu0 0.0
  %2627 = vmatpush1.msra.mxu0 0.0
  %2628 = vmatprep.subr.mxu0 0.0
  %2629 = vmatpush1.msra.mxu0 0.0
  %2630 = vmatprep.subr.mxu0 0.0
  %2631 = vmatpush1.msra.mxu0 0.0
  %2632 = vmatprep.subr.mxu0 0.0
  %2633 = vmatpush1.msra.mxu0 0.0
  %2634 = vmatprep.subr.mxu0 0.0
  %2635 = vmatpush1.msra.mxu0 0.0
  %2636 = vmatprep.subr.mxu0 0.0
  %2637 = vmatpush1.msra.mxu0 0.0
  %2638 = vmatprep.subr.mxu0 0.0
  %2639 = vmatpush1.msra.mxu0 0.0
  %2640 = vmatprep.subr.mxu0 0.0
  %2641 = vmatpush1.msra.mxu0 0.0
  %2642 = vmatprep.subr.mxu0 0.0
  %2643 = vmatpush1.msra.mxu0 0.0
  %2644 = vmatprep.subr.mxu0 0.0
  %2645 = vmatpush1.msra.mxu0 0.0
  %2646 = vmatprep.subr.mxu0 0.0
  %2647 = vmatpush1.msra.mxu0 0.0
  %2648 = vmatprep.subr.mxu0 0.0
  %2649 = vmatpush1.msra.mxu0 0.0
  %2650 = vmatprep.subr.mxu0 0.0
  %2651 = vmatpush1.msra.mxu0 0.0
  %2652 = vmatprep.subr.mxu0 0.0
  %2653 = vmatpush1.msra.mxu0 0.0
  %2654 = vmatprep.subr.mxu0 0.0
  %2655 = vmatpush1.msra.mxu0 0.0
  %2656 = vmatprep.subr.mxu0 0.0
  %2657 = vmatpush1.msra.mxu0 0.0
  %2658 = vmatprep.subr.mxu0 0.0
  %2659 = vmatpush1.msra.mxu0 0.0
  %2660 = vmatprep.subr.mxu0 0.0
  %2661 = vmatpush1.msra.mxu0 0.0
  %2662 = vmatprep.subr.mxu0 0.0
  %2663 = vmatpush1.msra.mxu0 0.0
  %2664 = vmatprep.subr.mxu0 0.0
  %2665 = vmatpush1.msra.mxu0 0.0
  %2666 = vmatprep.mubr.f32.mxu0 0.0
  %2667 = vmatmul.mubr.f32.gmra.mrb[0].mxu0 %v2530
  %v2668 = vpop.f32.mrb[0].mxu0
  %v2669 = vadd.f32 %v2527, %v2668
  %v2670 = vpop.f32.mrb[0].mxu0
  %2671 = vdwg.mxu0
  %v2672 = vadd.f32 %v2488, %v2599
  %v2673 = vadd.f32 %v2493, %v2669
  %v2674 = vsel %vm236, %v2672, 0.0
  %v2675 = vrot.slane %v2674, 4
  %v2676 = vadd.f32 %v2674, %v2675
  %v2677 = vrot.slane %v2676, 2
  %v2678 = vadd.f32 %v2676, %v2677
  %v2679 = vrot.slane %v2678, 1
  %v2680 = vadd.f32 %v2678, %v2679
  %v2681 = vsel %vm236, %v2673, 0.0
  %v2682 = vrot.slane %v2681, 4
  %v2683 = vadd.f32 %v2681, %v2682
  %v2684 = vrot.slane %v2683, 2
  %v2685 = vadd.f32 %v2683, %v2684
  %v2686 = vrot.slane %v2685, 1
  %v2687 = vadd.f32 %v2685, %v2686
  %v2688 = vmul.f32 %v2680, %v2346
  %v2689 = vmul.f32 %v2687, %v2346
  %v2690 = vsub.f32 %v2672, %v2688
  %v2691 = vsub.f32 %v2673, %v2689
  %v2692 = vmul.f32 %v2690, %v2690
  %v2693 = vmul.f32 %v2691, %v2691
  %v2694 = vsel %vm236, %v2692, 0.0
  %v2695 = vrot.slane %v2694, 4
  %v2696 = vadd.f32 %v2694, %v2695
  %v2697 = vrot.slane %v2696, 2
  %v2698 = vadd.f32 %v2696, %v2697
  %v2699 = vrot.slane %v2698, 1
  %v2700 = vadd.f32 %v2698, %v2699
  %v2701 = vsel %vm236, %v2693, 0.0
  %v2702 = vrot.slane %v2701, 4
  %v2703 = vadd.f32 %v2701, %v2702
  %v2704 = vrot.slane %v2703, 2
  %v2705 = vadd.f32 %v2703, %v2704
  %v2706 = vrot.slane %v2705, 1
  %v2707 = vadd.f32 %v2705, %v2706
  %v2708 = vmul.f32 %v2700, %v2346
  %v2709 = vmul.f32 %v2707, %v2346
  %v2710 = vadd.f32 %v2708, 0.001
  %v2711 = vadd.f32 %v2709, 0.001
  %v2712 = vrsqrt.pop %v2710
  %v2713 = vrsqrt.pop %v2711
  %v2714 = vmul.f32 %v2690, %v2712
  %v2715 = vmul.f32 %v2691, %v2713
  %v2716 = vsel %vm236, %v2714, 0.0
  %v2717 = vsel %vm236, %v2715, 0.0
  %v2718 = vadd.f32 %v2716, %v2717
  %v2719 = vrot.slane %v2718, 4
  %v2720 = vadd.f32 %v2718, %v2719
  %v2721 = vrot.slane %v2720, 2
  %v2722 = vadd.f32 %v2720, %v2721
  %v2723 = vrot.slane %v2722, 1
  %v2724 = vadd.f32 %v2722, %v2723
  %v2725 = vmul.f32 %v2724, %v2384
  %v2726 = vsub.f32 %v2714, %v2725
  %v2727 = vsub.f32 %v2715, %v2725
  %v2728 = vmul.f32 %v2726, %v2726
  %v2729 = vmul.f32 %v2727, %v2727
  %v2730 = vsel %vm236, %v2728, 0.0
  %v2731 = vsel %vm236, %v2729, 0.0
  %v2732 = vadd.f32 %v2730, %v2731
  %v2733 = vrot.slane %v2732, 4
  %v2734 = vadd.f32 %v2732, %v2733
  %v2735 = vrot.slane %v2734, 2
  %v2736 = vadd.f32 %v2734, %v2735
  %v2737 = vrot.slane %v2736, 1
  %v2738 = vadd.f32 %v2736, %v2737
  %v2739 = vmul.f32 %v2738, %v2384
  %v2740 = vadd.f32 %v2739, 1e-05
  %v2741 = vrsqrt.pop %v2740
  %v2742 = vmul.f32 %v2726, %v2741
  %v2743 = vmul.f32 %v2727, %v2741
  %v2744 = vmax.f32 %v2742, 0.0
  %v2745 = vmax.f32 %v2743, 0.0
  %v2746 = vld [vmem:[%s1 + $0xe0] sm:$0xff]
  %v2747 = vld [vmem:[%s1 + $0xe8] sm:$0xff]
  %v2748 = vld [vmem:[%s1 + $0xf0] sm:$0xff]
  %v2749 = vld [vmem:[%s1 + $0xf8] sm:$0xff]
  %v2750 = vld [vmem:[%s1 + $0x100] sm:$0x1]
  %v2751 = vlaneseq
  %v2752 = vshrl.u32 %v2751, 7
  %v2753 = vsub.s32 0, %v2752
  %v2754 = vrot.slane %v2750, %v2753
  %v2756 = vsel %vm236, %v2744, 0
  %v2759 = vsel %vm236, %v2745, 0
  %2761 = vmatprep.subr.mxu0 0.0
  %2762 = vmatpush1.msra.mxu0 %v2746
  %2763 = vmatprep.subr.mxu0 0.0
  %2764 = vmatpush1.msra.mxu0 %v2747
  %2765 = vmatprep.subr.mxu0 0.0
  %2766 = vmatpush1.msra.mxu0 %v2748
  %2767 = vmatprep.subr.mxu0 0.0
  %2768 = vmatpush1.msra.mxu0 %v2749
  %2769 = vmatprep.subr.mxu0 0.0
  %2770 = vmatpush1.msra.mxu0 0.0
  %2771 = vmatprep.subr.mxu0 0.0
  %2772 = vmatpush1.msra.mxu0 0.0
  %2773 = vmatprep.subr.mxu0 0.0
  %2774 = vmatpush1.msra.mxu0 0.0
  %2775 = vmatprep.subr.mxu0 0.0
  %2776 = vmatpush1.msra.mxu0 0.0
  %2777 = vmatprep.subr.mxu0 0.0
  %2778 = vmatpush1.msra.mxu0 0.0
  %2779 = vmatprep.subr.mxu0 0.0
  %2780 = vmatpush1.msra.mxu0 0.0
  %2781 = vmatprep.subr.mxu0 0.0
  %2782 = vmatpush1.msra.mxu0 0.0
  %2783 = vmatprep.subr.mxu0 0.0
  %2784 = vmatpush1.msra.mxu0 0.0
  %2785 = vmatprep.subr.mxu0 0.0
  %2786 = vmatpush1.msra.mxu0 0.0
  %2787 = vmatprep.subr.mxu0 0.0
  %2788 = vmatpush1.msra.mxu0 0.0
  %2789 = vmatprep.subr.mxu0 0.0
  %2790 = vmatpush1.msra.mxu0 0.0
  %2791 = vmatprep.subr.mxu0 0.0
  %2792 = vmatpush1.msra.mxu0 0.0
  %2793 = vmatprep.subr.mxu0 0.0
  %2794 = vmatpush1.msra.mxu0 0.0
  %2795 = vmatprep.subr.mxu0 0.0
  %2796 = vmatpush1.msra.mxu0 0.0
  %2797 = vmatprep.subr.mxu0 0.0
  %2798 = vmatpush1.msra.mxu0 0.0
  %2799 = vmatprep.subr.mxu0 0.0
  %2800 = vmatpush1.msra.mxu0 0.0
  %2801 = vmatprep.subr.mxu0 0.0
  %2802 = vmatpush1.msra.mxu0 0.0
  %2803 = vmatprep.subr.mxu0 0.0
  %2804 = vmatpush1.msra.mxu0 0.0
  %2805 = vmatprep.subr.mxu0 0.0
  %2806 = vmatpush1.msra.mxu0 0.0
  %2807 = vmatprep.subr.mxu0 0.0
  %2808 = vmatpush1.msra.mxu0 0.0
  %2809 = vmatprep.subr.mxu0 0.0
  %2810 = vmatpush1.msra.mxu0 0.0
  %2811 = vmatprep.subr.mxu0 0.0
  %2812 = vmatpush1.msra.mxu0 0.0
  %2813 = vmatprep.subr.mxu0 0.0
  %2814 = vmatpush1.msra.mxu0 0.0
  %2815 = vmatprep.subr.mxu0 0.0
  %2816 = vmatpush1.msra.mxu0 0.0
  %2817 = vmatprep.subr.mxu0 0.0
  %2818 = vmatpush1.msra.mxu0 0.0
  %2819 = vmatprep.subr.mxu0 0.0
  %2820 = vmatpush1.msra.mxu0 0.0
  %2821 = vmatprep.subr.mxu0 0.0
  %2822 = vmatpush1.msra.mxu0 0.0
  %2823 = vmatprep.subr.mxu0 0.0
  %2824 = vmatpush1.msra.mxu0 0.0
  %2825 = vmatprep.mubr.f32.mxu0 0.0
  %2826 = vmatmul.mubr.f32.gmra.mrb[0].mxu0 %v2756
  %v2827 = vpop.f32.mrb[0].mxu0
  %v2828 = vadd.f32 %v2754, %v2827
  %v2829 = vpop.f32.mrb[0].mxu0
  %2830 = vmatprep.mubr.f32.mxu0 0.0
  %2831 = vmatmul.mubr.f32.gmra.mrb[0].mxu0 %v2759
  %v2832 = vpop.f32.mrb[0].mxu0
  %v2833 = vadd.f32 %v2754, %v2832
  %v2834 = vpop.f32.mrb[0].mxu0
  %2835 = vdwg.mxu0
  %v2836 = vadd.f32 %v2828, %v2151
  %v2837 = vadd.f32 %v2833, %v2329
  %v2838 = vsel %vm236, %v2836, 0.0
  %v2839 = vrot.slane %v2838, 4
  %v2840 = vadd.f32 %v2838, %v2839
  %v2841 = vrot.slane %v2840, 2
  %v2842 = vadd.f32 %v2840, %v2841
  %v2843 = vrot.slane %v2842, 1
  %v2844 = vadd.f32 %v2842, %v2843
  %v2845 = vsel %vm236, %v2837, 0.0
  %v2846 = vrot.slane %v2845, 4
  %v2847 = vadd.f32 %v2845, %v2846
  %v2848 = vrot.slane %v2847, 2
  %v2849 = vadd.f32 %v2847, %v2848
  %v2850 = vrot.slane %v2849, 1
  %v2851 = vadd.f32 %v2849, %v2850
  %v2852 = vmul.f32 %v2844, %v2346
  %v2853 = vmul.f32 %v2851, %v2346
  %v2854 = vsub.f32 %v2836, %v2852
  %v2855 = vsub.f32 %v2837, %v2853
  %v2856 = vmul.f32 %v2854, %v2854
  %v2857 = vmul.f32 %v2855, %v2855
  %v2858 = vsel %vm236, %v2856, 0.0
  %v2859 = vrot.slane %v2858, 4
  %v2860 = vadd.f32 %v2858, %v2859
  %v2861 = vrot.slane %v2860, 2
  %v2862 = vadd.f32 %v2860, %v2861
  %v2863 = vrot.slane %v2862, 1
  %v2864 = vadd.f32 %v2862, %v2863
  %v2865 = vsel %vm236, %v2857, 0.0
  %v2866 = vrot.slane %v2865, 4
  %v2867 = vadd.f32 %v2865, %v2866
  %v2868 = vrot.slane %v2867, 2
  %v2869 = vadd.f32 %v2867, %v2868
  %v2870 = vrot.slane %v2869, 1
  %v2871 = vadd.f32 %v2869, %v2870
  %v2872 = vmul.f32 %v2864, %v2346
  %v2873 = vmul.f32 %v2871, %v2346
  %v2874 = vadd.f32 %v2872, 0.001
  %v2875 = vadd.f32 %v2873, 0.001
  %v2876 = vrsqrt.pop %v2874
  %v2877 = vrsqrt.pop %v2875
  %v2878 = vmul.f32 %v2854, %v2876
  %v2879 = vmul.f32 %v2855, %v2877
  %v2880 = vsel %vm236, %v2878, 0.0
  %v2881 = vsel %vm236, %v2879, 0.0
  %v2882 = vadd.f32 %v2880, %v2881
  %v2883 = vrot.slane %v2882, 4
  %v2884 = vadd.f32 %v2882, %v2883
  %v2885 = vrot.slane %v2884, 2
  %v2886 = vadd.f32 %v2884, %v2885
  %v2887 = vrot.slane %v2886, 1
  %v2888 = vadd.f32 %v2886, %v2887
  %v2889 = vmul.f32 %v2888, %v2384
  %v2890 = vsub.f32 %v2878, %v2889
  %v2891 = vsub.f32 %v2879, %v2889
  %v2892 = vmul.f32 %v2890, %v2890
  %v2893 = vmul.f32 %v2891, %v2891
  %v2894 = vsel %vm236, %v2892, 0.0
  %v2895 = vsel %vm236, %v2893, 0.0
  %v2896 = vadd.f32 %v2894, %v2895
  %v2897 = vrot.slane %v2896, 4
  %v2898 = vadd.f32 %v2896, %v2897
  %v2899 = vrot.slane %v2898, 2
  %v2900 = vadd.f32 %v2898, %v2899
  %v2901 = vrot.slane %v2900, 1
  %v2902 = vadd.f32 %v2900, %v2901
  %v2903 = vmul.f32 %v2902, %v2384
  %v2904 = vadd.f32 %v2903, 1e-05
  %v2905 = vrsqrt.pop %v2904
  %v2906 = vmul.f32 %v2890, %v2905
  %v2907 = vmul.f32 %v2891, %v2905
  %v2908 = vmax.f32 %v2906, 0.0
  %v2909 = vmax.f32 %v2907, 0.0
  %v2910 = vld [vmem:[%s1 + $0x108] sm:$0xff]
  %v2911 = vld [vmem:[%s1 + $0x110] sm:$0xff]
  %v2912 = vld [vmem:[%s1 + $0x118] sm:$0xff]
  %v2913 = vld [vmem:[%s1 + $0x120] sm:$0xff]
  %v2914 = vld [vmem:[%s1 + $0x128] sm:$0x1]
  %v2915 = vlaneseq
  %v2916 = vshrl.u32 %v2915, 7
  %v2917 = vsub.s32 0, %v2916
  %v2918 = vrot.slane %v2914, %v2917
  %v2920 = vsel %vm236, %v2908, 0
  %v2923 = vsel %vm236, %v2909, 0
  %2925 = vmatprep.subr.mxu0 0.0
  %2926 = vmatpush1.msra.mxu0 %v2910
  %2927 = vmatprep.subr.mxu0 0.0
  %2928 = vmatpush1.msra.mxu0 %v2911
  %2929 = vmatprep.subr.mxu0 0.0
  %2930 = vmatpush1.msra.mxu0 %v2912
  %2931 = vmatprep.subr.mxu0 0.0
  %2932 = vmatpush1.msra.mxu0 %v2913
  %2933 = vmatprep.subr.mxu0 0.0
  %2934 = vmatpush1.msra.mxu0 0.0
  %2935 = vmatprep.subr.mxu0 0.0
  %2936 = vmatpush1.msra.mxu0 0.0
  %2937 = vmatprep.subr.mxu0 0.0
  %2938 = vmatpush1.msra.mxu0 0.0
  %2939 = vmatprep.subr.mxu0 0.0
  %2940 = vmatpush1.msra.mxu0 0.0
  %2941 = vmatprep.subr.mxu0 0.0
  %2942 = vmatpush1.msra.mxu0 0.0
  %2943 = vmatprep.subr.mxu0 0.0
  %2944 = vmatpush1.msra.mxu0 0.0
  %2945 = vmatprep.subr.mxu0 0.0
  %2946 = vmatpush1.msra.mxu0 0.0
  %2947 = vmatprep.subr.mxu0 0.0
  %2948 = vmatpush1.msra.mxu0 0.0
  %2949 = vmatprep.subr.mxu0 0.0
  %2950 = vmatpush1.msra.mxu0 0.0
  %2951 = vmatprep.subr.mxu0 0.0
  %2952 = vmatpush1.msra.mxu0 0.0
  %2953 = vmatprep.subr.mxu0 0.0
  %2954 = vmatpush1.msra.mxu0 0.0
  %2955 = vmatprep.subr.mxu0 0.0
  %2956 = vmatpush1.msra.mxu0 0.0
  %2957 = vmatprep.subr.mxu0 0.0
  %2958 = vmatpush1.msra.mxu0 0.0
  %2959 = vmatprep.subr.mxu0 0.0
  %2960 = vmatpush1.msra.mxu0 0.0
  %2961 = vmatprep.subr.mxu0 0.0
  %2962 = vmatpush1.msra.mxu0 0.0
  %2963 = vmatprep.subr.mxu0 0.0
  %2964 = vmatpush1.msra.mxu0 0.0
  %2965 = vmatprep.subr.mxu0 0.0
  %2966 = vmatpush1.msra.mxu0 0.0
  %2967 = vmatprep.subr.mxu0 0.0
  %2968 = vmatpush1.msra.mxu0 0.0
  %2969 = vmatprep.subr.mxu0 0.0
  %2970 = vmatpush1.msra.mxu0 0.0
  %2971 = vmatprep.subr.mxu0 0.0
  %2972 = vmatpush1.msra.mxu0 0.0
  %2973 = vmatprep.subr.mxu0 0.0
  %2974 = vmatpush1.msra.mxu0 0.0
  %2975 = vmatprep.subr.mxu0 0.0
  %2976 = vmatpush1.msra.mxu0 0.0
  %2977 = vmatprep.subr.mxu0 0.0
  %2978 = vmatpush1.msra.mxu0 0.0
  %2979 = vmatprep.subr.mxu0 0.0
  %2980 = vmatpush1.msra.mxu0 0.0
  %2981 = vmatprep.subr.mxu0 0.0
  %2982 = vmatpush1.msra.mxu0 0.0
  %2983 = vmatprep.subr.mxu0 0.0
  %2984 = vmatpush1.msra.mxu0 0.0
  %2985 = vmatprep.subr.mxu0 0.0
  %2986 = vmatpush1.msra.mxu0 0.0
  %2987 = vmatprep.subr.mxu0 0.0
  %2988 = vmatpush1.msra.mxu0 0.0
  %2989 = vmatprep.mubr.f32.mxu0 0.0
  %2990 = vmatmul.mubr.f32.gmra.mrb[0].mxu0 %v2920
  %v2991 = vpop.f32.mrb[0].mxu0
  %v2992 = vadd.f32 %v2918, %v2991
  %v2993 = vpop.f32.mrb[0].mxu0
  %2994 = vmatprep.mubr.f32.mxu0 0.0
  %2995 = vmatmul.mubr.f32.gmra.mrb[0].mxu0 %v2923
  %v2996 = vpop.f32.mrb[0].mxu0
  %v2997 = vadd.f32 %v2918, %v2996
  %v2998 = vpop.f32.mrb[0].mxu0
  %2999 = vdwg.mxu0
  %v3000 = vsel %vm236, %v2992, 0.0
  %3001 = vadd.xlane.f32.xlu0 %v3000
  %v3002 = vpop.xlane.xlu0 %3001
  %v3003 = vsel %vm236, %v2997, 0.0
  %3004 = vadd.xlane.f32.xlu0 %v3003
  %v3005 = vpop.xlane.xlu0 %3004
  %v3006 = vadd.f32 %v3002, %v3005
  %v3007 = vmul.f32 %v3006, %v472
  %v3008 = vsub.f32 %v2992, %v3007
  %v3009 = vsub.f32 %v2997, %v3007
  %v3010 = vmul.f32 %v3008, %v3008
  %v3011 = vmul.f32 %v3009, %v3009
  %v3012 = vsel %vm236, %v3010, 0.0
  %3013 = vadd.xlane.f32.xlu0 %v3012
  %v3014 = vpop.xlane.xlu0 %3013
  %v3015 = vsel %vm236, %v3011, 0.0
  %3016 = vadd.xlane.f32.xlu0 %v3015
  %v3017 = vpop.xlane.xlu0 %3016
  %v3018 = vadd.f32 %v3014, %v3017
  %v3019 = vmul.f32 %v3018, %v472
  %v3020 = vadd.f32 %v3019, 1e-05
  %v3021 = vrsqrt.pop %v3020
  %v3022 = vmul.f32 %v3008, %v3021
  %v3023 = vmul.f32 %v3009, %v3021
  %v3024 = vmax.f32 %v3022, 0.0
  %v3025 = vmax.f32 %v3023, 0.0
  %v3026 = vld [vmem:[%s1 + $0x130] sm:$0xff]
  %v3027 = vld [vmem:[%s1 + $0x138] sm:$0xff]
  %3029 = vset.pattern.permute.xlu0 0
  %3030 = vperm.xlu0 %3029, %v3027
  %v3031 = vpop.permute.xlu0 %3030
  %v3034 = vsel %vm33, %v3026, 0
  %3036 = vmatprep.subr.mxu0 0.0
  %3037 = vmatpush1.msra.mxu0 %v3024
  %3038 = vmatprep.subr.mxu0 0.0
  %3039 = vmatpush1.msra.mxu0 0.0
  %3040 = vmatprep.subr.mxu0 0.0
  %3041 = vmatpush1.msra.mxu0 0.0
  %3042 = vmatprep.subr.mxu0 0.0
  %3043 = vmatpush1.msra.mxu0 0.0
  %3044 = vmatprep.subr.mxu0 0.0
  %3045 = vmatpush1.msra.mxu0 0.0
  %3046 = vmatprep.subr.mxu0 0.0
  %3047 = vmatpush1.msra.mxu0 0.0
  %3048 = vmatprep.subr.mxu0 0.0
  %3049 = vmatpush1.msra.mxu0 0.0
  %3050 = vmatprep.subr.mxu0 0.0
  %3051 = vmatpush1.msra.mxu0 0.0
  %3052 = vmatprep.subr.mxu0 0.0
  %3053 = vmatpush1.msra.mxu0 0.0
  %3054 = vmatprep.subr.mxu0 0.0
  %3055 = vmatpush1.msra.mxu0 0.0
  %3056 = vmatprep.subr.mxu0 0.0
  %3057 = vmatpush1.msra.mxu0 0.0
  %3058 = vmatprep.subr.mxu0 0.0
  %3059 = vmatpush1.msra.mxu0 0.0
  %3060 = vmatprep.subr.mxu0 0.0
  %3061 = vmatpush1.msra.mxu0 0.0
  %3062 = vmatprep.subr.mxu0 0.0
  %3063 = vmatpush1.msra.mxu0 0.0
  %3064 = vmatprep.subr.mxu0 0.0
  %3065 = vmatpush1.msra.mxu0 0.0
  %3066 = vmatprep.subr.mxu0 0.0
  %3067 = vmatpush1.msra.mxu0 0.0
  %3068 = vmatprep.subr.mxu0 0.0
  %3069 = vmatpush1.msra.mxu0 0.0
  %3070 = vmatprep.subr.mxu0 0.0
  %3071 = vmatpush1.msra.mxu0 0.0
  %3072 = vmatprep.subr.mxu0 0.0
  %3073 = vmatpush1.msra.mxu0 0.0
  %3074 = vmatprep.subr.mxu0 0.0
  %3075 = vmatpush1.msra.mxu0 0.0
  %3076 = vmatprep.subr.mxu0 0.0
  %3077 = vmatpush1.msra.mxu0 0.0
  %3078 = vmatprep.subr.mxu0 0.0
  %3079 = vmatpush1.msra.mxu0 0.0
  %3080 = vmatprep.subr.mxu0 0.0
  %3081 = vmatpush1.msra.mxu0 0.0
  %3082 = vmatprep.subr.mxu0 0.0
  %3083 = vmatpush1.msra.mxu0 0.0
  %3084 = vmatprep.subr.mxu0 0.0
  %3085 = vmatpush1.msra.mxu0 0.0
  %3086 = vmatprep.subr.mxu0 0.0
  %3087 = vmatpush1.msra.mxu0 0.0
  %3088 = vmatprep.subr.mxu0 0.0
  %3089 = vmatpush1.msra.mxu0 0.0
  %3090 = vmatprep.subr.mxu0 0.0
  %3091 = vmatpush1.msra.mxu0 0.0
  %3092 = vmatprep.subr.mxu0 0.0
  %3093 = vmatpush1.msra.mxu0 0.0
  %3094 = vmatprep.subr.mxu0 0.0
  %3095 = vmatpush1.msra.mxu0 0.0
  %3096 = vmatprep.subr.mxu0 0.0
  %3097 = vmatpush1.msra.mxu0 0.0
  %3098 = vmatprep.subr.mxu0 0.0
  %3099 = vmatpush1.msra.mxu0 0.0
  %3100 = vmatprep.mubr.f32.mxu0 0.0
  %3101 = vmatmul.mubr.f32.gmra.mrb[0].mxu0 %v3034
  %v3102 = vpop.f32.mrb[0].mxu0
  %v3103 = vadd.f32 %v3031, %v3102
  %v3104 = vpop.f32.mrb[0].mxu0
  %3105 = vdwg.mxu0
  %3106 = vmatprep.subr.mxu0 0.0
  %3107 = vmatpush1.msra.mxu0 %v3025
  %3108 = vmatprep.subr.mxu0 0.0
  %3109 = vmatpush1.msra.mxu0 0.0
  %3110 = vmatprep.subr.mxu0 0.0
  %3111 = vmatpush1.msra.mxu0 0.0
  %3112 = vmatprep.subr.mxu0 0.0
  %3113 = vmatpush1.msra.mxu0 0.0
  %3114 = vmatprep.subr.mxu0 0.0
  %3115 = vmatpush1.msra.mxu0 0.0
  %3116 = vmatprep.subr.mxu0 0.0
  %3117 = vmatpush1.msra.mxu0 0.0
  %3118 = vmatprep.subr.mxu0 0.0
  %3119 = vmatpush1.msra.mxu0 0.0
  %3120 = vmatprep.subr.mxu0 0.0
  %3121 = vmatpush1.msra.mxu0 0.0
  %3122 = vmatprep.subr.mxu0 0.0
  %3123 = vmatpush1.msra.mxu0 0.0
  %3124 = vmatprep.subr.mxu0 0.0
  %3125 = vmatpush1.msra.mxu0 0.0
  %3126 = vmatprep.subr.mxu0 0.0
  %3127 = vmatpush1.msra.mxu0 0.0
  %3128 = vmatprep.subr.mxu0 0.0
  %3129 = vmatpush1.msra.mxu0 0.0
  %3130 = vmatprep.subr.mxu0 0.0
  %3131 = vmatpush1.msra.mxu0 0.0
  %3132 = vmatprep.subr.mxu0 0.0
  %3133 = vmatpush1.msra.mxu0 0.0
  %3134 = vmatprep.subr.mxu0 0.0
  %3135 = vmatpush1.msra.mxu0 0.0
  %3136 = vmatprep.subr.mxu0 0.0
  %3137 = vmatpush1.msra.mxu0 0.0
  %3138 = vmatprep.subr.mxu0 0.0
  %3139 = vmatpush1.msra.mxu0 0.0
  %3140 = vmatprep.subr.mxu0 0.0
  %3141 = vmatpush1.msra.mxu0 0.0
  %3142 = vmatprep.subr.mxu0 0.0
  %3143 = vmatpush1.msra.mxu0 0.0
  %3144 = vmatprep.subr.mxu0 0.0
  %3145 = vmatpush1.msra.mxu0 0.0
  %3146 = vmatprep.subr.mxu0 0.0
  %3147 = vmatpush1.msra.mxu0 0.0
  %3148 = vmatprep.subr.mxu0 0.0
  %3149 = vmatpush1.msra.mxu0 0.0
  %3150 = vmatprep.subr.mxu0 0.0
  %3151 = vmatpush1.msra.mxu0 0.0
  %3152 = vmatprep.subr.mxu0 0.0
  %3153 = vmatpush1.msra.mxu0 0.0
  %3154 = vmatprep.subr.mxu0 0.0
  %3155 = vmatpush1.msra.mxu0 0.0
  %3156 = vmatprep.subr.mxu0 0.0
  %3157 = vmatpush1.msra.mxu0 0.0
  %3158 = vmatprep.subr.mxu0 0.0
  %3159 = vmatpush1.msra.mxu0 0.0
  %3160 = vmatprep.subr.mxu0 0.0
  %3161 = vmatpush1.msra.mxu0 0.0
  %3162 = vmatprep.subr.mxu0 0.0
  %3163 = vmatpush1.msra.mxu0 0.0
  %3164 = vmatprep.subr.mxu0 0.0
  %3165 = vmatpush1.msra.mxu0 0.0
  %3166 = vmatprep.subr.mxu0 0.0
  %3167 = vmatpush1.msra.mxu0 0.0
  %3168 = vmatprep.subr.mxu0 0.0
  %3169 = vmatpush1.msra.mxu0 0.0
  %3170 = vmatprep.mubr.f32.mxu0 0.0
  %3171 = vmatmul.mubr.f32.gmra.mrb[0].mxu0 %v3034
  %v3172 = vpop.f32.mrb[0].mxu0
  %v3173 = vadd.f32 %v3031, %v3172
  %v3174 = vpop.f32.mrb[0].mxu0
  %3175 = vdwg.mxu0
  %v3176 = vadd.f32 %v2992, %v3103
  %v3177 = vadd.f32 %v2997, %v3173
  %v3178 = vsel %vm236, %v3176, 0.0
  %v3179 = vrot.slane %v3178, 4
  %v3180 = vadd.f32 %v3178, %v3179
  %v3181 = vrot.slane %v3180, 2
  %v3182 = vadd.f32 %v3180, %v3181
  %v3183 = vrot.slane %v3182, 1
  %v3184 = vadd.f32 %v3182, %v3183
  %v3185 = vsel %vm236, %v3177, 0.0
  %v3186 = vrot.slane %v3185, 4
  %v3187 = vadd.f32 %v3185, %v3186
  %v3188 = vrot.slane %v3187, 2
  %v3189 = vadd.f32 %v3187, %v3188
  %v3190 = vrot.slane %v3189, 1
  %v3191 = vadd.f32 %v3189, %v3190
  %v3192 = vmul.f32 %v3184, %v2346
  %v3193 = vmul.f32 %v3191, %v2346
  %v3194 = vsub.f32 %v3176, %v3192
  %v3195 = vsub.f32 %v3177, %v3193
  %v3196 = vmul.f32 %v3194, %v3194
  %v3197 = vmul.f32 %v3195, %v3195
  %v3198 = vsel %vm236, %v3196, 0.0
  %v3199 = vrot.slane %v3198, 4
  %v3200 = vadd.f32 %v3198, %v3199
  %v3201 = vrot.slane %v3200, 2
  %v3202 = vadd.f32 %v3200, %v3201
  %v3203 = vrot.slane %v3202, 1
  %v3204 = vadd.f32 %v3202, %v3203
  %v3205 = vsel %vm236, %v3197, 0.0
  %v3206 = vrot.slane %v3205, 4
  %v3207 = vadd.f32 %v3205, %v3206
  %v3208 = vrot.slane %v3207, 2
  %v3209 = vadd.f32 %v3207, %v3208
  %v3210 = vrot.slane %v3209, 1
  %v3211 = vadd.f32 %v3209, %v3210
  %v3212 = vmul.f32 %v3204, %v2346
  %v3213 = vmul.f32 %v3211, %v2346
  %v3214 = vadd.f32 %v3212, 0.001
  %v3215 = vadd.f32 %v3213, 0.001
  %v3216 = vrsqrt.pop %v3214
  %v3217 = vrsqrt.pop %v3215
  %v3218 = vmul.f32 %v3194, %v3216
  %v3219 = vmul.f32 %v3195, %v3217
  %v3220 = vsel %vm236, %v3218, 0.0
  %v3221 = vsel %vm236, %v3219, 0.0
  %v3222 = vadd.f32 %v3220, %v3221
  %v3223 = vrot.slane %v3222, 4
  %v3224 = vadd.f32 %v3222, %v3223
  %v3225 = vrot.slane %v3224, 2
  %v3226 = vadd.f32 %v3224, %v3225
  %v3227 = vrot.slane %v3226, 1
  %v3228 = vadd.f32 %v3226, %v3227
  %v3229 = vmul.f32 %v3228, %v2384
  %v3230 = vsub.f32 %v3218, %v3229
  %v3231 = vsub.f32 %v3219, %v3229
  %v3232 = vmul.f32 %v3230, %v3230
  %v3233 = vmul.f32 %v3231, %v3231
  %v3234 = vsel %vm236, %v3232, 0.0
  %v3235 = vsel %vm236, %v3233, 0.0
  %v3236 = vadd.f32 %v3234, %v3235
  %v3237 = vrot.slane %v3236, 4
  %v3238 = vadd.f32 %v3236, %v3237
  %v3239 = vrot.slane %v3238, 2
  %v3240 = vadd.f32 %v3238, %v3239
  %v3241 = vrot.slane %v3240, 1
  %v3242 = vadd.f32 %v3240, %v3241
  %v3243 = vmul.f32 %v3242, %v2384
  %v3244 = vadd.f32 %v3243, 1e-05
  %v3245 = vrsqrt.pop %v3244
  %v3246 = vmul.f32 %v3230, %v3245
  %v3247 = vmul.f32 %v3231, %v3245
  %v3248 = vmax.f32 %v3246, 0.0
  %v3249 = vmax.f32 %v3247, 0.0
  %v3250 = vld [vmem:[%s1 + $0x140] sm:$0xff]
  %v3251 = vld [vmem:[%s1 + $0x148] sm:$0xff]
  %v3252 = vld [vmem:[%s1 + $0x150] sm:$0xff]
  %v3253 = vld [vmem:[%s1 + $0x158] sm:$0xff]
  %v3254 = vld [vmem:[%s1 + $0x160] sm:$0x1]
  %v3255 = vlaneseq
  %v3256 = vshrl.u32 %v3255, 7
  %v3257 = vsub.s32 0, %v3256
  %v3258 = vrot.slane %v3254, %v3257
  %v3260 = vsel %vm236, %v3248, 0
  %v3263 = vsel %vm236, %v3249, 0
  %3265 = vmatprep.subr.mxu0 0.0
  %3266 = vmatpush1.msra.mxu0 %v3250
  %3267 = vmatprep.subr.mxu0 0.0
  %3268 = vmatpush1.msra.mxu0 %v3251
  %3269 = vmatprep.subr.mxu0 0.0
  %3270 = vmatpush1.msra.mxu0 %v3252
  %3271 = vmatprep.subr.mxu0 0.0
  %3272 = vmatpush1.msra.mxu0 %v3253
  %3273 = vmatprep.subr.mxu0 0.0
  %3274 = vmatpush1.msra.mxu0 0.0
  %3275 = vmatprep.subr.mxu0 0.0
  %3276 = vmatpush1.msra.mxu0 0.0
  %3277 = vmatprep.subr.mxu0 0.0
  %3278 = vmatpush1.msra.mxu0 0.0
  %3279 = vmatprep.subr.mxu0 0.0
  %3280 = vmatpush1.msra.mxu0 0.0
  %3281 = vmatprep.subr.mxu0 0.0
  %3282 = vmatpush1.msra.mxu0 0.0
  %3283 = vmatprep.subr.mxu0 0.0
  %3284 = vmatpush1.msra.mxu0 0.0
  %3285 = vmatprep.subr.mxu0 0.0
  %3286 = vmatpush1.msra.mxu0 0.0
  %3287 = vmatprep.subr.mxu0 0.0
  %3288 = vmatpush1.msra.mxu0 0.0
  %3289 = vmatprep.subr.mxu0 0.0
  %3290 = vmatpush1.msra.mxu0 0.0
  %3291 = vmatprep.subr.mxu0 0.0
  %3292 = vmatpush1.msra.mxu0 0.0
  %3293 = vmatprep.subr.mxu0 0.0
  %3294 = vmatpush1.msra.mxu0 0.0
  %3295 = vmatprep.subr.mxu0 0.0
  %3296 = vmatpush1.msra.mxu0 0.0
  %3297 = vmatprep.subr.mxu0 0.0
  %3298 = vmatpush1.msra.mxu0 0.0
  %3299 = vmatprep.subr.mxu0 0.0
  %3300 = vmatpush1.msra.mxu0 0.0
  %3301 = vmatprep.subr.mxu0 0.0
  %3302 = vmatpush1.msra.mxu0 0.0
  %3303 = vmatprep.subr.mxu0 0.0
  %3304 = vmatpush1.msra.mxu0 0.0
  %3305 = vmatprep.subr.mxu0 0.0
  %3306 = vmatpush1.msra.mxu0 0.0
  %3307 = vmatprep.subr.mxu0 0.0
  %3308 = vmatpush1.msra.mxu0 0.0
  %3309 = vmatprep.subr.mxu0 0.0
  %3310 = vmatpush1.msra.mxu0 0.0
  %3311 = vmatprep.subr.mxu0 0.0
  %3312 = vmatpush1.msra.mxu0 0.0
  %3313 = vmatprep.subr.mxu0 0.0
  %3314 = vmatpush1.msra.mxu0 0.0
  %3315 = vmatprep.subr.mxu0 0.0
  %3316 = vmatpush1.msra.mxu0 0.0
  %3317 = vmatprep.subr.mxu0 0.0
  %3318 = vmatpush1.msra.mxu0 0.0
  %3319 = vmatprep.subr.mxu0 0.0
  %3320 = vmatpush1.msra.mxu0 0.0
  %3321 = vmatprep.subr.mxu0 0.0
  %3322 = vmatpush1.msra.mxu0 0.0
  %3323 = vmatprep.subr.mxu0 0.0
  %3324 = vmatpush1.msra.mxu0 0.0
  %3325 = vmatprep.subr.mxu0 0.0
  %3326 = vmatpush1.msra.mxu0 0.0
  %3327 = vmatprep.subr.mxu0 0.0
  %3328 = vmatpush1.msra.mxu0 0.0
  %3329 = vmatprep.mubr.f32.mxu0 0.0
  %3330 = vmatmul.mubr.f32.gmra.mrb[0].mxu0 %v3260
  %v3331 = vpop.f32.mrb[0].mxu0
  %v3332 = vadd.f32 %v3258, %v3331
  %v3333 = vpop.f32.mrb[0].mxu0
  %3334 = vmatprep.mubr.f32.mxu0 0.0
  %3335 = vmatmul.mubr.f32.gmra.mrb[0].mxu0 %v3263
  %v3336 = vpop.f32.mrb[0].mxu0
  %v3337 = vadd.f32 %v3258, %v3336
  %v3338 = vpop.f32.mrb[0].mxu0
  %3339 = vdwg.mxu0
  %v3340 = vadd.f32 %v3332, %v2836
  %v3341 = vadd.f32 %v3337, %v2837
  %v3342 = vsel %vm236, %v3340, 0.0
  %v3343 = vrot.slane %v3342, 4
  %v3344 = vadd.f32 %v3342, %v3343
  %v3345 = vrot.slane %v3344, 2
  %v3346 = vadd.f32 %v3344, %v3345
  %v3347 = vrot.slane %v3346, 1
  %v3348 = vadd.f32 %v3346, %v3347
  %v3349 = vsel %vm236, %v3341, 0.0
  %v3350 = vrot.slane %v3349, 4
  %v3351 = vadd.f32 %v3349, %v3350
  %v3352 = vrot.slane %v3351, 2
  %v3353 = vadd.f32 %v3351, %v3352
  %v3354 = vrot.slane %v3353, 1
  %v3355 = vadd.f32 %v3353, %v3354
  %v3356 = vmul.f32 %v3348, %v2346
  %v3357 = vmul.f32 %v3355, %v2346
  %v3358 = vsub.f32 %v3340, %v3356
  %v3359 = vsub.f32 %v3341, %v3357
  %v3360 = vmul.f32 %v3358, %v3358
  %v3361 = vmul.f32 %v3359, %v3359
  %v3362 = vsel %vm236, %v3360, 0.0
  %v3363 = vrot.slane %v3362, 4
  %v3364 = vadd.f32 %v3362, %v3363
  %v3365 = vrot.slane %v3364, 2
  %v3366 = vadd.f32 %v3364, %v3365
  %v3367 = vrot.slane %v3366, 1
  %v3368 = vadd.f32 %v3366, %v3367
  %v3369 = vsel %vm236, %v3361, 0.0
  %v3370 = vrot.slane %v3369, 4
  %v3371 = vadd.f32 %v3369, %v3370
  %v3372 = vrot.slane %v3371, 2
  %v3373 = vadd.f32 %v3371, %v3372
  %v3374 = vrot.slane %v3373, 1
  %v3375 = vadd.f32 %v3373, %v3374
  %v3376 = vmul.f32 %v3368, %v2346
  %v3377 = vmul.f32 %v3375, %v2346
  %v3378 = vadd.f32 %v3376, 0.001
  %v3379 = vadd.f32 %v3377, 0.001
  %v3380 = vrsqrt.pop %v3378
  %v3381 = vrsqrt.pop %v3379
  %v3382 = vmul.f32 %v3358, %v3380
  %v3383 = vmul.f32 %v3359, %v3381
  %v3384 = vsel %vm236, %v3382, 0.0
  %v3385 = vsel %vm236, %v3383, 0.0
  %v3386 = vadd.f32 %v3384, %v3385
  %v3387 = vrot.slane %v3386, 4
  %v3388 = vadd.f32 %v3386, %v3387
  %v3389 = vrot.slane %v3388, 2
  %v3390 = vadd.f32 %v3388, %v3389
  %v3391 = vrot.slane %v3390, 1
  %v3392 = vadd.f32 %v3390, %v3391
  %v3393 = vmul.f32 %v3392, %v2384
  %v3394 = vsub.f32 %v3382, %v3393
  %v3395 = vsub.f32 %v3383, %v3393
  %v3396 = vmul.f32 %v3394, %v3394
  %v3397 = vmul.f32 %v3395, %v3395
  %v3398 = vsel %vm236, %v3396, 0.0
  %v3399 = vsel %vm236, %v3397, 0.0
  %v3400 = vadd.f32 %v3398, %v3399
  %v3401 = vrot.slane %v3400, 4
  %v3402 = vadd.f32 %v3400, %v3401
  %v3403 = vrot.slane %v3402, 2
  %v3404 = vadd.f32 %v3402, %v3403
  %v3405 = vrot.slane %v3404, 1
  %v3406 = vadd.f32 %v3404, %v3405
  %v3407 = vmul.f32 %v3406, %v2384
  %v3408 = vadd.f32 %v3407, 1e-05
  %v3409 = vrsqrt.pop %v3408
  %v3410 = vmul.f32 %v3394, %v3409
  %v3411 = vmul.f32 %v3395, %v3409
  %v3412 = vmax.f32 %v3410, 0.0
  %v3413 = vmax.f32 %v3411, 0.0
  %v3414 = vld [vmem:[%s1 + $0x168] sm:$0xff]
  %v3415 = vld [vmem:[%s1 + $0x170] sm:$0xff]
  %v3416 = vld [vmem:[%s1 + $0x178] sm:$0xff]
  %v3417 = vld [vmem:[%s1 + $0x180] sm:$0xff]
  %v3418 = vld [vmem:[%s1 + $0x188] sm:$0x1]
  %v3419 = vlaneseq
  %v3420 = vshrl.u32 %v3419, 7
  %v3421 = vsub.s32 0, %v3420
  %v3422 = vrot.slane %v3418, %v3421
  %v3424 = vsel %vm236, %v3412, 0
  %v3427 = vsel %vm236, %v3413, 0
  %3429 = vmatprep.subr.mxu0 0.0
  %3430 = vmatpush1.msra.mxu0 %v3414
  %3431 = vmatprep.subr.mxu0 0.0
  %3432 = vmatpush1.msra.mxu0 %v3415
  %3433 = vmatprep.subr.mxu0 0.0
  %3434 = vmatpush1.msra.mxu0 %v3416
  %3435 = vmatprep.subr.mxu0 0.0
  %3436 = vmatpush1.msra.mxu0 %v3417
  %3437 = vmatprep.subr.mxu0 0.0
  %3438 = vmatpush1.msra.mxu0 0.0
  %3439 = vmatprep.subr.mxu0 0.0
  %3440 = vmatpush1.msra.mxu0 0.0
  %3441 = vmatprep.subr.mxu0 0.0
  %3442 = vmatpush1.msra.mxu0 0.0
  %3443 = vmatprep.subr.mxu0 0.0
  %3444 = vmatpush1.msra.mxu0 0.0
  %3445 = vmatprep.subr.mxu0 0.0
  %3446 = vmatpush1.msra.mxu0 0.0
  %3447 = vmatprep.subr.mxu0 0.0
  %3448 = vmatpush1.msra.mxu0 0.0
  %3449 = vmatprep.subr.mxu0 0.0
  %3450 = vmatpush1.msra.mxu0 0.0
  %3451 = vmatprep.subr.mxu0 0.0
  %3452 = vmatpush1.msra.mxu0 0.0
  %3453 = vmatprep.subr.mxu0 0.0
  %3454 = vmatpush1.msra.mxu0 0.0
  %3455 = vmatprep.subr.mxu0 0.0
  %3456 = vmatpush1.msra.mxu0 0.0
  %3457 = vmatprep.subr.mxu0 0.0
  %3458 = vmatpush1.msra.mxu0 0.0
  %3459 = vmatprep.subr.mxu0 0.0
  %3460 = vmatpush1.msra.mxu0 0.0
  %3461 = vmatprep.subr.mxu0 0.0
  %3462 = vmatpush1.msra.mxu0 0.0
  %3463 = vmatprep.subr.mxu0 0.0
  %3464 = vmatpush1.msra.mxu0 0.0
  %3465 = vmatprep.subr.mxu0 0.0
  %3466 = vmatpush1.msra.mxu0 0.0
  %3467 = vmatprep.subr.mxu0 0.0
  %3468 = vmatpush1.msra.mxu0 0.0
  %3469 = vmatprep.subr.mxu0 0.0
  %3470 = vmatpush1.msra.mxu0 0.0
  %3471 = vmatprep.subr.mxu0 0.0
  %3472 = vmatpush1.msra.mxu0 0.0
  %3473 = vmatprep.subr.mxu0 0.0
  %3474 = vmatpush1.msra.mxu0 0.0
  %3475 = vmatprep.subr.mxu0 0.0
  %3476 = vmatpush1.msra.mxu0 0.0
  %3477 = vmatprep.subr.mxu0 0.0
  %3478 = vmatpush1.msra.mxu0 0.0
  %3479 = vmatprep.subr.mxu0 0.0
  %3480 = vmatpush1.msra.mxu0 0.0
  %3481 = vmatprep.subr.mxu0 0.0
  %3482 = vmatpush1.msra.mxu0 0.0
  %3483 = vmatprep.subr.mxu0 0.0
  %3484 = vmatpush1.msra.mxu0 0.0
  %3485 = vmatprep.subr.mxu0 0.0
  %3486 = vmatpush1.msra.mxu0 0.0
  %3487 = vmatprep.subr.mxu0 0.0
  %3488 = vmatpush1.msra.mxu0 0.0
  %3489 = vmatprep.subr.mxu0 0.0
  %3490 = vmatpush1.msra.mxu0 0.0
  %3491 = vmatprep.subr.mxu0 0.0
  %3492 = vmatpush1.msra.mxu0 0.0
  %3493 = vmatprep.mubr.f32.mxu0 0.0
  %3494 = vmatmul.mubr.f32.gmra.mrb[0].mxu0 %v3424
  %v3495 = vpop.f32.mrb[0].mxu0
  %v3496 = vadd.f32 %v3422, %v3495
  %v3497 = vpop.f32.mrb[0].mxu0
  %3498 = vmatprep.mubr.f32.mxu0 0.0
  %3499 = vmatmul.mubr.f32.gmra.mrb[0].mxu0 %v3427
  %v3500 = vpop.f32.mrb[0].mxu0
  %v3501 = vadd.f32 %v3422, %v3500
  %v3502 = vpop.f32.mrb[0].mxu0
  %3503 = vdwg.mxu0
  %v3504 = vsel %vm236, %v3496, 0.0
  %3505 = vadd.xlane.f32.xlu0 %v3504
  %v3506 = vpop.xlane.xlu0 %3505
  %v3507 = vsel %vm236, %v3501, 0.0
  %3508 = vadd.xlane.f32.xlu0 %v3507
  %v3509 = vpop.xlane.xlu0 %3508
  %v3510 = vadd.f32 %v3506, %v3509
  %v3511 = vmul.f32 %v3510, %v472
  %v3512 = vsub.f32 %v3496, %v3511
  %v3513 = vsub.f32 %v3501, %v3511
  %v3514 = vmul.f32 %v3512, %v3512
  %v3515 = vmul.f32 %v3513, %v3513
  %v3516 = vsel %vm236, %v3514, 0.0
  %3517 = vadd.xlane.f32.xlu0 %v3516
  %v3518 = vpop.xlane.xlu0 %3517
  %v3519 = vsel %vm236, %v3515, 0.0
  %3520 = vadd.xlane.f32.xlu0 %v3519
  %v3521 = vpop.xlane.xlu0 %3520
  %v3522 = vadd.f32 %v3518, %v3521
  %v3523 = vmul.f32 %v3522, %v472
  %v3524 = vadd.f32 %v3523, 1e-05
  %v3525 = vrsqrt.pop %v3524
  %v3526 = vmul.f32 %v3512, %v3525
  %v3527 = vmul.f32 %v3513, %v3525
  %v3528 = vmax.f32 %v3526, 0.0
  %v3529 = vmax.f32 %v3527, 0.0
  %v3530 = vld [vmem:[%s1 + $0x190] sm:$0xff]
  %v3531 = vld [vmem:[%s1 + $0x198] sm:$0xff]
  %3533 = vset.pattern.permute.xlu0 0
  %3534 = vperm.xlu0 %3533, %v3531
  %v3535 = vpop.permute.xlu0 %3534
  %v3538 = vsel %vm33, %v3530, 0
  %3540 = vmatprep.subr.mxu0 0.0
  %3541 = vmatpush1.msra.mxu0 %v3528
  %3542 = vmatprep.subr.mxu0 0.0
  %3543 = vmatpush1.msra.mxu0 0.0
  %3544 = vmatprep.subr.mxu0 0.0
  %3545 = vmatpush1.msra.mxu0 0.0
  %3546 = vmatprep.subr.mxu0 0.0
  %3547 = vmatpush1.msra.mxu0 0.0
  %3548 = vmatprep.subr.mxu0 0.0
  %3549 = vmatpush1.msra.mxu0 0.0
  %3550 = vmatprep.subr.mxu0 0.0
  %3551 = vmatpush1.msra.mxu0 0.0
  %3552 = vmatprep.subr.mxu0 0.0
  %3553 = vmatpush1.msra.mxu0 0.0
  %3554 = vmatprep.subr.mxu0 0.0
  %3555 = vmatpush1.msra.mxu0 0.0
  %3556 = vmatprep.subr.mxu0 0.0
  %3557 = vmatpush1.msra.mxu0 0.0
  %3558 = vmatprep.subr.mxu0 0.0
  %3559 = vmatpush1.msra.mxu0 0.0
  %3560 = vmatprep.subr.mxu0 0.0
  %3561 = vmatpush1.msra.mxu0 0.0
  %3562 = vmatprep.subr.mxu0 0.0
  %3563 = vmatpush1.msra.mxu0 0.0
  %3564 = vmatprep.subr.mxu0 0.0
  %3565 = vmatpush1.msra.mxu0 0.0
  %3566 = vmatprep.subr.mxu0 0.0
  %3567 = vmatpush1.msra.mxu0 0.0
  %3568 = vmatprep.subr.mxu0 0.0
  %3569 = vmatpush1.msra.mxu0 0.0
  %3570 = vmatprep.subr.mxu0 0.0
  %3571 = vmatpush1.msra.mxu0 0.0
  %3572 = vmatprep.subr.mxu0 0.0
  %3573 = vmatpush1.msra.mxu0 0.0
  %3574 = vmatprep.subr.mxu0 0.0
  %3575 = vmatpush1.msra.mxu0 0.0
  %3576 = vmatprep.subr.mxu0 0.0
  %3577 = vmatpush1.msra.mxu0 0.0
  %3578 = vmatprep.subr.mxu0 0.0
  %3579 = vmatpush1.msra.mxu0 0.0
  %3580 = vmatprep.subr.mxu0 0.0
  %3581 = vmatpush1.msra.mxu0 0.0
  %3582 = vmatprep.subr.mxu0 0.0
  %3583 = vmatpush1.msra.mxu0 0.0
  %3584 = vmatprep.subr.mxu0 0.0
  %3585 = vmatpush1.msra.mxu0 0.0
  %3586 = vmatprep.subr.mxu0 0.0
  %3587 = vmatpush1.msra.mxu0 0.0
  %3588 = vmatprep.subr.mxu0 0.0
  %3589 = vmatpush1.msra.mxu0 0.0
  %3590 = vmatprep.subr.mxu0 0.0
  %3591 = vmatpush1.msra.mxu0 0.0
  %3592 = vmatprep.subr.mxu0 0.0
  %3593 = vmatpush1.msra.mxu0 0.0
  %3594 = vmatprep.subr.mxu0 0.0
  %3595 = vmatpush1.msra.mxu0 0.0
  %3596 = vmatprep.subr.mxu0 0.0
  %3597 = vmatpush1.msra.mxu0 0.0
  %3598 = vmatprep.subr.mxu0 0.0
  %3599 = vmatpush1.msra.mxu0 0.0
  %3600 = vmatprep.subr.mxu0 0.0
  %3601 = vmatpush1.msra.mxu0 0.0
  %3602 = vmatprep.subr.mxu0 0.0
  %3603 = vmatpush1.msra.mxu0 0.0
  %3604 = vmatprep.mubr.f32.mxu0 0.0
  %3605 = vmatmul.mubr.f32.gmra.mrb[0].mxu0 %v3538
  %v3606 = vpop.f32.mrb[0].mxu0
  %v3607 = vadd.f32 %v3535, %v3606
  %v3608 = vpop.f32.mrb[0].mxu0
  %3609 = vdwg.mxu0
  %3610 = vmatprep.subr.mxu0 0.0
  %3611 = vmatpush1.msra.mxu0 %v3529
  %3612 = vmatprep.subr.mxu0 0.0
  %3613 = vmatpush1.msra.mxu0 0.0
  %3614 = vmatprep.subr.mxu0 0.0
  %3615 = vmatpush1.msra.mxu0 0.0
  %3616 = vmatprep.subr.mxu0 0.0
  %3617 = vmatpush1.msra.mxu0 0.0
  %3618 = vmatprep.subr.mxu0 0.0
  %3619 = vmatpush1.msra.mxu0 0.0
  %3620 = vmatprep.subr.mxu0 0.0
  %3621 = vmatpush1.msra.mxu0 0.0
  %3622 = vmatprep.subr.mxu0 0.0
  %3623 = vmatpush1.msra.mxu0 0.0
  %3624 = vmatprep.subr.mxu0 0.0
  %3625 = vmatpush1.msra.mxu0 0.0
  %3626 = vmatprep.subr.mxu0 0.0
  %3627 = vmatpush1.msra.mxu0 0.0
  %3628 = vmatprep.subr.mxu0 0.0
  %3629 = vmatpush1.msra.mxu0 0.0
  %3630 = vmatprep.subr.mxu0 0.0
  %3631 = vmatpush1.msra.mxu0 0.0
  %3632 = vmatprep.subr.mxu0 0.0
  %3633 = vmatpush1.msra.mxu0 0.0
  %3634 = vmatprep.subr.mxu0 0.0
  %3635 = vmatpush1.msra.mxu0 0.0
  %3636 = vmatprep.subr.mxu0 0.0
  %3637 = vmatpush1.msra.mxu0 0.0
  %3638 = vmatprep.subr.mxu0 0.0
  %3639 = vmatpush1.msra.mxu0 0.0
  %3640 = vmatprep.subr.mxu0 0.0
  %3641 = vmatpush1.msra.mxu0 0.0
  %3642 = vmatprep.subr.mxu0 0.0
  %3643 = vmatpush1.msra.mxu0 0.0
  %3644 = vmatprep.subr.mxu0 0.0
  %3645 = vmatpush1.msra.mxu0 0.0
  %3646 = vmatprep.subr.mxu0 0.0
  %3647 = vmatpush1.msra.mxu0 0.0
  %3648 = vmatprep.subr.mxu0 0.0
  %3649 = vmatpush1.msra.mxu0 0.0
  %3650 = vmatprep.subr.mxu0 0.0
  %3651 = vmatpush1.msra.mxu0 0.0
  %3652 = vmatprep.subr.mxu0 0.0
  %3653 = vmatpush1.msra.mxu0 0.0
  %3654 = vmatprep.subr.mxu0 0.0
  %3655 = vmatpush1.msra.mxu0 0.0
  %3656 = vmatprep.subr.mxu0 0.0
  %3657 = vmatpush1.msra.mxu0 0.0
  %3658 = vmatprep.subr.mxu0 0.0
  %3659 = vmatpush1.msra.mxu0 0.0
  %3660 = vmatprep.subr.mxu0 0.0
  %3661 = vmatpush1.msra.mxu0 0.0
  %3662 = vmatprep.subr.mxu0 0.0
  %3663 = vmatpush1.msra.mxu0 0.0
  %3664 = vmatprep.subr.mxu0 0.0
  %3665 = vmatpush1.msra.mxu0 0.0
  %3666 = vmatprep.subr.mxu0 0.0
  %3667 = vmatpush1.msra.mxu0 0.0
  %3668 = vmatprep.subr.mxu0 0.0
  %3669 = vmatpush1.msra.mxu0 0.0
  %3670 = vmatprep.subr.mxu0 0.0
  %3671 = vmatpush1.msra.mxu0 0.0
  %3672 = vmatprep.subr.mxu0 0.0
  %3673 = vmatpush1.msra.mxu0 0.0
  %3674 = vmatprep.mubr.f32.mxu0 0.0
  %3675 = vmatmul.mubr.f32.gmra.mrb[0].mxu0 %v3538
  %v3676 = vpop.f32.mrb[0].mxu0
  %v3677 = vadd.f32 %v3535, %v3676
  %v3678 = vpop.f32.mrb[0].mxu0
  %3679 = vdwg.mxu0
  %v3680 = vadd.f32 %v3496, %v3607
  %v3681 = vadd.f32 %v3501, %v3677
  %v3682 = vsel %vm236, %v3680, 0.0
  %v3683 = vrot.slane %v3682, 4
  %v3684 = vadd.f32 %v3682, %v3683
  %v3685 = vrot.slane %v3684, 2
  %v3686 = vadd.f32 %v3684, %v3685
  %v3687 = vrot.slane %v3686, 1
  %v3688 = vadd.f32 %v3686, %v3687
  %v3689 = vsel %vm236, %v3681, 0.0
  %v3690 = vrot.slane %v3689, 4
  %v3691 = vadd.f32 %v3689, %v3690
  %v3692 = vrot.slane %v3691, 2
  %v3693 = vadd.f32 %v3691, %v3692
  %v3694 = vrot.slane %v3693, 1
  %v3695 = vadd.f32 %v3693, %v3694
  %v3696 = vmul.f32 %v3688, %v2346
  %v3697 = vmul.f32 %v3695, %v2346
  %v3698 = vsub.f32 %v3680, %v3696
  %v3699 = vsub.f32 %v3681, %v3697
  %v3700 = vmul.f32 %v3698, %v3698
  %v3701 = vmul.f32 %v3699, %v3699
  %v3702 = vsel %vm236, %v3700, 0.0
  %v3703 = vrot.slane %v3702, 4
  %v3704 = vadd.f32 %v3702, %v3703
  %v3705 = vrot.slane %v3704, 2
  %v3706 = vadd.f32 %v3704, %v3705
  %v3707 = vrot.slane %v3706, 1
  %v3708 = vadd.f32 %v3706, %v3707
  %v3709 = vsel %vm236, %v3701, 0.0
  %v3710 = vrot.slane %v3709, 4
  %v3711 = vadd.f32 %v3709, %v3710
  %v3712 = vrot.slane %v3711, 2
  %v3713 = vadd.f32 %v3711, %v3712
  %v3714 = vrot.slane %v3713, 1
  %v3715 = vadd.f32 %v3713, %v3714
  %v3716 = vmul.f32 %v3708, %v2346
  %v3717 = vmul.f32 %v3715, %v2346
  %v3718 = vadd.f32 %v3716, 0.001
  %v3719 = vadd.f32 %v3717, 0.001
  %v3720 = vrsqrt.pop %v3718
  %v3721 = vrsqrt.pop %v3719
  %v3722 = vmul.f32 %v3698, %v3720
  %v3723 = vmul.f32 %v3699, %v3721
  %v3724 = vsel %vm236, %v3722, 0.0
  %v3725 = vsel %vm236, %v3723, 0.0
  %v3726 = vadd.f32 %v3724, %v3725
  %v3727 = vrot.slane %v3726, 4
  %v3728 = vadd.f32 %v3726, %v3727
  %v3729 = vrot.slane %v3728, 2
  %v3730 = vadd.f32 %v3728, %v3729
  %v3731 = vrot.slane %v3730, 1
  %v3732 = vadd.f32 %v3730, %v3731
  %v3733 = vmul.f32 %v3732, %v2384
  %v3734 = vsub.f32 %v3722, %v3733
  %v3735 = vsub.f32 %v3723, %v3733
  %v3736 = vmul.f32 %v3734, %v3734
  %v3737 = vmul.f32 %v3735, %v3735
  %v3738 = vsel %vm236, %v3736, 0.0
  %v3739 = vsel %vm236, %v3737, 0.0
  %v3740 = vadd.f32 %v3738, %v3739
  %v3741 = vrot.slane %v3740, 4
  %v3742 = vadd.f32 %v3740, %v3741
  %v3743 = vrot.slane %v3742, 2
  %v3744 = vadd.f32 %v3742, %v3743
  %v3745 = vrot.slane %v3744, 1
  %v3746 = vadd.f32 %v3744, %v3745
  %v3747 = vmul.f32 %v3746, %v2384
  %v3748 = vadd.f32 %v3747, 1e-05
  %v3749 = vrsqrt.pop %v3748
  %v3750 = vmul.f32 %v3734, %v3749
  %v3751 = vmul.f32 %v3735, %v3749
  %v3752 = vmax.f32 %v3750, 0.0
  %v3753 = vmax.f32 %v3751, 0.0
  %v3754 = vld [vmem:[%s1 + $0x1a0] sm:$0xff]
  %v3755 = vld [vmem:[%s1 + $0x1a8] sm:$0xff]
  %v3756 = vld [vmem:[%s1 + $0x1b0] sm:$0xff]
  %v3757 = vld [vmem:[%s1 + $0x1b8] sm:$0xff]
  %v3758 = vld [vmem:[%s1 + $0x1c0] sm:$0x1]
  %v3759 = vlaneseq
  %v3760 = vshrl.u32 %v3759, 7
  %v3761 = vsub.s32 0, %v3760
  %v3762 = vrot.slane %v3758, %v3761
  %v3764 = vsel %vm236, %v3752, 0
  %v3767 = vsel %vm236, %v3753, 0
  %3769 = vmatprep.subr.mxu0 0.0
  %3770 = vmatpush1.msra.mxu0 %v3754
  %3771 = vmatprep.subr.mxu0 0.0
  %3772 = vmatpush1.msra.mxu0 %v3755
  %3773 = vmatprep.subr.mxu0 0.0
  %3774 = vmatpush1.msra.mxu0 %v3756
  %3775 = vmatprep.subr.mxu0 0.0
  %3776 = vmatpush1.msra.mxu0 %v3757
  %3777 = vmatprep.subr.mxu0 0.0
  %3778 = vmatpush1.msra.mxu0 0.0
  %3779 = vmatprep.subr.mxu0 0.0
  %3780 = vmatpush1.msra.mxu0 0.0
  %3781 = vmatprep.subr.mxu0 0.0
  %3782 = vmatpush1.msra.mxu0 0.0
  %3783 = vmatprep.subr.mxu0 0.0
  %3784 = vmatpush1.msra.mxu0 0.0
  %3785 = vmatprep.subr.mxu0 0.0
  %3786 = vmatpush1.msra.mxu0 0.0
  %3787 = vmatprep.subr.mxu0 0.0
  %3788 = vmatpush1.msra.mxu0 0.0
  %3789 = vmatprep.subr.mxu0 0.0
  %3790 = vmatpush1.msra.mxu0 0.0
  %3791 = vmatprep.subr.mxu0 0.0
  %3792 = vmatpush1.msra.mxu0 0.0
  %3793 = vmatprep.subr.mxu0 0.0
  %3794 = vmatpush1.msra.mxu0 0.0
  %3795 = vmatprep.subr.mxu0 0.0
  %3796 = vmatpush1.msra.mxu0 0.0
  %3797 = vmatprep.subr.mxu0 0.0
  %3798 = vmatpush1.msra.mxu0 0.0
  %3799 = vmatprep.subr.mxu0 0.0
  %3800 = vmatpush1.msra.mxu0 0.0
  %3801 = vmatprep.subr.mxu0 0.0
  %3802 = vmatpush1.msra.mxu0 0.0
  %3803 = vmatprep.subr.mxu0 0.0
  %3804 = vmatpush1.msra.mxu0 0.0
  %3805 = vmatprep.subr.mxu0 0.0
  %3806 = vmatpush1.msra.mxu0 0.0
  %3807 = vmatprep.subr.mxu0 0.0
  %3808 = vmatpush1.msra.mxu0 0.0
  %3809 = vmatprep.subr.mxu0 0.0
  %3810 = vmatpush1.msra.mxu0 0.0
  %3811 = vmatprep.subr.mxu0 0.0
  %3812 = vmatpush1.msra.mxu0 0.0
  %3813 = vmatprep.subr.mxu0 0.0
  %3814 = vmatpush1.msra.mxu0 0.0
  %3815 = vmatprep.subr.mxu0 0.0
  %3816 = vmatpush1.msra.mxu0 0.0
  %3817 = vmatprep.subr.mxu0 0.0
  %3818 = vmatpush1.msra.mxu0 0.0
  %3819 = vmatprep.subr.mxu0 0.0
  %3820 = vmatpush1.msra.mxu0 0.0
  %3821 = vmatprep.subr.mxu0 0.0
  %3822 = vmatpush1.msra.mxu0 0.0
  %3823 = vmatprep.subr.mxu0 0.0
  %3824 = vmatpush1.msra.mxu0 0.0
  %3825 = vmatprep.subr.mxu0 0.0
  %3826 = vmatpush1.msra.mxu0 0.0
  %3827 = vmatprep.subr.mxu0 0.0
  %3828 = vmatpush1.msra.mxu0 0.0
  %3829 = vmatprep.subr.mxu0 0.0
  %3830 = vmatpush1.msra.mxu0 0.0
  %3831 = vmatprep.subr.mxu0 0.0
  %3832 = vmatpush1.msra.mxu0 0.0
  %3833 = vmatprep.mubr.f32.mxu0 0.0
  %3834 = vmatmul.mubr.f32.gmra.mrb[0].mxu0 %v3764
  %v3835 = vpop.f32.mrb[0].mxu0
  %v3836 = vadd.f32 %v3762, %v3835
  %v3837 = vpop.f32.mrb[0].mxu0
  %3838 = vmatprep.mubr.f32.mxu0 0.0
  %3839 = vmatmul.mubr.f32.gmra.mrb[0].mxu0 %v3767
  %v3840 = vpop.f32.mrb[0].mxu0
  %v3841 = vadd.f32 %v3762, %v3840
  %v3842 = vpop.f32.mrb[0].mxu0
  %3843 = vdwg.mxu0
  %v3844 = vadd.f32 %v3836, %v3340
  %v3845 = vadd.f32 %v3841, %v3341
  %v3846 = vld [vmem:[%s1 + $0x98] sm:$0xff]
  %v3847 = vld [vmem:[%s1 + $0xa0] sm:$0x1]
  %v3848 = vlaneseq
  %v3849 = vshrl.u32 %v3848, 7
  %v3850 = vsub.s32 0, %v3849
  %v3851 = vrot.slane %v3847, %v3850
  %v3853 = vsel %vm236, %v3846, 0
  %3855 = vmatprep.subr.mxu0 0.0
  %3856 = vmatpush1.xpose.msra.mxu0 %v3853
  %3857 = vmatprep.subr.mxu0 0.0
  %3858 = vmatpush1.xpose.msra.mxu0 0.0
  %3859 = vmatprep.subr.mxu0 0.0
  %3860 = vmatpush1.xpose.msra.mxu0 0.0
  %3861 = vmatprep.subr.mxu0 0.0
  %3862 = vmatpush1.xpose.msra.mxu0 0.0
  %3863 = vmatprep.subr.mxu0 0.0
  %3864 = vmatpush1.xpose.msra.mxu0 0.0
  %3865 = vmatprep.subr.mxu0 0.0
  %3866 = vmatpush1.xpose.msra.mxu0 0.0
  %3867 = vmatprep.subr.mxu0 0.0
  %3868 = vmatpush1.xpose.msra.mxu0 0.0
  %3869 = vmatprep.subr.mxu0 0.0
  %3870 = vmatpush1.xpose.msra.mxu0 0.0
  %3871 = vmatprep.subr.mxu0 0.0
  %3872 = vmatpush1.xpose.msra.mxu0 0.0
  %3873 = vmatprep.subr.mxu0 0.0
  %3874 = vmatpush1.xpose.msra.mxu0 0.0
  %3875 = vmatprep.subr.mxu0 0.0
  %3876 = vmatpush1.xpose.msra.mxu0 0.0
  %3877 = vmatprep.subr.mxu0 0.0
  %3878 = vmatpush1.xpose.msra.mxu0 0.0
  %3879 = vmatprep.subr.mxu0 0.0
  %3880 = vmatpush1.xpose.msra.mxu0 0.0
  %3881 = vmatprep.subr.mxu0 0.0
  %3882 = vmatpush1.xpose.msra.mxu0 0.0
  %3883 = vmatprep.subr.mxu0 0.0
  %3884 = vmatpush1.xpose.msra.mxu0 0.0
  %3885 = vmatprep.subr.mxu0 0.0
  %3886 = vmatpush1.xpose.msra.mxu0 0.0
  %3887 = vmatprep.subr.mxu0 0.0
  %3888 = vmatpush1.xpose.msra.mxu0 0.0
  %3889 = vmatprep.subr.mxu0 0.0
  %3890 = vmatpush1.xpose.msra.mxu0 0.0
  %3891 = vmatprep.subr.mxu0 0.0
  %3892 = vmatpush1.xpose.msra.mxu0 0.0
  %3893 = vmatprep.subr.mxu0 0.0
  %3894 = vmatpush1.xpose.msra.mxu0 0.0
  %3895 = vmatprep.subr.mxu0 0.0
  %3896 = vmatpush1.xpose.msra.mxu0 0.0
  %3897 = vmatprep.subr.mxu0 0.0
  %3898 = vmatpush1.xpose.msra.mxu0 0.0
  %3899 = vmatprep.subr.mxu0 0.0
  %3900 = vmatpush1.xpose.msra.mxu0 0.0
  %3901 = vmatprep.subr.mxu0 0.0
  %3902 = vmatpush1.xpose.msra.mxu0 0.0
  %3903 = vmatprep.subr.mxu0 0.0
  %3904 = vmatpush1.xpose.msra.mxu0 0.0
  %3905 = vmatprep.subr.mxu0 0.0
  %3906 = vmatpush1.xpose.msra.mxu0 0.0
  %3907 = vmatprep.subr.mxu0 0.0
  %3908 = vmatpush1.xpose.msra.mxu0 0.0
  %3909 = vmatprep.subr.mxu0 0.0
  %3910 = vmatpush1.xpose.msra.mxu0 0.0
  %3911 = vmatprep.subr.mxu0 0.0
  %3912 = vmatpush1.xpose.msra.mxu0 0.0
  %3913 = vmatprep.subr.mxu0 0.0
  %3914 = vmatpush1.xpose.msra.mxu0 0.0
  %3915 = vmatprep.subr.mxu0 0.0
  %3916 = vmatpush1.xpose.msra.mxu0 0.0
  %3917 = vmatprep.subr.mxu0 0.0
  %3918 = vmatpush1.xpose.msra.mxu0 0.0
  %3919 = vmatprep.mubr.f32.mxu0 0.0
  %3920 = vmatmul.mubr.f32.gmra.mrb[0].mxu0 %v1976
  %v3921 = vpop.f32.mrb[0].mxu0
  %v3922 = vadd.f32 %v3851, %v3921
  %v3923 = vpop.f32.mrb[0].mxu0
  %3924 = vmatprep.mubr.f32.mxu0 0.0
  %3925 = vmatmul.mubr.f32.gmra.mrb[0].mxu0 %v1979
  %v3926 = vpop.f32.mrb[0].mxu0
  %v3927 = vadd.f32 %v3851, %v3926
  %v3928 = vpop.f32.mrb[0].mxu0
  %3929 = vmatprep.mubr.f32.mxu0 0.0
  %3930 = vmatmul.mubr.f32.gmra.mrb[0].mxu0 %v1982
  %v3931 = vpop.f32.mrb[0].mxu0
  %v3932 = vadd.f32 %v3851, %v3931
  %v3933 = vpop.f32.mrb[0].mxu0
  %3934 = vmatprep.mubr.f32.mxu0 0.0
  %3935 = vmatmul.mubr.f32.gmra.mrb[0].mxu0 %v1985
  %v3936 = vpop.f32.mrb[0].mxu0
  %v3937 = vadd.f32 %v3851, %v3936
  %v3938 = vpop.f32.mrb[0].mxu0
  %3939 = vmatprep.mubr.f32.mxu0 0.0
  %3940 = vmatmul.mubr.f32.gmra.mrb[0].mxu0 %v1988
  %v3941 = vpop.f32.mrb[0].mxu0
  %v3942 = vadd.f32 %v3851, %v3941
  %v3943 = vpop.f32.mrb[0].mxu0
  %3944 = vmatprep.mubr.f32.mxu0 0.0
  %3945 = vmatmul.mubr.f32.gmra.mrb[0].mxu0 %v1991
  %v3946 = vpop.f32.mrb[0].mxu0
  %v3947 = vadd.f32 %v3851, %v3946
  %v3948 = vpop.f32.mrb[0].mxu0
  %3949 = vmatprep.mubr.f32.mxu0 0.0
  %3950 = vmatmul.mubr.f32.gmra.mrb[0].mxu0 %v1994
  %v3951 = vpop.f32.mrb[0].mxu0
  %v3952 = vadd.f32 %v3851, %v3951
  %v3953 = vpop.f32.mrb[0].mxu0
  %3954 = vmatprep.mubr.f32.mxu0 0.0
  %3955 = vmatmul.mubr.f32.gmra.mrb[0].mxu0 %v1997
  %v3956 = vpop.f32.mrb[0].mxu0
  %v3957 = vadd.f32 %v3851, %v3956
  %v3958 = vpop.f32.mrb[0].mxu0
  %3959 = vmatprep.mubr.f32.mxu0 0.0
  %3960 = vmatmul.mubr.f32.gmra.mrb[0].mxu0 %v2155
  %v3961 = vpop.f32.mrb[0].mxu0
  %v3962 = vadd.f32 %v3851, %v3961
  %v3963 = vpop.f32.mrb[0].mxu0
  %3964 = vmatprep.mubr.f32.mxu0 0.0
  %3965 = vmatmul.mubr.f32.gmra.mrb[0].mxu0 %v2158
  %v3966 = vpop.f32.mrb[0].mxu0
  %v3967 = vadd.f32 %v3851, %v3966
  %v3968 = vpop.f32.mrb[0].mxu0
  %3969 = vmatprep.mubr.f32.mxu0 0.0
  %3970 = vmatmul.mubr.f32.gmra.mrb[0].mxu0 %v2161
  %v3971 = vpop.f32.mrb[0].mxu0
  %v3972 = vadd.f32 %v3851, %v3971
  %v3973 = vpop.f32.mrb[0].mxu0
  %3974 = vmatprep.mubr.f32.mxu0 0.0
  %3975 = vmatmul.mubr.f32.gmra.mrb[0].mxu0 %v2164
  %v3976 = vpop.f32.mrb[0].mxu0
  %v3977 = vadd.f32 %v3851, %v3976
  %v3978 = vpop.f32.mrb[0].mxu0
  %3979 = vmatprep.mubr.f32.mxu0 0.0
  %3980 = vmatmul.mubr.f32.gmra.mrb[0].mxu0 %v2167
  %v3981 = vpop.f32.mrb[0].mxu0
  %v3982 = vadd.f32 %v3851, %v3981
  %v3983 = vpop.f32.mrb[0].mxu0
  %3984 = vmatprep.mubr.f32.mxu0 0.0
  %3985 = vmatmul.mubr.f32.gmra.mrb[0].mxu0 %v2170
  %v3986 = vpop.f32.mrb[0].mxu0
  %v3987 = vadd.f32 %v3851, %v3986
  %v3988 = vpop.f32.mrb[0].mxu0
  %3989 = vmatprep.mubr.f32.mxu0 0.0
  %3990 = vmatmul.mubr.f32.gmra.mrb[0].mxu0 %v2173
  %v3991 = vpop.f32.mrb[0].mxu0
  %v3992 = vadd.f32 %v3851, %v3991
  %v3993 = vpop.f32.mrb[0].mxu0
  %3994 = vmatprep.mubr.f32.mxu0 0.0
  %3995 = vmatmul.mubr.f32.gmra.mrb[0].mxu0 %v2176
  %v3996 = vpop.f32.mrb[0].mxu0
  %v3997 = vadd.f32 %v3851, %v3996
  %v3998 = vpop.f32.mrb[0].mxu0
  %3999 = vdwg.mxu0
  %v4000 = vsel %vm33, %v3922, -inf
  %4001 = vmax.xlane.f32.xlu0 %v4000
  %v4002 = vpop.xlane.xlu0 %4001
  %v4003 = vsel %vm33, %v3927, -inf
  %4004 = vmax.xlane.f32.xlu0 %v4003
  %v4005 = vpop.xlane.xlu0 %4004
  %v4006 = vsel %vm33, %v3932, -inf
  %4007 = vmax.xlane.f32.xlu0 %v4006
  %v4008 = vpop.xlane.xlu0 %4007
  %v4009 = vsel %vm33, %v3937, -inf
  %4010 = vmax.xlane.f32.xlu0 %v4009
  %v4011 = vpop.xlane.xlu0 %4010
  %v4012 = vsel %vm33, %v3942, -inf
  %4013 = vmax.xlane.f32.xlu0 %v4012
  %v4014 = vpop.xlane.xlu0 %4013
  %v4015 = vsel %vm33, %v3947, -inf
  %4016 = vmax.xlane.f32.xlu0 %v4015
  %v4017 = vpop.xlane.xlu0 %4016
  %v4018 = vsel %vm33, %v3952, -inf
  %4019 = vmax.xlane.f32.xlu0 %v4018
  %v4020 = vpop.xlane.xlu0 %4019
  %v4021 = vsel %vm33, %v3957, -inf
  %4022 = vmax.xlane.f32.xlu0 %v4021
  %v4023 = vpop.xlane.xlu0 %4022
  %v4024 = vsel %vm33, %v3962, -inf
  %4025 = vmax.xlane.f32.xlu0 %v4024
  %v4026 = vpop.xlane.xlu0 %4025
  %v4027 = vsel %vm33, %v3967, -inf
  %4028 = vmax.xlane.f32.xlu0 %v4027
  %v4029 = vpop.xlane.xlu0 %4028
  %v4030 = vsel %vm33, %v3972, -inf
  %4031 = vmax.xlane.f32.xlu0 %v4030
  %v4032 = vpop.xlane.xlu0 %4031
  %v4033 = vsel %vm33, %v3977, -inf
  %4034 = vmax.xlane.f32.xlu0 %v4033
  %v4035 = vpop.xlane.xlu0 %4034
  %v4036 = vsel %vm33, %v3982, -inf
  %4037 = vmax.xlane.f32.xlu0 %v4036
  %v4038 = vpop.xlane.xlu0 %4037
  %v4039 = vsel %vm33, %v3987, -inf
  %4040 = vmax.xlane.f32.xlu0 %v4039
  %v4041 = vpop.xlane.xlu0 %4040
  %v4042 = vsel %vm33, %v3992, -inf
  %4043 = vmax.xlane.f32.xlu0 %v4042
  %v4044 = vpop.xlane.xlu0 %4043
  %v4045 = vsel %vm33, %v3997, -inf
  %4046 = vmax.xlane.f32.xlu0 %v4045
  %v4047 = vpop.xlane.xlu0 %4046
  %v4048 = vsub.f32 %v3922, %v4002
  %v4049 = vsub.f32 %v3927, %v4005
  %v4050 = vsub.f32 %v3932, %v4008
  %v4051 = vsub.f32 %v3937, %v4011
  %v4052 = vsub.f32 %v3942, %v4014
  %v4053 = vsub.f32 %v3947, %v4017
  %v4054 = vsub.f32 %v3952, %v4020
  %v4055 = vsub.f32 %v3957, %v4023
  %v4056 = vsub.f32 %v3962, %v4026
  %v4057 = vsub.f32 %v3967, %v4029
  %v4058 = vsub.f32 %v3972, %v4032
  %v4059 = vsub.f32 %v3977, %v4035
  %v4060 = vsub.f32 %v3982, %v4038
  %v4061 = vsub.f32 %v3987, %v4041
  %v4062 = vsub.f32 %v3992, %v4044
  %v4063 = vsub.f32 %v3997, %v4047
  %v4064 = vmul.f32 %v4048, 1.442695
  %v4065 = vpow.pop %v4064
  %v4066 = vmul.f32 %v4049, 1.442695
  %v4067 = vpow.pop %v4066
  %v4068 = vmul.f32 %v4050, 1.442695
  %v4069 = vpow.pop %v4068
  %v4070 = vmul.f32 %v4051, 1.442695
  %v4071 = vpow.pop %v4070
  %v4072 = vmul.f32 %v4052, 1.442695
  %v4073 = vpow.pop %v4072
  %v4074 = vmul.f32 %v4053, 1.442695
  %v4075 = vpow.pop %v4074
  %v4076 = vmul.f32 %v4054, 1.442695
  %v4077 = vpow.pop %v4076
  %v4078 = vmul.f32 %v4055, 1.442695
  %v4079 = vpow.pop %v4078
  %v4080 = vmul.f32 %v4056, 1.442695
  %v4081 = vpow.pop %v4080
  %v4082 = vmul.f32 %v4057, 1.442695
  %v4083 = vpow.pop %v4082
  %v4084 = vmul.f32 %v4058, 1.442695
  %v4085 = vpow.pop %v4084
  %v4086 = vmul.f32 %v4059, 1.442695
  %v4087 = vpow.pop %v4086
  %v4088 = vmul.f32 %v4060, 1.442695
  %v4089 = vpow.pop %v4088
  %v4090 = vmul.f32 %v4061, 1.442695
  %v4091 = vpow.pop %v4090
  %v4092 = vmul.f32 %v4062, 1.442695
  %v4093 = vpow.pop %v4092
  %v4094 = vmul.f32 %v4063, 1.442695
  %v4095 = vpow.pop %v4094
  %v4096 = vsel %vm33, %v4065, 0.0
  %4097 = vadd.xlane.f32.xlu0 %v4096
  %v4098 = vpop.xlane.xlu0 %4097
  %v4099 = vsel %vm33, %v4067, 0.0
  %4100 = vadd.xlane.f32.xlu0 %v4099
  %v4101 = vpop.xlane.xlu0 %4100
  %v4102 = vsel %vm33, %v4069, 0.0
  %4103 = vadd.xlane.f32.xlu0 %v4102
  %v4104 = vpop.xlane.xlu0 %4103
  %v4105 = vsel %vm33, %v4071, 0.0
  %4106 = vadd.xlane.f32.xlu0 %v4105
  %v4107 = vpop.xlane.xlu0 %4106
  %v4108 = vsel %vm33, %v4073, 0.0
  %4109 = vadd.xlane.f32.xlu0 %v4108
  %v4110 = vpop.xlane.xlu0 %4109
  %v4111 = vsel %vm33, %v4075, 0.0
  %4112 = vadd.xlane.f32.xlu0 %v4111
  %v4113 = vpop.xlane.xlu0 %4112
  %v4114 = vsel %vm33, %v4077, 0.0
  %4115 = vadd.xlane.f32.xlu0 %v4114
  %v4116 = vpop.xlane.xlu0 %4115
  %v4117 = vsel %vm33, %v4079, 0.0
  %4118 = vadd.xlane.f32.xlu0 %v4117
  %v4119 = vpop.xlane.xlu0 %4118
  %v4120 = vsel %vm33, %v4081, 0.0
  %4121 = vadd.xlane.f32.xlu0 %v4120
  %v4122 = vpop.xlane.xlu0 %4121
  %v4123 = vsel %vm33, %v4083, 0.0
  %4124 = vadd.xlane.f32.xlu0 %v4123
  %v4125 = vpop.xlane.xlu0 %4124
  %v4126 = vsel %vm33, %v4085, 0.0
  %4127 = vadd.xlane.f32.xlu0 %v4126
  %v4128 = vpop.xlane.xlu0 %4127
  %v4129 = vsel %vm33, %v4087, 0.0
  %4130 = vadd.xlane.f32.xlu0 %v4129
  %v4131 = vpop.xlane.xlu0 %4130
  %v4132 = vsel %vm33, %v4089, 0.0
  %4133 = vadd.xlane.f32.xlu0 %v4132
  %v4134 = vpop.xlane.xlu0 %4133
  %v4135 = vsel %vm33, %v4091, 0.0
  %4136 = vadd.xlane.f32.xlu0 %v4135
  %v4137 = vpop.xlane.xlu0 %4136
  %v4138 = vsel %vm33, %v4093, 0.0
  %4139 = vadd.xlane.f32.xlu0 %v4138
  %v4140 = vpop.xlane.xlu0 %4139
  %v4141 = vsel %vm33, %v4095, 0.0
  %4142 = vadd.xlane.f32.xlu0 %v4141
  %v4143 = vpop.xlane.xlu0 %4142
  %v4144 = vrcp.pop %v4098
  %v4145 = vrcp.pop %v4101
  %v4146 = vrcp.pop %v4104
  %v4147 = vrcp.pop %v4107
  %v4148 = vrcp.pop %v4110
  %v4149 = vrcp.pop %v4113
  %v4150 = vrcp.pop %v4116
  %v4151 = vrcp.pop %v4119
  %v4152 = vrcp.pop %v4122
  %v4153 = vrcp.pop %v4125
  %v4154 = vrcp.pop %v4128
  %v4155 = vrcp.pop %v4131
  %v4156 = vrcp.pop %v4134
  %v4157 = vrcp.pop %v4137
  %v4158 = vrcp.pop %v4140
  %v4159 = vrcp.pop %v4143
  %v4160 = vmul.f32 %v4065, %v4144
  %v4161 = vmul.f32 %v4067, %v4145
  %v4162 = vmul.f32 %v4069, %v4146
  %v4163 = vmul.f32 %v4071, %v4147
  %v4164 = vmul.f32 %v4073, %v4148
  %v4165 = vmul.f32 %v4075, %v4149
  %v4166 = vmul.f32 %v4077, %v4150
  %v4167 = vmul.f32 %v4079, %v4151
  %v4168 = vmul.f32 %v4081, %v4152
  %v4169 = vmul.f32 %v4083, %v4153
  %v4170 = vmul.f32 %v4085, %v4154
  %v4171 = vmul.f32 %v4087, %v4155
  %v4172 = vmul.f32 %v4089, %v4156
  %v4173 = vmul.f32 %v4091, %v4157
  %v4174 = vmul.f32 %v4093, %v4158
  %v4175 = vmul.f32 %v4095, %v4159
  %v4177 = vsel %vm33, %v4160, 0
  %v4180 = vsel %vm33, %v4161, 0
  %v4183 = vsel %vm33, %v4162, 0
  %v4186 = vsel %vm33, %v4163, 0
  %v4189 = vsel %vm33, %v4164, 0
  %v4192 = vsel %vm33, %v4165, 0
  %v4195 = vsel %vm33, %v4166, 0
  %v4198 = vsel %vm33, %v4167, 0
  %4200 = vmatprep.subr.mxu0 0.0
  %4201 = vmatpush1.msra.mxu0 %v3844
  %4202 = vmatprep.subr.mxu0 0.0
  %4203 = vmatpush1.msra.mxu0 0.0
  %4204 = vmatprep.subr.mxu0 0.0
  %4205 = vmatpush1.msra.mxu0 0.0
  %4206 = vmatprep.subr.mxu0 0.0
  %4207 = vmatpush1.msra.mxu0 0.0
  %4208 = vmatprep.subr.mxu0 0.0
  %4209 = vmatpush1.msra.mxu0 0.0
  %4210 = vmatprep.subr.mxu0 0.0
  %4211 = vmatpush1.msra.mxu0 0.0
  %4212 = vmatprep.subr.mxu0 0.0
  %4213 = vmatpush1.msra.mxu0 0.0
  %4214 = vmatprep.subr.mxu0 0.0
  %4215 = vmatpush1.msra.mxu0 0.0
  %4216 = vmatprep.subr.mxu0 0.0
  %4217 = vmatpush1.msra.mxu0 0.0
  %4218 = vmatprep.subr.mxu0 0.0
  %4219 = vmatpush1.msra.mxu0 0.0
  %4220 = vmatprep.subr.mxu0 0.0
  %4221 = vmatpush1.msra.mxu0 0.0
  %4222 = vmatprep.subr.mxu0 0.0
  %4223 = vmatpush1.msra.mxu0 0.0
  %4224 = vmatprep.subr.mxu0 0.0
  %4225 = vmatpush1.msra.mxu0 0.0
  %4226 = vmatprep.subr.mxu0 0.0
  %4227 = vmatpush1.msra.mxu0 0.0
  %4228 = vmatprep.subr.mxu0 0.0
  %4229 = vmatpush1.msra.mxu0 0.0
  %4230 = vmatprep.subr.mxu0 0.0
  %4231 = vmatpush1.msra.mxu0 0.0
  %4232 = vmatprep.subr.mxu0 0.0
  %4233 = vmatpush1.msra.mxu0 0.0
  %4234 = vmatprep.subr.mxu0 0.0
  %4235 = vmatpush1.msra.mxu0 0.0
  %4236 = vmatprep.subr.mxu0 0.0
  %4237 = vmatpush1.msra.mxu0 0.0
  %4238 = vmatprep.subr.mxu0 0.0
  %4239 = vmatpush1.msra.mxu0 0.0
  %4240 = vmatprep.subr.mxu0 0.0
  %4241 = vmatpush1.msra.mxu0 0.0
  %4242 = vmatprep.subr.mxu0 0.0
  %4243 = vmatpush1.msra.mxu0 0.0
  %4244 = vmatprep.subr.mxu0 0.0
  %4245 = vmatpush1.msra.mxu0 0.0
  %4246 = vmatprep.subr.mxu0 0.0
  %4247 = vmatpush1.msra.mxu0 0.0
  %4248 = vmatprep.subr.mxu0 0.0
  %4249 = vmatpush1.msra.mxu0 0.0
  %4250 = vmatprep.subr.mxu0 0.0
  %4251 = vmatpush1.msra.mxu0 0.0
  %4252 = vmatprep.subr.mxu0 0.0
  %4253 = vmatpush1.msra.mxu0 0.0
  %4254 = vmatprep.subr.mxu0 0.0
  %4255 = vmatpush1.msra.mxu0 0.0
  %4256 = vmatprep.subr.mxu0 0.0
  %4257 = vmatpush1.msra.mxu0 0.0
  %4258 = vmatprep.subr.mxu0 0.0
  %4259 = vmatpush1.msra.mxu0 0.0
  %4260 = vmatprep.subr.mxu0 0.0
  %4261 = vmatpush1.msra.mxu0 0.0
  %4262 = vmatprep.subr.mxu0 0.0
  %4263 = vmatpush1.msra.mxu0 0.0
  %4264 = vmatprep.mubr.f32.mxu0 0.0
  %4265 = vmatmul.mubr.f32.gmra.mrb[0].mxu0 %v4177
  %v4266 = vpop.f32.mrb[0].mxu0
  %v4267 = vadd.f32 0.0, %v4266
  %v4268 = vpop.f32.mrb[0].mxu0
  %4269 = vmatprep.mubr.f32.mxu0 0.0
  %4270 = vmatmul.mubr.f32.gmra.mrb[0].mxu0 %v4180
  %v4271 = vpop.f32.mrb[0].mxu0
  %v4272 = vadd.f32 0.0, %v4271
  %v4273 = vpop.f32.mrb[0].mxu0
  %4274 = vmatprep.mubr.f32.mxu0 0.0
  %4275 = vmatmul.mubr.f32.gmra.mrb[0].mxu0 %v4183
  %v4276 = vpop.f32.mrb[0].mxu0
  %v4277 = vadd.f32 0.0, %v4276
  %v4278 = vpop.f32.mrb[0].mxu0
  %4279 = vmatprep.mubr.f32.mxu0 0.0
  %4280 = vmatmul.mubr.f32.gmra.mrb[0].mxu0 %v4186
  %v4281 = vpop.f32.mrb[0].mxu0
  %v4282 = vadd.f32 0.0, %v4281
  %v4283 = vpop.f32.mrb[0].mxu0
  %4284 = vmatprep.mubr.f32.mxu0 0.0
  %4285 = vmatmul.mubr.f32.gmra.mrb[0].mxu0 %v4189
  %v4286 = vpop.f32.mrb[0].mxu0
  %v4287 = vadd.f32 0.0, %v4286
  %v4288 = vpop.f32.mrb[0].mxu0
  %4289 = vmatprep.mubr.f32.mxu0 0.0
  %4290 = vmatmul.mubr.f32.gmra.mrb[0].mxu0 %v4192
  %v4291 = vpop.f32.mrb[0].mxu0
  %v4292 = vadd.f32 0.0, %v4291
  %v4293 = vpop.f32.mrb[0].mxu0
  %4294 = vmatprep.mubr.f32.mxu0 0.0
  %4295 = vmatmul.mubr.f32.gmra.mrb[0].mxu0 %v4195
  %v4296 = vpop.f32.mrb[0].mxu0
  %v4297 = vadd.f32 0.0, %v4296
  %v4298 = vpop.f32.mrb[0].mxu0
  %4299 = vmatprep.mubr.f32.mxu0 0.0
  %4300 = vmatmul.mubr.f32.gmra.mrb[0].mxu0 %v4198
  %v4301 = vpop.f32.mrb[0].mxu0
  %v4302 = vadd.f32 0.0, %v4301
  %v4303 = vpop.f32.mrb[0].mxu0
  %4304 = vdwg.mxu0
  %v4306 = vsel %vm33, %v4168, 0
  %v4309 = vsel %vm33, %v4169, 0
  %v4312 = vsel %vm33, %v4170, 0
  %v4315 = vsel %vm33, %v4171, 0
  %v4318 = vsel %vm33, %v4172, 0
  %v4321 = vsel %vm33, %v4173, 0
  %v4324 = vsel %vm33, %v4174, 0
  %v4327 = vsel %vm33, %v4175, 0
  %4329 = vmatprep.subr.mxu0 0.0
  %4330 = vmatpush1.msra.mxu0 %v3845
  %4331 = vmatprep.subr.mxu0 0.0
  %4332 = vmatpush1.msra.mxu0 0.0
  %4333 = vmatprep.subr.mxu0 0.0
  %4334 = vmatpush1.msra.mxu0 0.0
  %4335 = vmatprep.subr.mxu0 0.0
  %4336 = vmatpush1.msra.mxu0 0.0
  %4337 = vmatprep.subr.mxu0 0.0
  %4338 = vmatpush1.msra.mxu0 0.0
  %4339 = vmatprep.subr.mxu0 0.0
  %4340 = vmatpush1.msra.mxu0 0.0
  %4341 = vmatprep.subr.mxu0 0.0
  %4342 = vmatpush1.msra.mxu0 0.0
  %4343 = vmatprep.subr.mxu0 0.0
  %4344 = vmatpush1.msra.mxu0 0.0
  %4345 = vmatprep.subr.mxu0 0.0
  %4346 = vmatpush1.msra.mxu0 0.0
  %4347 = vmatprep.subr.mxu0 0.0
  %4348 = vmatpush1.msra.mxu0 0.0
  %4349 = vmatprep.subr.mxu0 0.0
  %4350 = vmatpush1.msra.mxu0 0.0
  %4351 = vmatprep.subr.mxu0 0.0
  %4352 = vmatpush1.msra.mxu0 0.0
  %4353 = vmatprep.subr.mxu0 0.0
  %4354 = vmatpush1.msra.mxu0 0.0
  %4355 = vmatprep.subr.mxu0 0.0
  %4356 = vmatpush1.msra.mxu0 0.0
  %4357 = vmatprep.subr.mxu0 0.0
  %4358 = vmatpush1.msra.mxu0 0.0
  %4359 = vmatprep.subr.mxu0 0.0
  %4360 = vmatpush1.msra.mxu0 0.0
  %4361 = vmatprep.subr.mxu0 0.0
  %4362 = vmatpush1.msra.mxu0 0.0
  %4363 = vmatprep.subr.mxu0 0.0
  %4364 = vmatpush1.msra.mxu0 0.0
  %4365 = vmatprep.subr.mxu0 0.0
  %4366 = vmatpush1.msra.mxu0 0.0
  %4367 = vmatprep.subr.mxu0 0.0
  %4368 = vmatpush1.msra.mxu0 0.0
  %4369 = vmatprep.subr.mxu0 0.0
  %4370 = vmatpush1.msra.mxu0 0.0
  %4371 = vmatprep.subr.mxu0 0.0
  %4372 = vmatpush1.msra.mxu0 0.0
  %4373 = vmatprep.subr.mxu0 0.0
  %4374 = vmatpush1.msra.mxu0 0.0
  %4375 = vmatprep.subr.mxu0 0.0
  %4376 = vmatpush1.msra.mxu0 0.0
  %4377 = vmatprep.subr.mxu0 0.0
  %4378 = vmatpush1.msra.mxu0 0.0
  %4379 = vmatprep.subr.mxu0 0.0
  %4380 = vmatpush1.msra.mxu0 0.0
  %4381 = vmatprep.subr.mxu0 0.0
  %4382 = vmatpush1.msra.mxu0 0.0
  %4383 = vmatprep.subr.mxu0 0.0
  %4384 = vmatpush1.msra.mxu0 0.0
  %4385 = vmatprep.subr.mxu0 0.0
  %4386 = vmatpush1.msra.mxu0 0.0
  %4387 = vmatprep.subr.mxu0 0.0
  %4388 = vmatpush1.msra.mxu0 0.0
  %4389 = vmatprep.subr.mxu0 0.0
  %4390 = vmatpush1.msra.mxu0 0.0
  %4391 = vmatprep.subr.mxu0 0.0
  %4392 = vmatpush1.msra.mxu0 0.0
  %4393 = vmatprep.mubr.f32.mxu0 0.0
  %4394 = vmatmul.mubr.f32.gmra.mrb[0].mxu0 %v4306
  %v4395 = vpop.f32.mrb[0].mxu0
  %v4396 = vadd.f32 0.0, %v4395
  %v4397 = vpop.f32.mrb[0].mxu0
  %4398 = vmatprep.mubr.f32.mxu0 0.0
  %4399 = vmatmul.mubr.f32.gmra.mrb[0].mxu0 %v4309
  %v4400 = vpop.f32.mrb[0].mxu0
  %v4401 = vadd.f32 0.0, %v4400
  %v4402 = vpop.f32.mrb[0].mxu0
  %4403 = vmatprep.mubr.f32.mxu0 0.0
  %4404 = vmatmul.mubr.f32.gmra.mrb[0].mxu0 %v4312
  %v4405 = vpop.f32.mrb[0].mxu0
  %v4406 = vadd.f32 0.0, %v4405
  %v4407 = vpop.f32.mrb[0].mxu0
  %4408 = vmatprep.mubr.f32.mxu0 0.0
  %4409 = vmatmul.mubr.f32.gmra.mrb[0].mxu0 %v4315
  %v4410 = vpop.f32.mrb[0].mxu0
  %v4411 = vadd.f32 0.0, %v4410
  %v4412 = vpop.f32.mrb[0].mxu0
  %4413 = vmatprep.mubr.f32.mxu0 0.0
  %4414 = vmatmul.mubr.f32.gmra.mrb[0].mxu0 %v4318
  %v4415 = vpop.f32.mrb[0].mxu0
  %v4416 = vadd.f32 0.0, %v4415
  %v4417 = vpop.f32.mrb[0].mxu0
  %4418 = vmatprep.mubr.f32.mxu0 0.0
  %4419 = vmatmul.mubr.f32.gmra.mrb[0].mxu0 %v4321
  %v4420 = vpop.f32.mrb[0].mxu0
  %v4421 = vadd.f32 0.0, %v4420
  %v4422 = vpop.f32.mrb[0].mxu0
  %4423 = vmatprep.mubr.f32.mxu0 0.0
  %4424 = vmatmul.mubr.f32.gmra.mrb[0].mxu0 %v4324
  %v4425 = vpop.f32.mrb[0].mxu0
  %v4426 = vadd.f32 0.0, %v4425
  %v4427 = vpop.f32.mrb[0].mxu0
  %4428 = vmatprep.mubr.f32.mxu0 0.0
  %4429 = vmatmul.mubr.f32.gmra.mrb[0].mxu0 %v4327
  %v4430 = vpop.f32.mrb[0].mxu0
  %v4431 = vadd.f32 0.0, %v4430
  %v4432 = vpop.f32.mrb[0].mxu0
  %4433 = vdwg.mxu0
  %v4434 = vld [vmem:[%s1 + $0x1c8] sm:$0xff]
  %v4435 = vld [vmem:[%s1 + $0x1d0] sm:$0xff]
  %v4436 = vld [vmem:[%s1 + $0x1d8] sm:$0xff]
  %v4437 = vld [vmem:[%s1 + $0x1e0] sm:$0xff]
  %v4438 = vld [vmem:[%s1 + $0x1e8] sm:$0xff]
  %v4439 = vld [vmem:[%s1 + $0x1f0] sm:$0xff]
  %v4440 = vld [vmem:[%s1 + $0x1f8] sm:$0xff]
  %v4441 = vld [vmem:[%s1 + $0x200] sm:$0xff]
  %v4443 = vsel %vm236, %v4267, 0
  %v4446 = vsel %vm236, %v4272, 0
  %v4449 = vsel %vm236, %v4277, 0
  %v4452 = vsel %vm236, %v4282, 0
  %v4455 = vsel %vm236, %v4287, 0
  %v4458 = vsel %vm236, %v4292, 0
  %v4461 = vsel %vm236, %v4297, 0
  %v4464 = vsel %vm236, %v4302, 0
  %v4467 = vsel %vm236, %v4396, 0
  %v4470 = vsel %vm236, %v4401, 0
  %v4473 = vsel %vm236, %v4406, 0
  %v4476 = vsel %vm236, %v4411, 0
  %v4479 = vsel %vm236, %v4416, 0
  %v4482 = vsel %vm236, %v4421, 0
  %v4485 = vsel %vm236, %v4426, 0
  %v4488 = vsel %vm236, %v4431, 0
  %4490 = vmatprep.subr.mxu0 0.0
  %4491 = vmatpush1.msra.mxu0 %v4438
  %4492 = vmatprep.subr.mxu0 0.0
  %4493 = vmatpush1.msra.mxu0 %v4439
  %4494 = vmatprep.subr.mxu0 0.0
  %4495 = vmatpush1.msra.mxu0 %v4440
  %4496 = vmatprep.subr.mxu0 0.0
  %4497 = vmatpush1.msra.mxu0 %v4441
  %4498 = vmatprep.subr.mxu0 0.0
  %4499 = vmatpush1.msra.mxu0 0.0
  %4500 = vmatprep.subr.mxu0 0.0
  %4501 = vmatpush1.msra.mxu0 0.0
  %4502 = vmatprep.subr.mxu0 0.0
  %4503 = vmatpush1.msra.mxu0 0.0
  %4504 = vmatprep.subr.mxu0 0.0
  %4505 = vmatpush1.msra.mxu0 0.0
  %4506 = vmatprep.subr.mxu0 0.0
  %4507 = vmatpush1.msra.mxu0 0.0
  %4508 = vmatprep.subr.mxu0 0.0
  %4509 = vmatpush1.msra.mxu0 0.0
  %4510 = vmatprep.subr.mxu0 0.0
  %4511 = vmatpush1.msra.mxu0 0.0
  %4512 = vmatprep.subr.mxu0 0.0
  %4513 = vmatpush1.msra.mxu0 0.0
  %4514 = vmatprep.subr.mxu0 0.0
  %4515 = vmatpush1.msra.mxu0 0.0
  %4516 = vmatprep.subr.mxu0 0.0
  %4517 = vmatpush1.msra.mxu0 0.0
  %4518 = vmatprep.subr.mxu0 0.0
  %4519 = vmatpush1.msra.mxu0 0.0
  %4520 = vmatprep.subr.mxu0 0.0
  %4521 = vmatpush1.msra.mxu0 0.0
  %4522 = vmatprep.subr.mxu0 0.0
  %4523 = vmatpush1.msra.mxu0 0.0
  %4524 = vmatprep.subr.mxu0 0.0
  %4525 = vmatpush1.msra.mxu0 0.0
  %4526 = vmatprep.subr.mxu0 0.0
  %4527 = vmatpush1.msra.mxu0 0.0
  %4528 = vmatprep.subr.mxu0 0.0
  %4529 = vmatpush1.msra.mxu0 0.0
  %4530 = vmatprep.subr.mxu0 0.0
  %4531 = vmatpush1.msra.mxu0 0.0
  %4532 = vmatprep.subr.mxu0 0.0
  %4533 = vmatpush1.msra.mxu0 0.0
  %4534 = vmatprep.subr.mxu0 0.0
  %4535 = vmatpush1.msra.mxu0 0.0
  %4536 = vmatprep.subr.mxu0 0.0
  %4537 = vmatpush1.msra.mxu0 0.0
  %4538 = vmatprep.subr.mxu0 0.0
  %4539 = vmatpush1.msra.mxu0 0.0
  %4540 = vmatprep.subr.mxu0 0.0
  %4541 = vmatpush1.msra.mxu0 0.0
  %4542 = vmatprep.subr.mxu0 0.0
  %4543 = vmatpush1.msra.mxu0 0.0
  %4544 = vmatprep.subr.mxu0 0.0
  %4545 = vmatpush1.msra.mxu0 0.0
  %4546 = vmatprep.subr.mxu0 0.0
  %4547 = vmatpush1.msra.mxu0 0.0
  %4548 = vmatprep.subr.mxu0 0.0
  %4549 = vmatpush1.msra.mxu0 0.0
  %4550 = vmatprep.subr.mxu0 0.0
  %4551 = vmatpush1.msra.mxu0 0.0
  %4552 = vmatprep.subr.mxu0 0.0
  %4553 = vmatpush1.msra.mxu0 0.0
  %4554 = vmatprep.mubr.f32.mxu0 0.0
  %4555 = vmatmul.mubr.f32.gmra.mrb[0].mxu0 %v4443
  %v4556 = vpop.f32.mrb[0].mxu0
  %v4557 = vadd.f32 0.0, %v4556
  %v4558 = vpop.f32.mrb[0].mxu0
  %4559 = vmatprep.mubr.f32.mxu0 0.0
  %4560 = vmatmul.mubr.f32.gmra.mrb[0].mxu0 %v4446
  %v4561 = vpop.f32.mrb[0].mxu0
  %v4562 = vadd.f32 0.0, %v4561
  %v4563 = vpop.f32.mrb[0].mxu0
  %4564 = vmatprep.mubr.f32.mxu0 0.0
  %4565 = vmatmul.mubr.f32.gmra.mrb[0].mxu0 %v4449
  %v4566 = vpop.f32.mrb[0].mxu0
  %v4567 = vadd.f32 0.0, %v4566
  %v4568 = vpop.f32.mrb[0].mxu0
  %4569 = vmatprep.mubr.f32.mxu0 0.0
  %4570 = vmatmul.mubr.f32.gmra.mrb[0].mxu0 %v4452
  %v4571 = vpop.f32.mrb[0].mxu0
  %v4572 = vadd.f32 0.0, %v4571
  %v4573 = vpop.f32.mrb[0].mxu0
  %4574 = vmatprep.mubr.f32.mxu0 0.0
  %4575 = vmatmul.mubr.f32.gmra.mrb[0].mxu0 %v4455
  %v4576 = vpop.f32.mrb[0].mxu0
  %v4577 = vadd.f32 0.0, %v4576
  %v4578 = vpop.f32.mrb[0].mxu0
  %4579 = vmatprep.mubr.f32.mxu0 0.0
  %4580 = vmatmul.mubr.f32.gmra.mrb[0].mxu0 %v4458
  %v4581 = vpop.f32.mrb[0].mxu0
  %v4582 = vadd.f32 0.0, %v4581
  %v4583 = vpop.f32.mrb[0].mxu0
  %4584 = vmatprep.mubr.f32.mxu0 0.0
  %4585 = vmatmul.mubr.f32.gmra.mrb[0].mxu0 %v4461
  %v4586 = vpop.f32.mrb[0].mxu0
  %v4587 = vadd.f32 0.0, %v4586
  %v4588 = vpop.f32.mrb[0].mxu0
  %4589 = vmatprep.mubr.f32.mxu0 0.0
  %4590 = vmatmul.mubr.f32.gmra.mrb[0].mxu0 %v4464
  %v4591 = vpop.f32.mrb[0].mxu0
  %v4592 = vadd.f32 0.0, %v4591
  %v4593 = vpop.f32.mrb[0].mxu0
  %4594 = vmatprep.mubr.f32.mxu0 0.0
  %4595 = vmatmul.mubr.f32.gmra.mrb[0].mxu0 %v4467
  %v4596 = vpop.f32.mrb[0].mxu0
  %v4597 = vadd.f32 0.0, %v4596
  %v4598 = vpop.f32.mrb[0].mxu0
  %4599 = vmatprep.mubr.f32.mxu0 0.0
  %4600 = vmatmul.mubr.f32.gmra.mrb[0].mxu0 %v4470
  %v4601 = vpop.f32.mrb[0].mxu0
  %v4602 = vadd.f32 0.0, %v4601
  %v4603 = vpop.f32.mrb[0].mxu0
  %4604 = vmatprep.mubr.f32.mxu0 0.0
  %4605 = vmatmul.mubr.f32.gmra.mrb[0].mxu0 %v4473
  %v4606 = vpop.f32.mrb[0].mxu0
  %v4607 = vadd.f32 0.0, %v4606
  %v4608 = vpop.f32.mrb[0].mxu0
  %4609 = vmatprep.mubr.f32.mxu0 0.0
  %4610 = vmatmul.mubr.f32.gmra.mrb[0].mxu0 %v4476
  %v4611 = vpop.f32.mrb[0].mxu0
  %v4612 = vadd.f32 0.0, %v4611
  %v4613 = vpop.f32.mrb[0].mxu0
  %4614 = vmatprep.mubr.f32.mxu0 0.0
  %4615 = vmatmul.mubr.f32.gmra.mrb[0].mxu0 %v4479
  %v4616 = vpop.f32.mrb[0].mxu0
  %v4617 = vadd.f32 0.0, %v4616
  %v4618 = vpop.f32.mrb[0].mxu0
  %4619 = vmatprep.mubr.f32.mxu0 0.0
  %4620 = vmatmul.mubr.f32.gmra.mrb[0].mxu0 %v4482
  %v4621 = vpop.f32.mrb[0].mxu0
  %v4622 = vadd.f32 0.0, %v4621
  %v4623 = vpop.f32.mrb[0].mxu0
  %4624 = vmatprep.mubr.f32.mxu0 0.0
  %4625 = vmatmul.mubr.f32.gmra.mrb[0].mxu0 %v4485
  %v4626 = vpop.f32.mrb[0].mxu0
  %v4627 = vadd.f32 0.0, %v4626
  %v4628 = vpop.f32.mrb[0].mxu0
  %4629 = vmatprep.mubr.f32.mxu0 0.0
  %4630 = vmatmul.mubr.f32.gmra.mrb[0].mxu0 %v4488
  %v4631 = vpop.f32.mrb[0].mxu0
  %v4632 = vadd.f32 0.0, %v4631
  %v4633 = vpop.f32.mrb[0].mxu0
  %4634 = vdwg.mxu0
  %v4636 = vsel %vm236, %v1667, 0
  %v4639 = vsel %vm236, %v1668, 0
  %v4642 = vsel %vm236, %v1669, 0
  %v4645 = vsel %vm236, %v1670, 0
  %v4648 = vsel %vm236, %v1671, 0
  %v4651 = vsel %vm236, %v1672, 0
  %v4654 = vsel %vm236, %v1673, 0
  %v4657 = vsel %vm236, %v1674, 0
  %v4660 = vsel %vm236, %v1675, 0
  %v4663 = vsel %vm236, %v1676, 0
  %v4666 = vsel %vm236, %v1677, 0
  %v4669 = vsel %vm236, %v1678, 0
  %v4672 = vsel %vm236, %v1679, 0
  %v4675 = vsel %vm236, %v1680, 0
  %v4678 = vsel %vm236, %v1681, 0
  %v4681 = vsel %vm236, %v1682, 0
  %4683 = vmatprep.subr.mxu0 0.0
  %4684 = vmatpush1.msra.mxu0 %v4434
  %4685 = vmatprep.subr.mxu0 0.0
  %4686 = vmatpush1.msra.mxu0 %v4435
  %4687 = vmatprep.subr.mxu0 0.0
  %4688 = vmatpush1.msra.mxu0 %v4436
  %4689 = vmatprep.subr.mxu0 0.0
  %4690 = vmatpush1.msra.mxu0 %v4437
  %4691 = vmatprep.subr.mxu0 0.0
  %4692 = vmatpush1.msra.mxu0 0.0
  %4693 = vmatprep.subr.mxu0 0.0
  %4694 = vmatpush1.msra.mxu0 0.0
  %4695 = vmatprep.subr.mxu0 0.0
  %4696 = vmatpush1.msra.mxu0 0.0
  %4697 = vmatprep.subr.mxu0 0.0
  %4698 = vmatpush1.msra.mxu0 0.0
  %4699 = vmatprep.subr.mxu0 0.0
  %4700 = vmatpush1.msra.mxu0 0.0
  %4701 = vmatprep.subr.mxu0 0.0
  %4702 = vmatpush1.msra.mxu0 0.0
  %4703 = vmatprep.subr.mxu0 0.0
  %4704 = vmatpush1.msra.mxu0 0.0
  %4705 = vmatprep.subr.mxu0 0.0
  %4706 = vmatpush1.msra.mxu0 0.0
  %4707 = vmatprep.subr.mxu0 0.0
  %4708 = vmatpush1.msra.mxu0 0.0
  %4709 = vmatprep.subr.mxu0 0.0
  %4710 = vmatpush1.msra.mxu0 0.0
  %4711 = vmatprep.subr.mxu0 0.0
  %4712 = vmatpush1.msra.mxu0 0.0
  %4713 = vmatprep.subr.mxu0 0.0
  %4714 = vmatpush1.msra.mxu0 0.0
  %4715 = vmatprep.subr.mxu0 0.0
  %4716 = vmatpush1.msra.mxu0 0.0
  %4717 = vmatprep.subr.mxu0 0.0
  %4718 = vmatpush1.msra.mxu0 0.0
  %4719 = vmatprep.subr.mxu0 0.0
  %4720 = vmatpush1.msra.mxu0 0.0
  %4721 = vmatprep.subr.mxu0 0.0
  %4722 = vmatpush1.msra.mxu0 0.0
  %4723 = vmatprep.subr.mxu0 0.0
  %4724 = vmatpush1.msra.mxu0 0.0
  %4725 = vmatprep.subr.mxu0 0.0
  %4726 = vmatpush1.msra.mxu0 0.0
  %4727 = vmatprep.subr.mxu0 0.0
  %4728 = vmatpush1.msra.mxu0 0.0
  %4729 = vmatprep.subr.mxu0 0.0
  %4730 = vmatpush1.msra.mxu0 0.0
  %4731 = vmatprep.subr.mxu0 0.0
  %4732 = vmatpush1.msra.mxu0 0.0
  %4733 = vmatprep.subr.mxu0 0.0
  %4734 = vmatpush1.msra.mxu0 0.0
  %4735 = vmatprep.subr.mxu0 0.0
  %4736 = vmatpush1.msra.mxu0 0.0
  %4737 = vmatprep.subr.mxu0 0.0
  %4738 = vmatpush1.msra.mxu0 0.0
  %4739 = vmatprep.subr.mxu0 0.0
  %4740 = vmatpush1.msra.mxu0 0.0
  %4741 = vmatprep.subr.mxu0 0.0
  %4742 = vmatpush1.msra.mxu0 0.0
  %4743 = vmatprep.subr.mxu0 0.0
  %4744 = vmatpush1.msra.mxu0 0.0
  %4745 = vmatprep.subr.mxu0 0.0
  %4746 = vmatpush1.msra.mxu0 0.0
  %4747 = vmatprep.mubr.f32.mxu0 0.0
  %4748 = vmatmul.mubr.f32.gmra.mrb[0].mxu0 %v4636
  %v4749 = vpop.f32.mrb[0].mxu0
  %v4750 = vadd.f32 %v4557, %v4749
  %v4751 = vpop.f32.mrb[0].mxu0
  %4752 = vmatprep.mubr.f32.mxu0 0.0
  %4753 = vmatmul.mubr.f32.gmra.mrb[0].mxu0 %v4639
  %v4754 = vpop.f32.mrb[0].mxu0
  %v4755 = vadd.f32 %v4562, %v4754
  %v4756 = vpop.f32.mrb[0].mxu0
  %4757 = vmatprep.mubr.f32.mxu0 0.0
  %4758 = vmatmul.mubr.f32.gmra.mrb[0].mxu0 %v4642
  %v4759 = vpop.f32.mrb[0].mxu0
  %v4760 = vadd.f32 %v4567, %v4759
  %v4761 = vpop.f32.mrb[0].mxu0
  %4762 = vmatprep.mubr.f32.mxu0 0.0
  %4763 = vmatmul.mubr.f32.gmra.mrb[0].mxu0 %v4645
  %v4764 = vpop.f32.mrb[0].mxu0
  %v4765 = vadd.f32 %v4572, %v4764
  %v4766 = vpop.f32.mrb[0].mxu0
  %4767 = vmatprep.mubr.f32.mxu0 0.0
  %4768 = vmatmul.mubr.f32.gmra.mrb[0].mxu0 %v4648
  %v4769 = vpop.f32.mrb[0].mxu0
  %v4770 = vadd.f32 %v4577, %v4769
  %v4771 = vpop.f32.mrb[0].mxu0
  %4772 = vmatprep.mubr.f32.mxu0 0.0
  %4773 = vmatmul.mubr.f32.gmra.mrb[0].mxu0 %v4651
  %v4774 = vpop.f32.mrb[0].mxu0
  %v4775 = vadd.f32 %v4582, %v4774
  %v4776 = vpop.f32.mrb[0].mxu0
  %4777 = vmatprep.mubr.f32.mxu0 0.0
  %4778 = vmatmul.mubr.f32.gmra.mrb[0].mxu0 %v4654
  %v4779 = vpop.f32.mrb[0].mxu0
  %v4780 = vadd.f32 %v4587, %v4779
  %v4781 = vpop.f32.mrb[0].mxu0
  %4782 = vmatprep.mubr.f32.mxu0 0.0
  %4783 = vmatmul.mubr.f32.gmra.mrb[0].mxu0 %v4657
  %v4784 = vpop.f32.mrb[0].mxu0
  %v4785 = vadd.f32 %v4592, %v4784
  %v4786 = vpop.f32.mrb[0].mxu0
  %4787 = vmatprep.mubr.f32.mxu0 0.0
  %4788 = vmatmul.mubr.f32.gmra.mrb[0].mxu0 %v4660
  %v4789 = vpop.f32.mrb[0].mxu0
  %v4790 = vadd.f32 %v4597, %v4789
  %v4791 = vpop.f32.mrb[0].mxu0
  %4792 = vmatprep.mubr.f32.mxu0 0.0
  %4793 = vmatmul.mubr.f32.gmra.mrb[0].mxu0 %v4663
  %v4794 = vpop.f32.mrb[0].mxu0
  %v4795 = vadd.f32 %v4602, %v4794
  %v4796 = vpop.f32.mrb[0].mxu0
  %4797 = vmatprep.mubr.f32.mxu0 0.0
  %4798 = vmatmul.mubr.f32.gmra.mrb[0].mxu0 %v4666
  %v4799 = vpop.f32.mrb[0].mxu0
  %v4800 = vadd.f32 %v4607, %v4799
  %v4801 = vpop.f32.mrb[0].mxu0
  %4802 = vmatprep.mubr.f32.mxu0 0.0
  %4803 = vmatmul.mubr.f32.gmra.mrb[0].mxu0 %v4669
  %v4804 = vpop.f32.mrb[0].mxu0
  %v4805 = vadd.f32 %v4612, %v4804
  %v4806 = vpop.f32.mrb[0].mxu0
  %4807 = vmatprep.mubr.f32.mxu0 0.0
  %4808 = vmatmul.mubr.f32.gmra.mrb[0].mxu0 %v4672
  %v4809 = vpop.f32.mrb[0].mxu0
  %v4810 = vadd.f32 %v4617, %v4809
  %v4811 = vpop.f32.mrb[0].mxu0
  %4812 = vmatprep.mubr.f32.mxu0 0.0
  %4813 = vmatmul.mubr.f32.gmra.mrb[0].mxu0 %v4675
  %v4814 = vpop.f32.mrb[0].mxu0
  %v4815 = vadd.f32 %v4622, %v4814
  %v4816 = vpop.f32.mrb[0].mxu0
  %4817 = vmatprep.mubr.f32.mxu0 0.0
  %4818 = vmatmul.mubr.f32.gmra.mrb[0].mxu0 %v4678
  %v4819 = vpop.f32.mrb[0].mxu0
  %v4820 = vadd.f32 %v4627, %v4819
  %v4821 = vpop.f32.mrb[0].mxu0
  %4822 = vmatprep.mubr.f32.mxu0 0.0
  %4823 = vmatmul.mubr.f32.gmra.mrb[0].mxu0 %v4681
  %v4824 = vpop.f32.mrb[0].mxu0
  %v4825 = vadd.f32 %v4632, %v4824
  %v4826 = vpop.f32.mrb[0].mxu0
  %4827 = vdwg.mxu0
  %v4828 = vld [vmem:[%s1 + $0x208] sm:$0x1]
  %v4829 = vlaneseq
  %v4830 = vshrl.u32 %v4829, 7
  %v4831 = vsub.s32 0, %v4830
  %v4832 = vrot.slane %v4828, %v4831
  %v4833 = vadd.f32 %v4750, %v4832
  %v4834 = vadd.f32 %v4755, %v4832
  %v4835 = vadd.f32 %v4760, %v4832
  %v4836 = vadd.f32 %v4765, %v4832
  %v4837 = vadd.f32 %v4770, %v4832
  %v4838 = vadd.f32 %v4775, %v4832
  %v4839 = vadd.f32 %v4780, %v4832
  %v4840 = vadd.f32 %v4785, %v4832
  %v4841 = vadd.f32 %v4790, %v4832
  %v4842 = vadd.f32 %v4795, %v4832
  %v4843 = vadd.f32 %v4800, %v4832
  %v4844 = vadd.f32 %v4805, %v4832
  %v4845 = vadd.f32 %v4810, %v4832
  %v4846 = vadd.f32 %v4815, %v4832
  %v4847 = vadd.f32 %v4820, %v4832
  %v4848 = vadd.f32 %v4825, %v4832
  %v4849 = vld [vmem:[%s1 + $0x210] sm:$0xff]
  %v4850 = vld [vmem:[%s1 + $0x218] sm:$0xff]
  %v4851 = vld [vmem:[%s1 + $0x220] sm:$0xff]
  %v4852 = vld [vmem:[%s1 + $0x228] sm:$0xff]
  %v4853 = vld [vmem:[%s1 + $0x230] sm:$0x1]
  %v4854 = vlaneseq
  %v4855 = vshrl.u32 %v4854, 7
  %v4856 = vsub.s32 0, %v4855
  %v4857 = vrot.slane %v4853, %v4856
  %v4859 = vsel %vm236, %v4833, 0
  %v4862 = vsel %vm236, %v4834, 0
  %v4865 = vsel %vm236, %v4835, 0
  %v4868 = vsel %vm236, %v4836, 0
  %v4871 = vsel %vm236, %v4837, 0
  %v4874 = vsel %vm236, %v4838, 0
  %v4877 = vsel %vm236, %v4839, 0
  %v4880 = vsel %vm236, %v4840, 0
  %v4883 = vsel %vm236, %v4841, 0
  %v4886 = vsel %vm236, %v4842, 0
  %v4889 = vsel %vm236, %v4843, 0
  %v4892 = vsel %vm236, %v4844, 0
  %v4895 = vsel %vm236, %v4845, 0
  %v4898 = vsel %vm236, %v4846, 0
  %v4901 = vsel %vm236, %v4847, 0
  %v4904 = vsel %vm236, %v4848, 0
  %4906 = vmatprep.subr.mxu0 0.0
  %4907 = vmatpush1.msra.mxu0 %v4849
  %4908 = vmatprep.subr.mxu0 0.0
  %4909 = vmatpush1.msra.mxu0 %v4850
  %4910 = vmatprep.subr.mxu0 0.0
  %4911 = vmatpush1.msra.mxu0 %v4851
  %4912 = vmatprep.subr.mxu0 0.0
  %4913 = vmatpush1.msra.mxu0 %v4852
  %4914 = vmatprep.subr.mxu0 0.0
  %4915 = vmatpush1.msra.mxu0 0.0
  %4916 = vmatprep.subr.mxu0 0.0
  %4917 = vmatpush1.msra.mxu0 0.0
  %4918 = vmatprep.subr.mxu0 0.0
  %4919 = vmatpush1.msra.mxu0 0.0
  %4920 = vmatprep.subr.mxu0 0.0
  %4921 = vmatpush1.msra.mxu0 0.0
  %4922 = vmatprep.subr.mxu0 0.0
  %4923 = vmatpush1.msra.mxu0 0.0
  %4924 = vmatprep.subr.mxu0 0.0
  %4925 = vmatpush1.msra.mxu0 0.0
  %4926 = vmatprep.subr.mxu0 0.0
  %4927 = vmatpush1.msra.mxu0 0.0
  %4928 = vmatprep.subr.mxu0 0.0
  %4929 = vmatpush1.msra.mxu0 0.0
  %4930 = vmatprep.subr.mxu0 0.0
  %4931 = vmatpush1.msra.mxu0 0.0
  %4932 = vmatprep.subr.mxu0 0.0
  %4933 = vmatpush1.msra.mxu0 0.0
  %4934 = vmatprep.subr.mxu0 0.0
  %4935 = vmatpush1.msra.mxu0 0.0
  %4936 = vmatprep.subr.mxu0 0.0
  %4937 = vmatpush1.msra.mxu0 0.0
  %4938 = vmatprep.subr.mxu0 0.0
  %4939 = vmatpush1.msra.mxu0 0.0
  %4940 = vmatprep.subr.mxu0 0.0
  %4941 = vmatpush1.msra.mxu0 0.0
  %4942 = vmatprep.subr.mxu0 0.0
  %4943 = vmatpush1.msra.mxu0 0.0
  %4944 = vmatprep.subr.mxu0 0.0
  %4945 = vmatpush1.msra.mxu0 0.0
  %4946 = vmatprep.subr.mxu0 0.0
  %4947 = vmatpush1.msra.mxu0 0.0
  %4948 = vmatprep.subr.mxu0 0.0
  %4949 = vmatpush1.msra.mxu0 0.0
  %4950 = vmatprep.subr.mxu0 0.0
  %4951 = vmatpush1.msra.mxu0 0.0
  %4952 = vmatprep.subr.mxu0 0.0
  %4953 = vmatpush1.msra.mxu0 0.0
  %4954 = vmatprep.subr.mxu0 0.0
  %4955 = vmatpush1.msra.mxu0 0.0
  %4956 = vmatprep.subr.mxu0 0.0
  %4957 = vmatpush1.msra.mxu0 0.0
  %4958 = vmatprep.subr.mxu0 0.0
  %4959 = vmatpush1.msra.mxu0 0.0
  %4960 = vmatprep.subr.mxu0 0.0
  %4961 = vmatpush1.msra.mxu0 0.0
  %4962 = vmatprep.subr.mxu0 0.0
  %4963 = vmatpush1.msra.mxu0 0.0
  %4964 = vmatprep.subr.mxu0 0.0
  %4965 = vmatpush1.msra.mxu0 0.0
  %4966 = vmatprep.subr.mxu0 0.0
  %4967 = vmatpush1.msra.mxu0 0.0
  %4968 = vmatprep.subr.mxu0 0.0
  %4969 = vmatpush1.msra.mxu0 0.0
  %4970 = vmatprep.mubr.f32.mxu0 0.0
  %4971 = vmatmul.mubr.f32.gmra.mrb[0].mxu0 %v4859
  %v4972 = vpop.f32.mrb[0].mxu0
  %v4973 = vadd.f32 %v4857, %v4972
  %v4974 = vpop.f32.mrb[0].mxu0
  %4975 = vmatprep.mubr.f32.mxu0 0.0
  %4976 = vmatmul.mubr.f32.gmra.mrb[0].mxu0 %v4862
  %v4977 = vpop.f32.mrb[0].mxu0
  %v4978 = vadd.f32 %v4857, %v4977
  %v4979 = vpop.f32.mrb[0].mxu0
  %4980 = vmatprep.mubr.f32.mxu0 0.0
  %4981 = vmatmul.mubr.f32.gmra.mrb[0].mxu0 %v4865
  %v4982 = vpop.f32.mrb[0].mxu0
  %v4983 = vadd.f32 %v4857, %v4982
  %v4984 = vpop.f32.mrb[0].mxu0
  %4985 = vmatprep.mubr.f32.mxu0 0.0
  %4986 = vmatmul.mubr.f32.gmra.mrb[0].mxu0 %v4868
  %v4987 = vpop.f32.mrb[0].mxu0
  %v4988 = vadd.f32 %v4857, %v4987
  %v4989 = vpop.f32.mrb[0].mxu0
  %4990 = vmatprep.mubr.f32.mxu0 0.0
  %4991 = vmatmul.mubr.f32.gmra.mrb[0].mxu0 %v4871
  %v4992 = vpop.f32.mrb[0].mxu0
  %v4993 = vadd.f32 %v4857, %v4992
  %v4994 = vpop.f32.mrb[0].mxu0
  %4995 = vmatprep.mubr.f32.mxu0 0.0
  %4996 = vmatmul.mubr.f32.gmra.mrb[0].mxu0 %v4874
  %v4997 = vpop.f32.mrb[0].mxu0
  %v4998 = vadd.f32 %v4857, %v4997
  %v4999 = vpop.f32.mrb[0].mxu0
  %5000 = vmatprep.mubr.f32.mxu0 0.0
  %5001 = vmatmul.mubr.f32.gmra.mrb[0].mxu0 %v4877
  %v5002 = vpop.f32.mrb[0].mxu0
  %v5003 = vadd.f32 %v4857, %v5002
  %v5004 = vpop.f32.mrb[0].mxu0
  %5005 = vmatprep.mubr.f32.mxu0 0.0
  %5006 = vmatmul.mubr.f32.gmra.mrb[0].mxu0 %v4880
  %v5007 = vpop.f32.mrb[0].mxu0
  %v5008 = vadd.f32 %v4857, %v5007
  %v5009 = vpop.f32.mrb[0].mxu0
  %5010 = vmatprep.mubr.f32.mxu0 0.0
  %5011 = vmatmul.mubr.f32.gmra.mrb[0].mxu0 %v4883
  %v5012 = vpop.f32.mrb[0].mxu0
  %v5013 = vadd.f32 %v4857, %v5012
  %v5014 = vpop.f32.mrb[0].mxu0
  %5015 = vmatprep.mubr.f32.mxu0 0.0
  %5016 = vmatmul.mubr.f32.gmra.mrb[0].mxu0 %v4886
  %v5017 = vpop.f32.mrb[0].mxu0
  %v5018 = vadd.f32 %v4857, %v5017
  %v5019 = vpop.f32.mrb[0].mxu0
  %5020 = vmatprep.mubr.f32.mxu0 0.0
  %5021 = vmatmul.mubr.f32.gmra.mrb[0].mxu0 %v4889
  %v5022 = vpop.f32.mrb[0].mxu0
  %v5023 = vadd.f32 %v4857, %v5022
  %v5024 = vpop.f32.mrb[0].mxu0
  %5025 = vmatprep.mubr.f32.mxu0 0.0
  %5026 = vmatmul.mubr.f32.gmra.mrb[0].mxu0 %v4892
  %v5027 = vpop.f32.mrb[0].mxu0
  %v5028 = vadd.f32 %v4857, %v5027
  %v5029 = vpop.f32.mrb[0].mxu0
  %5030 = vmatprep.mubr.f32.mxu0 0.0
  %5031 = vmatmul.mubr.f32.gmra.mrb[0].mxu0 %v4895
  %v5032 = vpop.f32.mrb[0].mxu0
  %v5033 = vadd.f32 %v4857, %v5032
  %v5034 = vpop.f32.mrb[0].mxu0
  %5035 = vmatprep.mubr.f32.mxu0 0.0
  %5036 = vmatmul.mubr.f32.gmra.mrb[0].mxu0 %v4898
  %v5037 = vpop.f32.mrb[0].mxu0
  %v5038 = vadd.f32 %v4857, %v5037
  %v5039 = vpop.f32.mrb[0].mxu0
  %5040 = vmatprep.mubr.f32.mxu0 0.0
  %5041 = vmatmul.mubr.f32.gmra.mrb[0].mxu0 %v4901
  %v5042 = vpop.f32.mrb[0].mxu0
  %v5043 = vadd.f32 %v4857, %v5042
  %v5044 = vpop.f32.mrb[0].mxu0
  %5045 = vmatprep.mubr.f32.mxu0 0.0
  %5046 = vmatmul.mubr.f32.gmra.mrb[0].mxu0 %v4904
  %v5047 = vpop.f32.mrb[0].mxu0
  %v5048 = vadd.f32 %v4857, %v5047
  %v5049 = vpop.f32.mrb[0].mxu0
  %5050 = vdwg.mxu0
  %v5051 = vsel %vm236, %v4973, 0.0
  %v5052 = vsel %vm236, %v4978, 0.0
  %v5053 = vadd.f32 %v5051, %v5052
  %v5054 = vsel %vm236, %v4983, 0.0
  %v5055 = vadd.f32 %v5053, %v5054
  %v5056 = vsel %vm236, %v4988, 0.0
  %v5057 = vadd.f32 %v5055, %v5056
  %v5058 = vsel %vm236, %v4993, 0.0
  %v5059 = vadd.f32 %v5057, %v5058
  %v5060 = vsel %vm236, %v4998, 0.0
  %v5061 = vadd.f32 %v5059, %v5060
  %v5062 = vsel %vm236, %v5003, 0.0
  %v5063 = vadd.f32 %v5061, %v5062
  %v5064 = vsel %vm236, %v5008, 0.0
  %v5065 = vadd.f32 %v5063, %v5064
  %v5066 = vrot.slane %v5065, 4
  %v5067 = vadd.f32 %v5065, %v5066
  %v5068 = vrot.slane %v5067, 2
  %v5069 = vadd.f32 %v5067, %v5068
  %v5070 = vrot.slane %v5069, 1
  %v5071 = vadd.f32 %v5069, %v5070
  %v5072 = vsel %vm236, %v5013, 0.0
  %v5073 = vsel %vm236, %v5018, 0.0
  %v5074 = vadd.f32 %v5072, %v5073
  %v5075 = vsel %vm236, %v5023, 0.0
  %v5076 = vadd.f32 %v5074, %v5075
  %v5077 = vsel %vm236, %v5028, 0.0
  %v5078 = vadd.f32 %v5076, %v5077
  %v5079 = vsel %vm236, %v5033, 0.0
  %v5080 = vadd.f32 %v5078, %v5079
  %v5081 = vsel %vm236, %v5038, 0.0
  %v5082 = vadd.f32 %v5080, %v5081
  %v5083 = vsel %vm236, %v5043, 0.0
  %v5084 = vadd.f32 %v5082, %v5083
  %v5085 = vsel %vm236, %v5048, 0.0
  %v5086 = vadd.f32 %v5084, %v5085
  %v5087 = vrot.slane %v5086, 4
  %v5088 = vadd.f32 %v5086, %v5087
  %v5089 = vrot.slane %v5088, 2
  %v5090 = vadd.f32 %v5088, %v5089
  %v5091 = vrot.slane %v5090, 1
  %v5092 = vadd.f32 %v5090, %v5091
  %v5093 = vmul.f32 %v5071, %v472
  %v5094 = vmul.f32 %v5092, %v472
  %v5095 = vsub.f32 %v4973, %v5093
  %v5096 = vsub.f32 %v4978, %v5093
  %v5097 = vsub.f32 %v4983, %v5093
  %v5098 = vsub.f32 %v4988, %v5093
  %v5099 = vsub.f32 %v4993, %v5093
  %v5100 = vsub.f32 %v4998, %v5093
  %v5101 = vsub.f32 %v5003, %v5093
  %v5102 = vsub.f32 %v5008, %v5093
  %v5103 = vsub.f32 %v5013, %v5094
  %v5104 = vsub.f32 %v5018, %v5094
  %v5105 = vsub.f32 %v5023, %v5094
  %v5106 = vsub.f32 %v5028, %v5094
  %v5107 = vsub.f32 %v5033, %v5094
  %v5108 = vsub.f32 %v5038, %v5094
  %v5109 = vsub.f32 %v5043, %v5094
  %v5110 = vsub.f32 %v5048, %v5094
  %v5111 = vmul.f32 %v5095, %v5095
  %v5112 = vmul.f32 %v5096, %v5096
  %v5113 = vmul.f32 %v5097, %v5097
  %v5114 = vmul.f32 %v5098, %v5098
  %v5115 = vmul.f32 %v5099, %v5099
  %v5116 = vmul.f32 %v5100, %v5100
  %v5117 = vmul.f32 %v5101, %v5101
  %v5118 = vmul.f32 %v5102, %v5102
  %v5119 = vmul.f32 %v5103, %v5103
  %v5120 = vmul.f32 %v5104, %v5104
  %v5121 = vmul.f32 %v5105, %v5105
  %v5122 = vmul.f32 %v5106, %v5106
  %v5123 = vmul.f32 %v5107, %v5107
  %v5124 = vmul.f32 %v5108, %v5108
  %v5125 = vmul.f32 %v5109, %v5109
  %v5126 = vmul.f32 %v5110, %v5110
  %v5127 = vsel %vm236, %v5111, 0.0
  %v5128 = vsel %vm236, %v5112, 0.0
  %v5129 = vadd.f32 %v5127, %v5128
  %v5130 = vsel %vm236, %v5113, 0.0
  %v5131 = vadd.f32 %v5129, %v5130
  %v5132 = vsel %vm236, %v5114, 0.0
  %v5133 = vadd.f32 %v5131, %v5132
  %v5134 = vsel %vm236, %v5115, 0.0
  %v5135 = vadd.f32 %v5133, %v5134
  %v5136 = vsel %vm236, %v5116, 0.0
  %v5137 = vadd.f32 %v5135, %v5136
  %v5138 = vsel %vm236, %v5117, 0.0
  %v5139 = vadd.f32 %v5137, %v5138
  %v5140 = vsel %vm236, %v5118, 0.0
  %v5141 = vadd.f32 %v5139, %v5140
  %v5142 = vrot.slane %v5141, 4
  %v5143 = vadd.f32 %v5141, %v5142
  %v5144 = vrot.slane %v5143, 2
  %v5145 = vadd.f32 %v5143, %v5144
  %v5146 = vrot.slane %v5145, 1
  %v5147 = vadd.f32 %v5145, %v5146
  %v5148 = vsel %vm236, %v5119, 0.0
  %v5149 = vsel %vm236, %v5120, 0.0
  %v5150 = vadd.f32 %v5148, %v5149
  %v5151 = vsel %vm236, %v5121, 0.0
  %v5152 = vadd.f32 %v5150, %v5151
  %v5153 = vsel %vm236, %v5122, 0.0
  %v5154 = vadd.f32 %v5152, %v5153
  %v5155 = vsel %vm236, %v5123, 0.0
  %v5156 = vadd.f32 %v5154, %v5155
  %v5157 = vsel %vm236, %v5124, 0.0
  %v5158 = vadd.f32 %v5156, %v5157
  %v5159 = vsel %vm236, %v5125, 0.0
  %v5160 = vadd.f32 %v5158, %v5159
  %v5161 = vsel %vm236, %v5126, 0.0
  %v5162 = vadd.f32 %v5160, %v5161
  %v5163 = vrot.slane %v5162, 4
  %v5164 = vadd.f32 %v5162, %v5163
  %v5165 = vrot.slane %v5164, 2
  %v5166 = vadd.f32 %v5164, %v5165
  %v5167 = vrot.slane %v5166, 1
  %v5168 = vadd.f32 %v5166, %v5167
  %v5169 = vmul.f32 %v5147, %v549
  %v5170 = vmul.f32 %v5168, %v549
  %v5171 = vadd.f32 %v5169, 0.001
  %v5172 = vadd.f32 %v5170, 0.001
  %v5173 = vrsqrt.pop %v5171
  %v5174 = vrsqrt.pop %v5172
  %v5175 = vmul.f32 %v5095, %v5173
  %v5176 = vmul.f32 %v5096, %v5173
  %v5177 = vmul.f32 %v5097, %v5173
  %v5178 = vmul.f32 %v5098, %v5173
  %v5179 = vmul.f32 %v5099, %v5173
  %v5180 = vmul.f32 %v5100, %v5173
  %v5181 = vmul.f32 %v5101, %v5173
  %v5182 = vmul.f32 %v5102, %v5173
  %v5183 = vmul.f32 %v5103, %v5174
  %v5184 = vmul.f32 %v5104, %v5174
  %v5185 = vmul.f32 %v5105, %v5174
  %v5186 = vmul.f32 %v5106, %v5174
  %v5187 = vmul.f32 %v5107, %v5174
  %v5188 = vmul.f32 %v5108, %v5174
  %v5189 = vmul.f32 %v5109, %v5174
  %v5190 = vmul.f32 %v5110, %v5174
  %v5191 = vsel %vm236, %v5175, 0.0
  %v5192 = vsel %vm236, %v5176, 0.0
  %v5193 = vadd.f32 %v5191, %v5192
  %v5194 = vsel %vm236, %v5177, 0.0
  %v5195 = vadd.f32 %v5193, %v5194
  %v5196 = vsel %vm236, %v5178, 0.0
  %v5197 = vadd.f32 %v5195, %v5196
  %v5198 = vsel %vm236, %v5179, 0.0
  %v5199 = vadd.f32 %v5197, %v5198
  %v5200 = vsel %vm236, %v5180, 0.0
  %v5201 = vadd.f32 %v5199, %v5200
  %v5202 = vsel %vm236, %v5181, 0.0
  %v5203 = vadd.f32 %v5201, %v5202
  %v5204 = vsel %vm236, %v5182, 0.0
  %v5205 = vadd.f32 %v5203, %v5204
  %v5206 = vsel %vm236, %v5183, 0.0
  %v5207 = vadd.f32 %v5205, %v5206
  %v5208 = vsel %vm236, %v5184, 0.0
  %v5209 = vadd.f32 %v5207, %v5208
  %v5210 = vsel %vm236, %v5185, 0.0
  %v5211 = vadd.f32 %v5209, %v5210
  %v5212 = vsel %vm236, %v5186, 0.0
  %v5213 = vadd.f32 %v5211, %v5212
  %v5214 = vsel %vm236, %v5187, 0.0
  %v5215 = vadd.f32 %v5213, %v5214
  %v5216 = vsel %vm236, %v5188, 0.0
  %v5217 = vadd.f32 %v5215, %v5216
  %v5218 = vsel %vm236, %v5189, 0.0
  %v5219 = vadd.f32 %v5217, %v5218
  %v5220 = vsel %vm236, %v5190, 0.0
  %v5221 = vadd.f32 %v5219, %v5220
  %v5222 = vrot.slane %v5221, 4
  %v5223 = vadd.f32 %v5221, %v5222
  %v5224 = vrot.slane %v5223, 2
  %v5225 = vadd.f32 %v5223, %v5224
  %v5226 = vrot.slane %v5225, 1
  %v5227 = vadd.f32 %v5225, %v5226
  %v5228 = vmul.f32 %v5227, %v609
  %v5229 = vsub.f32 %v5175, %v5228
  %v5230 = vsub.f32 %v5176, %v5228
  %v5231 = vsub.f32 %v5177, %v5228
  %v5232 = vsub.f32 %v5178, %v5228
  %v5233 = vsub.f32 %v5179, %v5228
  %v5234 = vsub.f32 %v5180, %v5228
  %v5235 = vsub.f32 %v5181, %v5228
  %v5236 = vsub.f32 %v5182, %v5228
  %v5237 = vsub.f32 %v5183, %v5228
  %v5238 = vsub.f32 %v5184, %v5228
  %v5239 = vsub.f32 %v5185, %v5228
  %v5240 = vsub.f32 %v5186, %v5228
  %v5241 = vsub.f32 %v5187, %v5228
  %v5242 = vsub.f32 %v5188, %v5228
  %v5243 = vsub.f32 %v5189, %v5228
  %v5244 = vsub.f32 %v5190, %v5228
  %v5245 = vmul.f32 %v5229, %v5229
  %v5246 = vmul.f32 %v5230, %v5230
  %v5247 = vmul.f32 %v5231, %v5231
  %v5248 = vmul.f32 %v5232, %v5232
  %v5249 = vmul.f32 %v5233, %v5233
  %v5250 = vmul.f32 %v5234, %v5234
  %v5251 = vmul.f32 %v5235, %v5235
  %v5252 = vmul.f32 %v5236, %v5236
  %v5253 = vmul.f32 %v5237, %v5237
  %v5254 = vmul.f32 %v5238, %v5238
  %v5255 = vmul.f32 %v5239, %v5239
  %v5256 = vmul.f32 %v5240, %v5240
  %v5257 = vmul.f32 %v5241, %v5241
  %v5258 = vmul.f32 %v5242, %v5242
  %v5259 = vmul.f32 %v5243, %v5243
  %v5260 = vmul.f32 %v5244, %v5244
  %v5261 = vsel %vm236, %v5245, 0.0
  %v5262 = vsel %vm236, %v5246, 0.0
  %v5263 = vadd.f32 %v5261, %v5262
  %v5264 = vsel %vm236, %v5247, 0.0
  %v5265 = vadd.f32 %v5263, %v5264
  %v5266 = vsel %vm236, %v5248, 0.0
  %v5267 = vadd.f32 %v5265, %v5266
  %v5268 = vsel %vm236, %v5249, 0.0
  %v5269 = vadd.f32 %v5267, %v5268
  %v5270 = vsel %vm236, %v5250, 0.0
  %v5271 = vadd.f32 %v5269, %v5270
  %v5272 = vsel %vm236, %v5251, 0.0
  %v5273 = vadd.f32 %v5271, %v5272
  %v5274 = vsel %vm236, %v5252, 0.0
  %v5275 = vadd.f32 %v5273, %v5274
  %v5276 = vsel %vm236, %v5253, 0.0
  %v5277 = vadd.f32 %v5275, %v5276
  %v5278 = vsel %vm236, %v5254, 0.0
  %v5279 = vadd.f32 %v5277, %v5278
  %v5280 = vsel %vm236, %v5255, 0.0
  %v5281 = vadd.f32 %v5279, %v5280
  %v5282 = vsel %vm236, %v5256, 0.0
  %v5283 = vadd.f32 %v5281, %v5282
  %v5284 = vsel %vm236, %v5257, 0.0
  %v5285 = vadd.f32 %v5283, %v5284
  %v5286 = vsel %vm236, %v5258, 0.0
  %v5287 = vadd.f32 %v5285, %v5286
  %v5288 = vsel %vm236, %v5259, 0.0
  %v5289 = vadd.f32 %v5287, %v5288
  %v5290 = vsel %vm236, %v5260, 0.0
  %v5291 = vadd.f32 %v5289, %v5290
  %v5292 = vrot.slane %v5291, 4
  %v5293 = vadd.f32 %v5291, %v5292
  %v5294 = vrot.slane %v5293, 2
  %v5295 = vadd.f32 %v5293, %v5294
  %v5296 = vrot.slane %v5295, 1
  %v5297 = vadd.f32 %v5295, %v5296
  %v5298 = vmul.f32 %v5297, %v609
  %v5299 = vadd.f32 %v5298, 1e-05
  %v5300 = vrsqrt.pop %v5299
  %v5301 = vmul.f32 %v5229, %v5300
  %v5302 = vmul.f32 %v5230, %v5300
  %v5303 = vmul.f32 %v5231, %v5300
  %v5304 = vmul.f32 %v5232, %v5300
  %v5305 = vmul.f32 %v5233, %v5300
  %v5306 = vmul.f32 %v5234, %v5300
  %v5307 = vmul.f32 %v5235, %v5300
  %v5308 = vmul.f32 %v5236, %v5300
  %v5309 = vmul.f32 %v5237, %v5300
  %v5310 = vmul.f32 %v5238, %v5300
  %v5311 = vmul.f32 %v5239, %v5300
  %v5312 = vmul.f32 %v5240, %v5300
  %v5313 = vmul.f32 %v5241, %v5300
  %v5314 = vmul.f32 %v5242, %v5300
  %v5315 = vmul.f32 %v5243, %v5300
  %v5316 = vmul.f32 %v5244, %v5300
  %v5317 = vmax.f32 %v5301, 0.0
  %v5318 = vmax.f32 %v5302, 0.0
  %v5319 = vmax.f32 %v5303, 0.0
  %v5320 = vmax.f32 %v5304, 0.0
  %v5321 = vmax.f32 %v5305, 0.0
  %v5322 = vmax.f32 %v5306, 0.0
  %v5323 = vmax.f32 %v5307, 0.0
  %v5324 = vmax.f32 %v5308, 0.0
  %v5325 = vmax.f32 %v5309, 0.0
  %v5326 = vmax.f32 %v5310, 0.0
  %v5327 = vmax.f32 %v5311, 0.0
  %v5328 = vmax.f32 %v5312, 0.0
  %v5329 = vmax.f32 %v5313, 0.0
  %v5330 = vmax.f32 %v5314, 0.0
  %v5331 = vmax.f32 %v5315, 0.0
  %v5332 = vmax.f32 %v5316, 0.0
  %v5333 = vld [vmem:[%s1 + $0x238] sm:$0xff]
  %v5334 = vld [vmem:[%s1 + $0x240] sm:$0xff]
  %v5335 = vld [vmem:[%s1 + $0x248] sm:$0xff]
  %v5336 = vld [vmem:[%s1 + $0x250] sm:$0xff]
  %v5337 = vld [vmem:[%s1 + $0x258] sm:$0x1]
  %v5338 = vlaneseq
  %v5339 = vshrl.u32 %v5338, 7
  %v5340 = vsub.s32 0, %v5339
  %v5341 = vrot.slane %v5337, %v5340
  %v5343 = vsel %vm236, %v5317, 0
  %v5346 = vsel %vm236, %v5318, 0
  %v5349 = vsel %vm236, %v5319, 0
  %v5352 = vsel %vm236, %v5320, 0
  %v5355 = vsel %vm236, %v5321, 0
  %v5358 = vsel %vm236, %v5322, 0
  %v5361 = vsel %vm236, %v5323, 0
  %v5364 = vsel %vm236, %v5324, 0
  %v5367 = vsel %vm236, %v5325, 0
  %v5370 = vsel %vm236, %v5326, 0
  %v5373 = vsel %vm236, %v5327, 0
  %v5376 = vsel %vm236, %v5328, 0
  %v5379 = vsel %vm236, %v5329, 0
  %v5382 = vsel %vm236, %v5330, 0
  %v5385 = vsel %vm236, %v5331, 0
  %v5388 = vsel %vm236, %v5332, 0
  %5390 = vmatprep.subr.mxu0 0.0
  %5391 = vmatpush1.msra.mxu0 %v5333
  %5392 = vmatprep.subr.mxu0 0.0
  %5393 = vmatpush1.msra.mxu0 %v5334
  %5394 = vmatprep.subr.mxu0 0.0
  %5395 = vmatpush1.msra.mxu0 %v5335
  %5396 = vmatprep.subr.mxu0 0.0
  %5397 = vmatpush1.msra.mxu0 %v5336
  %5398 = vmatprep.subr.mxu0 0.0
  %5399 = vmatpush1.msra.mxu0 0.0
  %5400 = vmatprep.subr.mxu0 0.0
  %5401 = vmatpush1.msra.mxu0 0.0
  %5402 = vmatprep.subr.mxu0 0.0
  %5403 = vmatpush1.msra.mxu0 0.0
  %5404 = vmatprep.subr.mxu0 0.0
  %5405 = vmatpush1.msra.mxu0 0.0
  %5406 = vmatprep.subr.mxu0 0.0
  %5407 = vmatpush1.msra.mxu0 0.0
  %5408 = vmatprep.subr.mxu0 0.0
  %5409 = vmatpush1.msra.mxu0 0.0
  %5410 = vmatprep.subr.mxu0 0.0
  %5411 = vmatpush1.msra.mxu0 0.0
  %5412 = vmatprep.subr.mxu0 0.0
  %5413 = vmatpush1.msra.mxu0 0.0
  %5414 = vmatprep.subr.mxu0 0.0
  %5415 = vmatpush1.msra.mxu0 0.0
  %5416 = vmatprep.subr.mxu0 0.0
  %5417 = vmatpush1.msra.mxu0 0.0
  %5418 = vmatprep.subr.mxu0 0.0
  %5419 = vmatpush1.msra.mxu0 0.0
  %5420 = vmatprep.subr.mxu0 0.0
  %5421 = vmatpush1.msra.mxu0 0.0
  %5422 = vmatprep.subr.mxu0 0.0
  %5423 = vmatpush1.msra.mxu0 0.0
  %5424 = vmatprep.subr.mxu0 0.0
  %5425 = vmatpush1.msra.mxu0 0.0
  %5426 = vmatprep.subr.mxu0 0.0
  %5427 = vmatpush1.msra.mxu0 0.0
  %5428 = vmatprep.subr.mxu0 0.0
  %5429 = vmatpush1.msra.mxu0 0.0
  %5430 = vmatprep.subr.mxu0 0.0
  %5431 = vmatpush1.msra.mxu0 0.0
  %5432 = vmatprep.subr.mxu0 0.0
  %5433 = vmatpush1.msra.mxu0 0.0
  %5434 = vmatprep.subr.mxu0 0.0
  %5435 = vmatpush1.msra.mxu0 0.0
  %5436 = vmatprep.subr.mxu0 0.0
  %5437 = vmatpush1.msra.mxu0 0.0
  %5438 = vmatprep.subr.mxu0 0.0
  %5439 = vmatpush1.msra.mxu0 0.0
  %5440 = vmatprep.subr.mxu0 0.0
  %5441 = vmatpush1.msra.mxu0 0.0
  %5442 = vmatprep.subr.mxu0 0.0
  %5443 = vmatpush1.msra.mxu0 0.0
  %5444 = vmatprep.subr.mxu0 0.0
  %5445 = vmatpush1.msra.mxu0 0.0
  %5446 = vmatprep.subr.mxu0 0.0
  %5447 = vmatpush1.msra.mxu0 0.0
  %5448 = vmatprep.subr.mxu0 0.0
  %5449 = vmatpush1.msra.mxu0 0.0
  %5450 = vmatprep.subr.mxu0 0.0
  %5451 = vmatpush1.msra.mxu0 0.0
  %5452 = vmatprep.subr.mxu0 0.0
  %5453 = vmatpush1.msra.mxu0 0.0
  %5454 = vmatprep.mubr.f32.mxu0 0.0
  %5455 = vmatmul.mubr.f32.gmra.mrb[0].mxu0 %v5343
  %v5456 = vpop.f32.mrb[0].mxu0
  %v5457 = vadd.f32 %v5341, %v5456
  %v5458 = vpop.f32.mrb[0].mxu0
  %5459 = vmatprep.mubr.f32.mxu0 0.0
  %5460 = vmatmul.mubr.f32.gmra.mrb[0].mxu0 %v5346
  %v5461 = vpop.f32.mrb[0].mxu0
  %v5462 = vadd.f32 %v5341, %v5461
  %v5463 = vpop.f32.mrb[0].mxu0
  %5464 = vmatprep.mubr.f32.mxu0 0.0
  %5465 = vmatmul.mubr.f32.gmra.mrb[0].mxu0 %v5349
  %v5466 = vpop.f32.mrb[0].mxu0
  %v5467 = vadd.f32 %v5341, %v5466
  %v5468 = vpop.f32.mrb[0].mxu0
  %5469 = vmatprep.mubr.f32.mxu0 0.0
  %5470 = vmatmul.mubr.f32.gmra.mrb[0].mxu0 %v5352
  %v5471 = vpop.f32.mrb[0].mxu0
  %v5472 = vadd.f32 %v5341, %v5471
  %v5473 = vpop.f32.mrb[0].mxu0
  %5474 = vmatprep.mubr.f32.mxu0 0.0
  %5475 = vmatmul.mubr.f32.gmra.mrb[0].mxu0 %v5355
  %v5476 = vpop.f32.mrb[0].mxu0
  %v5477 = vadd.f32 %v5341, %v5476
  %v5478 = vpop.f32.mrb[0].mxu0
  %5479 = vmatprep.mubr.f32.mxu0 0.0
  %5480 = vmatmul.mubr.f32.gmra.mrb[0].mxu0 %v5358
  %v5481 = vpop.f32.mrb[0].mxu0
  %v5482 = vadd.f32 %v5341, %v5481
  %v5483 = vpop.f32.mrb[0].mxu0
  %5484 = vmatprep.mubr.f32.mxu0 0.0
  %5485 = vmatmul.mubr.f32.gmra.mrb[0].mxu0 %v5361
  %v5486 = vpop.f32.mrb[0].mxu0
  %v5487 = vadd.f32 %v5341, %v5486
  %v5488 = vpop.f32.mrb[0].mxu0
  %5489 = vmatprep.mubr.f32.mxu0 0.0
  %5490 = vmatmul.mubr.f32.gmra.mrb[0].mxu0 %v5364
  %v5491 = vpop.f32.mrb[0].mxu0
  %v5492 = vadd.f32 %v5341, %v5491
  %v5493 = vpop.f32.mrb[0].mxu0
  %5494 = vmatprep.mubr.f32.mxu0 0.0
  %5495 = vmatmul.mubr.f32.gmra.mrb[0].mxu0 %v5367
  %v5496 = vpop.f32.mrb[0].mxu0
  %v5497 = vadd.f32 %v5341, %v5496
  %v5498 = vpop.f32.mrb[0].mxu0
  %5499 = vmatprep.mubr.f32.mxu0 0.0
  %5500 = vmatmul.mubr.f32.gmra.mrb[0].mxu0 %v5370
  %v5501 = vpop.f32.mrb[0].mxu0
  %v5502 = vadd.f32 %v5341, %v5501
  %v5503 = vpop.f32.mrb[0].mxu0
  %5504 = vmatprep.mubr.f32.mxu0 0.0
  %5505 = vmatmul.mubr.f32.gmra.mrb[0].mxu0 %v5373
  %v5506 = vpop.f32.mrb[0].mxu0
  %v5507 = vadd.f32 %v5341, %v5506
  %v5508 = vpop.f32.mrb[0].mxu0
  %5509 = vmatprep.mubr.f32.mxu0 0.0
  %5510 = vmatmul.mubr.f32.gmra.mrb[0].mxu0 %v5376
  %v5511 = vpop.f32.mrb[0].mxu0
  %v5512 = vadd.f32 %v5341, %v5511
  %v5513 = vpop.f32.mrb[0].mxu0
  %5514 = vmatprep.mubr.f32.mxu0 0.0
  %5515 = vmatmul.mubr.f32.gmra.mrb[0].mxu0 %v5379
  %v5516 = vpop.f32.mrb[0].mxu0
  %v5517 = vadd.f32 %v5341, %v5516
  %v5518 = vpop.f32.mrb[0].mxu0
  %5519 = vmatprep.mubr.f32.mxu0 0.0
  %5520 = vmatmul.mubr.f32.gmra.mrb[0].mxu0 %v5382
  %v5521 = vpop.f32.mrb[0].mxu0
  %v5522 = vadd.f32 %v5341, %v5521
  %v5523 = vpop.f32.mrb[0].mxu0
  %5524 = vmatprep.mubr.f32.mxu0 0.0
  %5525 = vmatmul.mubr.f32.gmra.mrb[0].mxu0 %v5385
  %v5526 = vpop.f32.mrb[0].mxu0
  %v5527 = vadd.f32 %v5341, %v5526
  %v5528 = vpop.f32.mrb[0].mxu0
  %5529 = vmatprep.mubr.f32.mxu0 0.0
  %5530 = vmatmul.mubr.f32.gmra.mrb[0].mxu0 %v5388
  %v5531 = vpop.f32.mrb[0].mxu0
  %v5532 = vadd.f32 %v5341, %v5531
  %v5533 = vpop.f32.mrb[0].mxu0
  %5534 = vdwg.mxu0
  %v5535 = vsel %vm236, %v5457, 0.0
  %v5536 = vsel %vm236, %v5462, 0.0
  %v5537 = vadd.f32 %v5535, %v5536
  %v5538 = vsel %vm236, %v5467, 0.0
  %v5539 = vadd.f32 %v5537, %v5538
  %v5540 = vsel %vm236, %v5472, 0.0
  %v5541 = vadd.f32 %v5539, %v5540
  %v5542 = vsel %vm236, %v5477, 0.0
  %v5543 = vadd.f32 %v5541, %v5542
  %v5544 = vsel %vm236, %v5482, 0.0
  %v5545 = vadd.f32 %v5543, %v5544
  %v5546 = vsel %vm236, %v5487, 0.0
  %v5547 = vadd.f32 %v5545, %v5546
  %v5548 = vsel %vm236, %v5492, 0.0
  %v5549 = vadd.f32 %v5547, %v5548
  %v5550 = vrot.slane %v5549, 4
  %v5551 = vadd.f32 %v5549, %v5550
  %v5552 = vrot.slane %v5551, 2
  %v5553 = vadd.f32 %v5551, %v5552
  %v5554 = vrot.slane %v5553, 1
  %v5555 = vadd.f32 %v5553, %v5554
  %v5556 = vsel %vm236, %v5497, 0.0
  %v5557 = vsel %vm236, %v5502, 0.0
  %v5558 = vadd.f32 %v5556, %v5557
  %v5559 = vsel %vm236, %v5507, 0.0
  %v5560 = vadd.f32 %v5558, %v5559
  %v5561 = vsel %vm236, %v5512, 0.0
  %v5562 = vadd.f32 %v5560, %v5561
  %v5563 = vsel %vm236, %v5517, 0.0
  %v5564 = vadd.f32 %v5562, %v5563
  %v5565 = vsel %vm236, %v5522, 0.0
  %v5566 = vadd.f32 %v5564, %v5565
  %v5567 = vsel %vm236, %v5527, 0.0
  %v5568 = vadd.f32 %v5566, %v5567
  %v5569 = vsel %vm236, %v5532, 0.0
  %v5570 = vadd.f32 %v5568, %v5569
  %v5571 = vrot.slane %v5570, 4
  %v5572 = vadd.f32 %v5570, %v5571
  %v5573 = vrot.slane %v5572, 2
  %v5574 = vadd.f32 %v5572, %v5573
  %v5575 = vrot.slane %v5574, 1
  %v5576 = vadd.f32 %v5574, %v5575
  %v5577 = vmul.f32 %v5555, %v472
  %v5578 = vmul.f32 %v5576, %v472
  %v5579 = vsub.f32 %v5457, %v5577
  %v5580 = vsub.f32 %v5462, %v5577
  %v5581 = vsub.f32 %v5467, %v5577
  %v5582 = vsub.f32 %v5472, %v5577
  %v5583 = vsub.f32 %v5477, %v5577
  %v5584 = vsub.f32 %v5482, %v5577
  %v5585 = vsub.f32 %v5487, %v5577
  %v5586 = vsub.f32 %v5492, %v5577
  %v5587 = vsub.f32 %v5497, %v5578
  %v5588 = vsub.f32 %v5502, %v5578
  %v5589 = vsub.f32 %v5507, %v5578
  %v5590 = vsub.f32 %v5512, %v5578
  %v5591 = vsub.f32 %v5517, %v5578
  %v5592 = vsub.f32 %v5522, %v5578
  %v5593 = vsub.f32 %v5527, %v5578
  %v5594 = vsub.f32 %v5532, %v5578
  %v5595 = vmul.f32 %v5579, %v5579
  %v5596 = vmul.f32 %v5580, %v5580
  %v5597 = vmul.f32 %v5581, %v5581
  %v5598 = vmul.f32 %v5582, %v5582
  %v5599 = vmul.f32 %v5583, %v5583
  %v5600 = vmul.f32 %v5584, %v5584
  %v5601 = vmul.f32 %v5585, %v5585
  %v5602 = vmul.f32 %v5586, %v5586
  %v5603 = vmul.f32 %v5587, %v5587
  %v5604 = vmul.f32 %v5588, %v5588
  %v5605 = vmul.f32 %v5589, %v5589
  %v5606 = vmul.f32 %v5590, %v5590
  %v5607 = vmul.f32 %v5591, %v5591
  %v5608 = vmul.f32 %v5592, %v5592
  %v5609 = vmul.f32 %v5593, %v5593
  %v5610 = vmul.f32 %v5594, %v5594
  %v5611 = vsel %vm236, %v5595, 0.0
  %v5612 = vsel %vm236, %v5596, 0.0
  %v5613 = vadd.f32 %v5611, %v5612
  %v5614 = vsel %vm236, %v5597, 0.0
  %v5615 = vadd.f32 %v5613, %v5614
  %v5616 = vsel %vm236, %v5598, 0.0
  %v5617 = vadd.f32 %v5615, %v5616
  %v5618 = vsel %vm236, %v5599, 0.0
  %v5619 = vadd.f32 %v5617, %v5618
  %v5620 = vsel %vm236, %v5600, 0.0
  %v5621 = vadd.f32 %v5619, %v5620
  %v5622 = vsel %vm236, %v5601, 0.0
  %v5623 = vadd.f32 %v5621, %v5622
  %v5624 = vsel %vm236, %v5602, 0.0
  %v5625 = vadd.f32 %v5623, %v5624
  %v5626 = vrot.slane %v5625, 4
  %v5627 = vadd.f32 %v5625, %v5626
  %v5628 = vrot.slane %v5627, 2
  %v5629 = vadd.f32 %v5627, %v5628
  %v5630 = vrot.slane %v5629, 1
  %v5631 = vadd.f32 %v5629, %v5630
  %v5632 = vsel %vm236, %v5603, 0.0
  %v5633 = vsel %vm236, %v5604, 0.0
  %v5634 = vadd.f32 %v5632, %v5633
  %v5635 = vsel %vm236, %v5605, 0.0
  %v5636 = vadd.f32 %v5634, %v5635
  %v5637 = vsel %vm236, %v5606, 0.0
  %v5638 = vadd.f32 %v5636, %v5637
  %v5639 = vsel %vm236, %v5607, 0.0
  %v5640 = vadd.f32 %v5638, %v5639
  %v5641 = vsel %vm236, %v5608, 0.0
  %v5642 = vadd.f32 %v5640, %v5641
  %v5643 = vsel %vm236, %v5609, 0.0
  %v5644 = vadd.f32 %v5642, %v5643
  %v5645 = vsel %vm236, %v5610, 0.0
  %v5646 = vadd.f32 %v5644, %v5645
  %v5647 = vrot.slane %v5646, 4
  %v5648 = vadd.f32 %v5646, %v5647
  %v5649 = vrot.slane %v5648, 2
  %v5650 = vadd.f32 %v5648, %v5649
  %v5651 = vrot.slane %v5650, 1
  %v5652 = vadd.f32 %v5650, %v5651
  %v5653 = vmul.f32 %v5631, %v549
  %v5654 = vmul.f32 %v5652, %v549
  %v5655 = vadd.f32 %v5653, 0.001
  %v5656 = vadd.f32 %v5654, 0.001
  %v5657 = vrsqrt.pop %v5655
  %v5658 = vrsqrt.pop %v5656
  %v5659 = vmul.f32 %v5579, %v5657
  %v5660 = vmul.f32 %v5580, %v5657
  %v5661 = vmul.f32 %v5581, %v5657
  %v5662 = vmul.f32 %v5582, %v5657
  %v5663 = vmul.f32 %v5583, %v5657
  %v5664 = vmul.f32 %v5584, %v5657
  %v5665 = vmul.f32 %v5585, %v5657
  %v5666 = vmul.f32 %v5586, %v5657
  %v5667 = vmul.f32 %v5587, %v5658
  %v5668 = vmul.f32 %v5588, %v5658
  %v5669 = vmul.f32 %v5589, %v5658
  %v5670 = vmul.f32 %v5590, %v5658
  %v5671 = vmul.f32 %v5591, %v5658
  %v5672 = vmul.f32 %v5592, %v5658
  %v5673 = vmul.f32 %v5593, %v5658
  %v5674 = vmul.f32 %v5594, %v5658
  %v5675 = vsel %vm236, %v5659, 0.0
  %v5676 = vsel %vm236, %v5660, 0.0
  %v5677 = vadd.f32 %v5675, %v5676
  %v5678 = vsel %vm236, %v5661, 0.0
  %v5679 = vadd.f32 %v5677, %v5678
  %v5680 = vsel %vm236, %v5662, 0.0
  %v5681 = vadd.f32 %v5679, %v5680
  %v5682 = vsel %vm236, %v5663, 0.0
  %v5683 = vadd.f32 %v5681, %v5682
  %v5684 = vsel %vm236, %v5664, 0.0
  %v5685 = vadd.f32 %v5683, %v5684
  %v5686 = vsel %vm236, %v5665, 0.0
  %v5687 = vadd.f32 %v5685, %v5686
  %v5688 = vsel %vm236, %v5666, 0.0
  %v5689 = vadd.f32 %v5687, %v5688
  %v5690 = vsel %vm236, %v5667, 0.0
  %v5691 = vadd.f32 %v5689, %v5690
  %v5692 = vsel %vm236, %v5668, 0.0
  %v5693 = vadd.f32 %v5691, %v5692
  %v5694 = vsel %vm236, %v5669, 0.0
  %v5695 = vadd.f32 %v5693, %v5694
  %v5696 = vsel %vm236, %v5670, 0.0
  %v5697 = vadd.f32 %v5695, %v5696
  %v5698 = vsel %vm236, %v5671, 0.0
  %v5699 = vadd.f32 %v5697, %v5698
  %v5700 = vsel %vm236, %v5672, 0.0
  %v5701 = vadd.f32 %v5699, %v5700
  %v5702 = vsel %vm236, %v5673, 0.0
  %v5703 = vadd.f32 %v5701, %v5702
  %v5704 = vsel %vm236, %v5674, 0.0
  %v5705 = vadd.f32 %v5703, %v5704
  %v5706 = vrot.slane %v5705, 4
  %v5707 = vadd.f32 %v5705, %v5706
  %v5708 = vrot.slane %v5707, 2
  %v5709 = vadd.f32 %v5707, %v5708
  %v5710 = vrot.slane %v5709, 1
  %v5711 = vadd.f32 %v5709, %v5710
  %v5712 = vmul.f32 %v5711, %v609
  %v5713 = vsub.f32 %v5659, %v5712
  %v5714 = vsub.f32 %v5660, %v5712
  %v5715 = vsub.f32 %v5661, %v5712
  %v5716 = vsub.f32 %v5662, %v5712
  %v5717 = vsub.f32 %v5663, %v5712
  %v5718 = vsub.f32 %v5664, %v5712
  %v5719 = vsub.f32 %v5665, %v5712
  %v5720 = vsub.f32 %v5666, %v5712
  %v5721 = vsub.f32 %v5667, %v5712
  %v5722 = vsub.f32 %v5668, %v5712
  %v5723 = vsub.f32 %v5669, %v5712
  %v5724 = vsub.f32 %v5670, %v5712
  %v5725 = vsub.f32 %v5671, %v5712
  %v5726 = vsub.f32 %v5672, %v5712
  %v5727 = vsub.f32 %v5673, %v5712
  %v5728 = vsub.f32 %v5674, %v5712
  %v5729 = vmul.f32 %v5713, %v5713
  %v5730 = vmul.f32 %v5714, %v5714
  %v5731 = vmul.f32 %v5715, %v5715
  %v5732 = vmul.f32 %v5716, %v5716
  %v5733 = vmul.f32 %v5717, %v5717
  %v5734 = vmul.f32 %v5718, %v5718
  %v5735 = vmul.f32 %v5719, %v5719
  %v5736 = vmul.f32 %v5720, %v5720
  %v5737 = vmul.f32 %v5721, %v5721
  %v5738 = vmul.f32 %v5722, %v5722
  %v5739 = vmul.f32 %v5723, %v5723
  %v5740 = vmul.f32 %v5724, %v5724
  %v5741 = vmul.f32 %v5725, %v5725
  %v5742 = vmul.f32 %v5726, %v5726
  %v5743 = vmul.f32 %v5727, %v5727
  %v5744 = vmul.f32 %v5728, %v5728
  %v5745 = vsel %vm236, %v5729, 0.0
  %v5746 = vsel %vm236, %v5730, 0.0
  %v5747 = vadd.f32 %v5745, %v5746
  %v5748 = vsel %vm236, %v5731, 0.0
  %v5749 = vadd.f32 %v5747, %v5748
  %v5750 = vsel %vm236, %v5732, 0.0
  %v5751 = vadd.f32 %v5749, %v5750
  %v5752 = vsel %vm236, %v5733, 0.0
  %v5753 = vadd.f32 %v5751, %v5752
  %v5754 = vsel %vm236, %v5734, 0.0
  %v5755 = vadd.f32 %v5753, %v5754
  %v5756 = vsel %vm236, %v5735, 0.0
  %v5757 = vadd.f32 %v5755, %v5756
  %v5758 = vsel %vm236, %v5736, 0.0
  %v5759 = vadd.f32 %v5757, %v5758
  %v5760 = vsel %vm236, %v5737, 0.0
  %v5761 = vadd.f32 %v5759, %v5760
  %v5762 = vsel %vm236, %v5738, 0.0
  %v5763 = vadd.f32 %v5761, %v5762
  %v5764 = vsel %vm236, %v5739, 0.0
  %v5765 = vadd.f32 %v5763, %v5764
  %v5766 = vsel %vm236, %v5740, 0.0
  %v5767 = vadd.f32 %v5765, %v5766
  %v5768 = vsel %vm236, %v5741, 0.0
  %v5769 = vadd.f32 %v5767, %v5768
  %v5770 = vsel %vm236, %v5742, 0.0
  %v5771 = vadd.f32 %v5769, %v5770
  %v5772 = vsel %vm236, %v5743, 0.0
  %v5773 = vadd.f32 %v5771, %v5772
  %v5774 = vsel %vm236, %v5744, 0.0
  %v5775 = vadd.f32 %v5773, %v5774
  %v5776 = vrot.slane %v5775, 4
  %v5777 = vadd.f32 %v5775, %v5776
  %v5778 = vrot.slane %v5777, 2
  %v5779 = vadd.f32 %v5777, %v5778
  %v5780 = vrot.slane %v5779, 1
  %v5781 = vadd.f32 %v5779, %v5780
  %v5782 = vmul.f32 %v5781, %v609
  %v5783 = vadd.f32 %v5782, 1e-05
  %v5784 = vrsqrt.pop %v5783
  %v5785 = vmul.f32 %v5713, %v5784
  %v5786 = vmul.f32 %v5714, %v5784
  %v5787 = vmul.f32 %v5715, %v5784
  %v5788 = vmul.f32 %v5716, %v5784
  %v5789 = vmul.f32 %v5717, %v5784
  %v5790 = vmul.f32 %v5718, %v5784
  %v5791 = vmul.f32 %v5719, %v5784
  %v5792 = vmul.f32 %v5720, %v5784
  %v5793 = vmul.f32 %v5721, %v5784
  %v5794 = vmul.f32 %v5722, %v5784
  %v5795 = vmul.f32 %v5723, %v5784
  %v5796 = vmul.f32 %v5724, %v5784
  %v5797 = vmul.f32 %v5725, %v5784
  %v5798 = vmul.f32 %v5726, %v5784
  %v5799 = vmul.f32 %v5727, %v5784
  %v5800 = vmul.f32 %v5728, %v5784
  %v5801 = vmax.f32 %v5785, 0.0
  %v5802 = vmax.f32 %v5786, 0.0
  %v5803 = vmax.f32 %v5787, 0.0
  %v5804 = vmax.f32 %v5788, 0.0
  %v5805 = vmax.f32 %v5789, 0.0
  %v5806 = vmax.f32 %v5790, 0.0
  %v5807 = vmax.f32 %v5791, 0.0
  %v5808 = vmax.f32 %v5792, 0.0
  %v5809 = vmax.f32 %v5793, 0.0
  %v5810 = vmax.f32 %v5794, 0.0
  %v5811 = vmax.f32 %v5795, 0.0
  %v5812 = vmax.f32 %v5796, 0.0
  %v5813 = vmax.f32 %v5797, 0.0
  %v5814 = vmax.f32 %v5798, 0.0
  %v5815 = vmax.f32 %v5799, 0.0
  %v5816 = vmax.f32 %v5800, 0.0
  %5817 = vst.msk [vmem:[%s2] sm:$0xff] %vm236, %v5801
  %5818 = vst.msk [vmem:[%s2 + $0x8] sm:$0xff] %vm236, %v5802
  %5819 = vst.msk [vmem:[%s2 + $0x10] sm:$0xff] %vm236, %v5803
  %5820 = vst.msk [vmem:[%s2 + $0x18] sm:$0xff] %vm236, %v5804
  %5821 = vst.msk [vmem:[%s2 + $0x20] sm:$0xff] %vm236, %v5805
  %5822 = vst.msk [vmem:[%s2 + $0x28] sm:$0xff] %vm236, %v5806
  %5823 = vst.msk [vmem:[%s2 + $0x30] sm:$0xff] %vm236, %v5807
  %5824 = vst.msk [vmem:[%s2 + $0x38] sm:$0xff] %vm236, %v5808
  %5825 = vst.msk [vmem:[%s2 + $0x40] sm:$0xff] %vm236, %v5809
  %5826 = vst.msk [vmem:[%s2 + $0x48] sm:$0xff] %vm236, %v5810
  %5827 = vst.msk [vmem:[%s2 + $0x50] sm:$0xff] %vm236, %v5811
  %5828 = vst.msk [vmem:[%s2 + $0x58] sm:$0xff] %vm236, %v5812
  %5829 = vst.msk [vmem:[%s2 + $0x60] sm:$0xff] %vm236, %v5813
  %5830 = vst.msk [vmem:[%s2 + $0x68] sm:$0xff] %vm236, %v5814
  %5831 = vst.msk [vmem:[%s2 + $0x70] sm:$0xff] %vm236, %v5815
  %5832 = vst.msk [vmem:[%s2 + $0x78] sm:$0xff] %vm236, %v5816
  // Predicated region
  $region10: #{oanet_forward.1} parent=0 // pred_check
    _
  $region11: #{oanet_forward.1} parent=0 // pred_check_branch
    %5834 = sbr.rel (0) target = $region13
  $region12: #{oanet_forward.1} parent=0 // pred_region
    _
  $region13: #{oanet_forward.1} parent=0 // pred_fallthru
    _
  // Predicated region
  $region14: #{oanet_forward.1} parent=0 // pred_check
    _
  $region15: #{oanet_forward.1} parent=0 // pred_check_branch
    %5836 = sbr.rel (0) target = $region17
  $region16: #{oanet_forward.1} parent=0 // pred_region
    _
  $region17: #{oanet_forward.1} parent=0 // pred_fallthru
    _

</llo_original>
